<compile_context>
chip_gen: v6e
topology: v6e:2x2x1
jax: 0.10.0
libtpu: 0.0.40
codegen_flags: <defaults>
</compile_context>

<pallas_src>
import math

import jax
import jax.numpy as jnp
from jax.experimental import pallas as pl
from jax.experimental.pallas import tpu as pltpu

# ----------------------------- configuration --------------------------------
BATCH = 8                 # args.batch_size (per view)
C = 3
H = W = 64
PATCH = 32
GH, GW = H // PATCH, W // PATCH
T = GH * GW               # 4 tokens
EMBED_DIM = 64
NUM_HEADS = 4
HEAD_DIM = EMBED_DIM // NUM_HEADS
MLP_HIDDEN = 4 * EMBED_DIM
DEPTH = 2
EMBEDDING = T * EMBED_DIM                 # flattened backbone features (256)

# TODO(synk): full-size timm vit_small_patch32_224 dims (18816-dim embedding,
# 8192-wide projector) are not reproduced; this is a deterministic scaled-down
# backbone/projector with identical op structure.
MLP_SPEC = "128-128-64"                   # args.mlp (scaled down)
PROJ_DIMS = [EMBEDDING] + list(map(int, MLP_SPEC.split("-")))
NUM_FEATURES = PROJ_DIMS[-1]

SIM_COEFF = 25.0
STD_COEFF = 25.0
COV_COEFF = 1.0

B2 = 2 * BATCH            # both views batched together through backbone/projector
NROWS = T * B2            # 64 token rows (token-major layout: row = t*B2 + b)
PACKED = NUM_HEADS * NROWS  # 256 packed score columns (all heads side by side)


# --------------------------- in-kernel helpers -------------------------------
def _erf(x):
    # Abramowitz & Stegun 7.1.26; divide done with the EUP approx reciprocal
    # (error well below the bf16 quantization applied before the next matmul).
    a1, a2, a3, a4, a5 = (0.254829592, -0.284496736, 1.421413741,
                          -1.453152027, 1.061405429)
    pc = 0.3275911
    ax = jnp.abs(x)
    t = pl.reciprocal(1.0 + pc * ax, approx=True)
    poly = ((((a5 * t + a4) * t + a3) * t + a2) * t + a1) * t
    y = 1.0 - poly * jnp.exp(-(ax * ax))
    return jnp.where(x >= 0.0, y, -y)


def _gelu_exact(x):
    return 0.5 * x * (1.0 + _erf(x * 0.7071067811865476))


def _layer_norm(x, g, b, eps=1e-6):
    mu = jnp.mean(x, axis=-1, keepdims=True)
    var = jnp.mean((x - mu) ** 2, axis=-1, keepdims=True)
    return (x - mu) * jax.lax.rsqrt(var + eps) * g + b


def _mm(x, w_bf16):
    # MXU matmul: bf16 operands, f32 accumulation.
    return jnp.dot(x.astype(jnp.bfloat16), w_bf16,
                   preferred_element_type=jnp.float32)


# ------------------------------ fused kernel ---------------------------------
def _vicreg_fused_kernel(
    patches_ref, patch_w_ref, posb_ref, attn_bias_ref, hmask_ref,
    ln1_g_ref, ln1_b_ref,
    wq_ref, bq_ref, wk_ref, bk_ref, wv_ref, bv_ref,
    proj_w_ref, proj_b_ref,
    ln2_g_ref, ln2_b_ref,
    fc1_w_ref, fc1_b_ref, fc2_w_ref, fc2_b_ref,
    norm_g_ref, norm_b_ref,
    w1_ref, b1_ref, g1_ref, be1_ref,
    w2_ref, b2_ref, g2_ref, be2_ref,
    w3_ref,
    loss_ref,
):
    f32 = jnp.float32

    # ---------------- backbone: patch embed (+bias+pos) ----------------------
    # patches: (NROWS, C*P*P) bf16, token-major rows: row = t*B2 + b
    tok = jnp.dot(patches_ref[...], patch_w_ref[...], preferred_element_type=f32)
    tok = tok + posb_ref[...]                              # (NROWS, EMBED_DIM) f32

    # precomputed constants (wrapper-side): packed block-diagonal additive
    # bias (tokens attend only within their own sample/view) and per-head
    # feature mask used to build the block-diagonal K/V stacks.
    attn_bias = attn_bias_ref[...]                         # (NROWS, PACKED) f32
    hmask = hmask_ref[...]                                 # (PACKED, EMBED_DIM) f32

    scale = 1.0 / math.sqrt(HEAD_DIM)

    for d in range(DEPTH):
        # --- attention (pre-norm), all heads packed lane-dense ---
        h = _layer_norm(tok, ln1_g_ref[d], ln1_b_ref[d])
        q = _mm(h, wq_ref[d]) + bq_ref[d]                  # (NROWS, EMBED_DIM)
        k = _mm(h, wk_ref[d]) + bk_ref[d]
        v = _mm(h, wv_ref[d]) + bv_ref[d]

        # block-diagonal stacks: row h*NROWS+j holds token j masked to head h's
        # 16 feature columns (sublane concat + one elementwise mask multiply).
        kb = jnp.concatenate([k, k, k, k], axis=0) * hmask  # (PACKED, EMBED_DIM)
        vb = jnp.concatenate([v, v, v, v], axis=0) * hmask  # (PACKED, EMBED_DIM)

        # packed scores: s[:, h*NROWS + j] = q_h . k_h[j]   (f32 MXU)
        s = jax.lax.dot_general(q, kb, (((1,), (1,)), ((), ())),
                                preferred_element_type=f32) * scale + attn_bias
        # softmax is shift-invariant per head, so one global row max suffices.
        m = jnp.max(s, axis=-1, keepdims=True)
        p = jnp.exp(s - m)                                  # masked entries -> exact 0

        # unnormalized head-concatenated output + per-head denominators from
        # the same packed matmul shape; normalize with EUP approx reciprocal.
        o_un = jnp.dot(p, vb, preferred_element_type=f32)   # (NROWS, EMBED_DIM)
        den = jnp.dot(p, hmask, preferred_element_type=f32) # denom broadcast per head
        attn = o_un * pl.reciprocal(den, approx=True)

        attn = _mm(attn, proj_w_ref[d]) + proj_b_ref[d]
        tok = tok + attn

        # --- MLP (pre-norm) ---
        h = _layer_norm(tok, ln2_g_ref[d], ln2_b_ref[d])
        h = _mm(h, fc1_w_ref[d]) + fc1_b_ref[d]             # (NROWS, MLP_HIDDEN)
        h = _gelu_exact(h)                                  # erf GELU, f32
        h = _mm(h, fc2_w_ref[d]) + fc2_b_ref[d]
        tok = tok + h

    tok = _layer_norm(tok, norm_g_ref[...], norm_b_ref[...])   # final LN

    # --------------- projector (both views; BN stats per view) ---------------
    # flatten(B, T*D) @ W1 == sum_t tok[t-row-block] @ W1[t-feature-block]
    h1 = _mm(tok[0:B2, :], w1_ref[0:EMBED_DIM, :])
    for t in range(1, T):
        h1 = h1 + _mm(tok[t * B2:(t + 1) * B2, :],
                      w1_ref[t * EMBED_DIM:(t + 1) * EMBED_DIM, :])
    h1 = h1 + b1_ref[...]

    def bn_relu(hh, g, be):
        # BatchNorm1d training-mode (biased batch var, eps=1e-5), per view.
        # (2, BATCH, N) is a layout-preserving sublane regroup (no slicing /
        # row concatenation on the serial path).
        n = hh.shape[-1]
        z = hh.reshape(2, BATCH, n)
        mu = jnp.mean(z, axis=1, keepdims=True)
        var = jnp.mean((z - mu) ** 2, axis=1, keepdims=True)
        zn = (z - mu) * jax.lax.rsqrt(var + 1e-5)
        return jnp.maximum(zn.reshape(B2, n) * g + be, 0.0)

    h1 = bn_relu(h1, g1_ref[...], be1_ref[...])
    h2 = _mm(h1, w2_ref[...]) + b2_ref[...]
    h2 = bn_relu(h2, g2_ref[...], be2_ref[...])
    z = _mm(h2, w3_ref[...])                               # (B2, NUM_FEATURES) f32

    # ------------------------------ VICReg loss ------------------------------
    x = z[0:BATCH, :]
    y = z[BATCH:B2, :]

    repr_loss = jnp.mean((x - y) ** 2)                     # F.mse_loss (mean)

    xc = x - jnp.mean(x, axis=0, keepdims=True)
    yc = y - jnp.mean(y, axis=0, keepdims=True)

    inv_nm1 = 1.0 / (BATCH - 1)
    var_x = jnp.sum(xc * xc, axis=0, keepdims=True) * inv_nm1   # torch.var (unbiased)
    var_y = jnp.sum(yc * yc, axis=0, keepdims=True) * inv_nm1
    std_x = jnp.sqrt(var_x + 1e-4)
    std_y = jnp.sqrt(var_y + 1e-4)
    std_loss = (jnp.mean(jnp.maximum(1.0 - std_x, 0.0)) / 2.0
                + jnp.mean(jnp.maximum(1.0 - std_y, 0.0)) / 2.0)

    cov_x = jax.lax.dot_general(xc, xc, (((0,), (0,)), ((), ())),
                                preferred_element_type=jnp.float32) * inv_nm1
    cov_y = jax.lax.dot_general(yc, yc, (((0,), (0,)), ((), ())),
                                preferred_element_type=jnp.float32) * inv_nm1
    # off-diagonal(cov)^2 sum = sum(cov^2) - sum(diag^2);  diag(cov) == var
    off_x = jnp.sum(cov_x * cov_x) - jnp.sum(var_x * var_x)
    off_y = jnp.sum(cov_y * cov_y) - jnp.sum(var_y * var_y)
    cov_loss = off_x / NUM_FEATURES + off_y / NUM_FEATURES

    loss_ref[0, 0] = (SIM_COEFF * repr_loss + STD_COEFF * std_loss
                      + COV_COEFF * cov_loss)


# ----------------------------- wrapper / glue ---------------------------------
def _packed_attention_constants():
    # Per-head feature mask (PACKED, EMBED_DIM): row h*NROWS+j keeps only head
    # h's 16 feature columns.  Also serves as the denominator-broadcast matrix.
    row_head = (jnp.arange(PACKED) // NROWS)[:, None]
    col_head = (jnp.arange(EMBED_DIM) // HEAD_DIM)[None, :]
    hmask = (row_head == col_head).astype(jnp.float32)
    # Packed block-diagonal additive bias (NROWS, PACKED): token rows only
    # attend within their own sample (keeps the two views independent).
    r_sample = (jnp.arange(NROWS) % B2)[:, None]
    c_sample = (jnp.arange(PACKED) % B2)[None, :]          # (h*NROWS+j) % B2 == j % B2
    attn_bias = jnp.where(r_sample == c_sample, 0.0, -1e30).astype(jnp.float32)
    return attn_bias, hmask


def vicreg_forward(x_img, y_img, params):
    bb = params["backbone"]
    pj = params["projector"]
    bf16 = jnp.bfloat16

    imgs = jnp.concatenate([x_img, y_img], axis=0)          # (B2, C, H, W)
    # unfold into patches; rows token-major (row = t*B2 + b), cols (c, ph, pw)
    patches = (imgs.reshape(B2, C, GH, PATCH, GW, PATCH)
                   .transpose(2, 4, 0, 1, 3, 5)
                   .reshape(NROWS, C * PATCH * PATCH)).astype(bf16)
    # patch-embed bias + positional embedding, pre-tiled to token-major rows
    posb = jnp.repeat(bb["patch_b"] + bb["pos_embed"][0], B2, axis=0)  # (NROWS, D)
    attn_bias, hmask = _packed_attention_constants()

    inputs = (
        patches, bb["patch_w"].astype(bf16), posb, attn_bias, hmask,
        bb["ln1_g"], bb["ln1_b"],
        bb["wq"].astype(bf16), bb["bq"],
        bb["wk"].astype(bf16), bb["bk"],
        bb["wv"].astype(bf16), bb["bv"],
        bb["proj_w"].astype(bf16), bb["proj_b"],
        bb["ln2_g"], bb["ln2_b"],
        bb["fc1_w"].astype(bf16), bb["fc1_b"],
        bb["fc2_w"].astype(bf16), bb["fc2_b"],
        bb["norm_g"], bb["norm_b"],
        pj["w1"].astype(bf16), pj["b1"], pj["g1"], pj["be1"],
        pj["w2"].astype(bf16), pj["b2"], pj["g2"], pj["be2"],
        pj["w3"].astype(bf16),
    )

    loss = pl.pallas_call(
        _vicreg_fused_kernel,
        out_shape=jax.ShapeDtypeStruct((1, 1), jnp.float32),
        in_specs=[pl.BlockSpec(memory_space=pltpu.MemorySpace.VMEM)] * len(inputs),
        out_specs=pl.BlockSpec(memory_space=pltpu.MemorySpace.SMEM),
    )(*inputs)
    return loss[0, 0]


# ----------------------------- parameter init ---------------------------------
def init_params(key):
    keys = iter(jax.random.split(key, 64))

    def nrm(shape, scale=0.02):
        return (scale * jax.random.normal(next(keys), shape)).astype(jnp.float32)

    def zeros(shape):
        return jnp.zeros(shape, jnp.float32)

    def ones(shape):
        return jnp.ones(shape, jnp.float32)

    backbone = dict(
        patch_w=nrm((C * PATCH * PATCH, EMBED_DIM)),
        patch_b=zeros((1, EMBED_DIM)),
        pos_embed=nrm((1, T, EMBED_DIM)),
        # per-block params stacked along a leading depth axis; Q/K/V pre-split
        # so the kernel never slices a fused 192-lane qkv tensor.
        ln1_g=ones((DEPTH, 1, EMBED_DIM)), ln1_b=zeros((DEPTH, 1, EMBED_DIM)),
        wq=nrm((DEPTH, EMBED_DIM, EMBED_DIM)), bq=zeros((DEPTH, 1, EMBED_DIM)),
        wk=nrm((DEPTH, EMBED_DIM, EMBED_DIM)), bk=zeros((DEPTH, 1, EMBED_DIM)),
        wv=nrm((DEPTH, EMBED_DIM, EMBED_DIM)), bv=zeros((DEPTH, 1, EMBED_DIM)),
        proj_w=nrm((DEPTH, EMBED_DIM, EMBED_DIM)),
        proj_b=zeros((DEPTH, 1, EMBED_DIM)),
        ln2_g=ones((DEPTH, 1, EMBED_DIM)), ln2_b=zeros((DEPTH, 1, EMBED_DIM)),
        fc1_w=nrm((DEPTH, EMBED_DIM, MLP_HIDDEN)),
        fc1_b=zeros((DEPTH, 1, MLP_HIDDEN)),
        fc2_w=nrm((DEPTH, MLP_HIDDEN, EMBED_DIM)),
        fc2_b=zeros((DEPTH, 1, EMBED_DIM)),
        norm_g=ones((1, EMBED_DIM)), norm_b=zeros((1, EMBED_DIM)),
    )

    d0, d1, d2, d3 = PROJ_DIMS
    projector = dict(
        w1=nrm((d0, d1)), b1=zeros((1, d1)), g1=ones((1, d1)), be1=zeros((1, d1)),
        w2=nrm((d1, d2)), b2=zeros((1, d2)), g2=ones((1, d2)), be2=zeros((1, d2)),
        w3=nrm((d2, d3)),
    )
    return dict(backbone=backbone, projector=projector)


# ----------------------------------- main --------------------------------------
if __name__ == "__main__":
    key = jax.random.PRNGKey(0)
    k_params, k_x, k_y = jax.random.split(key, 3)
    params = init_params(k_params)

    x_img = jax.random.normal(k_x, (BATCH, C, H, W), jnp.float32)
    y_img = jax.random.normal(k_y, (BATCH, C, H, W), jnp.float32)

    loss = jax.jit(vicreg_forward)(x_img, y_img, params)
    loss = jax.block_until_ready(loss)
    assert loss.shape == () and bool(jnp.isfinite(loss))
    print("KERNEL_OK")
</pallas_src>

<mosaic_0001>
module attributes {stable_mosaic.version = 11 : i64} {
  func.func @_vicreg_fused_kernel(%arg0: memref<64x3072xbf16, #tpu.memory_space<vmem>>, %arg1: memref<3072x64xbf16, #tpu.memory_space<vmem>>, %arg2: memref<64x64xf32, #tpu.memory_space<vmem>>, %arg3: memref<64x256xf32, #tpu.memory_space<vmem>>, %arg4: memref<256x64xf32, #tpu.memory_space<vmem>>, %arg5: memref<2x1x64xf32, #tpu.memory_space<vmem>>, %arg6: memref<2x1x64xf32, #tpu.memory_space<vmem>>, %arg7: memref<2x64x64xbf16, #tpu.memory_space<vmem>>, %arg8: memref<2x1x64xf32, #tpu.memory_space<vmem>>, %arg9: memref<2x64x64xbf16, #tpu.memory_space<vmem>>, %arg10: memref<2x1x64xf32, #tpu.memory_space<vmem>>, %arg11: memref<2x64x64xbf16, #tpu.memory_space<vmem>>, %arg12: memref<2x1x64xf32, #tpu.memory_space<vmem>>, %arg13: memref<2x64x64xbf16, #tpu.memory_space<vmem>>, %arg14: memref<2x1x64xf32, #tpu.memory_space<vmem>>, %arg15: memref<2x1x64xf32, #tpu.memory_space<vmem>>, %arg16: memref<2x1x64xf32, #tpu.memory_space<vmem>>, %arg17: memref<2x64x256xbf16, #tpu.memory_space<vmem>>, %arg18: memref<2x1x256xf32, #tpu.memory_space<vmem>>, %arg19: memref<2x256x64xbf16, #tpu.memory_space<vmem>>, %arg20: memref<2x1x64xf32, #tpu.memory_space<vmem>>, %arg21: memref<1x64xf32, #tpu.memory_space<vmem>>, %arg22: memref<1x64xf32, #tpu.memory_space<vmem>>, %arg23: memref<256x128xbf16, #tpu.memory_space<vmem>>, %arg24: memref<1x128xf32, #tpu.memory_space<vmem>>, %arg25: memref<1x128xf32, #tpu.memory_space<vmem>>, %arg26: memref<1x128xf32, #tpu.memory_space<vmem>>, %arg27: memref<128x128xbf16, #tpu.memory_space<vmem>>, %arg28: memref<1x128xf32, #tpu.memory_space<vmem>>, %arg29: memref<1x128xf32, #tpu.memory_space<vmem>>, %arg30: memref<1x128xf32, #tpu.memory_space<vmem>>, %arg31: memref<128x64xbf16, #tpu.memory_space<vmem>>, %arg32: memref<1x1xf32, #tpu.memory_space<smem>>) attributes {dimension_semantics = [], scalar_prefetch = 0 : i64, scratch_operands = 0 : i64, tpu.core_type = #tpu.core_type<tc>} {
    %c0 = arith.constant 0 : index
    %c0_0 = arith.constant 0 : index
    %0 = vector.load %arg0[%c0, %c0_0] : memref<64x3072xbf16, #tpu.memory_space<vmem>>, vector<64x3072xbf16>
    %c0_1 = arith.constant 0 : index
    %c0_2 = arith.constant 0 : index
    %1 = vector.load %arg1[%c0_1, %c0_2] : memref<3072x64xbf16, #tpu.memory_space<vmem>>, vector<3072x64xbf16>
    %cst = arith.constant dense<0.000000e+00> : vector<64x64xf32>
    %2 = tpu.matmul %0, %1, %cst {dimension_numbers = #tpu.dot_dimension_numbers<[1], [0], [0], [1], [0, 0, 1, 1], [], []>} : vector<64x3072xbf16>, vector<3072x64xbf16>, vector<64x64xf32> -> vector<64x64xf32>
    %c0_3 = arith.constant 0 : index
    %c0_4 = arith.constant 0 : index
    %3 = vector.load %arg2[%c0_3, %c0_4] : memref<64x64xf32, #tpu.memory_space<vmem>>, vector<64x64xf32>
    %4 = arith.addf %2, %3 : vector<64x64xf32>
    %c0_5 = arith.constant 0 : index
    %c0_6 = arith.constant 0 : index
    %5 = vector.load %arg3[%c0_5, %c0_6] : memref<64x256xf32, #tpu.memory_space<vmem>>, vector<64x256xf32>
    %c0_7 = arith.constant 0 : index
    %c0_8 = arith.constant 0 : index
    %6 = vector.load %arg4[%c0_7, %c0_8] : memref<256x64xf32, #tpu.memory_space<vmem>>, vector<256x64xf32>
    %c0_9 = arith.constant 0 : index
    %c0_10 = arith.constant 0 : index
    %c0_11 = arith.constant 0 : index
    %7 = vector.load %arg5[%c0_9, %c0_10, %c0_11] : memref<2x1x64xf32, #tpu.memory_space<vmem>>, vector<1x1x64xf32>
    %8 = vector.shape_cast %7 : vector<1x1x64xf32> to vector<1x64xf32>
    %c0_12 = arith.constant 0 : index
    %c0_13 = arith.constant 0 : index
    %c0_14 = arith.constant 0 : index
    %9 = vector.load %arg6[%c0_12, %c0_13, %c0_14] : memref<2x1x64xf32, #tpu.memory_space<vmem>>, vector<1x1x64xf32>
    %10 = vector.shape_cast %9 : vector<1x1x64xf32> to vector<1x64xf32>
    %cst_15 = arith.constant dense<0.000000e+00> : vector<64xf32>
    %11 = vector.multi_reduction <add>, %4, %cst_15 [1] : vector<64x64xf32> to vector<64xf32>
    %12 = vector.shape_cast %11 : vector<64xf32> to vector<64x1xf32>
    %cst_16 = arith.constant 6.400000e+01 : f32
    %13 = vector.broadcast %cst_16 : f32 to vector<64x1xf32>
    %14 = arith.divf %12, %13 : vector<64x1xf32>
    %15 = vector.broadcast %14 : vector<64x1xf32> to vector<64x64xf32>
    %16 = arith.subf %4, %15 : vector<64x64xf32>
    %17 = arith.mulf %16, %16 : vector<64x64xf32>
    %cst_17 = arith.constant dense<0.000000e+00> : vector<64xf32>
    %18 = vector.multi_reduction <add>, %17, %cst_17 [1] : vector<64x64xf32> to vector<64xf32>
    %19 = vector.shape_cast %18 : vector<64xf32> to vector<64x1xf32>
    %cst_18 = arith.constant 6.400000e+01 : f32
    %20 = vector.broadcast %cst_18 : f32 to vector<64x1xf32>
    %21 = arith.divf %19, %20 : vector<64x1xf32>
    %22 = vector.broadcast %14 : vector<64x1xf32> to vector<64x64xf32>
    %23 = arith.subf %4, %22 : vector<64x64xf32>
    %cst_19 = arith.constant 9.99999997E-7 : f32
    %24 = vector.broadcast %cst_19 : f32 to vector<64x1xf32>
    %25 = arith.addf %21, %24 : vector<64x1xf32>
    %26 = math.rsqrt %25 : vector<64x1xf32>
    %27 = vector.broadcast %26 : vector<64x1xf32> to vector<64x64xf32>
    %28 = arith.mulf %23, %27 : vector<64x64xf32>
    %29 = vector.broadcast %8 : vector<1x64xf32> to vector<64x64xf32>
    %30 = arith.mulf %28, %29 : vector<64x64xf32>
    %31 = vector.broadcast %10 : vector<1x64xf32> to vector<64x64xf32>
    %32 = arith.addf %30, %31 : vector<64x64xf32>
    %c0_20 = arith.constant 0 : index
    %c0_21 = arith.constant 0 : index
    %c0_22 = arith.constant 0 : index
    %33 = vector.load %arg7[%c0_20, %c0_21, %c0_22] : memref<2x64x64xbf16, #tpu.memory_space<vmem>>, vector<1x64x64xbf16>
    %34 = vector.shape_cast %33 : vector<1x64x64xbf16> to vector<64x64xbf16>
    %35 = arith.truncf %32 : vector<64x64xf32> to vector<64x64xbf16>
    %cst_23 = arith.constant dense<0.000000e+00> : vector<64x64xf32>
    %36 = tpu.matmul %35, %34, %cst_23 {dimension_numbers = #tpu.dot_dimension_numbers<[1], [0], [0], [1], [0, 0, 1, 1], [], []>} : vector<64x64xbf16>, vector<64x64xbf16>, vector<64x64xf32> -> vector<64x64xf32>
    %c0_24 = arith.constant 0 : index
    %c0_25 = arith.constant 0 : index
    %c0_26 = arith.constant 0 : index
    %37 = vector.load %arg8[%c0_24, %c0_25, %c0_26] : memref<2x1x64xf32, #tpu.memory_space<vmem>>, vector<1x1x64xf32>
    %38 = vector.shape_cast %37 : vector<1x1x64xf32> to vector<1x64xf32>
    %39 = vector.broadcast %38 : vector<1x64xf32> to vector<64x64xf32>
    %40 = arith.addf %36, %39 : vector<64x64xf32>
    %c0_27 = arith.constant 0 : index
    %c0_28 = arith.constant 0 : index
    %c0_29 = arith.constant 0 : index
    %41 = vector.load %arg9[%c0_27, %c0_28, %c0_29] : memref<2x64x64xbf16, #tpu.memory_space<vmem>>, vector<1x64x64xbf16>
    %42 = vector.shape_cast %41 : vector<1x64x64xbf16> to vector<64x64xbf16>
    %43 = arith.truncf %32 : vector<64x64xf32> to vector<64x64xbf16>
    %cst_30 = arith.constant dense<0.000000e+00> : vector<64x64xf32>
    %44 = tpu.matmul %43, %42, %cst_30 {dimension_numbers = #tpu.dot_dimension_numbers<[1], [0], [0], [1], [0, 0, 1, 1], [], []>} : vector<64x64xbf16>, vector<64x64xbf16>, vector<64x64xf32> -> vector<64x64xf32>
    %c0_31 = arith.constant 0 : index
    %c0_32 = arith.constant 0 : index
    %c0_33 = arith.constant 0 : index
    %45 = vector.load %arg10[%c0_31, %c0_32, %c0_33] : memref<2x1x64xf32, #tpu.memory_space<vmem>>, vector<1x1x64xf32>
    %46 = vector.shape_cast %45 : vector<1x1x64xf32> to vector<1x64xf32>
    %47 = vector.broadcast %46 : vector<1x64xf32> to vector<64x64xf32>
    %48 = arith.addf %44, %47 : vector<64x64xf32>
    %c0_34 = arith.constant 0 : index
    %c0_35 = arith.constant 0 : index
    %c0_36 = arith.constant 0 : index
    %49 = vector.load %arg11[%c0_34, %c0_35, %c0_36] : memref<2x64x64xbf16, #tpu.memory_space<vmem>>, vector<1x64x64xbf16>
    %50 = vector.shape_cast %49 : vector<1x64x64xbf16> to vector<64x64xbf16>
    %51 = arith.truncf %32 : vector<64x64xf32> to vector<64x64xbf16>
    %cst_37 = arith.constant dense<0.000000e+00> : vector<64x64xf32>
    %52 = tpu.matmul %51, %50, %cst_37 {dimension_numbers = #tpu.dot_dimension_numbers<[1], [0], [0], [1], [0, 0, 1, 1], [], []>} : vector<64x64xbf16>, vector<64x64xbf16>, vector<64x64xf32> -> vector<64x64xf32>
    %c0_38 = arith.constant 0 : index
    %c0_39 = arith.constant 0 : index
    %c0_40 = arith.constant 0 : index
    %53 = vector.load %arg12[%c0_38, %c0_39, %c0_40] : memref<2x1x64xf32, #tpu.memory_space<vmem>>, vector<1x1x64xf32>
    %54 = vector.shape_cast %53 : vector<1x1x64xf32> to vector<1x64xf32>
    %55 = vector.broadcast %54 : vector<1x64xf32> to vector<64x64xf32>
    %56 = arith.addf %52, %55 : vector<64x64xf32>
    %57 = tpu.concatenate %48, %48, %48, %48 in 0 : vector<64x64xf32>, vector<64x64xf32>, vector<64x64xf32>, vector<64x64xf32> -> vector<256x64xf32>
    %58 = arith.mulf %57, %6 : vector<256x64xf32>
    %59 = tpu.concatenate %56, %56, %56, %56 in 0 : vector<64x64xf32>, vector<64x64xf32>, vector<64x64xf32>, vector<64x64xf32> -> vector<256x64xf32>
    %60 = arith.mulf %59, %6 : vector<256x64xf32>
    %cst_41 = arith.constant dense<0.000000e+00> : vector<64x256xf32>
    %61 = tpu.matmul %40, %58, %cst_41 {dimension_numbers = #tpu.dot_dimension_numbers<[1], [1], [0], [0], [0, 0, 1, 0], [], []>} : vector<64x64xf32>, vector<256x64xf32>, vector<64x256xf32> -> vector<64x256xf32>
    %cst_42 = arith.constant 2.500000e-01 : f32
    %62 = vector.broadcast %cst_42 : f32 to vector<64x256xf32>
    %63 = arith.mulf %61, %62 : vector<64x256xf32>
    %64 = arith.addf %63, %5 : vector<64x256xf32>
    %cst_43 = arith.constant dense<0xFF800000> : vector<64xf32>
    %65 = vector.multi_reduction <maximumf>, %64, %cst_43 [1] : vector<64x256xf32> to vector<64xf32>
    %66 = vector.shape_cast %65 : vector<64xf32> to vector<64x1xf32>
    %67 = vector.broadcast %66 : vector<64x1xf32> to vector<64x256xf32>
    %68 = arith.subf %64, %67 : vector<64x256xf32>
    %69 = math.exp %68 : vector<64x256xf32>
    %cst_44 = arith.constant dense<0.000000e+00> : vector<64x64xf32>
    %70 = tpu.matmul %69, %60, %cst_44 {dimension_numbers = #tpu.dot_dimension_numbers<[1], [0], [0], [1], [0, 0, 1, 1], [], []>} : vector<64x256xf32>, vector<256x64xf32>, vector<64x64xf32> -> vector<64x64xf32>
    %cst_45 = arith.constant dense<0.000000e+00> : vector<64x64xf32>
    %71 = tpu.matmul %69, %6, %cst_45 {dimension_numbers = #tpu.dot_dimension_numbers<[1], [0], [0], [1], [0, 0, 1, 1], [], []>} : vector<64x256xf32>, vector<256x64xf32>, vector<64x64xf32> -> vector<64x64xf32>
    %72 = tpu.reciprocal %71 {approx = true} : vector<64x64xf32> -> vector<64x64xf32>
    %73 = arith.mulf %70, %72 : vector<64x64xf32>
    %c0_46 = arith.constant 0 : index
    %c0_47 = arith.constant 0 : index
    %c0_48 = arith.constant 0 : index
    %74 = vector.load %arg13[%c0_46, %c0_47, %c0_48] : memref<2x64x64xbf16, #tpu.memory_space<vmem>>, vector<1x64x64xbf16>
    %75 = vector.shape_cast %74 : vector<1x64x64xbf16> to vector<64x64xbf16>
    %76 = arith.truncf %73 : vector<64x64xf32> to vector<64x64xbf16>
    %cst_49 = arith.constant dense<0.000000e+00> : vector<64x64xf32>
    %77 = tpu.matmul %76, %75, %cst_49 {dimension_numbers = #tpu.dot_dimension_numbers<[1], [0], [0], [1], [0, 0, 1, 1], [], []>} : vector<64x64xbf16>, vector<64x64xbf16>, vector<64x64xf32> -> vector<64x64xf32>
    %c0_50 = arith.constant 0 : index
    %c0_51 = arith.constant 0 : index
    %c0_52 = arith.constant 0 : index
    %78 = vector.load %arg14[%c0_50, %c0_51, %c0_52] : memref<2x1x64xf32, #tpu.memory_space<vmem>>, vector<1x1x64xf32>
    %79 = vector.shape_cast %78 : vector<1x1x64xf32> to vector<1x64xf32>
    %80 = vector.broadcast %79 : vector<1x64xf32> to vector<64x64xf32>
    %81 = arith.addf %77, %80 : vector<64x64xf32>
    %82 = arith.addf %4, %81 : vector<64x64xf32>
    %c0_53 = arith.constant 0 : index
    %c0_54 = arith.constant 0 : index
    %c0_55 = arith.constant 0 : index
    %83 = vector.load %arg15[%c0_53, %c0_54, %c0_55] : memref<2x1x64xf32, #tpu.memory_space<vmem>>, vector<1x1x64xf32>
    %84 = vector.shape_cast %83 : vector<1x1x64xf32> to vector<1x64xf32>
    %c0_56 = arith.constant 0 : index
    %c0_57 = arith.constant 0 : index
    %c0_58 = arith.constant 0 : index
    %85 = vector.load %arg16[%c0_56, %c0_57, %c0_58] : memref<2x1x64xf32, #tpu.memory_space<vmem>>, vector<1x1x64xf32>
    %86 = vector.shape_cast %85 : vector<1x1x64xf32> to vector<1x64xf32>
    %cst_59 = arith.constant dense<0.000000e+00> : vector<64xf32>
    %87 = vector.multi_reduction <add>, %82, %cst_59 [1] : vector<64x64xf32> to vector<64xf32>
    %88 = vector.shape_cast %87 : vector<64xf32> to vector<64x1xf32>
    %cst_60 = arith.constant 6.400000e+01 : f32
    %89 = vector.broadcast %cst_60 : f32 to vector<64x1xf32>
    %90 = arith.divf %88, %89 : vector<64x1xf32>
    %91 = vector.broadcast %90 : vector<64x1xf32> to vector<64x64xf32>
    %92 = arith.subf %82, %91 : vector<64x64xf32>
    %93 = arith.mulf %92, %92 : vector<64x64xf32>
    %cst_61 = arith.constant dense<0.000000e+00> : vector<64xf32>
    %94 = vector.multi_reduction <add>, %93, %cst_61 [1] : vector<64x64xf32> to vector<64xf32>
    %95 = vector.shape_cast %94 : vector<64xf32> to vector<64x1xf32>
    %cst_62 = arith.constant 6.400000e+01 : f32
    %96 = vector.broadcast %cst_62 : f32 to vector<64x1xf32>
    %97 = arith.divf %95, %96 : vector<64x1xf32>
    %98 = vector.broadcast %90 : vector<64x1xf32> to vector<64x64xf32>
    %99 = arith.subf %82, %98 : vector<64x64xf32>
    %cst_63 = arith.constant 9.99999997E-7 : f32
    %100 = vector.broadcast %cst_63 : f32 to vector<64x1xf32>
    %101 = arith.addf %97, %100 : vector<64x1xf32>
    %102 = math.rsqrt %101 : vector<64x1xf32>
    %103 = vector.broadcast %102 : vector<64x1xf32> to vector<64x64xf32>
    %104 = arith.mulf %99, %103 : vector<64x64xf32>
    %105 = vector.broadcast %84 : vector<1x64xf32> to vector<64x64xf32>
    %106 = arith.mulf %104, %105 : vector<64x64xf32>
    %107 = vector.broadcast %86 : vector<1x64xf32> to vector<64x64xf32>
    %108 = arith.addf %106, %107 : vector<64x64xf32>
    %c0_64 = arith.constant 0 : index
    %c0_65 = arith.constant 0 : index
    %c0_66 = arith.constant 0 : index
    %109 = vector.load %arg17[%c0_64, %c0_65, %c0_66] : memref<2x64x256xbf16, #tpu.memory_space<vmem>>, vector<1x64x256xbf16>
    %110 = vector.shape_cast %109 : vector<1x64x256xbf16> to vector<64x256xbf16>
    %111 = arith.truncf %108 : vector<64x64xf32> to vector<64x64xbf16>
    %cst_67 = arith.constant dense<0.000000e+00> : vector<64x256xf32>
    %112 = tpu.matmul %111, %110, %cst_67 {dimension_numbers = #tpu.dot_dimension_numbers<[1], [0], [0], [1], [0, 0, 1, 1], [], []>} : vector<64x64xbf16>, vector<64x256xbf16>, vector<64x256xf32> -> vector<64x256xf32>
    %c0_68 = arith.constant 0 : index
    %c0_69 = arith.constant 0 : index
    %c0_70 = arith.constant 0 : index
    %113 = vector.load %arg18[%c0_68, %c0_69, %c0_70] : memref<2x1x256xf32, #tpu.memory_space<vmem>>, vector<1x1x256xf32>
    %114 = vector.shape_cast %113 : vector<1x1x256xf32> to vector<1x256xf32>
    %115 = vector.broadcast %114 : vector<1x256xf32> to vector<64x256xf32>
    %116 = arith.addf %112, %115 : vector<64x256xf32>
    %cst_71 = arith.constant 5.000000e-01 : f32
    %117 = vector.broadcast %cst_71 : f32 to vector<64x256xf32>
    %118 = arith.mulf %117, %116 : vector<64x256xf32>
    %cst_72 = arith.constant 0.707106769 : f32
    %119 = vector.broadcast %cst_72 : f32 to vector<64x256xf32>
    %120 = arith.mulf %116, %119 : vector<64x256xf32>
    %121 = math.absf %120 : vector<64x256xf32>
    %cst_73 = arith.constant 0.327591091 : f32
    %122 = vector.broadcast %cst_73 : f32 to vector<64x256xf32>
    %123 = arith.mulf %122, %121 : vector<64x256xf32>
    %cst_74 = arith.constant 1.000000e+00 : f32
    %124 = vector.broadcast %cst_74 : f32 to vector<64x256xf32>
    %125 = arith.addf %124, %123 : vector<64x256xf32>
    %126 = tpu.reciprocal %125 {approx = true} : vector<64x256xf32> -> vector<64x256xf32>
    %cst_75 = arith.constant 1.06140542 : f32
    %127 = vector.broadcast %cst_75 : f32 to vector<64x256xf32>
    %128 = arith.mulf %127, %126 : vector<64x256xf32>
    %cst_76 = arith.constant -1.45315206 : f32
    %129 = vector.broadcast %cst_76 : f32 to vector<64x256xf32>
    %130 = arith.addf %128, %129 : vector<64x256xf32>
    %131 = arith.mulf %130, %126 : vector<64x256xf32>
    %cst_77 = arith.constant 1.42141378 : f32
    %132 = vector.broadcast %cst_77 : f32 to vector<64x256xf32>
    %133 = arith.addf %131, %132 : vector<64x256xf32>
    %134 = arith.mulf %133, %126 : vector<64x256xf32>
    %cst_78 = arith.constant -0.284496725 : f32
    %135 = vector.broadcast %cst_78 : f32 to vector<64x256xf32>
    %136 = arith.addf %134, %135 : vector<64x256xf32>
    %137 = arith.mulf %136, %126 : vector<64x256xf32>
    %cst_79 = arith.constant 0.254829586 : f32
    %138 = vector.broadcast %cst_79 : f32 to vector<64x256xf32>
    %139 = arith.addf %137, %138 : vector<64x256xf32>
    %140 = arith.mulf %139, %126 : vector<64x256xf32>
    %141 = arith.mulf %121, %121 : vector<64x256xf32>
    %cst_80 = arith.constant 0.000000e+00 : f32
    %142 = vector.broadcast %cst_80 : f32 to vector<64x256xf32>
    %143 = arith.subf %142, %141 : vector<64x256xf32>
    %144 = math.exp %143 : vector<64x256xf32>
    %145 = arith.mulf %140, %144 : vector<64x256xf32>
    %cst_81 = arith.constant 1.000000e+00 : f32
    %146 = vector.broadcast %cst_81 : f32 to vector<64x256xf32>
    %147 = arith.subf %146, %145 : vector<64x256xf32>
    %cst_82 = arith.constant 0.000000e+00 : f32
    %148 = vector.broadcast %cst_82 : f32 to vector<64x256xf32>
    %149 = arith.cmpf oge, %120, %148 : vector<64x256xf32>
    %cst_83 = arith.constant 0.000000e+00 : f32
    %150 = vector.broadcast %cst_83 : f32 to vector<64x256xf32>
    %151 = arith.subf %150, %147 : vector<64x256xf32>
    %152 = arith.select %149, %147, %151 : vector<64x256xi1>, vector<64x256xf32>
    %cst_84 = arith.constant 1.000000e+00 : f32
    %153 = vector.broadcast %cst_84 : f32 to vector<64x256xf32>
    %154 = arith.addf %153, %152 : vector<64x256xf32>
    %155 = arith.mulf %118, %154 : vector<64x256xf32>
    %c0_85 = arith.constant 0 : index
    %c0_86 = arith.constant 0 : index
    %c0_87 = arith.constant 0 : index
    %156 = vector.load %arg19[%c0_85, %c0_86, %c0_87] : memref<2x256x64xbf16, #tpu.memory_space<vmem>>, vector<1x256x64xbf16>
    %157 = vector.shape_cast %156 : vector<1x256x64xbf16> to vector<256x64xbf16>
    %158 = arith.truncf %155 : vector<64x256xf32> to vector<64x256xbf16>
    %cst_88 = arith.constant dense<0.000000e+00> : vector<64x64xf32>
    %159 = tpu.matmul %158, %157, %cst_88 {dimension_numbers = #tpu.dot_dimension_numbers<[1], [0], [0], [1], [0, 0, 1, 1], [], []>} : vector<64x256xbf16>, vector<256x64xbf16>, vector<64x64xf32> -> vector<64x64xf32>
    %c0_89 = arith.constant 0 : index
    %c0_90 = arith.constant 0 : index
    %c0_91 = arith.constant 0 : index
    %160 = vector.load %arg20[%c0_89, %c0_90, %c0_91] : memref<2x1x64xf32, #tpu.memory_space<vmem>>, vector<1x1x64xf32>
    %161 = vector.shape_cast %160 : vector<1x1x64xf32> to vector<1x64xf32>
    %162 = vector.broadcast %161 : vector<1x64xf32> to vector<64x64xf32>
    %163 = arith.addf %159, %162 : vector<64x64xf32>
    %164 = arith.addf %82, %163 : vector<64x64xf32>
    %c1 = arith.constant 1 : index
    %c0_92 = arith.constant 0 : index
    %c0_93 = arith.constant 0 : index
    %165 = vector.load %arg5[%c1, %c0_92, %c0_93] : memref<2x1x64xf32, #tpu.memory_space<vmem>>, vector<1x1x64xf32>
    %166 = vector.shape_cast %165 : vector<1x1x64xf32> to vector<1x64xf32>
    %c1_94 = arith.constant 1 : index
    %c0_95 = arith.constant 0 : index
    %c0_96 = arith.constant 0 : index
    %167 = vector.load %arg6[%c1_94, %c0_95, %c0_96] : memref<2x1x64xf32, #tpu.memory_space<vmem>>, vector<1x1x64xf32>
    %168 = vector.shape_cast %167 : vector<1x1x64xf32> to vector<1x64xf32>
    %cst_97 = arith.constant dense<0.000000e+00> : vector<64xf32>
    %169 = vector.multi_reduction <add>, %164, %cst_97 [1] : vector<64x64xf32> to vector<64xf32>
    %170 = vector.shape_cast %169 : vector<64xf32> to vector<64x1xf32>
    %cst_98 = arith.constant 6.400000e+01 : f32
    %171 = vector.broadcast %cst_98 : f32 to vector<64x1xf32>
    %172 = arith.divf %170, %171 : vector<64x1xf32>
    %173 = vector.broadcast %172 : vector<64x1xf32> to vector<64x64xf32>
    %174 = arith.subf %164, %173 : vector<64x64xf32>
    %175 = arith.mulf %174, %174 : vector<64x64xf32>
    %cst_99 = arith.constant dense<0.000000e+00> : vector<64xf32>
    %176 = vector.multi_reduction <add>, %175, %cst_99 [1] : vector<64x64xf32> to vector<64xf32>
    %177 = vector.shape_cast %176 : vector<64xf32> to vector<64x1xf32>
    %cst_100 = arith.constant 6.400000e+01 : f32
    %178 = vector.broadcast %cst_100 : f32 to vector<64x1xf32>
    %179 = arith.divf %177, %178 : vector<64x1xf32>
    %180 = vector.broadcast %172 : vector<64x1xf32> to vector<64x64xf32>
    %181 = arith.subf %164, %180 : vector<64x64xf32>
    %cst_101 = arith.constant 9.99999997E-7 : f32
    %182 = vector.broadcast %cst_101 : f32 to vector<64x1xf32>
    %183 = arith.addf %179, %182 : vector<64x1xf32>
    %184 = math.rsqrt %183 : vector<64x1xf32>
    %185 = vector.broadcast %184 : vector<64x1xf32> to vector<64x64xf32>
    %186 = arith.mulf %181, %185 : vector<64x64xf32>
    %187 = vector.broadcast %166 : vector<1x64xf32> to vector<64x64xf32>
    %188 = arith.mulf %186, %187 : vector<64x64xf32>
    %189 = vector.broadcast %168 : vector<1x64xf32> to vector<64x64xf32>
    %190 = arith.addf %188, %189 : vector<64x64xf32>
    %c1_102 = arith.constant 1 : index
    %c0_103 = arith.constant 0 : index
    %c0_104 = arith.constant 0 : index
    %191 = vector.load %arg7[%c1_102, %c0_103, %c0_104] : memref<2x64x64xbf16, #tpu.memory_space<vmem>>, vector<1x64x64xbf16>
    %192 = vector.shape_cast %191 : vector<1x64x64xbf16> to vector<64x64xbf16>
    %193 = arith.truncf %190 : vector<64x64xf32> to vector<64x64xbf16>
    %cst_105 = arith.constant dense<0.000000e+00> : vector<64x64xf32>
    %194 = tpu.matmul %193, %192, %cst_105 {dimension_numbers = #tpu.dot_dimension_numbers<[1], [0], [0], [1], [0, 0, 1, 1], [], []>} : vector<64x64xbf16>, vector<64x64xbf16>, vector<64x64xf32> -> vector<64x64xf32>
    %c1_106 = arith.constant 1 : index
    %c0_107 = arith.constant 0 : index
    %c0_108 = arith.constant 0 : index
    %195 = vector.load %arg8[%c1_106, %c0_107, %c0_108] : memref<2x1x64xf32, #tpu.memory_space<vmem>>, vector<1x1x64xf32>
    %196 = vector.shape_cast %195 : vector<1x1x64xf32> to vector<1x64xf32>
    %197 = vector.broadcast %196 : vector<1x64xf32> to vector<64x64xf32>
    %198 = arith.addf %194, %197 : vector<64x64xf32>
    %c1_109 = arith.constant 1 : index
    %c0_110 = arith.constant 0 : index
    %c0_111 = arith.constant 0 : index
    %199 = vector.load %arg9[%c1_109, %c0_110, %c0_111] : memref<2x64x64xbf16, #tpu.memory_space<vmem>>, vector<1x64x64xbf16>
    %200 = vector.shape_cast %199 : vector<1x64x64xbf16> to vector<64x64xbf16>
    %201 = arith.truncf %190 : vector<64x64xf32> to vector<64x64xbf16>
    %cst_112 = arith.constant dense<0.000000e+00> : vector<64x64xf32>
    %202 = tpu.matmul %201, %200, %cst_112 {dimension_numbers = #tpu.dot_dimension_numbers<[1], [0], [0], [1], [0, 0, 1, 1], [], []>} : vector<64x64xbf16>, vector<64x64xbf16>, vector<64x64xf32> -> vector<64x64xf32>
    %c1_113 = arith.constant 1 : index
    %c0_114 = arith.constant 0 : index
    %c0_115 = arith.constant 0 : index
    %203 = vector.load %arg10[%c1_113, %c0_114, %c0_115] : memref<2x1x64xf32, #tpu.memory_space<vmem>>, vector<1x1x64xf32>
    %204 = vector.shape_cast %203 : vector<1x1x64xf32> to vector<1x64xf32>
    %205 = vector.broadcast %204 : vector<1x64xf32> to vector<64x64xf32>
    %206 = arith.addf %202, %205 : vector<64x64xf32>
    %c1_116 = arith.constant 1 : index
    %c0_117 = arith.constant 0 : index
    %c0_118 = arith.constant 0 : index
    %207 = vector.load %arg11[%c1_116, %c0_117, %c0_118] : memref<2x64x64xbf16, #tpu.memory_space<vmem>>, vector<1x64x64xbf16>
    %208 = vector.shape_cast %207 : vector<1x64x64xbf16> to vector<64x64xbf16>
    %209 = arith.truncf %190 : vector<64x64xf32> to vector<64x64xbf16>
    %cst_119 = arith.constant dense<0.000000e+00> : vector<64x64xf32>
    %210 = tpu.matmul %209, %208, %cst_119 {dimension_numbers = #tpu.dot_dimension_numbers<[1], [0], [0], [1], [0, 0, 1, 1], [], []>} : vector<64x64xbf16>, vector<64x64xbf16>, vector<64x64xf32> -> vector<64x64xf32>
    %c1_120 = arith.constant 1 : index
    %c0_121 = arith.constant 0 : index
    %c0_122 = arith.constant 0 : index
    %211 = vector.load %arg12[%c1_120, %c0_121, %c0_122] : memref<2x1x64xf32, #tpu.memory_space<vmem>>, vector<1x1x64xf32>
    %212 = vector.shape_cast %211 : vector<1x1x64xf32> to vector<1x64xf32>
    %213 = vector.broadcast %212 : vector<1x64xf32> to vector<64x64xf32>
    %214 = arith.addf %210, %213 : vector<64x64xf32>
    %215 = tpu.concatenate %206, %206, %206, %206 in 0 : vector<64x64xf32>, vector<64x64xf32>, vector<64x64xf32>, vector<64x64xf32> -> vector<256x64xf32>
    %216 = arith.mulf %215, %6 : vector<256x64xf32>
    %217 = tpu.concatenate %214, %214, %214, %214 in 0 : vector<64x64xf32>, vector<64x64xf32>, vector<64x64xf32>, vector<64x64xf32> -> vector<256x64xf32>
    %218 = arith.mulf %217, %6 : vector<256x64xf32>
    %cst_123 = arith.constant dense<0.000000e+00> : vector<64x256xf32>
    %219 = tpu.matmul %198, %216, %cst_123 {dimension_numbers = #tpu.dot_dimension_numbers<[1], [1], [0], [0], [0, 0, 1, 0], [], []>} : vector<64x64xf32>, vector<256x64xf32>, vector<64x256xf32> -> vector<64x256xf32>
    %cst_124 = arith.constant 2.500000e-01 : f32
    %220 = vector.broadcast %cst_124 : f32 to vector<64x256xf32>
    %221 = arith.mulf %219, %220 : vector<64x256xf32>
    %222 = arith.addf %221, %5 : vector<64x256xf32>
    %cst_125 = arith.constant dense<0xFF800000> : vector<64xf32>
    %223 = vector.multi_reduction <maximumf>, %222, %cst_125 [1] : vector<64x256xf32> to vector<64xf32>
    %224 = vector.shape_cast %223 : vector<64xf32> to vector<64x1xf32>
    %225 = vector.broadcast %224 : vector<64x1xf32> to vector<64x256xf32>
    %226 = arith.subf %222, %225 : vector<64x256xf32>
    %227 = math.exp %226 : vector<64x256xf32>
    %cst_126 = arith.constant dense<0.000000e+00> : vector<64x64xf32>
    %228 = tpu.matmul %227, %218, %cst_126 {dimension_numbers = #tpu.dot_dimension_numbers<[1], [0], [0], [1], [0, 0, 1, 1], [], []>} : vector<64x256xf32>, vector<256x64xf32>, vector<64x64xf32> -> vector<64x64xf32>
    %cst_127 = arith.constant dense<0.000000e+00> : vector<64x64xf32>
    %229 = tpu.matmul %227, %6, %cst_127 {dimension_numbers = #tpu.dot_dimension_numbers<[1], [0], [0], [1], [0, 0, 1, 1], [], []>} : vector<64x256xf32>, vector<256x64xf32>, vector<64x64xf32> -> vector<64x64xf32>
    %230 = tpu.reciprocal %229 {approx = true} : vector<64x64xf32> -> vector<64x64xf32>
    %231 = arith.mulf %228, %230 : vector<64x64xf32>
    %c1_128 = arith.constant 1 : index
    %c0_129 = arith.constant 0 : index
    %c0_130 = arith.constant 0 : index
    %232 = vector.load %arg13[%c1_128, %c0_129, %c0_130] : memref<2x64x64xbf16, #tpu.memory_space<vmem>>, vector<1x64x64xbf16>
    %233 = vector.shape_cast %232 : vector<1x64x64xbf16> to vector<64x64xbf16>
    %234 = arith.truncf %231 : vector<64x64xf32> to vector<64x64xbf16>
    %cst_131 = arith.constant dense<0.000000e+00> : vector<64x64xf32>
    %235 = tpu.matmul %234, %233, %cst_131 {dimension_numbers = #tpu.dot_dimension_numbers<[1], [0], [0], [1], [0, 0, 1, 1], [], []>} : vector<64x64xbf16>, vector<64x64xbf16>, vector<64x64xf32> -> vector<64x64xf32>
    %c1_132 = arith.constant 1 : index
    %c0_133 = arith.constant 0 : index
    %c0_134 = arith.constant 0 : index
    %236 = vector.load %arg14[%c1_132, %c0_133, %c0_134] : memref<2x1x64xf32, #tpu.memory_space<vmem>>, vector<1x1x64xf32>
    %237 = vector.shape_cast %236 : vector<1x1x64xf32> to vector<1x64xf32>
    %238 = vector.broadcast %237 : vector<1x64xf32> to vector<64x64xf32>
    %239 = arith.addf %235, %238 : vector<64x64xf32>
    %240 = arith.addf %164, %239 : vector<64x64xf32>
    %c1_135 = arith.constant 1 : index
    %c0_136 = arith.constant 0 : index
    %c0_137 = arith.constant 0 : index
    %241 = vector.load %arg15[%c1_135, %c0_136, %c0_137] : memref<2x1x64xf32, #tpu.memory_space<vmem>>, vector<1x1x64xf32>
    %242 = vector.shape_cast %241 : vector<1x1x64xf32> to vector<1x64xf32>
    %c1_138 = arith.constant 1 : index
    %c0_139 = arith.constant 0 : index
    %c0_140 = arith.constant 0 : index
    %243 = vector.load %arg16[%c1_138, %c0_139, %c0_140] : memref<2x1x64xf32, #tpu.memory_space<vmem>>, vector<1x1x64xf32>
    %244 = vector.shape_cast %243 : vector<1x1x64xf32> to vector<1x64xf32>
    %cst_141 = arith.constant dense<0.000000e+00> : vector<64xf32>
    %245 = vector.multi_reduction <add>, %240, %cst_141 [1] : vector<64x64xf32> to vector<64xf32>
    %246 = vector.shape_cast %245 : vector<64xf32> to vector<64x1xf32>
    %cst_142 = arith.constant 6.400000e+01 : f32
    %247 = vector.broadcast %cst_142 : f32 to vector<64x1xf32>
    %248 = arith.divf %246, %247 : vector<64x1xf32>
    %249 = vector.broadcast %248 : vector<64x1xf32> to vector<64x64xf32>
    %250 = arith.subf %240, %249 : vector<64x64xf32>
    %251 = arith.mulf %250, %250 : vector<64x64xf32>
    %cst_143 = arith.constant dense<0.000000e+00> : vector<64xf32>
    %252 = vector.multi_reduction <add>, %251, %cst_143 [1] : vector<64x64xf32> to vector<64xf32>
    %253 = vector.shape_cast %252 : vector<64xf32> to vector<64x1xf32>
    %cst_144 = arith.constant 6.400000e+01 : f32
    %254 = vector.broadcast %cst_144 : f32 to vector<64x1xf32>
    %255 = arith.divf %253, %254 : vector<64x1xf32>
    %256 = vector.broadcast %248 : vector<64x1xf32> to vector<64x64xf32>
    %257 = arith.subf %240, %256 : vector<64x64xf32>
    %cst_145 = arith.constant 9.99999997E-7 : f32
    %258 = vector.broadcast %cst_145 : f32 to vector<64x1xf32>
    %259 = arith.addf %255, %258 : vector<64x1xf32>
    %260 = math.rsqrt %259 : vector<64x1xf32>
    %261 = vector.broadcast %260 : vector<64x1xf32> to vector<64x64xf32>
    %262 = arith.mulf %257, %261 : vector<64x64xf32>
    %263 = vector.broadcast %242 : vector<1x64xf32> to vector<64x64xf32>
    %264 = arith.mulf %262, %263 : vector<64x64xf32>
    %265 = vector.broadcast %244 : vector<1x64xf32> to vector<64x64xf32>
    %266 = arith.addf %264, %265 : vector<64x64xf32>
    %c1_146 = arith.constant 1 : index
    %c0_147 = arith.constant 0 : index
    %c0_148 = arith.constant 0 : index
    %267 = vector.load %arg17[%c1_146, %c0_147, %c0_148] : memref<2x64x256xbf16, #tpu.memory_space<vmem>>, vector<1x64x256xbf16>
    %268 = vector.shape_cast %267 : vector<1x64x256xbf16> to vector<64x256xbf16>
    %269 = arith.truncf %266 : vector<64x64xf32> to vector<64x64xbf16>
    %cst_149 = arith.constant dense<0.000000e+00> : vector<64x256xf32>
    %270 = tpu.matmul %269, %268, %cst_149 {dimension_numbers = #tpu.dot_dimension_numbers<[1], [0], [0], [1], [0, 0, 1, 1], [], []>} : vector<64x64xbf16>, vector<64x256xbf16>, vector<64x256xf32> -> vector<64x256xf32>
    %c1_150 = arith.constant 1 : index
    %c0_151 = arith.constant 0 : index
    %c0_152 = arith.constant 0 : index
    %271 = vector.load %arg18[%c1_150, %c0_151, %c0_152] : memref<2x1x256xf32, #tpu.memory_space<vmem>>, vector<1x1x256xf32>
    %272 = vector.shape_cast %271 : vector<1x1x256xf32> to vector<1x256xf32>
    %273 = vector.broadcast %272 : vector<1x256xf32> to vector<64x256xf32>
    %274 = arith.addf %270, %273 : vector<64x256xf32>
    %cst_153 = arith.constant 5.000000e-01 : f32
    %275 = vector.broadcast %cst_153 : f32 to vector<64x256xf32>
    %276 = arith.mulf %275, %274 : vector<64x256xf32>
    %cst_154 = arith.constant 0.707106769 : f32
    %277 = vector.broadcast %cst_154 : f32 to vector<64x256xf32>
    %278 = arith.mulf %274, %277 : vector<64x256xf32>
    %279 = math.absf %278 : vector<64x256xf32>
    %cst_155 = arith.constant 0.327591091 : f32
    %280 = vector.broadcast %cst_155 : f32 to vector<64x256xf32>
    %281 = arith.mulf %280, %279 : vector<64x256xf32>
    %cst_156 = arith.constant 1.000000e+00 : f32
    %282 = vector.broadcast %cst_156 : f32 to vector<64x256xf32>
    %283 = arith.addf %282, %281 : vector<64x256xf32>
    %284 = tpu.reciprocal %283 {approx = true} : vector<64x256xf32> -> vector<64x256xf32>
    %cst_157 = arith.constant 1.06140542 : f32
    %285 = vector.broadcast %cst_157 : f32 to vector<64x256xf32>
    %286 = arith.mulf %285, %284 : vector<64x256xf32>
    %cst_158 = arith.constant -1.45315206 : f32
    %287 = vector.broadcast %cst_158 : f32 to vector<64x256xf32>
    %288 = arith.addf %286, %287 : vector<64x256xf32>
    %289 = arith.mulf %288, %284 : vector<64x256xf32>
    %cst_159 = arith.constant 1.42141378 : f32
    %290 = vector.broadcast %cst_159 : f32 to vector<64x256xf32>
    %291 = arith.addf %289, %290 : vector<64x256xf32>
    %292 = arith.mulf %291, %284 : vector<64x256xf32>
    %cst_160 = arith.constant -0.284496725 : f32
    %293 = vector.broadcast %cst_160 : f32 to vector<64x256xf32>
    %294 = arith.addf %292, %293 : vector<64x256xf32>
    %295 = arith.mulf %294, %284 : vector<64x256xf32>
    %cst_161 = arith.constant 0.254829586 : f32
    %296 = vector.broadcast %cst_161 : f32 to vector<64x256xf32>
    %297 = arith.addf %295, %296 : vector<64x256xf32>
    %298 = arith.mulf %297, %284 : vector<64x256xf32>
    %299 = arith.mulf %279, %279 : vector<64x256xf32>
    %cst_162 = arith.constant 0.000000e+00 : f32
    %300 = vector.broadcast %cst_162 : f32 to vector<64x256xf32>
    %301 = arith.subf %300, %299 : vector<64x256xf32>
    %302 = math.exp %301 : vector<64x256xf32>
    %303 = arith.mulf %298, %302 : vector<64x256xf32>
    %cst_163 = arith.constant 1.000000e+00 : f32
    %304 = vector.broadcast %cst_163 : f32 to vector<64x256xf32>
    %305 = arith.subf %304, %303 : vector<64x256xf32>
    %cst_164 = arith.constant 0.000000e+00 : f32
    %306 = vector.broadcast %cst_164 : f32 to vector<64x256xf32>
    %307 = arith.cmpf oge, %278, %306 : vector<64x256xf32>
    %cst_165 = arith.constant 0.000000e+00 : f32
    %308 = vector.broadcast %cst_165 : f32 to vector<64x256xf32>
    %309 = arith.subf %308, %305 : vector<64x256xf32>
    %310 = arith.select %307, %305, %309 : vector<64x256xi1>, vector<64x256xf32>
    %cst_166 = arith.constant 1.000000e+00 : f32
    %311 = vector.broadcast %cst_166 : f32 to vector<64x256xf32>
    %312 = arith.addf %311, %310 : vector<64x256xf32>
    %313 = arith.mulf %276, %312 : vector<64x256xf32>
    %c1_167 = arith.constant 1 : index
    %c0_168 = arith.constant 0 : index
    %c0_169 = arith.constant 0 : index
    %314 = vector.load %arg19[%c1_167, %c0_168, %c0_169] : memref<2x256x64xbf16, #tpu.memory_space<vmem>>, vector<1x256x64xbf16>
    %315 = vector.shape_cast %314 : vector<1x256x64xbf16> to vector<256x64xbf16>
    %316 = arith.truncf %313 : vector<64x256xf32> to vector<64x256xbf16>
    %cst_170 = arith.constant dense<0.000000e+00> : vector<64x64xf32>
    %317 = tpu.matmul %316, %315, %cst_170 {dimension_numbers = #tpu.dot_dimension_numbers<[1], [0], [0], [1], [0, 0, 1, 1], [], []>} : vector<64x256xbf16>, vector<256x64xbf16>, vector<64x64xf32> -> vector<64x64xf32>
    %c1_171 = arith.constant 1 : index
    %c0_172 = arith.constant 0 : index
    %c0_173 = arith.constant 0 : index
    %318 = vector.load %arg20[%c1_171, %c0_172, %c0_173] : memref<2x1x64xf32, #tpu.memory_space<vmem>>, vector<1x1x64xf32>
    %319 = vector.shape_cast %318 : vector<1x1x64xf32> to vector<1x64xf32>
    %320 = vector.broadcast %319 : vector<1x64xf32> to vector<64x64xf32>
    %321 = arith.addf %317, %320 : vector<64x64xf32>
    %322 = arith.addf %240, %321 : vector<64x64xf32>
    %c0_174 = arith.constant 0 : index
    %c0_175 = arith.constant 0 : index
    %323 = vector.load %arg21[%c0_174, %c0_175] : memref<1x64xf32, #tpu.memory_space<vmem>>, vector<1x64xf32>
    %c0_176 = arith.constant 0 : index
    %c0_177 = arith.constant 0 : index
    %324 = vector.load %arg22[%c0_176, %c0_177] : memref<1x64xf32, #tpu.memory_space<vmem>>, vector<1x64xf32>
    %cst_178 = arith.constant dense<0.000000e+00> : vector<64xf32>
    %325 = vector.multi_reduction <add>, %322, %cst_178 [1] : vector<64x64xf32> to vector<64xf32>
    %326 = vector.shape_cast %325 : vector<64xf32> to vector<64x1xf32>
    %cst_179 = arith.constant 6.400000e+01 : f32
    %327 = vector.broadcast %cst_179 : f32 to vector<64x1xf32>
    %328 = arith.divf %326, %327 : vector<64x1xf32>
    %329 = vector.broadcast %328 : vector<64x1xf32> to vector<64x64xf32>
    %330 = arith.subf %322, %329 : vector<64x64xf32>
    %331 = arith.mulf %330, %330 : vector<64x64xf32>
    %cst_180 = arith.constant dense<0.000000e+00> : vector<64xf32>
    %332 = vector.multi_reduction <add>, %331, %cst_180 [1] : vector<64x64xf32> to vector<64xf32>
    %333 = vector.shape_cast %332 : vector<64xf32> to vector<64x1xf32>
    %cst_181 = arith.constant 6.400000e+01 : f32
    %334 = vector.broadcast %cst_181 : f32 to vector<64x1xf32>
    %335 = arith.divf %333, %334 : vector<64x1xf32>
    %336 = vector.broadcast %328 : vector<64x1xf32> to vector<64x64xf32>
    %337 = arith.subf %322, %336 : vector<64x64xf32>
    %cst_182 = arith.constant 9.99999997E-7 : f32
    %338 = vector.broadcast %cst_182 : f32 to vector<64x1xf32>
    %339 = arith.addf %335, %338 : vector<64x1xf32>
    %340 = math.rsqrt %339 : vector<64x1xf32>
    %341 = vector.broadcast %340 : vector<64x1xf32> to vector<64x64xf32>
    %342 = arith.mulf %337, %341 : vector<64x64xf32>
    %343 = vector.broadcast %323 : vector<1x64xf32> to vector<64x64xf32>
    %344 = arith.mulf %342, %343 : vector<64x64xf32>
    %345 = vector.broadcast %324 : vector<1x64xf32> to vector<64x64xf32>
    %346 = arith.addf %344, %345 : vector<64x64xf32>
    %347 = vector.extract_strided_slice %346 {offsets = [0, 0], sizes = [16, 64], strides = [1, 1]} : vector<64x64xf32> to vector<16x64xf32>
    %c0_183 = arith.constant 0 : index
    %c0_184 = arith.constant 0 : index
    %348 = vector.load %arg23[%c0_183, %c0_184] : memref<256x128xbf16, #tpu.memory_space<vmem>>, vector<64x128xbf16>
    %349 = arith.truncf %347 : vector<16x64xf32> to vector<16x64xbf16>
    %cst_185 = arith.constant dense<0.000000e+00> : vector<16x128xf32>
    %350 = tpu.matmul %349, %348, %cst_185 {dimension_numbers = #tpu.dot_dimension_numbers<[1], [0], [0], [1], [0, 0, 1, 1], [], []>} : vector<16x64xbf16>, vector<64x128xbf16>, vector<16x128xf32> -> vector<16x128xf32>
    %351 = vector.extract_strided_slice %346 {offsets = [16, 0], sizes = [16, 64], strides = [1, 1]} : vector<64x64xf32> to vector<16x64xf32>
    %c64 = arith.constant 64 : index
    %c0_186 = arith.constant 0 : index
    %352 = vector.load %arg23[%c64, %c0_186] : memref<256x128xbf16, #tpu.memory_space<vmem>>, vector<64x128xbf16>
    %353 = arith.truncf %351 : vector<16x64xf32> to vector<16x64xbf16>
    %cst_187 = arith.constant dense<0.000000e+00> : vector<16x128xf32>
    %354 = tpu.matmul %353, %352, %cst_187 {dimension_numbers = #tpu.dot_dimension_numbers<[1], [0], [0], [1], [0, 0, 1, 1], [], []>} : vector<16x64xbf16>, vector<64x128xbf16>, vector<16x128xf32> -> vector<16x128xf32>
    %355 = arith.addf %350, %354 : vector<16x128xf32>
    %356 = vector.extract_strided_slice %346 {offsets = [32, 0], sizes = [16, 64], strides = [1, 1]} : vector<64x64xf32> to vector<16x64xf32>
    %c128 = arith.constant 128 : index
    %c0_188 = arith.constant 0 : index
    %357 = vector.load %arg23[%c128, %c0_188] : memref<256x128xbf16, #tpu.memory_space<vmem>>, vector<64x128xbf16>
    %358 = arith.truncf %356 : vector<16x64xf32> to vector<16x64xbf16>
    %cst_189 = arith.constant dense<0.000000e+00> : vector<16x128xf32>
    %359 = tpu.matmul %358, %357, %cst_189 {dimension_numbers = #tpu.dot_dimension_numbers<[1], [0], [0], [1], [0, 0, 1, 1], [], []>} : vector<16x64xbf16>, vector<64x128xbf16>, vector<16x128xf32> -> vector<16x128xf32>
    %360 = arith.addf %355, %359 : vector<16x128xf32>
    %361 = vector.extract_strided_slice %346 {offsets = [48, 0], sizes = [16, 64], strides = [1, 1]} : vector<64x64xf32> to vector<16x64xf32>
    %c192 = arith.constant 192 : index
    %c0_190 = arith.constant 0 : index
    %362 = vector.load %arg23[%c192, %c0_190] : memref<256x128xbf16, #tpu.memory_space<vmem>>, vector<64x128xbf16>
    %363 = arith.truncf %361 : vector<16x64xf32> to vector<16x64xbf16>
    %cst_191 = arith.constant dense<0.000000e+00> : vector<16x128xf32>
    %364 = tpu.matmul %363, %362, %cst_191 {dimension_numbers = #tpu.dot_dimension_numbers<[1], [0], [0], [1], [0, 0, 1, 1], [], []>} : vector<16x64xbf16>, vector<64x128xbf16>, vector<16x128xf32> -> vector<16x128xf32>
    %365 = arith.addf %360, %364 : vector<16x128xf32>
    %c0_192 = arith.constant 0 : index
    %c0_193 = arith.constant 0 : index
    %366 = vector.load %arg24[%c0_192, %c0_193] : memref<1x128xf32, #tpu.memory_space<vmem>>, vector<1x128xf32>
    %367 = vector.broadcast %366 : vector<1x128xf32> to vector<16x128xf32>
    %368 = arith.addf %365, %367 : vector<16x128xf32>
    %c0_194 = arith.constant 0 : index
    %c0_195 = arith.constant 0 : index
    %369 = vector.load %arg25[%c0_194, %c0_195] : memref<1x128xf32, #tpu.memory_space<vmem>>, vector<1x128xf32>
    %c0_196 = arith.constant 0 : index
    %c0_197 = arith.constant 0 : index
    %370 = vector.load %arg26[%c0_196, %c0_197] : memref<1x128xf32, #tpu.memory_space<vmem>>, vector<1x128xf32>
    %371 = vector.shape_cast %368 : vector<16x128xf32> to vector<2x8x128xf32>
    %cst_198 = arith.constant dense<0.000000e+00> : vector<2x128xf32>
    %372 = vector.multi_reduction <add>, %371, %cst_198 [1] : vector<2x8x128xf32> to vector<2x128xf32>
    %373 = vector.shape_cast %372 : vector<2x128xf32> to vector<2x1x128xf32>
    %cst_199 = arith.constant 8.000000e+00 : f32
    %374 = vector.broadcast %cst_199 : f32 to vector<2x1x128xf32>
    %375 = arith.divf %373, %374 : vector<2x1x128xf32>
    %376 = vector.broadcast %375 : vector<2x1x128xf32> to vector<2x8x128xf32>
    %377 = arith.subf %371, %376 : vector<2x8x128xf32>
    %378 = arith.mulf %377, %377 : vector<2x8x128xf32>
    %cst_200 = arith.constant dense<0.000000e+00> : vector<2x128xf32>
    %379 = vector.multi_reduction <add>, %378, %cst_200 [1] : vector<2x8x128xf32> to vector<2x128xf32>
    %380 = vector.shape_cast %379 : vector<2x128xf32> to vector<2x1x128xf32>
    %cst_201 = arith.constant 8.000000e+00 : f32
    %381 = vector.broadcast %cst_201 : f32 to vector<2x1x128xf32>
    %382 = arith.divf %380, %381 : vector<2x1x128xf32>
    %383 = vector.broadcast %375 : vector<2x1x128xf32> to vector<2x8x128xf32>
    %384 = arith.subf %371, %383 : vector<2x8x128xf32>
    %cst_202 = arith.constant 9.99999974E-6 : f32
    %385 = vector.broadcast %cst_202 : f32 to vector<2x1x128xf32>
    %386 = arith.addf %382, %385 : vector<2x1x128xf32>
    %387 = math.rsqrt %386 : vector<2x1x128xf32>
    %388 = vector.broadcast %387 : vector<2x1x128xf32> to vector<2x8x128xf32>
    %389 = arith.mulf %384, %388 : vector<2x8x128xf32>
    %390 = vector.shape_cast %389 : vector<2x8x128xf32> to vector<16x128xf32>
    %391 = vector.broadcast %369 : vector<1x128xf32> to vector<16x128xf32>
    %392 = arith.mulf %390, %391 : vector<16x128xf32>
    %393 = vector.broadcast %370 : vector<1x128xf32> to vector<16x128xf32>
    %394 = arith.addf %392, %393 : vector<16x128xf32>
    %cst_203 = arith.constant 0.000000e+00 : f32
    %395 = vector.broadcast %cst_203 : f32 to vector<16x128xf32>
    %396 = arith.maximumf %394, %395 : vector<16x128xf32>
    %c0_204 = arith.constant 0 : index
    %c0_205 = arith.constant 0 : index
    %397 = vector.load %arg27[%c0_204, %c0_205] : memref<128x128xbf16, #tpu.memory_space<vmem>>, vector<128x128xbf16>
    %398 = arith.truncf %396 : vector<16x128xf32> to vector<16x128xbf16>
    %cst_206 = arith.constant dense<0.000000e+00> : vector<16x128xf32>
    %399 = tpu.matmul %398, %397, %cst_206 {dimension_numbers = #tpu.dot_dimension_numbers<[1], [0], [0], [1], [0, 0, 1, 1], [], []>} : vector<16x128xbf16>, vector<128x128xbf16>, vector<16x128xf32> -> vector<16x128xf32>
    %c0_207 = arith.constant 0 : index
    %c0_208 = arith.constant 0 : index
    %400 = vector.load %arg28[%c0_207, %c0_208] : memref<1x128xf32, #tpu.memory_space<vmem>>, vector<1x128xf32>
    %401 = vector.broadcast %400 : vector<1x128xf32> to vector<16x128xf32>
    %402 = arith.addf %399, %401 : vector<16x128xf32>
    %c0_209 = arith.constant 0 : index
    %c0_210 = arith.constant 0 : index
    %403 = vector.load %arg29[%c0_209, %c0_210] : memref<1x128xf32, #tpu.memory_space<vmem>>, vector<1x128xf32>
    %c0_211 = arith.constant 0 : index
    %c0_212 = arith.constant 0 : index
    %404 = vector.load %arg30[%c0_211, %c0_212] : memref<1x128xf32, #tpu.memory_space<vmem>>, vector<1x128xf32>
    %405 = vector.shape_cast %402 : vector<16x128xf32> to vector<2x8x128xf32>
    %cst_213 = arith.constant dense<0.000000e+00> : vector<2x128xf32>
    %406 = vector.multi_reduction <add>, %405, %cst_213 [1] : vector<2x8x128xf32> to vector<2x128xf32>
    %407 = vector.shape_cast %406 : vector<2x128xf32> to vector<2x1x128xf32>
    %cst_214 = arith.constant 8.000000e+00 : f32
    %408 = vector.broadcast %cst_214 : f32 to vector<2x1x128xf32>
    %409 = arith.divf %407, %408 : vector<2x1x128xf32>
    %410 = vector.broadcast %409 : vector<2x1x128xf32> to vector<2x8x128xf32>
    %411 = arith.subf %405, %410 : vector<2x8x128xf32>
    %412 = arith.mulf %411, %411 : vector<2x8x128xf32>
    %cst_215 = arith.constant dense<0.000000e+00> : vector<2x128xf32>
    %413 = vector.multi_reduction <add>, %412, %cst_215 [1] : vector<2x8x128xf32> to vector<2x128xf32>
    %414 = vector.shape_cast %413 : vector<2x128xf32> to vector<2x1x128xf32>
    %cst_216 = arith.constant 8.000000e+00 : f32
    %415 = vector.broadcast %cst_216 : f32 to vector<2x1x128xf32>
    %416 = arith.divf %414, %415 : vector<2x1x128xf32>
    %417 = vector.broadcast %409 : vector<2x1x128xf32> to vector<2x8x128xf32>
    %418 = arith.subf %405, %417 : vector<2x8x128xf32>
    %cst_217 = arith.constant 9.99999974E-6 : f32
    %419 = vector.broadcast %cst_217 : f32 to vector<2x1x128xf32>
    %420 = arith.addf %416, %419 : vector<2x1x128xf32>
    %421 = math.rsqrt %420 : vector<2x1x128xf32>
    %422 = vector.broadcast %421 : vector<2x1x128xf32> to vector<2x8x128xf32>
    %423 = arith.mulf %418, %422 : vector<2x8x128xf32>
    %424 = vector.shape_cast %423 : vector<2x8x128xf32> to vector<16x128xf32>
    %425 = vector.broadcast %403 : vector<1x128xf32> to vector<16x128xf32>
    %426 = arith.mulf %424, %425 : vector<16x128xf32>
    %427 = vector.broadcast %404 : vector<1x128xf32> to vector<16x128xf32>
    %428 = arith.addf %426, %427 : vector<16x128xf32>
    %cst_218 = arith.constant 0.000000e+00 : f32
    %429 = vector.broadcast %cst_218 : f32 to vector<16x128xf32>
    %430 = arith.maximumf %428, %429 : vector<16x128xf32>
    %c0_219 = arith.constant 0 : index
    %c0_220 = arith.constant 0 : index
    %431 = vector.load %arg31[%c0_219, %c0_220] : memref<128x64xbf16, #tpu.memory_space<vmem>>, vector<128x64xbf16>
    %432 = arith.truncf %430 : vector<16x128xf32> to vector<16x128xbf16>
    %cst_221 = arith.constant dense<0.000000e+00> : vector<16x64xf32>
    %433 = tpu.matmul %432, %431, %cst_221 {dimension_numbers = #tpu.dot_dimension_numbers<[1], [0], [0], [1], [0, 0, 1, 1], [], []>} : vector<16x128xbf16>, vector<128x64xbf16>, vector<16x64xf32> -> vector<16x64xf32>
    %434 = vector.extract_strided_slice %433 {offsets = [0, 0], sizes = [8, 64], strides = [1, 1]} : vector<16x64xf32> to vector<8x64xf32>
    %435 = vector.extract_strided_slice %433 {offsets = [8, 0], sizes = [8, 64], strides = [1, 1]} : vector<16x64xf32> to vector<8x64xf32>
    %436 = arith.subf %434, %435 : vector<8x64xf32>
    %437 = arith.mulf %436, %436 : vector<8x64xf32>
    %438 = vector.shape_cast %437 : vector<8x64xf32> to vector<1x8x64xf32>
    %cst_222 = arith.constant dense<0.000000e+00> : vector<1xf32>
    %439 = vector.multi_reduction <add>, %438, %cst_222 [1, 2] : vector<1x8x64xf32> to vector<1xf32>
    %440 = vector.shape_cast %439 : vector<1xf32> to vector<1x1x1xf32>
    %441 = vector.extract %440[0, 0, 0] : f32 from vector<1x1x1xf32>
    %cst_223 = arith.constant 5.120000e+02 : f32
    %442 = arith.divf %441, %cst_223 : f32
    %cst_224 = arith.constant dense<0.000000e+00> : vector<64xf32>
    %443 = vector.multi_reduction <add>, %434, %cst_224 [0] : vector<8x64xf32> to vector<64xf32>
    %444 = vector.shape_cast %443 : vector<64xf32> to vector<1x64xf32>
    %cst_225 = arith.constant 8.000000e+00 : f32
    %445 = vector.broadcast %cst_225 : f32 to vector<1x64xf32>
    %446 = arith.divf %444, %445 : vector<1x64xf32>
    %447 = vector.broadcast %446 : vector<1x64xf32> to vector<8x64xf32>
    %448 = arith.subf %434, %447 : vector<8x64xf32>
    %cst_226 = arith.constant dense<0.000000e+00> : vector<64xf32>
    %449 = vector.multi_reduction <add>, %435, %cst_226 [0] : vector<8x64xf32> to vector<64xf32>
    %450 = vector.shape_cast %449 : vector<64xf32> to vector<1x64xf32>
    %cst_227 = arith.constant 8.000000e+00 : f32
    %451 = vector.broadcast %cst_227 : f32 to vector<1x64xf32>
    %452 = arith.divf %450, %451 : vector<1x64xf32>
    %453 = vector.broadcast %452 : vector<1x64xf32> to vector<8x64xf32>
    %454 = arith.subf %435, %453 : vector<8x64xf32>
    %455 = arith.mulf %448, %448 : vector<8x64xf32>
    %cst_228 = arith.constant dense<0.000000e+00> : vector<64xf32>
    %456 = vector.multi_reduction <add>, %455, %cst_228 [0] : vector<8x64xf32> to vector<64xf32>
    %457 = vector.shape_cast %456 : vector<64xf32> to vector<1x64xf32>
    %cst_229 = arith.constant 0.142857149 : f32
    %458 = vector.broadcast %cst_229 : f32 to vector<1x64xf32>
    %459 = arith.mulf %457, %458 : vector<1x64xf32>
    %460 = arith.mulf %454, %454 : vector<8x64xf32>
    %cst_230 = arith.constant dense<0.000000e+00> : vector<64xf32>
    %461 = vector.multi_reduction <add>, %460, %cst_230 [0] : vector<8x64xf32> to vector<64xf32>
    %462 = vector.shape_cast %461 : vector<64xf32> to vector<1x64xf32>
    %cst_231 = arith.constant 0.142857149 : f32
    %463 = vector.broadcast %cst_231 : f32 to vector<1x64xf32>
    %464 = arith.mulf %462, %463 : vector<1x64xf32>
    %cst_232 = arith.constant 9.99999974E-5 : f32
    %465 = vector.broadcast %cst_232 : f32 to vector<1x64xf32>
    %466 = arith.addf %459, %465 : vector<1x64xf32>
    %467 = math.sqrt %466 : vector<1x64xf32>
    %cst_233 = arith.constant 9.99999974E-5 : f32
    %468 = vector.broadcast %cst_233 : f32 to vector<1x64xf32>
    %469 = arith.addf %464, %468 : vector<1x64xf32>
    %470 = math.sqrt %469 : vector<1x64xf32>
    %cst_234 = arith.constant 1.000000e+00 : f32
    %471 = vector.broadcast %cst_234 : f32 to vector<1x64xf32>
    %472 = arith.subf %471, %467 : vector<1x64xf32>
    %cst_235 = arith.constant 0.000000e+00 : f32
    %473 = vector.broadcast %cst_235 : f32 to vector<1x64xf32>
    %474 = arith.maximumf %472, %473 : vector<1x64xf32>
    %475 = vector.shape_cast %474 : vector<1x64xf32> to vector<1x1x64xf32>
    %cst_236 = arith.constant dense<0.000000e+00> : vector<1xf32>
    %476 = vector.multi_reduction <add>, %475, %cst_236 [1, 2] : vector<1x1x64xf32> to vector<1xf32>
    %477 = vector.shape_cast %476 : vector<1xf32> to vector<1x1x1xf32>
    %478 = vector.extract %477[0, 0, 0] : f32 from vector<1x1x1xf32>
    %cst_237 = arith.constant 6.400000e+01 : f32
    %479 = arith.divf %478, %cst_237 : f32
    %cst_238 = arith.constant 2.000000e+00 : f32
    %480 = arith.divf %479, %cst_238 : f32
    %cst_239 = arith.constant 1.000000e+00 : f32
    %481 = vector.broadcast %cst_239 : f32 to vector<1x64xf32>
    %482 = arith.subf %481, %470 : vector<1x64xf32>
    %cst_240 = arith.constant 0.000000e+00 : f32
    %483 = vector.broadcast %cst_240 : f32 to vector<1x64xf32>
    %484 = arith.maximumf %482, %483 : vector<1x64xf32>
    %485 = vector.shape_cast %484 : vector<1x64xf32> to vector<1x1x64xf32>
    %cst_241 = arith.constant dense<0.000000e+00> : vector<1xf32>
    %486 = vector.multi_reduction <add>, %485, %cst_241 [1, 2] : vector<1x1x64xf32> to vector<1xf32>
    %487 = vector.shape_cast %486 : vector<1xf32> to vector<1x1x1xf32>
    %488 = vector.extract %487[0, 0, 0] : f32 from vector<1x1x1xf32>
    %cst_242 = arith.constant 6.400000e+01 : f32
    %489 = arith.divf %488, %cst_242 : f32
    %cst_243 = arith.constant 2.000000e+00 : f32
    %490 = arith.divf %489, %cst_243 : f32
    %491 = arith.addf %480, %490 : f32
    %cst_244 = arith.constant dense<0.000000e+00> : vector<64x64xf32>
    %492 = tpu.matmul %448, %448, %cst_244 {dimension_numbers = #tpu.dot_dimension_numbers<[0], [0], [1], [1], [0, 1, 1, 1], [], []>} : vector<8x64xf32>, vector<8x64xf32>, vector<64x64xf32> -> vector<64x64xf32>
    %cst_245 = arith.constant 0.142857149 : f32
    %493 = vector.broadcast %cst_245 : f32 to vector<64x64xf32>
    %494 = arith.mulf %492, %493 : vector<64x64xf32>
    %cst_246 = arith.constant dense<0.000000e+00> : vector<64x64xf32>
    %495 = tpu.matmul %454, %454, %cst_246 {dimension_numbers = #tpu.dot_dimension_numbers<[0], [0], [1], [1], [0, 1, 1, 1], [], []>} : vector<8x64xf32>, vector<8x64xf32>, vector<64x64xf32> -> vector<64x64xf32>
    %cst_247 = arith.constant 0.142857149 : f32
    %496 = vector.broadcast %cst_247 : f32 to vector<64x64xf32>
    %497 = arith.mulf %495, %496 : vector<64x64xf32>
    %498 = arith.mulf %494, %494 : vector<64x64xf32>
    %499 = vector.shape_cast %498 : vector<64x64xf32> to vector<1x64x64xf32>
    %cst_248 = arith.constant dense<0.000000e+00> : vector<1xf32>
    %500 = vector.multi_reduction <add>, %499, %cst_248 [1, 2] : vector<1x64x64xf32> to vector<1xf32>
    %501 = vector.shape_cast %500 : vector<1xf32> to vector<1x1x1xf32>
    %502 = vector.extract %501[0, 0, 0] : f32 from vector<1x1x1xf32>
    %503 = arith.mulf %459, %459 : vector<1x64xf32>
    %504 = vector.shape_cast %503 : vector<1x64xf32> to vector<1x1x64xf32>
    %cst_249 = arith.constant dense<0.000000e+00> : vector<1xf32>
    %505 = vector.multi_reduction <add>, %504, %cst_249 [1, 2] : vector<1x1x64xf32> to vector<1xf32>
    %506 = vector.shape_cast %505 : vector<1xf32> to vector<1x1x1xf32>
    %507 = vector.extract %506[0, 0, 0] : f32 from vector<1x1x1xf32>
    %508 = arith.subf %502, %507 : f32
    %509 = arith.mulf %497, %497 : vector<64x64xf32>
    %510 = vector.shape_cast %509 : vector<64x64xf32> to vector<1x64x64xf32>
    %cst_250 = arith.constant dense<0.000000e+00> : vector<1xf32>
    %511 = vector.multi_reduction <add>, %510, %cst_250 [1, 2] : vector<1x64x64xf32> to vector<1xf32>
    %512 = vector.shape_cast %511 : vector<1xf32> to vector<1x1x1xf32>
    %513 = vector.extract %512[0, 0, 0] : f32 from vector<1x1x1xf32>
    %514 = arith.mulf %464, %464 : vector<1x64xf32>
    %515 = vector.shape_cast %514 : vector<1x64xf32> to vector<1x1x64xf32>
    %cst_251 = arith.constant dense<0.000000e+00> : vector<1xf32>
    %516 = vector.multi_reduction <add>, %515, %cst_251 [1, 2] : vector<1x1x64xf32> to vector<1xf32>
    %517 = vector.shape_cast %516 : vector<1xf32> to vector<1x1x1xf32>
    %518 = vector.extract %517[0, 0, 0] : f32 from vector<1x1x1xf32>
    %519 = arith.subf %513, %518 : f32
    %cst_252 = arith.constant 6.400000e+01 : f32
    %520 = arith.divf %508, %cst_252 : f32
    %cst_253 = arith.constant 6.400000e+01 : f32
    %521 = arith.divf %519, %cst_253 : f32
    %522 = arith.addf %520, %521 : f32
    %cst_254 = arith.constant 2.500000e+01 : f32
    %523 = arith.mulf %cst_254, %442 : f32
    %cst_255 = arith.constant 2.500000e+01 : f32
    %524 = arith.mulf %cst_255, %491 : f32
    %525 = arith.addf %523, %524 : f32
    %cst_256 = arith.constant 1.000000e+00 : f32
    %526 = arith.mulf %cst_256, %522 : f32
    %527 = arith.addf %525, %526 : f32
    %c0_257 = arith.constant 0 : index
    %c0_258 = arith.constant 0 : index
    %528 = memref.load %arg32[%c0_257, %c0_258] : memref<1x1xf32, #tpu.memory_space<smem>>
    memref.store %527, %arg32[%c0_257, %c0_258] : memref<1x1xf32, #tpu.memory_space<smem>>
    return
  }
}

</mosaic_0001>

<llo_original>
// kernel: vicreg_forward.1
$region0: #{vicreg_forward.1}
  #allocation0 [shape = 'u32[]', space=smem, size = 0x4, offset = 0x4, fixed_abs, tag = 'smem constant byte address 0x4 - core index']
  #allocation1 [shape = 'u32[144,128]{1,0:T(1,128)}', space=vmem, size = 0x12000, scoped, tag = 'internal scratch']
  %s0 = inlined_call_operand.smem [shape: u32[33], index: -1, kind: input, shape index: {}]
  %s1 = sld [smem:[%s0]]
  %s2 = scalar_lea.smem %s0, 1
  %s3 = sld [smem:[%s2]]
  %s4 = scalar_lea.smem %s0, 2
  %s5 = sld [smem:[%s4]]
  %s6 = scalar_lea.smem %s0, 3
  %s7 = sld [smem:[%s6]]
  %s8 = scalar_lea.smem %s0, 4
  %s9 = sld [smem:[%s8]]
  %s10 = scalar_lea.smem %s0, 5
  %s11 = sld [smem:[%s10]]
  %s12 = scalar_lea.smem %s0, 6
  %s13 = sld [smem:[%s12]]
  %s14 = scalar_lea.smem %s0, 7
  %s15 = sld [smem:[%s14]]
  %s16 = scalar_lea.smem %s0, 8
  %s17 = sld [smem:[%s16]]
  %s18 = scalar_lea.smem %s0, 9
  %s19 = sld [smem:[%s18]]
  %s20 = scalar_lea.smem %s0, 10
  %s21 = sld [smem:[%s20]]
  %s22 = scalar_lea.smem %s0, 11
  %s23 = sld [smem:[%s22]]
  %s24 = scalar_lea.smem %s0, 12
  %s25 = sld [smem:[%s24]]
  %s26 = scalar_lea.smem %s0, 13
  %s27 = sld [smem:[%s26]]
  %s28 = scalar_lea.smem %s0, 14
  %s29 = sld [smem:[%s28]]
  %s30 = scalar_lea.smem %s0, 15
  %s31 = sld [smem:[%s30]]
  %s32 = scalar_lea.smem %s0, 16
  %s33 = sld [smem:[%s32]]
  %s34 = scalar_lea.smem %s0, 17
  %s35 = sld [smem:[%s34]]
  %s36 = scalar_lea.smem %s0, 18
  %s37 = sld [smem:[%s36]]
  %s38 = scalar_lea.smem %s0, 19
  %s39 = sld [smem:[%s38]]
  %s40 = scalar_lea.smem %s0, 20
  %s41 = sld [smem:[%s40]]
  %s42 = scalar_lea.smem %s0, 21
  %s43 = sld [smem:[%s42]]
  %s44 = scalar_lea.smem %s0, 22
  %s45 = sld [smem:[%s44]]
  %s46 = scalar_lea.smem %s0, 23
  %s47 = sld [smem:[%s46]]
  %s48 = scalar_lea.smem %s0, 24
  %s49 = sld [smem:[%s48]]
  %s50 = scalar_lea.smem %s0, 25
  %s51 = sld [smem:[%s50]]
  %s52 = scalar_lea.smem %s0, 26
  %s53 = sld [smem:[%s52]]
  %s54 = scalar_lea.smem %s0, 27
  %s55 = sld [smem:[%s54]]
  %s56 = scalar_lea.smem %s0, 28
  %s57 = sld [smem:[%s56]]
  %s58 = scalar_lea.smem %s0, 29
  %s59 = sld [smem:[%s58]]
  %s60 = scalar_lea.smem %s0, 30
  %s61 = sld [smem:[%s60]]
  %s62 = scalar_lea.smem %s0, 31
  %s63 = sld [smem:[%s62]]
  %s64 = scalar_lea.smem %s0, 32
  %s65 = sld [smem:[%s64]]
  %s66 = sld [smem:[#allocation0]]
  $region138: #{vicreg_forward.1} parent=0
    _
  %s68 = ssub.s32 1, %s66
  %s69 = scalar_select 0, %s68, %s66
  $region1: #{vicreg_forward.1} parent=0
    #allocation2 [shape = 'u8[512]{0}', space=smem, size = 0x200, scoped, tag = 'output window, operand 0, single buffered']
    #allocation3 [shape = 's32[1]{0}', space=sflag, size = 0x4, scoped, tag = 'scoped memory for vicreg_forward.1']
    %70 = vsyncpa [#allocation3], 0
    // Predicated region
    $region2: #{vicreg_forward.1} parent=1 // pred_check
      _
    $region3: #{vicreg_forward.1} parent=1 // pred_check_branch
      %72 = sbr.rel (0) target = $region5
    $region4: #{vicreg_forward.1} parent=1 // pred_region
      _
    $region5: #{vicreg_forward.1} parent=1 // pred_fallthru
      _
    // Predicated region
    $region6: #{vicreg_forward.1} parent=1 // pred_check
      _
    $region7: #{vicreg_forward.1} parent=1 // pred_check_branch
      %74 = sbr.rel (0) target = $region9
    $region8: #{vicreg_forward.1} parent=1 // pred_region
      _
    $region9: #{vicreg_forward.1} parent=1 // pred_fallthru
      _
    // Predicated region
    $region10: #{vicreg_forward.1} parent=1 // pred_check
      _
    $region11: #{vicreg_forward.1} parent=1 // pred_check_branch
      %76 = sbr.rel (0) target = $region13
    $region12: #{vicreg_forward.1} parent=1 // pred_region
      _
    $region13: #{vicreg_forward.1} parent=1 // pred_fallthru
      _
    // Predicated region
    $region14: #{vicreg_forward.1} parent=1 // pred_check
      _
    $region15: #{vicreg_forward.1} parent=1 // pred_check_branch
      %78 = sbr.rel (0) target = $region17
    $region16: #{vicreg_forward.1} parent=1 // pred_region
      _
    $region17: #{vicreg_forward.1} parent=1 // pred_fallthru
      _
    // Predicated region
    $region18: #{vicreg_forward.1} parent=1 // pred_check
      _
    $region19: #{vicreg_forward.1} parent=1 // pred_check_branch
      %80 = sbr.rel (0) target = $region21
    $region20: #{vicreg_forward.1} parent=1 // pred_region
      _
    $region21: #{vicreg_forward.1} parent=1 // pred_fallthru
      _
    // Predicated region
    $region22: #{vicreg_forward.1} parent=1 // pred_check
      _
    $region23: #{vicreg_forward.1} parent=1 // pred_check_branch
      %82 = sbr.rel (0) target = $region25
    $region24: #{vicreg_forward.1} parent=1 // pred_region
      _
    $region25: #{vicreg_forward.1} parent=1 // pred_fallthru
      _
    // Predicated region
    $region26: #{vicreg_forward.1} parent=1 // pred_check
      _
    $region27: #{vicreg_forward.1} parent=1 // pred_check_branch
      %84 = sbr.rel (0) target = $region29
    $region28: #{vicreg_forward.1} parent=1 // pred_region
      _
    $region29: #{vicreg_forward.1} parent=1 // pred_fallthru
      _
    // Predicated region
    $region30: #{vicreg_forward.1} parent=1 // pred_check
      _
    $region31: #{vicreg_forward.1} parent=1 // pred_check_branch
      %86 = sbr.rel (0) target = $region33
    $region32: #{vicreg_forward.1} parent=1 // pred_region
      _
    $region33: #{vicreg_forward.1} parent=1 // pred_fallthru
      _
    // Predicated region
    $region34: #{vicreg_forward.1} parent=1 // pred_check
      _
    $region35: #{vicreg_forward.1} parent=1 // pred_check_branch
      %88 = sbr.rel (0) target = $region37
    $region36: #{vicreg_forward.1} parent=1 // pred_region
      _
    $region37: #{vicreg_forward.1} parent=1 // pred_fallthru
      _
    // Predicated region
    $region38: #{vicreg_forward.1} parent=1 // pred_check
      _
    $region39: #{vicreg_forward.1} parent=1 // pred_check_branch
      %90 = sbr.rel (0) target = $region41
    $region40: #{vicreg_forward.1} parent=1 // pred_region
      _
    $region41: #{vicreg_forward.1} parent=1 // pred_fallthru
      _
    // Predicated region
    $region42: #{vicreg_forward.1} parent=1 // pred_check
      _
    $region43: #{vicreg_forward.1} parent=1 // pred_check_branch
      %92 = sbr.rel (0) target = $region45
    $region44: #{vicreg_forward.1} parent=1 // pred_region
      _
    $region45: #{vicreg_forward.1} parent=1 // pred_fallthru
      _
    // Predicated region
    $region46: #{vicreg_forward.1} parent=1 // pred_check
      _
    $region47: #{vicreg_forward.1} parent=1 // pred_check_branch
      %94 = sbr.rel (0) target = $region49
    $region48: #{vicreg_forward.1} parent=1 // pred_region
      _
    $region49: #{vicreg_forward.1} parent=1 // pred_fallthru
      _
    // Predicated region
    $region50: #{vicreg_forward.1} parent=1 // pred_check
      _
    $region51: #{vicreg_forward.1} parent=1 // pred_check_branch
      %96 = sbr.rel (0) target = $region53
    $region52: #{vicreg_forward.1} parent=1 // pred_region
      _
    $region53: #{vicreg_forward.1} parent=1 // pred_fallthru
      _
    // Predicated region
    $region54: #{vicreg_forward.1} parent=1 // pred_check
      _
    $region55: #{vicreg_forward.1} parent=1 // pred_check_branch
      %98 = sbr.rel (0) target = $region57
    $region56: #{vicreg_forward.1} parent=1 // pred_region
      _
    $region57: #{vicreg_forward.1} parent=1 // pred_fallthru
      _
    // Predicated region
    $region58: #{vicreg_forward.1} parent=1 // pred_check
      _
    $region59: #{vicreg_forward.1} parent=1 // pred_check_branch
      %100 = sbr.rel (0) target = $region61
    $region60: #{vicreg_forward.1} parent=1 // pred_region
      _
    $region61: #{vicreg_forward.1} parent=1 // pred_fallthru
      _
    // Predicated region
    $region62: #{vicreg_forward.1} parent=1 // pred_check
      _
    $region63: #{vicreg_forward.1} parent=1 // pred_check_branch
      %102 = sbr.rel (0) target = $region65
    $region64: #{vicreg_forward.1} parent=1 // pred_region
      _
    $region65: #{vicreg_forward.1} parent=1 // pred_fallthru
      _
    // Predicated region
    $region66: #{vicreg_forward.1} parent=1 // pred_check
      _
    $region67: #{vicreg_forward.1} parent=1 // pred_check_branch
      %104 = sbr.rel (0) target = $region69
    $region68: #{vicreg_forward.1} parent=1 // pred_region
      _
    $region69: #{vicreg_forward.1} parent=1 // pred_fallthru
      _
    // Predicated region
    $region70: #{vicreg_forward.1} parent=1 // pred_check
      _
    $region71: #{vicreg_forward.1} parent=1 // pred_check_branch
      %106 = sbr.rel (0) target = $region73
    $region72: #{vicreg_forward.1} parent=1 // pred_region
      _
    $region73: #{vicreg_forward.1} parent=1 // pred_fallthru
      _
    // Predicated region
    $region74: #{vicreg_forward.1} parent=1 // pred_check
      _
    $region75: #{vicreg_forward.1} parent=1 // pred_check_branch
      %108 = sbr.rel (0) target = $region77
    $region76: #{vicreg_forward.1} parent=1 // pred_region
      _
    $region77: #{vicreg_forward.1} parent=1 // pred_fallthru
      _
    // Predicated region
    $region78: #{vicreg_forward.1} parent=1 // pred_check
      _
    $region79: #{vicreg_forward.1} parent=1 // pred_check_branch
      %110 = sbr.rel (0) target = $region81
    $region80: #{vicreg_forward.1} parent=1 // pred_region
      _
    $region81: #{vicreg_forward.1} parent=1 // pred_fallthru
      _
    // Predicated region
    $region82: #{vicreg_forward.1} parent=1 // pred_check
      _
    $region83: #{vicreg_forward.1} parent=1 // pred_check_branch
      %112 = sbr.rel (0) target = $region85
    $region84: #{vicreg_forward.1} parent=1 // pred_region
      _
    $region85: #{vicreg_forward.1} parent=1 // pred_fallthru
      _
    // Predicated region
    $region86: #{vicreg_forward.1} parent=1 // pred_check
      _
    $region87: #{vicreg_forward.1} parent=1 // pred_check_branch
      %114 = sbr.rel (0) target = $region89
    $region88: #{vicreg_forward.1} parent=1 // pred_region
      _
    $region89: #{vicreg_forward.1} parent=1 // pred_fallthru
      _
    // Predicated region
    $region90: #{vicreg_forward.1} parent=1 // pred_check
      _
    $region91: #{vicreg_forward.1} parent=1 // pred_check_branch
      %116 = sbr.rel (0) target = $region93
    $region92: #{vicreg_forward.1} parent=1 // pred_region
      _
    $region93: #{vicreg_forward.1} parent=1 // pred_fallthru
      _
    // Predicated region
    $region94: #{vicreg_forward.1} parent=1 // pred_check
      _
    $region95: #{vicreg_forward.1} parent=1 // pred_check_branch
      %118 = sbr.rel (0) target = $region97
    $region96: #{vicreg_forward.1} parent=1 // pred_region
      _
    $region97: #{vicreg_forward.1} parent=1 // pred_fallthru
      _
    // Predicated region
    $region98: #{vicreg_forward.1} parent=1 // pred_check
      _
    $region99: #{vicreg_forward.1} parent=1 // pred_check_branch
      %120 = sbr.rel (0) target = $region101
    $region100: #{vicreg_forward.1} parent=1 // pred_region
      _
    $region101: #{vicreg_forward.1} parent=1 // pred_fallthru
      _
    // Predicated region
    $region102: #{vicreg_forward.1} parent=1 // pred_check
      _
    $region103: #{vicreg_forward.1} parent=1 // pred_check_branch
      %122 = sbr.rel (0) target = $region105
    $region104: #{vicreg_forward.1} parent=1 // pred_region
      _
    $region105: #{vicreg_forward.1} parent=1 // pred_fallthru
      _
    // Predicated region
    $region106: #{vicreg_forward.1} parent=1 // pred_check
      _
    $region107: #{vicreg_forward.1} parent=1 // pred_check_branch
      %124 = sbr.rel (0) target = $region109
    $region108: #{vicreg_forward.1} parent=1 // pred_region
      _
    $region109: #{vicreg_forward.1} parent=1 // pred_fallthru
      _
    // Predicated region
    $region110: #{vicreg_forward.1} parent=1 // pred_check
      _
    $region111: #{vicreg_forward.1} parent=1 // pred_check_branch
      %126 = sbr.rel (0) target = $region113
    $region112: #{vicreg_forward.1} parent=1 // pred_region
      _
    $region113: #{vicreg_forward.1} parent=1 // pred_fallthru
      _
    // Predicated region
    $region114: #{vicreg_forward.1} parent=1 // pred_check
      _
    $region115: #{vicreg_forward.1} parent=1 // pred_check_branch
      %128 = sbr.rel (0) target = $region117
    $region116: #{vicreg_forward.1} parent=1 // pred_region
      _
    $region117: #{vicreg_forward.1} parent=1 // pred_fallthru
      _
    // Predicated region
    $region118: #{vicreg_forward.1} parent=1 // pred_check
      _
    $region119: #{vicreg_forward.1} parent=1 // pred_check_branch
      %130 = sbr.rel (0) target = $region121
    $region120: #{vicreg_forward.1} parent=1 // pred_region
      _
    $region121: #{vicreg_forward.1} parent=1 // pred_fallthru
      _
    // Predicated region
    $region122: #{vicreg_forward.1} parent=1 // pred_check
      _
    $region123: #{vicreg_forward.1} parent=1 // pred_check_branch
      %132 = sbr.rel (0) target = $region125
    $region124: #{vicreg_forward.1} parent=1 // pred_region
      _
    $region125: #{vicreg_forward.1} parent=1 // pred_fallthru
      _
    // Predicated region
    $region126: #{vicreg_forward.1} parent=1 // pred_check
      _
    $region127: #{vicreg_forward.1} parent=1 // pred_check_branch
      %134 = sbr.rel (0) target = $region129
    $region128: #{vicreg_forward.1} parent=1 // pred_region
      _
    $region129: #{vicreg_forward.1} parent=1 // pred_fallthru
      _
    %v136 = vld [vmem:[%s1] sm:$0xff]
    %v137 = vld [vmem:[%s1 + $0x8] sm:$0xff]
    %v138 = vld [vmem:[%s1 + $0x10] sm:$0xff]
    %v139 = vld [vmem:[%s1 + $0x18] sm:$0xff]
    %v140 = vld [vmem:[%s1 + $0x20] sm:$0xff]
    %v141 = vld [vmem:[%s1 + $0x28] sm:$0xff]
    %v142 = vld [vmem:[%s1 + $0x30] sm:$0xff]
    %v143 = vld [vmem:[%s1 + $0x38] sm:$0xff]
    %v144 = vld [vmem:[%s1 + $0x40] sm:$0xff]
    %v145 = vld [vmem:[%s1 + $0x48] sm:$0xff]
    %v146 = vld [vmem:[%s1 + $0x50] sm:$0xff]
    %v147 = vld [vmem:[%s1 + $0x58] sm:$0xff]
    %v148 = vld [vmem:[%s1 + $0x60] sm:$0xff]
    %v149 = vld [vmem:[%s1 + $0x68] sm:$0xff]
    %v150 = vld [vmem:[%s1 + $0x70] sm:$0xff]
    %v151 = vld [vmem:[%s1 + $0x78] sm:$0xff]
    %v152 = vld [vmem:[%s1 + $0x80] sm:$0xff]
    %v153 = vld [vmem:[%s1 + $0x88] sm:$0xff]
    %v154 = vld [vmem:[%s1 + $0x90] sm:$0xff]
    %v155 = vld [vmem:[%s1 + $0x98] sm:$0xff]
    %v156 = vld [vmem:[%s1 + $0xa0] sm:$0xff]
    %v157 = vld [vmem:[%s1 + $0xa8] sm:$0xff]
    %v158 = vld [vmem:[%s1 + $0xb0] sm:$0xff]
    %v159 = vld [vmem:[%s1 + $0xb8] sm:$0xff]
    %v160 = vld [vmem:[%s1 + $0xc0] sm:$0xff]
    %v161 = vld [vmem:[%s1 + $0xc8] sm:$0xff]
    %v162 = vld [vmem:[%s1 + $0xd0] sm:$0xff]
    %v163 = vld [vmem:[%s1 + $0xd8] sm:$0xff]
    %v164 = vld [vmem:[%s1 + $0xe0] sm:$0xff]
    %v165 = vld [vmem:[%s1 + $0xe8] sm:$0xff]
    %v166 = vld [vmem:[%s1 + $0xf0] sm:$0xff]
    %v167 = vld [vmem:[%s1 + $0xf8] sm:$0xff]
    %v168 = vld [vmem:[%s1 + $0x100] sm:$0xff]
    %v169 = vld [vmem:[%s1 + $0x108] sm:$0xff]
    %v170 = vld [vmem:[%s1 + $0x110] sm:$0xff]
    %v171 = vld [vmem:[%s1 + $0x118] sm:$0xff]
    %v172 = vld [vmem:[%s1 + $0x120] sm:$0xff]
    %v173 = vld [vmem:[%s1 + $0x128] sm:$0xff]
    %v174 = vld [vmem:[%s1 + $0x130] sm:$0xff]
    %v175 = vld [vmem:[%s1 + $0x138] sm:$0xff]
    %v176 = vld [vmem:[%s1 + $0x140] sm:$0xff]
    %v177 = vld [vmem:[%s1 + $0x148] sm:$0xff]
    %v178 = vld [vmem:[%s1 + $0x150] sm:$0xff]
    %v179 = vld [vmem:[%s1 + $0x158] sm:$0xff]
    %v180 = vld [vmem:[%s1 + $0x160] sm:$0xff]
    %v181 = vld [vmem:[%s1 + $0x168] sm:$0xff]
    %v182 = vld [vmem:[%s1 + $0x170] sm:$0xff]
    %v183 = vld [vmem:[%s1 + $0x178] sm:$0xff]
    %v184 = vld [vmem:[%s1 + $0x180] sm:$0xff]
    %v185 = vld [vmem:[%s1 + $0x188] sm:$0xff]
    %v186 = vld [vmem:[%s1 + $0x190] sm:$0xff]
    %v187 = vld [vmem:[%s1 + $0x198] sm:$0xff]
    %v188 = vld [vmem:[%s1 + $0x1a0] sm:$0xff]
    %v189 = vld [vmem:[%s1 + $0x1a8] sm:$0xff]
    %v190 = vld [vmem:[%s1 + $0x1b0] sm:$0xff]
    %v191 = vld [vmem:[%s1 + $0x1b8] sm:$0xff]
    %v192 = vld [vmem:[%s1 + $0x1c0] sm:$0xff]
    %v193 = vld [vmem:[%s1 + $0x1c8] sm:$0xff]
    %v194 = vld [vmem:[%s1 + $0x1d0] sm:$0xff]
    %v195 = vld [vmem:[%s1 + $0x1d8] sm:$0xff]
    %v196 = vld [vmem:[%s1 + $0x1e0] sm:$0xff]
    %v197 = vld [vmem:[%s1 + $0x1e8] sm:$0xff]
    %v198 = vld [vmem:[%s1 + $0x1f0] sm:$0xff]
    %v199 = vld [vmem:[%s1 + $0x1f8] sm:$0xff]
    %v200 = vld [vmem:[%s1 + $0x200] sm:$0xff]
    %v201 = vld [vmem:[%s1 + $0x208] sm:$0xff]
    %v202 = vld [vmem:[%s1 + $0x210] sm:$0xff]
    %v203 = vld [vmem:[%s1 + $0x218] sm:$0xff]
    %v204 = vld [vmem:[%s1 + $0x220] sm:$0xff]
    %v205 = vld [vmem:[%s1 + $0x228] sm:$0xff]
    %v206 = vld [vmem:[%s1 + $0x230] sm:$0xff]
    %v207 = vld [vmem:[%s1 + $0x238] sm:$0xff]
    %v208 = vld [vmem:[%s1 + $0x240] sm:$0xff]
    %v209 = vld [vmem:[%s1 + $0x248] sm:$0xff]
    %v210 = vld [vmem:[%s1 + $0x250] sm:$0xff]
    %v211 = vld [vmem:[%s1 + $0x258] sm:$0xff]
    %v212 = vld [vmem:[%s1 + $0x260] sm:$0xff]
    %v213 = vld [vmem:[%s1 + $0x268] sm:$0xff]
    %v214 = vld [vmem:[%s1 + $0x270] sm:$0xff]
    %v215 = vld [vmem:[%s1 + $0x278] sm:$0xff]
    %v216 = vld [vmem:[%s1 + $0x280] sm:$0xff]
    %v217 = vld [vmem:[%s1 + $0x288] sm:$0xff]
    %v218 = vld [vmem:[%s1 + $0x290] sm:$0xff]
    %v219 = vld [vmem:[%s1 + $0x298] sm:$0xff]
    %v220 = vld [vmem:[%s1 + $0x2a0] sm:$0xff]
    %v221 = vld [vmem:[%s1 + $0x2a8] sm:$0xff]
    %v222 = vld [vmem:[%s1 + $0x2b0] sm:$0xff]
    %v223 = vld [vmem:[%s1 + $0x2b8] sm:$0xff]
    %v224 = vld [vmem:[%s1 + $0x2c0] sm:$0xff]
    %v225 = vld [vmem:[%s1 + $0x2c8] sm:$0xff]
    %v226 = vld [vmem:[%s1 + $0x2d0] sm:$0xff]
    %v227 = vld [vmem:[%s1 + $0x2d8] sm:$0xff]
    %v228 = vld [vmem:[%s1 + $0x2e0] sm:$0xff]
    %v229 = vld [vmem:[%s1 + $0x2e8] sm:$0xff]
    %v230 = vld [vmem:[%s1 + $0x2f0] sm:$0xff]
    %v231 = vld [vmem:[%s1 + $0x2f8] sm:$0xff]
    %v232 = vld [vmem:[%s3] sm:$0xf]
    %v233 = vld [vmem:[%s3 + $0x4] sm:$0xf]
    %v234 = vld [vmem:[%s3 + $0x8] sm:$0xf]
    %v235 = vld [vmem:[%s3 + $0xc] sm:$0xf]
    %v236 = vld [vmem:[%s3 + $0x10] sm:$0xf]
    %v237 = vld [vmem:[%s3 + $0x14] sm:$0xf]
    %v238 = vld [vmem:[%s3 + $0x18] sm:$0xf]
    %v239 = vld [vmem:[%s3 + $0x1c] sm:$0xf]
    %v240 = vld [vmem:[%s3 + $0x20] sm:$0xf]
    %v241 = vld [vmem:[%s3 + $0x24] sm:$0xf]
    %v242 = vld [vmem:[%s3 + $0x28] sm:$0xf]
    %v243 = vld [vmem:[%s3 + $0x2c] sm:$0xf]
    %v244 = vld [vmem:[%s3 + $0x30] sm:$0xf]
    %v245 = vld [vmem:[%s3 + $0x34] sm:$0xf]
    %v246 = vld [vmem:[%s3 + $0x38] sm:$0xf]
    %v247 = vld [vmem:[%s3 + $0x3c] sm:$0xf]
    %v248 = vld [vmem:[%s3 + $0x40] sm:$0xf]
    %v249 = vld [vmem:[%s3 + $0x44] sm:$0xf]
    %v250 = vld [vmem:[%s3 + $0x48] sm:$0xf]
    %v251 = vld [vmem:[%s3 + $0x4c] sm:$0xf]
    %v252 = vld [vmem:[%s3 + $0x50] sm:$0xf]
    %v253 = vld [vmem:[%s3 + $0x54] sm:$0xf]
    %v254 = vld [vmem:[%s3 + $0x58] sm:$0xf]
    %v255 = vld [vmem:[%s3 + $0x5c] sm:$0xf]
    %v256 = vld [vmem:[%s3 + $0x60] sm:$0xf]
    %v257 = vld [vmem:[%s3 + $0x64] sm:$0xf]
    %v258 = vld [vmem:[%s3 + $0x68] sm:$0xf]
    %v259 = vld [vmem:[%s3 + $0x6c] sm:$0xf]
    %v260 = vld [vmem:[%s3 + $0x70] sm:$0xf]
    %v261 = vld [vmem:[%s3 + $0x74] sm:$0xf]
    %v262 = vld [vmem:[%s3 + $0x78] sm:$0xf]
    %v263 = vld [vmem:[%s3 + $0x7c] sm:$0xf]
    %v264 = vld [vmem:[%s3 + $0x80] sm:$0xf]
    %v265 = vld [vmem:[%s3 + $0x84] sm:$0xf]
    %v266 = vld [vmem:[%s3 + $0x88] sm:$0xf]
    %v267 = vld [vmem:[%s3 + $0x8c] sm:$0xf]
    %v268 = vld [vmem:[%s3 + $0x90] sm:$0xf]
    %v269 = vld [vmem:[%s3 + $0x94] sm:$0xf]
    %v270 = vld [vmem:[%s3 + $0x98] sm:$0xf]
    %v271 = vld [vmem:[%s3 + $0x9c] sm:$0xf]
    %v272 = vld [vmem:[%s3 + $0xa0] sm:$0xf]
    %v273 = vld [vmem:[%s3 + $0xa4] sm:$0xf]
    %v274 = vld [vmem:[%s3 + $0xa8] sm:$0xf]
    %v275 = vld [vmem:[%s3 + $0xac] sm:$0xf]
    %v276 = vld [vmem:[%s3 + $0xb0] sm:$0xf]
    %v277 = vld [vmem:[%s3 + $0xb4] sm:$0xf]
    %v278 = vld [vmem:[%s3 + $0xb8] sm:$0xf]
    %v279 = vld [vmem:[%s3 + $0xbc] sm:$0xf]
    %v280 = vld [vmem:[%s3 + $0xc0] sm:$0xf]
    %v281 = vld [vmem:[%s3 + $0xc4] sm:$0xf]
    %v282 = vld [vmem:[%s3 + $0xc8] sm:$0xf]
    %v283 = vld [vmem:[%s3 + $0xcc] sm:$0xf]
    %v284 = vld [vmem:[%s3 + $0xd0] sm:$0xf]
    %v285 = vld [vmem:[%s3 + $0xd4] sm:$0xf]
    %v286 = vld [vmem:[%s3 + $0xd8] sm:$0xf]
    %v287 = vld [vmem:[%s3 + $0xdc] sm:$0xf]
    %v288 = vld [vmem:[%s3 + $0xe0] sm:$0xf]
    %v289 = vld [vmem:[%s3 + $0xe4] sm:$0xf]
    %v290 = vld [vmem:[%s3 + $0xe8] sm:$0xf]
    %v291 = vld [vmem:[%s3 + $0xec] sm:$0xf]
    %v292 = vld [vmem:[%s3 + $0xf0] sm:$0xf]
    %v293 = vld [vmem:[%s3 + $0xf4] sm:$0xf]
    %v294 = vld [vmem:[%s3 + $0xf8] sm:$0xf]
    %v295 = vld [vmem:[%s3 + $0xfc] sm:$0xf]
    %v296 = vld [vmem:[%s3 + $0x100] sm:$0xf]
    %v297 = vld [vmem:[%s3 + $0x104] sm:$0xf]
    %v298 = vld [vmem:[%s3 + $0x108] sm:$0xf]
    %v299 = vld [vmem:[%s3 + $0x10c] sm:$0xf]
    %v300 = vld [vmem:[%s3 + $0x110] sm:$0xf]
    %v301 = vld [vmem:[%s3 + $0x114] sm:$0xf]
    %v302 = vld [vmem:[%s3 + $0x118] sm:$0xf]
    %v303 = vld [vmem:[%s3 + $0x11c] sm:$0xf]
    %v304 = vld [vmem:[%s3 + $0x120] sm:$0xf]
    %v305 = vld [vmem:[%s3 + $0x124] sm:$0xf]
    %v306 = vld [vmem:[%s3 + $0x128] sm:$0xf]
    %v307 = vld [vmem:[%s3 + $0x12c] sm:$0xf]
    %v308 = vld [vmem:[%s3 + $0x130] sm:$0xf]
    %v309 = vld [vmem:[%s3 + $0x134] sm:$0xf]
    %v310 = vld [vmem:[%s3 + $0x138] sm:$0xf]
    %v311 = vld [vmem:[%s3 + $0x13c] sm:$0xf]
    %v312 = vld [vmem:[%s3 + $0x140] sm:$0xf]
    %v313 = vld [vmem:[%s3 + $0x144] sm:$0xf]
    %v314 = vld [vmem:[%s3 + $0x148] sm:$0xf]
    %v315 = vld [vmem:[%s3 + $0x14c] sm:$0xf]
    %v316 = vld [vmem:[%s3 + $0x150] sm:$0xf]
    %v317 = vld [vmem:[%s3 + $0x154] sm:$0xf]
    %v318 = vld [vmem:[%s3 + $0x158] sm:$0xf]
    %v319 = vld [vmem:[%s3 + $0x15c] sm:$0xf]
    %v320 = vld [vmem:[%s3 + $0x160] sm:$0xf]
    %v321 = vld [vmem:[%s3 + $0x164] sm:$0xf]
    %v322 = vld [vmem:[%s3 + $0x168] sm:$0xf]
    %v323 = vld [vmem:[%s3 + $0x16c] sm:$0xf]
    %v324 = vld [vmem:[%s3 + $0x170] sm:$0xf]
    %v325 = vld [vmem:[%s3 + $0x174] sm:$0xf]
    %v326 = vld [vmem:[%s3 + $0x178] sm:$0xf]
    %v327 = vld [vmem:[%s3 + $0x17c] sm:$0xf]
    %v328 = vld [vmem:[%s3 + $0x180] sm:$0xf]
    %v329 = vld [vmem:[%s3 + $0x184] sm:$0xf]
    %v330 = vld [vmem:[%s3 + $0x188] sm:$0xf]
    %v331 = vld [vmem:[%s3 + $0x18c] sm:$0xf]
    %v332 = vld [vmem:[%s3 + $0x190] sm:$0xf]
    %v333 = vld [vmem:[%s3 + $0x194] sm:$0xf]
    %v334 = vld [vmem:[%s3 + $0x198] sm:$0xf]
    %v335 = vld [vmem:[%s3 + $0x19c] sm:$0xf]
    %v336 = vld [vmem:[%s3 + $0x1a0] sm:$0xf]
    %v337 = vld [vmem:[%s3 + $0x1a4] sm:$0xf]
    %v338 = vld [vmem:[%s3 + $0x1a8] sm:$0xf]
    %v339 = vld [vmem:[%s3 + $0x1ac] sm:$0xf]
    %v340 = vld [vmem:[%s3 + $0x1b0] sm:$0xf]
    %v341 = vld [vmem:[%s3 + $0x1b4] sm:$0xf]
    %v342 = vld [vmem:[%s3 + $0x1b8] sm:$0xf]
    %v343 = vld [vmem:[%s3 + $0x1bc] sm:$0xf]
    %v344 = vld [vmem:[%s3 + $0x1c0] sm:$0xf]
    %v345 = vld [vmem:[%s3 + $0x1c4] sm:$0xf]
    %v346 = vld [vmem:[%s3 + $0x1c8] sm:$0xf]
    %v347 = vld [vmem:[%s3 + $0x1cc] sm:$0xf]
    %v348 = vld [vmem:[%s3 + $0x1d0] sm:$0xf]
    %v349 = vld [vmem:[%s3 + $0x1d4] sm:$0xf]
    %v350 = vld [vmem:[%s3 + $0x1d8] sm:$0xf]
    %v351 = vld [vmem:[%s3 + $0x1dc] sm:$0xf]
    %v352 = vld [vmem:[%s3 + $0x1e0] sm:$0xf]
    %v353 = vld [vmem:[%s3 + $0x1e4] sm:$0xf]
    %v354 = vld [vmem:[%s3 + $0x1e8] sm:$0xf]
    %v355 = vld [vmem:[%s3 + $0x1ec] sm:$0xf]
    %v356 = vld [vmem:[%s3 + $0x1f0] sm:$0xf]
    %v357 = vld [vmem:[%s3 + $0x1f4] sm:$0xf]
    %v358 = vld [vmem:[%s3 + $0x1f8] sm:$0xf]
    %v359 = vld [vmem:[%s3 + $0x1fc] sm:$0xf]
    %v360 = vld [vmem:[%s3 + $0x200] sm:$0xf]
    %v361 = vld [vmem:[%s3 + $0x204] sm:$0xf]
    %v362 = vld [vmem:[%s3 + $0x208] sm:$0xf]
    %v363 = vld [vmem:[%s3 + $0x20c] sm:$0xf]
    %v364 = vld [vmem:[%s3 + $0x210] sm:$0xf]
    %v365 = vld [vmem:[%s3 + $0x214] sm:$0xf]
    %v366 = vld [vmem:[%s3 + $0x218] sm:$0xf]
    %v367 = vld [vmem:[%s3 + $0x21c] sm:$0xf]
    %v368 = vld [vmem:[%s3 + $0x220] sm:$0xf]
    %v369 = vld [vmem:[%s3 + $0x224] sm:$0xf]
    %v370 = vld [vmem:[%s3 + $0x228] sm:$0xf]
    %v371 = vld [vmem:[%s3 + $0x22c] sm:$0xf]
    %v372 = vld [vmem:[%s3 + $0x230] sm:$0xf]
    %v373 = vld [vmem:[%s3 + $0x234] sm:$0xf]
    %v374 = vld [vmem:[%s3 + $0x238] sm:$0xf]
    %v375 = vld [vmem:[%s3 + $0x23c] sm:$0xf]
    %v376 = vld [vmem:[%s3 + $0x240] sm:$0xf]
    %v377 = vld [vmem:[%s3 + $0x244] sm:$0xf]
    %v378 = vld [vmem:[%s3 + $0x248] sm:$0xf]
    %v379 = vld [vmem:[%s3 + $0x24c] sm:$0xf]
    %v380 = vld [vmem:[%s3 + $0x250] sm:$0xf]
    %v381 = vld [vmem:[%s3 + $0x254] sm:$0xf]
    %v382 = vld [vmem:[%s3 + $0x258] sm:$0xf]
    %v383 = vld [vmem:[%s3 + $0x25c] sm:$0xf]
    %v384 = vld [vmem:[%s3 + $0x260] sm:$0xf]
    %v385 = vld [vmem:[%s3 + $0x264] sm:$0xf]
    %v386 = vld [vmem:[%s3 + $0x268] sm:$0xf]
    %v387 = vld [vmem:[%s3 + $0x26c] sm:$0xf]
    %v388 = vld [vmem:[%s3 + $0x270] sm:$0xf]
    %v389 = vld [vmem:[%s3 + $0x274] sm:$0xf]
    %v390 = vld [vmem:[%s3 + $0x278] sm:$0xf]
    %v391 = vld [vmem:[%s3 + $0x27c] sm:$0xf]
    %v392 = vld [vmem:[%s3 + $0x280] sm:$0xf]
    %v393 = vld [vmem:[%s3 + $0x284] sm:$0xf]
    %v394 = vld [vmem:[%s3 + $0x288] sm:$0xf]
    %v395 = vld [vmem:[%s3 + $0x28c] sm:$0xf]
    %v396 = vld [vmem:[%s3 + $0x290] sm:$0xf]
    %v397 = vld [vmem:[%s3 + $0x294] sm:$0xf]
    %v398 = vld [vmem:[%s3 + $0x298] sm:$0xf]
    %v399 = vld [vmem:[%s3 + $0x29c] sm:$0xf]
    %v400 = vld [vmem:[%s3 + $0x2a0] sm:$0xf]
    %v401 = vld [vmem:[%s3 + $0x2a4] sm:$0xf]
    %v402 = vld [vmem:[%s3 + $0x2a8] sm:$0xf]
    %v403 = vld [vmem:[%s3 + $0x2ac] sm:$0xf]
    %v404 = vld [vmem:[%s3 + $0x2b0] sm:$0xf]
    %v405 = vld [vmem:[%s3 + $0x2b4] sm:$0xf]
    %v406 = vld [vmem:[%s3 + $0x2b8] sm:$0xf]
    %v407 = vld [vmem:[%s3 + $0x2bc] sm:$0xf]
    %v408 = vld [vmem:[%s3 + $0x2c0] sm:$0xf]
    %v409 = vld [vmem:[%s3 + $0x2c4] sm:$0xf]
    %v410 = vld [vmem:[%s3 + $0x2c8] sm:$0xf]
    %v411 = vld [vmem:[%s3 + $0x2cc] sm:$0xf]
    %v412 = vld [vmem:[%s3 + $0x2d0] sm:$0xf]
    %v413 = vld [vmem:[%s3 + $0x2d4] sm:$0xf]
    %v414 = vld [vmem:[%s3 + $0x2d8] sm:$0xf]
    %v415 = vld [vmem:[%s3 + $0x2dc] sm:$0xf]
    %v416 = vld [vmem:[%s3 + $0x2e0] sm:$0xf]
    %v417 = vld [vmem:[%s3 + $0x2e4] sm:$0xf]
    %v418 = vld [vmem:[%s3 + $0x2e8] sm:$0xf]
    %v419 = vld [vmem:[%s3 + $0x2ec] sm:$0xf]
    %v420 = vld [vmem:[%s3 + $0x2f0] sm:$0xf]
    %v421 = vld [vmem:[%s3 + $0x2f4] sm:$0xf]
    %v422 = vld [vmem:[%s3 + $0x2f8] sm:$0xf]
    %v423 = vld [vmem:[%s3 + $0x2fc] sm:$0xf]
    %v424 = vld [vmem:[%s3 + $0x300] sm:$0xf]
    %v425 = vld [vmem:[%s3 + $0x304] sm:$0xf]
    %v426 = vld [vmem:[%s3 + $0x308] sm:$0xf]
    %v427 = vld [vmem:[%s3 + $0x30c] sm:$0xf]
    %v428 = vld [vmem:[%s3 + $0x310] sm:$0xf]
    %v429 = vld [vmem:[%s3 + $0x314] sm:$0xf]
    %v430 = vld [vmem:[%s3 + $0x318] sm:$0xf]
    %v431 = vld [vmem:[%s3 + $0x31c] sm:$0xf]
    %v432 = vld [vmem:[%s3 + $0x320] sm:$0xf]
    %v433 = vld [vmem:[%s3 + $0x324] sm:$0xf]
    %v434 = vld [vmem:[%s3 + $0x328] sm:$0xf]
    %v435 = vld [vmem:[%s3 + $0x32c] sm:$0xf]
    %v436 = vld [vmem:[%s3 + $0x330] sm:$0xf]
    %v437 = vld [vmem:[%s3 + $0x334] sm:$0xf]
    %v438 = vld [vmem:[%s3 + $0x338] sm:$0xf]
    %v439 = vld [vmem:[%s3 + $0x33c] sm:$0xf]
    %v440 = vld [vmem:[%s3 + $0x340] sm:$0xf]
    %v441 = vld [vmem:[%s3 + $0x344] sm:$0xf]
    %v442 = vld [vmem:[%s3 + $0x348] sm:$0xf]
    %v443 = vld [vmem:[%s3 + $0x34c] sm:$0xf]
    %v444 = vld [vmem:[%s3 + $0x350] sm:$0xf]
    %v445 = vld [vmem:[%s3 + $0x354] sm:$0xf]
    %v446 = vld [vmem:[%s3 + $0x358] sm:$0xf]
    %v447 = vld [vmem:[%s3 + $0x35c] sm:$0xf]
    %v448 = vld [vmem:[%s3 + $0x360] sm:$0xf]
    %v449 = vld [vmem:[%s3 + $0x364] sm:$0xf]
    %v450 = vld [vmem:[%s3 + $0x368] sm:$0xf]
    %v451 = vld [vmem:[%s3 + $0x36c] sm:$0xf]
    %v452 = vld [vmem:[%s3 + $0x370] sm:$0xf]
    %v453 = vld [vmem:[%s3 + $0x374] sm:$0xf]
    %v454 = vld [vmem:[%s3 + $0x378] sm:$0xf]
    %v455 = vld [vmem:[%s3 + $0x37c] sm:$0xf]
    %v456 = vld [vmem:[%s3 + $0x380] sm:$0xf]
    %v457 = vld [vmem:[%s3 + $0x384] sm:$0xf]
    %v458 = vld [vmem:[%s3 + $0x388] sm:$0xf]
    %v459 = vld [vmem:[%s3 + $0x38c] sm:$0xf]
    %v460 = vld [vmem:[%s3 + $0x390] sm:$0xf]
    %v461 = vld [vmem:[%s3 + $0x394] sm:$0xf]
    %v462 = vld [vmem:[%s3 + $0x398] sm:$0xf]
    %v463 = vld [vmem:[%s3 + $0x39c] sm:$0xf]
    %v464 = vld [vmem:[%s3 + $0x3a0] sm:$0xf]
    %v465 = vld [vmem:[%s3 + $0x3a4] sm:$0xf]
    %v466 = vld [vmem:[%s3 + $0x3a8] sm:$0xf]
    %v467 = vld [vmem:[%s3 + $0x3ac] sm:$0xf]
    %v468 = vld [vmem:[%s3 + $0x3b0] sm:$0xf]
    %v469 = vld [vmem:[%s3 + $0x3b4] sm:$0xf]
    %v470 = vld [vmem:[%s3 + $0x3b8] sm:$0xf]
    %v471 = vld [vmem:[%s3 + $0x3bc] sm:$0xf]
    %v472 = vld [vmem:[%s3 + $0x3c0] sm:$0xf]
    %v473 = vld [vmem:[%s3 + $0x3c4] sm:$0xf]
    %v474 = vld [vmem:[%s3 + $0x3c8] sm:$0xf]
    %v475 = vld [vmem:[%s3 + $0x3cc] sm:$0xf]
    %v476 = vld [vmem:[%s3 + $0x3d0] sm:$0xf]
    %v477 = vld [vmem:[%s3 + $0x3d4] sm:$0xf]
    %v478 = vld [vmem:[%s3 + $0x3d8] sm:$0xf]
    %v479 = vld [vmem:[%s3 + $0x3dc] sm:$0xf]
    %v480 = vld [vmem:[%s3 + $0x3e0] sm:$0xf]
    %v481 = vld [vmem:[%s3 + $0x3e4] sm:$0xf]
    %v482 = vld [vmem:[%s3 + $0x3e8] sm:$0xf]
    %v483 = vld [vmem:[%s3 + $0x3ec] sm:$0xf]
    %v484 = vld [vmem:[%s3 + $0x3f0] sm:$0xf]
    %v485 = vld [vmem:[%s3 + $0x3f4] sm:$0xf]
    %v486 = vld [vmem:[%s3 + $0x3f8] sm:$0xf]
    %v487 = vld [vmem:[%s3 + $0x3fc] sm:$0xf]
    %v488 = vld [vmem:[%s3 + $0x400] sm:$0xf]
    %v489 = vld [vmem:[%s3 + $0x404] sm:$0xf]
    %v490 = vld [vmem:[%s3 + $0x408] sm:$0xf]
    %v491 = vld [vmem:[%s3 + $0x40c] sm:$0xf]
    %v492 = vld [vmem:[%s3 + $0x410] sm:$0xf]
    %v493 = vld [vmem:[%s3 + $0x414] sm:$0xf]
    %v494 = vld [vmem:[%s3 + $0x418] sm:$0xf]
    %v495 = vld [vmem:[%s3 + $0x41c] sm:$0xf]
    %v496 = vld [vmem:[%s3 + $0x420] sm:$0xf]
    %v497 = vld [vmem:[%s3 + $0x424] sm:$0xf]
    %v498 = vld [vmem:[%s3 + $0x428] sm:$0xf]
    %v499 = vld [vmem:[%s3 + $0x42c] sm:$0xf]
    %v500 = vld [vmem:[%s3 + $0x430] sm:$0xf]
    %v501 = vld [vmem:[%s3 + $0x434] sm:$0xf]
    %v502 = vld [vmem:[%s3 + $0x438] sm:$0xf]
    %v503 = vld [vmem:[%s3 + $0x43c] sm:$0xf]
    %v504 = vld [vmem:[%s3 + $0x440] sm:$0xf]
    %v505 = vld [vmem:[%s3 + $0x444] sm:$0xf]
    %v506 = vld [vmem:[%s3 + $0x448] sm:$0xf]
    %v507 = vld [vmem:[%s3 + $0x44c] sm:$0xf]
    %v508 = vld [vmem:[%s3 + $0x450] sm:$0xf]
    %v509 = vld [vmem:[%s3 + $0x454] sm:$0xf]
    %v510 = vld [vmem:[%s3 + $0x458] sm:$0xf]
    %v511 = vld [vmem:[%s3 + $0x45c] sm:$0xf]
    %v512 = vld [vmem:[%s3 + $0x460] sm:$0xf]
    %v513 = vld [vmem:[%s3 + $0x464] sm:$0xf]
    %v514 = vld [vmem:[%s3 + $0x468] sm:$0xf]
    %v515 = vld [vmem:[%s3 + $0x46c] sm:$0xf]
    %v516 = vld [vmem:[%s3 + $0x470] sm:$0xf]
    %v517 = vld [vmem:[%s3 + $0x474] sm:$0xf]
    %v518 = vld [vmem:[%s3 + $0x478] sm:$0xf]
    %v519 = vld [vmem:[%s3 + $0x47c] sm:$0xf]
    %v520 = vld [vmem:[%s3 + $0x480] sm:$0xf]
    %v521 = vld [vmem:[%s3 + $0x484] sm:$0xf]
    %v522 = vld [vmem:[%s3 + $0x488] sm:$0xf]
    %v523 = vld [vmem:[%s3 + $0x48c] sm:$0xf]
    %v524 = vld [vmem:[%s3 + $0x490] sm:$0xf]
    %v525 = vld [vmem:[%s3 + $0x494] sm:$0xf]
    %v526 = vld [vmem:[%s3 + $0x498] sm:$0xf]
    %v527 = vld [vmem:[%s3 + $0x49c] sm:$0xf]
    %v528 = vld [vmem:[%s3 + $0x4a0] sm:$0xf]
    %v529 = vld [vmem:[%s3 + $0x4a4] sm:$0xf]
    %v530 = vld [vmem:[%s3 + $0x4a8] sm:$0xf]
    %v531 = vld [vmem:[%s3 + $0x4ac] sm:$0xf]
    %v532 = vld [vmem:[%s3 + $0x4b0] sm:$0xf]
    %v533 = vld [vmem:[%s3 + $0x4b4] sm:$0xf]
    %v534 = vld [vmem:[%s3 + $0x4b8] sm:$0xf]
    %v535 = vld [vmem:[%s3 + $0x4bc] sm:$0xf]
    %v536 = vld [vmem:[%s3 + $0x4c0] sm:$0xf]
    %v537 = vld [vmem:[%s3 + $0x4c4] sm:$0xf]
    %v538 = vld [vmem:[%s3 + $0x4c8] sm:$0xf]
    %v539 = vld [vmem:[%s3 + $0x4cc] sm:$0xf]
    %v540 = vld [vmem:[%s3 + $0x4d0] sm:$0xf]
    %v541 = vld [vmem:[%s3 + $0x4d4] sm:$0xf]
    %v542 = vld [vmem:[%s3 + $0x4d8] sm:$0xf]
    %v543 = vld [vmem:[%s3 + $0x4dc] sm:$0xf]
    %v544 = vld [vmem:[%s3 + $0x4e0] sm:$0xf]
    %v545 = vld [vmem:[%s3 + $0x4e4] sm:$0xf]
    %v546 = vld [vmem:[%s3 + $0x4e8] sm:$0xf]
    %v547 = vld [vmem:[%s3 + $0x4ec] sm:$0xf]
    %v548 = vld [vmem:[%s3 + $0x4f0] sm:$0xf]
    %v549 = vld [vmem:[%s3 + $0x4f4] sm:$0xf]
    %v550 = vld [vmem:[%s3 + $0x4f8] sm:$0xf]
    %v551 = vld [vmem:[%s3 + $0x4fc] sm:$0xf]
    %v552 = vld [vmem:[%s3 + $0x500] sm:$0xf]
    %v553 = vld [vmem:[%s3 + $0x504] sm:$0xf]
    %v554 = vld [vmem:[%s3 + $0x508] sm:$0xf]
    %v555 = vld [vmem:[%s3 + $0x50c] sm:$0xf]
    %v556 = vld [vmem:[%s3 + $0x510] sm:$0xf]
    %v557 = vld [vmem:[%s3 + $0x514] sm:$0xf]
    %v558 = vld [vmem:[%s3 + $0x518] sm:$0xf]
    %v559 = vld [vmem:[%s3 + $0x51c] sm:$0xf]
    %v560 = vld [vmem:[%s3 + $0x520] sm:$0xf]
    %v561 = vld [vmem:[%s3 + $0x524] sm:$0xf]
    %v562 = vld [vmem:[%s3 + $0x528] sm:$0xf]
    %v563 = vld [vmem:[%s3 + $0x52c] sm:$0xf]
    %v564 = vld [vmem:[%s3 + $0x530] sm:$0xf]
    %v565 = vld [vmem:[%s3 + $0x534] sm:$0xf]
    %v566 = vld [vmem:[%s3 + $0x538] sm:$0xf]
    %v567 = vld [vmem:[%s3 + $0x53c] sm:$0xf]
    %v568 = vld [vmem:[%s3 + $0x540] sm:$0xf]
    %v569 = vld [vmem:[%s3 + $0x544] sm:$0xf]
    %v570 = vld [vmem:[%s3 + $0x548] sm:$0xf]
    %v571 = vld [vmem:[%s3 + $0x54c] sm:$0xf]
    %v572 = vld [vmem:[%s3 + $0x550] sm:$0xf]
    %v573 = vld [vmem:[%s3 + $0x554] sm:$0xf]
    %v574 = vld [vmem:[%s3 + $0x558] sm:$0xf]
    %v575 = vld [vmem:[%s3 + $0x55c] sm:$0xf]
    %v576 = vld [vmem:[%s3 + $0x560] sm:$0xf]
    %v577 = vld [vmem:[%s3 + $0x564] sm:$0xf]
    %v578 = vld [vmem:[%s3 + $0x568] sm:$0xf]
    %v579 = vld [vmem:[%s3 + $0x56c] sm:$0xf]
    %v580 = vld [vmem:[%s3 + $0x570] sm:$0xf]
    %v581 = vld [vmem:[%s3 + $0x574] sm:$0xf]
    %v582 = vld [vmem:[%s3 + $0x578] sm:$0xf]
    %v583 = vld [vmem:[%s3 + $0x57c] sm:$0xf]
    %v584 = vld [vmem:[%s3 + $0x580] sm:$0xf]
    %v585 = vld [vmem:[%s3 + $0x584] sm:$0xf]
    %v586 = vld [vmem:[%s3 + $0x588] sm:$0xf]
    %v587 = vld [vmem:[%s3 + $0x58c] sm:$0xf]
    %v588 = vld [vmem:[%s3 + $0x590] sm:$0xf]
    %v589 = vld [vmem:[%s3 + $0x594] sm:$0xf]
    %v590 = vld [vmem:[%s3 + $0x598] sm:$0xf]
    %v591 = vld [vmem:[%s3 + $0x59c] sm:$0xf]
    %v592 = vld [vmem:[%s3 + $0x5a0] sm:$0xf]
    %v593 = vld [vmem:[%s3 + $0x5a4] sm:$0xf]
    %v594 = vld [vmem:[%s3 + $0x5a8] sm:$0xf]
    %v595 = vld [vmem:[%s3 + $0x5ac] sm:$0xf]
    %v596 = vld [vmem:[%s3 + $0x5b0] sm:$0xf]
    %v597 = vld [vmem:[%s3 + $0x5b4] sm:$0xf]
    %v598 = vld [vmem:[%s3 + $0x5b8] sm:$0xf]
    %v599 = vld [vmem:[%s3 + $0x5bc] sm:$0xf]
    %v600 = vld [vmem:[%s3 + $0x5c0] sm:$0xf]
    %v601 = vld [vmem:[%s3 + $0x5c4] sm:$0xf]
    %v602 = vld [vmem:[%s3 + $0x5c8] sm:$0xf]
    %v603 = vld [vmem:[%s3 + $0x5cc] sm:$0xf]
    %v604 = vld [vmem:[%s3 + $0x5d0] sm:$0xf]
    %v605 = vld [vmem:[%s3 + $0x5d4] sm:$0xf]
    %v606 = vld [vmem:[%s3 + $0x5d8] sm:$0xf]
    %v607 = vld [vmem:[%s3 + $0x5dc] sm:$0xf]
    %v608 = vld [vmem:[%s3 + $0x5e0] sm:$0xf]
    %v609 = vld [vmem:[%s3 + $0x5e4] sm:$0xf]
    %v610 = vld [vmem:[%s3 + $0x5e8] sm:$0xf]
    %v611 = vld [vmem:[%s3 + $0x5ec] sm:$0xf]
    %v612 = vld [vmem:[%s3 + $0x5f0] sm:$0xf]
    %v613 = vld [vmem:[%s3 + $0x5f4] sm:$0xf]
    %v614 = vld [vmem:[%s3 + $0x5f8] sm:$0xf]
    %v615 = vld [vmem:[%s3 + $0x5fc] sm:$0xf]
    %v616 = vld [vmem:[%s5] sm:$0xff]
    %v617 = vld [vmem:[%s5 + $0x8] sm:$0xff]
    %v618 = vld [vmem:[%s5 + $0x10] sm:$0xff]
    %v619 = vld [vmem:[%s5 + $0x18] sm:$0xff]
    %v620 = vld [vmem:[%s5 + $0x20] sm:$0xff]
    %v621 = vld [vmem:[%s5 + $0x28] sm:$0xff]
    %v622 = vld [vmem:[%s5 + $0x30] sm:$0xff]
    %v623 = vld [vmem:[%s5 + $0x38] sm:$0xff]
    %v720 = vunpack.c.l.b16 %v136
    %v721 = vunpack.c.h.b16 %v136
    %v722 = vunpack.c.l.b16 %v137
    %v723 = vunpack.c.h.b16 %v137
    %v724 = vunpack.c.l.b16 %v138
    %v725 = vunpack.c.h.b16 %v138
    %v726 = vunpack.c.l.b16 %v139
    %v727 = vunpack.c.h.b16 %v139
    %v728 = vunpack.c.l.b16 %v140
    %v729 = vunpack.c.h.b16 %v140
    %v730 = vunpack.c.l.b16 %v141
    %v731 = vunpack.c.h.b16 %v141
    %v732 = vunpack.c.l.b16 %v142
    %v733 = vunpack.c.h.b16 %v142
    %v734 = vunpack.c.l.b16 %v143
    %v735 = vunpack.c.h.b16 %v143
    %v736 = vunpack.c.l.b16 %v144
    %v737 = vunpack.c.h.b16 %v144
    %v738 = vunpack.c.l.b16 %v145
    %v739 = vunpack.c.h.b16 %v145
    %v740 = vunpack.c.l.b16 %v146
    %v741 = vunpack.c.h.b16 %v146
    %v742 = vunpack.c.l.b16 %v147
    %v743 = vunpack.c.h.b16 %v147
    %v744 = vunpack.c.l.b16 %v148
    %v745 = vunpack.c.h.b16 %v148
    %v746 = vunpack.c.l.b16 %v149
    %v747 = vunpack.c.h.b16 %v149
    %v748 = vunpack.c.l.b16 %v150
    %v749 = vunpack.c.h.b16 %v150
    %v750 = vunpack.c.l.b16 %v151
    %v751 = vunpack.c.h.b16 %v151
    %v752 = vunpack.c.l.b16 %v152
    %v753 = vunpack.c.h.b16 %v152
    %v754 = vunpack.c.l.b16 %v153
    %v755 = vunpack.c.h.b16 %v153
    %v756 = vunpack.c.l.b16 %v154
    %v757 = vunpack.c.h.b16 %v154
    %v758 = vunpack.c.l.b16 %v155
    %v759 = vunpack.c.h.b16 %v155
    %v760 = vunpack.c.l.b16 %v156
    %v761 = vunpack.c.h.b16 %v156
    %v762 = vunpack.c.l.b16 %v157
    %v763 = vunpack.c.h.b16 %v157
    %v764 = vunpack.c.l.b16 %v158
    %v765 = vunpack.c.h.b16 %v158
    %v766 = vunpack.c.l.b16 %v159
    %v767 = vunpack.c.h.b16 %v159
    %v768 = vunpack.c.l.b16 %v160
    %v769 = vunpack.c.h.b16 %v160
    %v770 = vunpack.c.l.b16 %v161
    %v771 = vunpack.c.h.b16 %v161
    %v772 = vunpack.c.l.b16 %v162
    %v773 = vunpack.c.h.b16 %v162
    %v774 = vunpack.c.l.b16 %v163
    %v775 = vunpack.c.h.b16 %v163
    %v776 = vunpack.c.l.b16 %v164
    %v777 = vunpack.c.h.b16 %v164
    %v778 = vunpack.c.l.b16 %v165
    %v779 = vunpack.c.h.b16 %v165
    %v780 = vunpack.c.l.b16 %v166
    %v781 = vunpack.c.h.b16 %v166
    %v782 = vunpack.c.l.b16 %v167
    %v783 = vunpack.c.h.b16 %v167
    %v784 = vunpack.c.l.b16 %v168
    %v785 = vunpack.c.h.b16 %v168
    %v786 = vunpack.c.l.b16 %v169
    %v787 = vunpack.c.h.b16 %v169
    %v788 = vunpack.c.l.b16 %v170
    %v789 = vunpack.c.h.b16 %v170
    %v790 = vunpack.c.l.b16 %v171
    %v791 = vunpack.c.h.b16 %v171
    %v792 = vunpack.c.l.b16 %v172
    %v793 = vunpack.c.h.b16 %v172
    %v794 = vunpack.c.l.b16 %v173
    %v795 = vunpack.c.h.b16 %v173
    %v796 = vunpack.c.l.b16 %v174
    %v797 = vunpack.c.h.b16 %v174
    %v798 = vunpack.c.l.b16 %v175
    %v799 = vunpack.c.h.b16 %v175
    %v800 = vunpack.c.l.b16 %v176
    %v801 = vunpack.c.h.b16 %v176
    %v802 = vunpack.c.l.b16 %v177
    %v803 = vunpack.c.h.b16 %v177
    %v804 = vunpack.c.l.b16 %v178
    %v805 = vunpack.c.h.b16 %v178
    %v806 = vunpack.c.l.b16 %v179
    %v807 = vunpack.c.h.b16 %v179
    %v808 = vunpack.c.l.b16 %v180
    %v809 = vunpack.c.h.b16 %v180
    %v810 = vunpack.c.l.b16 %v181
    %v811 = vunpack.c.h.b16 %v181
    %v812 = vunpack.c.l.b16 %v182
    %v813 = vunpack.c.h.b16 %v182
    %v814 = vunpack.c.l.b16 %v183
    %v815 = vunpack.c.h.b16 %v183
    %v816 = vunpack.c.l.b16 %v184
    %v817 = vunpack.c.h.b16 %v184
    %v818 = vunpack.c.l.b16 %v185
    %v819 = vunpack.c.h.b16 %v185
    %v820 = vunpack.c.l.b16 %v186
    %v821 = vunpack.c.h.b16 %v186
    %v822 = vunpack.c.l.b16 %v187
    %v823 = vunpack.c.h.b16 %v187
    %v824 = vunpack.c.l.b16 %v188
    %v825 = vunpack.c.h.b16 %v188
    %v826 = vunpack.c.l.b16 %v189
    %v827 = vunpack.c.h.b16 %v189
    %v828 = vunpack.c.l.b16 %v190
    %v829 = vunpack.c.h.b16 %v190
    %v830 = vunpack.c.l.b16 %v191
    %v831 = vunpack.c.h.b16 %v191
    %v832 = vunpack.c.l.b16 %v192
    %v833 = vunpack.c.h.b16 %v192
    %v834 = vunpack.c.l.b16 %v193
    %v835 = vunpack.c.h.b16 %v193
    %v836 = vunpack.c.l.b16 %v194
    %v837 = vunpack.c.h.b16 %v194
    %v838 = vunpack.c.l.b16 %v195
    %v839 = vunpack.c.h.b16 %v195
    %v840 = vunpack.c.l.b16 %v196
    %v841 = vunpack.c.h.b16 %v196
    %v842 = vunpack.c.l.b16 %v197
    %v843 = vunpack.c.h.b16 %v197
    %v844 = vunpack.c.l.b16 %v198
    %v845 = vunpack.c.h.b16 %v198
    %v846 = vunpack.c.l.b16 %v199
    %v847 = vunpack.c.h.b16 %v199
    %v848 = vunpack.c.l.b16 %v200
    %v849 = vunpack.c.h.b16 %v200
    %v850 = vunpack.c.l.b16 %v201
    %v851 = vunpack.c.h.b16 %v201
    %v852 = vunpack.c.l.b16 %v202
    %v853 = vunpack.c.h.b16 %v202
    %v854 = vunpack.c.l.b16 %v203
    %v855 = vunpack.c.h.b16 %v203
    %v856 = vunpack.c.l.b16 %v204
    %v857 = vunpack.c.h.b16 %v204
    %v858 = vunpack.c.l.b16 %v205
    %v859 = vunpack.c.h.b16 %v205
    %v860 = vunpack.c.l.b16 %v206
    %v861 = vunpack.c.h.b16 %v206
    %v862 = vunpack.c.l.b16 %v207
    %v863 = vunpack.c.h.b16 %v207
    %v864 = vunpack.c.l.b16 %v208
    %v865 = vunpack.c.h.b16 %v208
    %v866 = vunpack.c.l.b16 %v209
    %v867 = vunpack.c.h.b16 %v209
    %v868 = vunpack.c.l.b16 %v210
    %v869 = vunpack.c.h.b16 %v210
    %v870 = vunpack.c.l.b16 %v211
    %v871 = vunpack.c.h.b16 %v211
    %v872 = vunpack.c.l.b16 %v212
    %v873 = vunpack.c.h.b16 %v212
    %v874 = vunpack.c.l.b16 %v213
    %v875 = vunpack.c.h.b16 %v213
    %v876 = vunpack.c.l.b16 %v214
    %v877 = vunpack.c.h.b16 %v214
    %v878 = vunpack.c.l.b16 %v215
    %v879 = vunpack.c.h.b16 %v215
    %v880 = vunpack.c.l.b16 %v216
    %v881 = vunpack.c.h.b16 %v216
    %v882 = vunpack.c.l.b16 %v217
    %v883 = vunpack.c.h.b16 %v217
    %v884 = vunpack.c.l.b16 %v218
    %v885 = vunpack.c.h.b16 %v218
    %v886 = vunpack.c.l.b16 %v219
    %v887 = vunpack.c.h.b16 %v219
    %v888 = vunpack.c.l.b16 %v220
    %v889 = vunpack.c.h.b16 %v220
    %v890 = vunpack.c.l.b16 %v221
    %v891 = vunpack.c.h.b16 %v221
    %v892 = vunpack.c.l.b16 %v222
    %v893 = vunpack.c.h.b16 %v222
    %v894 = vunpack.c.l.b16 %v223
    %v895 = vunpack.c.h.b16 %v223
    %v896 = vunpack.c.l.b16 %v224
    %v897 = vunpack.c.h.b16 %v224
    %v898 = vunpack.c.l.b16 %v225
    %v899 = vunpack.c.h.b16 %v225
    %v900 = vunpack.c.l.b16 %v226
    %v901 = vunpack.c.h.b16 %v226
    %v902 = vunpack.c.l.b16 %v227
    %v903 = vunpack.c.h.b16 %v227
    %v904 = vunpack.c.l.b16 %v228
    %v905 = vunpack.c.h.b16 %v228
    %v906 = vunpack.c.l.b16 %v229
    %v907 = vunpack.c.h.b16 %v229
    %v908 = vunpack.c.l.b16 %v230
    %v909 = vunpack.c.h.b16 %v230
    %v910 = vunpack.c.l.b16 %v231
    %v911 = vunpack.c.h.b16 %v231
    %v912 = vpack.c.b16 %v744, %v720
    %v913 = vpack.c.b16 %v745, %v721
    %v914 = vpack.c.b16 %v746, %v722
    %v915 = vpack.c.b16 %v747, %v723
    %v916 = vpack.c.b16 %v748, %v724
    %v917 = vpack.c.b16 %v749, %v725
    %v918 = vpack.c.b16 %v750, %v726
    %v919 = vpack.c.b16 %v751, %v727
    %v920 = vpack.c.b16 %v752, %v728
    %v921 = vpack.c.b16 %v753, %v729
    %v922 = vpack.c.b16 %v754, %v730
    %v923 = vpack.c.b16 %v755, %v731
    %v924 = vpack.c.b16 %v756, %v732
    %v925 = vpack.c.b16 %v757, %v733
    %v926 = vpack.c.b16 %v758, %v734
    %v927 = vpack.c.b16 %v759, %v735
    %v928 = vpack.c.b16 %v760, %v736
    %v929 = vpack.c.b16 %v761, %v737
    %v930 = vpack.c.b16 %v762, %v738
    %v931 = vpack.c.b16 %v763, %v739
    %v932 = vpack.c.b16 %v764, %v740
    %v933 = vpack.c.b16 %v765, %v741
    %v934 = vpack.c.b16 %v766, %v742
    %v935 = vpack.c.b16 %v767, %v743
    %v936 = vpack.c.b16 %v792, %v768
    %v937 = vpack.c.b16 %v793, %v769
    %v938 = vpack.c.b16 %v794, %v770
    %v939 = vpack.c.b16 %v795, %v771
    %v940 = vpack.c.b16 %v796, %v772
    %v941 = vpack.c.b16 %v797, %v773
    %v942 = vpack.c.b16 %v798, %v774
    %v943 = vpack.c.b16 %v799, %v775
    %v944 = vpack.c.b16 %v800, %v776
    %v945 = vpack.c.b16 %v801, %v777
    %v946 = vpack.c.b16 %v802, %v778
    %v947 = vpack.c.b16 %v803, %v779
    %v948 = vpack.c.b16 %v804, %v780
    %v949 = vpack.c.b16 %v805, %v781
    %v950 = vpack.c.b16 %v806, %v782
    %v951 = vpack.c.b16 %v807, %v783
    %v952 = vpack.c.b16 %v808, %v784
    %v953 = vpack.c.b16 %v809, %v785
    %v954 = vpack.c.b16 %v810, %v786
    %v955 = vpack.c.b16 %v811, %v787
    %v956 = vpack.c.b16 %v812, %v788
    %v957 = vpack.c.b16 %v813, %v789
    %v958 = vpack.c.b16 %v814, %v790
    %v959 = vpack.c.b16 %v815, %v791
    %v960 = vpack.c.b16 %v840, %v816
    %v961 = vpack.c.b16 %v841, %v817
    %v962 = vpack.c.b16 %v842, %v818
    %v963 = vpack.c.b16 %v843, %v819
    %v964 = vpack.c.b16 %v844, %v820
    %v965 = vpack.c.b16 %v845, %v821
    %v966 = vpack.c.b16 %v846, %v822
    %v967 = vpack.c.b16 %v847, %v823
    %v968 = vpack.c.b16 %v848, %v824
    %v969 = vpack.c.b16 %v849, %v825
    %v970 = vpack.c.b16 %v850, %v826
    %v971 = vpack.c.b16 %v851, %v827
    %v972 = vpack.c.b16 %v852, %v828
    %v973 = vpack.c.b16 %v853, %v829
    %v974 = vpack.c.b16 %v854, %v830
    %v975 = vpack.c.b16 %v855, %v831
    %v976 = vpack.c.b16 %v856, %v832
    %v977 = vpack.c.b16 %v857, %v833
    %v978 = vpack.c.b16 %v858, %v834
    %v979 = vpack.c.b16 %v859, %v835
    %v980 = vpack.c.b16 %v860, %v836
    %v981 = vpack.c.b16 %v861, %v837
    %v982 = vpack.c.b16 %v862, %v838
    %v983 = vpack.c.b16 %v863, %v839
    %v984 = vpack.c.b16 %v888, %v864
    %v985 = vpack.c.b16 %v889, %v865
    %v986 = vpack.c.b16 %v890, %v866
    %v987 = vpack.c.b16 %v891, %v867
    %v988 = vpack.c.b16 %v892, %v868
    %v989 = vpack.c.b16 %v893, %v869
    %v990 = vpack.c.b16 %v894, %v870
    %v991 = vpack.c.b16 %v895, %v871
    %v992 = vpack.c.b16 %v896, %v872
    %v993 = vpack.c.b16 %v897, %v873
    %v994 = vpack.c.b16 %v898, %v874
    %v995 = vpack.c.b16 %v899, %v875
    %v996 = vpack.c.b16 %v900, %v876
    %v997 = vpack.c.b16 %v901, %v877
    %v998 = vpack.c.b16 %v902, %v878
    %v999 = vpack.c.b16 %v903, %v879
    %v1000 = vpack.c.b16 %v904, %v880
    %v1001 = vpack.c.b16 %v905, %v881
    %v1002 = vpack.c.b16 %v906, %v882
    %v1003 = vpack.c.b16 %v907, %v883
    %v1004 = vpack.c.b16 %v908, %v884
    %v1005 = vpack.c.b16 %v909, %v885
    %v1006 = vpack.c.b16 %v910, %v886
    %v1007 = vpack.c.b16 %v911, %v887
    %v1488 = vunpack.c.l.b16 %v232
    %v1489 = vunpack.c.l.b16 %v233
    %v1490 = vunpack.c.l.b16 %v234
    %v1491 = vunpack.c.l.b16 %v235
    %v1492 = vunpack.c.l.b16 %v236
    %v1493 = vunpack.c.l.b16 %v237
    %v1494 = vunpack.c.l.b16 %v238
    %v1495 = vunpack.c.l.b16 %v239
    %v1496 = vunpack.c.l.b16 %v240
    %v1497 = vunpack.c.l.b16 %v241
    %v1498 = vunpack.c.l.b16 %v242
    %v1499 = vunpack.c.l.b16 %v243
    %v1500 = vunpack.c.l.b16 %v244
    %v1501 = vunpack.c.l.b16 %v245
    %v1502 = vunpack.c.l.b16 %v246
    %v1503 = vunpack.c.l.b16 %v247
    %v1504 = vunpack.c.l.b16 %v248
    %v1505 = vunpack.c.l.b16 %v249
    %v1506 = vunpack.c.l.b16 %v250
    %v1507 = vunpack.c.l.b16 %v251
    %v1508 = vunpack.c.l.b16 %v252
    %v1509 = vunpack.c.l.b16 %v253
    %v1510 = vunpack.c.l.b16 %v254
    %v1511 = vunpack.c.l.b16 %v255
    %v1512 = vunpack.c.l.b16 %v256
    %v1513 = vunpack.c.l.b16 %v257
    %v1514 = vunpack.c.l.b16 %v258
    %v1515 = vunpack.c.l.b16 %v259
    %v1516 = vunpack.c.l.b16 %v260
    %v1517 = vunpack.c.l.b16 %v261
    %v1518 = vunpack.c.l.b16 %v262
    %v1519 = vunpack.c.l.b16 %v263
    %v1520 = vunpack.c.l.b16 %v264
    %v1521 = vunpack.c.l.b16 %v265
    %v1522 = vunpack.c.l.b16 %v266
    %v1523 = vunpack.c.l.b16 %v267
    %v1524 = vunpack.c.l.b16 %v268
    %v1525 = vunpack.c.l.b16 %v269
    %v1526 = vunpack.c.l.b16 %v270
    %v1527 = vunpack.c.l.b16 %v271
    %v1528 = vunpack.c.l.b16 %v272
    %v1529 = vunpack.c.l.b16 %v273
    %v1530 = vunpack.c.l.b16 %v274
    %v1531 = vunpack.c.l.b16 %v275
    %v1532 = vunpack.c.l.b16 %v276
    %v1533 = vunpack.c.l.b16 %v277
    %v1534 = vunpack.c.l.b16 %v278
    %v1535 = vunpack.c.l.b16 %v279
    %v1536 = vunpack.c.l.b16 %v280
    %v1537 = vunpack.c.l.b16 %v281
    %v1538 = vunpack.c.l.b16 %v282
    %v1539 = vunpack.c.l.b16 %v283
    %v1540 = vunpack.c.l.b16 %v284
    %v1541 = vunpack.c.l.b16 %v285
    %v1542 = vunpack.c.l.b16 %v286
    %v1543 = vunpack.c.l.b16 %v287
    %v1544 = vunpack.c.l.b16 %v288
    %v1545 = vunpack.c.l.b16 %v289
    %v1546 = vunpack.c.l.b16 %v290
    %v1547 = vunpack.c.l.b16 %v291
    %v1548 = vunpack.c.l.b16 %v292
    %v1549 = vunpack.c.l.b16 %v293
    %v1550 = vunpack.c.l.b16 %v294
    %v1551 = vunpack.c.l.b16 %v295
    %v1552 = vunpack.c.l.b16 %v296
    %v1553 = vunpack.c.l.b16 %v297
    %v1554 = vunpack.c.l.b16 %v298
    %v1555 = vunpack.c.l.b16 %v299
    %v1556 = vunpack.c.l.b16 %v300
    %v1557 = vunpack.c.l.b16 %v301
    %v1558 = vunpack.c.l.b16 %v302
    %v1559 = vunpack.c.l.b16 %v303
    %v1560 = vunpack.c.l.b16 %v304
    %v1561 = vunpack.c.l.b16 %v305
    %v1562 = vunpack.c.l.b16 %v306
    %v1563 = vunpack.c.l.b16 %v307
    %v1564 = vunpack.c.l.b16 %v308
    %v1565 = vunpack.c.l.b16 %v309
    %v1566 = vunpack.c.l.b16 %v310
    %v1567 = vunpack.c.l.b16 %v311
    %v1568 = vunpack.c.l.b16 %v312
    %v1569 = vunpack.c.l.b16 %v313
    %v1570 = vunpack.c.l.b16 %v314
    %v1571 = vunpack.c.l.b16 %v315
    %v1572 = vunpack.c.l.b16 %v316
    %v1573 = vunpack.c.l.b16 %v317
    %v1574 = vunpack.c.l.b16 %v318
    %v1575 = vunpack.c.l.b16 %v319
    %v1576 = vunpack.c.l.b16 %v320
    %v1577 = vunpack.c.l.b16 %v321
    %v1578 = vunpack.c.l.b16 %v322
    %v1579 = vunpack.c.l.b16 %v323
    %v1580 = vunpack.c.l.b16 %v324
    %v1581 = vunpack.c.l.b16 %v325
    %v1582 = vunpack.c.l.b16 %v326
    %v1583 = vunpack.c.l.b16 %v327
    %v1584 = vunpack.c.l.b16 %v328
    %v1585 = vunpack.c.l.b16 %v329
    %v1586 = vunpack.c.l.b16 %v330
    %v1587 = vunpack.c.l.b16 %v331
    %v1588 = vunpack.c.l.b16 %v332
    %v1589 = vunpack.c.l.b16 %v333
    %v1590 = vunpack.c.l.b16 %v334
    %v1591 = vunpack.c.l.b16 %v335
    %v1592 = vunpack.c.l.b16 %v336
    %v1593 = vunpack.c.l.b16 %v337
    %v1594 = vunpack.c.l.b16 %v338
    %v1595 = vunpack.c.l.b16 %v339
    %v1596 = vunpack.c.l.b16 %v340
    %v1597 = vunpack.c.l.b16 %v341
    %v1598 = vunpack.c.l.b16 %v342
    %v1599 = vunpack.c.l.b16 %v343
    %v1600 = vunpack.c.l.b16 %v344
    %v1601 = vunpack.c.l.b16 %v345
    %v1602 = vunpack.c.l.b16 %v346
    %v1603 = vunpack.c.l.b16 %v347
    %v1604 = vunpack.c.l.b16 %v348
    %v1605 = vunpack.c.l.b16 %v349
    %v1606 = vunpack.c.l.b16 %v350
    %v1607 = vunpack.c.l.b16 %v351
    %v1608 = vunpack.c.l.b16 %v352
    %v1609 = vunpack.c.l.b16 %v353
    %v1610 = vunpack.c.l.b16 %v354
    %v1611 = vunpack.c.l.b16 %v355
    %v1612 = vunpack.c.l.b16 %v356
    %v1613 = vunpack.c.l.b16 %v357
    %v1614 = vunpack.c.l.b16 %v358
    %v1615 = vunpack.c.l.b16 %v359
    %v1616 = vunpack.c.l.b16 %v360
    %v1617 = vunpack.c.l.b16 %v361
    %v1618 = vunpack.c.l.b16 %v362
    %v1619 = vunpack.c.l.b16 %v363
    %v1620 = vunpack.c.l.b16 %v364
    %v1621 = vunpack.c.l.b16 %v365
    %v1622 = vunpack.c.l.b16 %v366
    %v1623 = vunpack.c.l.b16 %v367
    %v1624 = vunpack.c.l.b16 %v368
    %v1625 = vunpack.c.l.b16 %v369
    %v1626 = vunpack.c.l.b16 %v370
    %v1627 = vunpack.c.l.b16 %v371
    %v1628 = vunpack.c.l.b16 %v372
    %v1629 = vunpack.c.l.b16 %v373
    %v1630 = vunpack.c.l.b16 %v374
    %v1631 = vunpack.c.l.b16 %v375
    %v1632 = vunpack.c.l.b16 %v376
    %v1633 = vunpack.c.l.b16 %v377
    %v1634 = vunpack.c.l.b16 %v378
    %v1635 = vunpack.c.l.b16 %v379
    %v1636 = vunpack.c.l.b16 %v380
    %v1637 = vunpack.c.l.b16 %v381
    %v1638 = vunpack.c.l.b16 %v382
    %v1639 = vunpack.c.l.b16 %v383
    %v1640 = vunpack.c.l.b16 %v384
    %v1641 = vunpack.c.l.b16 %v385
    %v1642 = vunpack.c.l.b16 %v386
    %v1643 = vunpack.c.l.b16 %v387
    %v1644 = vunpack.c.l.b16 %v388
    %v1645 = vunpack.c.l.b16 %v389
    %v1646 = vunpack.c.l.b16 %v390
    %v1647 = vunpack.c.l.b16 %v391
    %v1648 = vunpack.c.l.b16 %v392
    %v1649 = vunpack.c.l.b16 %v393
    %v1650 = vunpack.c.l.b16 %v394
    %v1651 = vunpack.c.l.b16 %v395
    %v1652 = vunpack.c.l.b16 %v396
    %v1653 = vunpack.c.l.b16 %v397
    %v1654 = vunpack.c.l.b16 %v398
    %v1655 = vunpack.c.l.b16 %v399
    %v1656 = vunpack.c.l.b16 %v400
    %v1657 = vunpack.c.l.b16 %v401
    %v1658 = vunpack.c.l.b16 %v402
    %v1659 = vunpack.c.l.b16 %v403
    %v1660 = vunpack.c.l.b16 %v404
    %v1661 = vunpack.c.l.b16 %v405
    %v1662 = vunpack.c.l.b16 %v406
    %v1663 = vunpack.c.l.b16 %v407
    %v1664 = vunpack.c.l.b16 %v408
    %v1665 = vunpack.c.l.b16 %v409
    %v1666 = vunpack.c.l.b16 %v410
    %v1667 = vunpack.c.l.b16 %v411
    %v1668 = vunpack.c.l.b16 %v412
    %v1669 = vunpack.c.l.b16 %v413
    %v1670 = vunpack.c.l.b16 %v414
    %v1671 = vunpack.c.l.b16 %v415
    %v1672 = vunpack.c.l.b16 %v416
    %v1673 = vunpack.c.l.b16 %v417
    %v1674 = vunpack.c.l.b16 %v418
    %v1675 = vunpack.c.l.b16 %v419
    %v1676 = vunpack.c.l.b16 %v420
    %v1677 = vunpack.c.l.b16 %v421
    %v1678 = vunpack.c.l.b16 %v422
    %v1679 = vunpack.c.l.b16 %v423
    %v1680 = vunpack.c.l.b16 %v424
    %v1681 = vunpack.c.l.b16 %v425
    %v1682 = vunpack.c.l.b16 %v426
    %v1683 = vunpack.c.l.b16 %v427
    %v1684 = vunpack.c.l.b16 %v428
    %v1685 = vunpack.c.l.b16 %v429
    %v1686 = vunpack.c.l.b16 %v430
    %v1687 = vunpack.c.l.b16 %v431
    %v1688 = vunpack.c.l.b16 %v432
    %v1689 = vunpack.c.l.b16 %v433
    %v1690 = vunpack.c.l.b16 %v434
    %v1691 = vunpack.c.l.b16 %v435
    %v1692 = vunpack.c.l.b16 %v436
    %v1693 = vunpack.c.l.b16 %v437
    %v1694 = vunpack.c.l.b16 %v438
    %v1695 = vunpack.c.l.b16 %v439
    %v1696 = vunpack.c.l.b16 %v440
    %v1697 = vunpack.c.l.b16 %v441
    %v1698 = vunpack.c.l.b16 %v442
    %v1699 = vunpack.c.l.b16 %v443
    %v1700 = vunpack.c.l.b16 %v444
    %v1701 = vunpack.c.l.b16 %v445
    %v1702 = vunpack.c.l.b16 %v446
    %v1703 = vunpack.c.l.b16 %v447
    %v1704 = vunpack.c.l.b16 %v448
    %v1705 = vunpack.c.l.b16 %v449
    %v1706 = vunpack.c.l.b16 %v450
    %v1707 = vunpack.c.l.b16 %v451
    %v1708 = vunpack.c.l.b16 %v452
    %v1709 = vunpack.c.l.b16 %v453
    %v1710 = vunpack.c.l.b16 %v454
    %v1711 = vunpack.c.l.b16 %v455
    %v1712 = vunpack.c.l.b16 %v456
    %v1713 = vunpack.c.l.b16 %v457
    %v1714 = vunpack.c.l.b16 %v458
    %v1715 = vunpack.c.l.b16 %v459
    %v1716 = vunpack.c.l.b16 %v460
    %v1717 = vunpack.c.l.b16 %v461
    %v1718 = vunpack.c.l.b16 %v462
    %v1719 = vunpack.c.l.b16 %v463
    %v1720 = vunpack.c.l.b16 %v464
    %v1721 = vunpack.c.l.b16 %v465
    %v1722 = vunpack.c.l.b16 %v466
    %v1723 = vunpack.c.l.b16 %v467
    %v1724 = vunpack.c.l.b16 %v468
    %v1725 = vunpack.c.l.b16 %v469
    %v1726 = vunpack.c.l.b16 %v470
    %v1727 = vunpack.c.l.b16 %v471
    %v1728 = vunpack.c.l.b16 %v472
    %v1729 = vunpack.c.l.b16 %v473
    %v1730 = vunpack.c.l.b16 %v474
    %v1731 = vunpack.c.l.b16 %v475
    %v1732 = vunpack.c.l.b16 %v476
    %v1733 = vunpack.c.l.b16 %v477
    %v1734 = vunpack.c.l.b16 %v478
    %v1735 = vunpack.c.l.b16 %v479
    %v1736 = vunpack.c.l.b16 %v480
    %v1737 = vunpack.c.l.b16 %v481
    %v1738 = vunpack.c.l.b16 %v482
    %v1739 = vunpack.c.l.b16 %v483
    %v1740 = vunpack.c.l.b16 %v484
    %v1741 = vunpack.c.l.b16 %v485
    %v1742 = vunpack.c.l.b16 %v486
    %v1743 = vunpack.c.l.b16 %v487
    %v1744 = vunpack.c.l.b16 %v488
    %v1745 = vunpack.c.l.b16 %v489
    %v1746 = vunpack.c.l.b16 %v490
    %v1747 = vunpack.c.l.b16 %v491
    %v1748 = vunpack.c.l.b16 %v492
    %v1749 = vunpack.c.l.b16 %v493
    %v1750 = vunpack.c.l.b16 %v494
    %v1751 = vunpack.c.l.b16 %v495
    %v1752 = vunpack.c.l.b16 %v496
    %v1753 = vunpack.c.l.b16 %v497
    %v1754 = vunpack.c.l.b16 %v498
    %v1755 = vunpack.c.l.b16 %v499
    %v1756 = vunpack.c.l.b16 %v500
    %v1757 = vunpack.c.l.b16 %v501
    %v1758 = vunpack.c.l.b16 %v502
    %v1759 = vunpack.c.l.b16 %v503
    %v1760 = vunpack.c.l.b16 %v504
    %v1761 = vunpack.c.l.b16 %v505
    %v1762 = vunpack.c.l.b16 %v506
    %v1763 = vunpack.c.l.b16 %v507
    %v1764 = vunpack.c.l.b16 %v508
    %v1765 = vunpack.c.l.b16 %v509
    %v1766 = vunpack.c.l.b16 %v510
    %v1767 = vunpack.c.l.b16 %v511
    %v1768 = vunpack.c.l.b16 %v512
    %v1769 = vunpack.c.l.b16 %v513
    %v1770 = vunpack.c.l.b16 %v514
    %v1771 = vunpack.c.l.b16 %v515
    %v1772 = vunpack.c.l.b16 %v516
    %v1773 = vunpack.c.l.b16 %v517
    %v1774 = vunpack.c.l.b16 %v518
    %v1775 = vunpack.c.l.b16 %v519
    %v1776 = vunpack.c.l.b16 %v520
    %v1777 = vunpack.c.l.b16 %v521
    %v1778 = vunpack.c.l.b16 %v522
    %v1779 = vunpack.c.l.b16 %v523
    %v1780 = vunpack.c.l.b16 %v524
    %v1781 = vunpack.c.l.b16 %v525
    %v1782 = vunpack.c.l.b16 %v526
    %v1783 = vunpack.c.l.b16 %v527
    %v1784 = vunpack.c.l.b16 %v528
    %v1785 = vunpack.c.l.b16 %v529
    %v1786 = vunpack.c.l.b16 %v530
    %v1787 = vunpack.c.l.b16 %v531
    %v1788 = vunpack.c.l.b16 %v532
    %v1789 = vunpack.c.l.b16 %v533
    %v1790 = vunpack.c.l.b16 %v534
    %v1791 = vunpack.c.l.b16 %v535
    %v1792 = vunpack.c.l.b16 %v536
    %v1793 = vunpack.c.l.b16 %v537
    %v1794 = vunpack.c.l.b16 %v538
    %v1795 = vunpack.c.l.b16 %v539
    %v1796 = vunpack.c.l.b16 %v540
    %v1797 = vunpack.c.l.b16 %v541
    %v1798 = vunpack.c.l.b16 %v542
    %v1799 = vunpack.c.l.b16 %v543
    %v1800 = vunpack.c.l.b16 %v544
    %v1801 = vunpack.c.l.b16 %v545
    %v1802 = vunpack.c.l.b16 %v546
    %v1803 = vunpack.c.l.b16 %v547
    %v1804 = vunpack.c.l.b16 %v548
    %v1805 = vunpack.c.l.b16 %v549
    %v1806 = vunpack.c.l.b16 %v550
    %v1807 = vunpack.c.l.b16 %v551
    %v1808 = vunpack.c.l.b16 %v552
    %v1809 = vunpack.c.l.b16 %v553
    %v1810 = vunpack.c.l.b16 %v554
    %v1811 = vunpack.c.l.b16 %v555
    %v1812 = vunpack.c.l.b16 %v556
    %v1813 = vunpack.c.l.b16 %v557
    %v1814 = vunpack.c.l.b16 %v558
    %v1815 = vunpack.c.l.b16 %v559
    %v1816 = vunpack.c.l.b16 %v560
    %v1817 = vunpack.c.l.b16 %v561
    %v1818 = vunpack.c.l.b16 %v562
    %v1819 = vunpack.c.l.b16 %v563
    %v1820 = vunpack.c.l.b16 %v564
    %v1821 = vunpack.c.l.b16 %v565
    %v1822 = vunpack.c.l.b16 %v566
    %v1823 = vunpack.c.l.b16 %v567
    %v1824 = vunpack.c.l.b16 %v568
    %v1825 = vunpack.c.l.b16 %v569
    %v1826 = vunpack.c.l.b16 %v570
    %v1827 = vunpack.c.l.b16 %v571
    %v1828 = vunpack.c.l.b16 %v572
    %v1829 = vunpack.c.l.b16 %v573
    %v1830 = vunpack.c.l.b16 %v574
    %v1831 = vunpack.c.l.b16 %v575
    %v1832 = vunpack.c.l.b16 %v576
    %v1833 = vunpack.c.l.b16 %v577
    %v1834 = vunpack.c.l.b16 %v578
    %v1835 = vunpack.c.l.b16 %v579
    %v1836 = vunpack.c.l.b16 %v580
    %v1837 = vunpack.c.l.b16 %v581
    %v1838 = vunpack.c.l.b16 %v582
    %v1839 = vunpack.c.l.b16 %v583
    %v1840 = vunpack.c.l.b16 %v584
    %v1841 = vunpack.c.l.b16 %v585
    %v1842 = vunpack.c.l.b16 %v586
    %v1843 = vunpack.c.l.b16 %v587
    %v1844 = vunpack.c.l.b16 %v588
    %v1845 = vunpack.c.l.b16 %v589
    %v1846 = vunpack.c.l.b16 %v590
    %v1847 = vunpack.c.l.b16 %v591
    %v1848 = vunpack.c.l.b16 %v592
    %v1849 = vunpack.c.l.b16 %v593
    %v1850 = vunpack.c.l.b16 %v594
    %v1851 = vunpack.c.l.b16 %v595
    %v1852 = vunpack.c.l.b16 %v596
    %v1853 = vunpack.c.l.b16 %v597
    %v1854 = vunpack.c.l.b16 %v598
    %v1855 = vunpack.c.l.b16 %v599
    %v1856 = vunpack.c.l.b16 %v600
    %v1857 = vunpack.c.l.b16 %v601
    %v1858 = vunpack.c.l.b16 %v602
    %v1859 = vunpack.c.l.b16 %v603
    %v1860 = vunpack.c.l.b16 %v604
    %v1861 = vunpack.c.l.b16 %v605
    %v1862 = vunpack.c.l.b16 %v606
    %v1863 = vunpack.c.l.b16 %v607
    %v1864 = vunpack.c.l.b16 %v608
    %v1865 = vunpack.c.l.b16 %v609
    %v1866 = vunpack.c.l.b16 %v610
    %v1867 = vunpack.c.l.b16 %v611
    %v1868 = vunpack.c.l.b16 %v612
    %v1869 = vunpack.c.l.b16 %v613
    %v1870 = vunpack.c.l.b16 %v614
    %v1871 = vunpack.c.l.b16 %v615
    %v1872 = vpack.c.b16 %v1489, %v1488
    %v1873 = vpack.c.b16 %v1491, %v1490
    %v1874 = vpack.c.b16 %v1493, %v1492
    %v1875 = vpack.c.b16 %v1495, %v1494
    %v1876 = vpack.c.b16 %v1497, %v1496
    %v1877 = vpack.c.b16 %v1499, %v1498
    %v1878 = vpack.c.b16 %v1501, %v1500
    %v1879 = vpack.c.b16 %v1503, %v1502
    %v1880 = vpack.c.b16 %v1505, %v1504
    %v1881 = vpack.c.b16 %v1507, %v1506
    %v1882 = vpack.c.b16 %v1509, %v1508
    %v1883 = vpack.c.b16 %v1511, %v1510
    %v1884 = vpack.c.b16 %v1513, %v1512
    %v1885 = vpack.c.b16 %v1515, %v1514
    %v1886 = vpack.c.b16 %v1517, %v1516
    %v1887 = vpack.c.b16 %v1519, %v1518
    %v1888 = vpack.c.b16 %v1521, %v1520
    %v1889 = vpack.c.b16 %v1523, %v1522
    %v1890 = vpack.c.b16 %v1525, %v1524
    %v1891 = vpack.c.b16 %v1527, %v1526
    %v1892 = vpack.c.b16 %v1529, %v1528
    %v1893 = vpack.c.b16 %v1531, %v1530
    %v1894 = vpack.c.b16 %v1533, %v1532
    %v1895 = vpack.c.b16 %v1535, %v1534
    %v1896 = vpack.c.b16 %v1537, %v1536
    %v1897 = vpack.c.b16 %v1539, %v1538
    %v1898 = vpack.c.b16 %v1541, %v1540
    %v1899 = vpack.c.b16 %v1543, %v1542
    %v1900 = vpack.c.b16 %v1545, %v1544
    %v1901 = vpack.c.b16 %v1547, %v1546
    %v1902 = vpack.c.b16 %v1549, %v1548
    %v1903 = vpack.c.b16 %v1551, %v1550
    %v1904 = vpack.c.b16 %v1553, %v1552
    %v1905 = vpack.c.b16 %v1555, %v1554
    %v1906 = vpack.c.b16 %v1557, %v1556
    %v1907 = vpack.c.b16 %v1559, %v1558
    %v1908 = vpack.c.b16 %v1561, %v1560
    %v1909 = vpack.c.b16 %v1563, %v1562
    %v1910 = vpack.c.b16 %v1565, %v1564
    %v1911 = vpack.c.b16 %v1567, %v1566
    %v1912 = vpack.c.b16 %v1569, %v1568
    %v1913 = vpack.c.b16 %v1571, %v1570
    %v1914 = vpack.c.b16 %v1573, %v1572
    %v1915 = vpack.c.b16 %v1575, %v1574
    %v1916 = vpack.c.b16 %v1577, %v1576
    %v1917 = vpack.c.b16 %v1579, %v1578
    %v1918 = vpack.c.b16 %v1581, %v1580
    %v1919 = vpack.c.b16 %v1583, %v1582
    %v1920 = vpack.c.b16 %v1585, %v1584
    %v1921 = vpack.c.b16 %v1587, %v1586
    %v1922 = vpack.c.b16 %v1589, %v1588
    %v1923 = vpack.c.b16 %v1591, %v1590
    %v1924 = vpack.c.b16 %v1593, %v1592
    %v1925 = vpack.c.b16 %v1595, %v1594
    %v1926 = vpack.c.b16 %v1597, %v1596
    %v1927 = vpack.c.b16 %v1599, %v1598
    %v1928 = vpack.c.b16 %v1601, %v1600
    %v1929 = vpack.c.b16 %v1603, %v1602
    %v1930 = vpack.c.b16 %v1605, %v1604
    %v1931 = vpack.c.b16 %v1607, %v1606
    %v1932 = vpack.c.b16 %v1609, %v1608
    %v1933 = vpack.c.b16 %v1611, %v1610
    %v1934 = vpack.c.b16 %v1613, %v1612
    %v1935 = vpack.c.b16 %v1615, %v1614
    %v1936 = vpack.c.b16 %v1617, %v1616
    %v1937 = vpack.c.b16 %v1619, %v1618
    %v1938 = vpack.c.b16 %v1621, %v1620
    %v1939 = vpack.c.b16 %v1623, %v1622
    %v1940 = vpack.c.b16 %v1625, %v1624
    %v1941 = vpack.c.b16 %v1627, %v1626
    %v1942 = vpack.c.b16 %v1629, %v1628
    %v1943 = vpack.c.b16 %v1631, %v1630
    %v1944 = vpack.c.b16 %v1633, %v1632
    %v1945 = vpack.c.b16 %v1635, %v1634
    %v1946 = vpack.c.b16 %v1637, %v1636
    %v1947 = vpack.c.b16 %v1639, %v1638
    %v1948 = vpack.c.b16 %v1641, %v1640
    %v1949 = vpack.c.b16 %v1643, %v1642
    %v1950 = vpack.c.b16 %v1645, %v1644
    %v1951 = vpack.c.b16 %v1647, %v1646
    %v1952 = vpack.c.b16 %v1649, %v1648
    %v1953 = vpack.c.b16 %v1651, %v1650
    %v1954 = vpack.c.b16 %v1653, %v1652
    %v1955 = vpack.c.b16 %v1655, %v1654
    %v1956 = vpack.c.b16 %v1657, %v1656
    %v1957 = vpack.c.b16 %v1659, %v1658
    %v1958 = vpack.c.b16 %v1661, %v1660
    %v1959 = vpack.c.b16 %v1663, %v1662
    %v1960 = vpack.c.b16 %v1665, %v1664
    %v1961 = vpack.c.b16 %v1667, %v1666
    %v1962 = vpack.c.b16 %v1669, %v1668
    %v1963 = vpack.c.b16 %v1671, %v1670
    %v1964 = vpack.c.b16 %v1673, %v1672
    %v1965 = vpack.c.b16 %v1675, %v1674
    %v1966 = vpack.c.b16 %v1677, %v1676
    %v1967 = vpack.c.b16 %v1679, %v1678
    %v1968 = vpack.c.b16 %v1681, %v1680
    %v1969 = vpack.c.b16 %v1683, %v1682
    %v1970 = vpack.c.b16 %v1685, %v1684
    %v1971 = vpack.c.b16 %v1687, %v1686
    %v1972 = vpack.c.b16 %v1689, %v1688
    %v1973 = vpack.c.b16 %v1691, %v1690
    %v1974 = vpack.c.b16 %v1693, %v1692
    %v1975 = vpack.c.b16 %v1695, %v1694
    %v1976 = vpack.c.b16 %v1697, %v1696
    %v1977 = vpack.c.b16 %v1699, %v1698
    %v1978 = vpack.c.b16 %v1701, %v1700
    %v1979 = vpack.c.b16 %v1703, %v1702
    %v1980 = vpack.c.b16 %v1705, %v1704
    %v1981 = vpack.c.b16 %v1707, %v1706
    %v1982 = vpack.c.b16 %v1709, %v1708
    %v1983 = vpack.c.b16 %v1711, %v1710
    %v1984 = vpack.c.b16 %v1713, %v1712
    %v1985 = vpack.c.b16 %v1715, %v1714
    %v1986 = vpack.c.b16 %v1717, %v1716
    %v1987 = vpack.c.b16 %v1719, %v1718
    %v1988 = vpack.c.b16 %v1721, %v1720
    %v1989 = vpack.c.b16 %v1723, %v1722
    %v1990 = vpack.c.b16 %v1725, %v1724
    %v1991 = vpack.c.b16 %v1727, %v1726
    %v1992 = vpack.c.b16 %v1729, %v1728
    %v1993 = vpack.c.b16 %v1731, %v1730
    %v1994 = vpack.c.b16 %v1733, %v1732
    %v1995 = vpack.c.b16 %v1735, %v1734
    %v1996 = vpack.c.b16 %v1737, %v1736
    %v1997 = vpack.c.b16 %v1739, %v1738
    %v1998 = vpack.c.b16 %v1741, %v1740
    %v1999 = vpack.c.b16 %v1743, %v1742
    %v2000 = vpack.c.b16 %v1745, %v1744
    %v2001 = vpack.c.b16 %v1747, %v1746
    %v2002 = vpack.c.b16 %v1749, %v1748
    %v2003 = vpack.c.b16 %v1751, %v1750
    %v2004 = vpack.c.b16 %v1753, %v1752
    %v2005 = vpack.c.b16 %v1755, %v1754
    %v2006 = vpack.c.b16 %v1757, %v1756
    %v2007 = vpack.c.b16 %v1759, %v1758
    %v2008 = vpack.c.b16 %v1761, %v1760
    %v2009 = vpack.c.b16 %v1763, %v1762
    %v2010 = vpack.c.b16 %v1765, %v1764
    %v2011 = vpack.c.b16 %v1767, %v1766
    %v2012 = vpack.c.b16 %v1769, %v1768
    %v2013 = vpack.c.b16 %v1771, %v1770
    %v2014 = vpack.c.b16 %v1773, %v1772
    %v2015 = vpack.c.b16 %v1775, %v1774
    %v2016 = vpack.c.b16 %v1777, %v1776
    %v2017 = vpack.c.b16 %v1779, %v1778
    %v2018 = vpack.c.b16 %v1781, %v1780
    %v2019 = vpack.c.b16 %v1783, %v1782
    %v2020 = vpack.c.b16 %v1785, %v1784
    %v2021 = vpack.c.b16 %v1787, %v1786
    %v2022 = vpack.c.b16 %v1789, %v1788
    %v2023 = vpack.c.b16 %v1791, %v1790
    %v2024 = vpack.c.b16 %v1793, %v1792
    %v2025 = vpack.c.b16 %v1795, %v1794
    %v2026 = vpack.c.b16 %v1797, %v1796
    %v2027 = vpack.c.b16 %v1799, %v1798
    %v2028 = vpack.c.b16 %v1801, %v1800
    %v2029 = vpack.c.b16 %v1803, %v1802
    %v2030 = vpack.c.b16 %v1805, %v1804
    %v2031 = vpack.c.b16 %v1807, %v1806
    %v2032 = vpack.c.b16 %v1809, %v1808
    %v2033 = vpack.c.b16 %v1811, %v1810
    %v2034 = vpack.c.b16 %v1813, %v1812
    %v2035 = vpack.c.b16 %v1815, %v1814
    %v2036 = vpack.c.b16 %v1817, %v1816
    %v2037 = vpack.c.b16 %v1819, %v1818
    %v2038 = vpack.c.b16 %v1821, %v1820
    %v2039 = vpack.c.b16 %v1823, %v1822
    %v2040 = vpack.c.b16 %v1825, %v1824
    %v2041 = vpack.c.b16 %v1827, %v1826
    %v2042 = vpack.c.b16 %v1829, %v1828
    %v2043 = vpack.c.b16 %v1831, %v1830
    %v2044 = vpack.c.b16 %v1833, %v1832
    %v2045 = vpack.c.b16 %v1835, %v1834
    %v2046 = vpack.c.b16 %v1837, %v1836
    %v2047 = vpack.c.b16 %v1839, %v1838
    %v2048 = vpack.c.b16 %v1841, %v1840
    %v2049 = vpack.c.b16 %v1843, %v1842
    %v2050 = vpack.c.b16 %v1845, %v1844
    %v2051 = vpack.c.b16 %v1847, %v1846
    %v2052 = vpack.c.b16 %v1849, %v1848
    %v2053 = vpack.c.b16 %v1851, %v1850
    %v2054 = vpack.c.b16 %v1853, %v1852
    %v2055 = vpack.c.b16 %v1855, %v1854
    %v2056 = vpack.c.b16 %v1857, %v1856
    %v2057 = vpack.c.b16 %v1859, %v1858
    %v2058 = vpack.c.b16 %v1861, %v1860
    %v2059 = vpack.c.b16 %v1863, %v1862
    %v2060 = vpack.c.b16 %v1865, %v1864
    %v2061 = vpack.c.b16 %v1867, %v1866
    %v2062 = vpack.c.b16 %v1869, %v1868
    %v2063 = vpack.c.b16 %v1871, %v1870
    %2256 = vmatprep.subr.bf16.mxu0 0
    %2257 = vmatpush1.bf16.msra.mxu0 %v1879
    %2258 = vmatprep.subr.bf16.mxu0 0
    %2259 = vmatpush1.bf16.msra.mxu0 %v1878
    %2260 = vmatprep.subr.bf16.mxu0 0
    %2261 = vmatpush1.bf16.msra.mxu0 %v1877
    %2262 = vmatprep.subr.bf16.mxu0 0
    %2263 = vmatpush1.bf16.msra.mxu0 %v1876
    %2264 = vmatprep.subr.bf16.mxu0 0
    %2265 = vmatpush1.bf16.msra.mxu0 %v1875
    %2266 = vmatprep.subr.bf16.mxu0 0
    %2267 = vmatpush1.bf16.msra.mxu0 %v1874
    %2268 = vmatprep.subr.bf16.mxu0 0
    %2269 = vmatpush1.bf16.msra.mxu0 %v1873
    %2270 = vmatprep.subr.bf16.mxu0 0
    %2271 = vmatpush1.bf16.msra.mxu0 %v1872
    %2272 = vmatprep.subr.bf16.mxu0 0
    %2273 = vmatpush2.bf16.msra.mxu0 %v1887
    %2274 = vmatprep.subr.bf16.mxu0 0
    %2275 = vmatpush2.bf16.msra.mxu0 %v1886
    %2276 = vmatprep.subr.bf16.mxu0 0
    %2277 = vmatpush2.bf16.msra.mxu0 %v1885
    %2278 = vmatprep.subr.bf16.mxu0 0
    %2279 = vmatpush2.bf16.msra.mxu0 %v1884
    %2280 = vmatprep.subr.bf16.mxu0 0
    %2281 = vmatpush2.bf16.msra.mxu0 %v1883
    %2282 = vmatprep.subr.bf16.mxu0 0
    %2283 = vmatpush2.bf16.msra.mxu0 %v1882
    %2284 = vmatprep.subr.bf16.mxu0 0
    %2285 = vmatpush2.bf16.msra.mxu0 %v1881
    %2286 = vmatprep.subr.bf16.mxu0 0
    %2287 = vmatpush2.bf16.msra.mxu0 %v1880
    %2288 = vmatprep.mubr.bf16.mxu0 %v913
    %2289 = vmatmul.mubr.bf16.gmra.mxu0 %v912
    %v2290 = vpop.f32.mrf.mxu0
    %v2291 = vadd.f32 %v616, %v2290
    %v2292 = vpop.f32.mrf.mxu0
    %v2293 = vpop.f32.mrf.mxu0
    %v2294 = vadd.f32 %v617, %v2293
    %v2295 = vpop.f32.mrf.mxu0
    %2296 = vmatprep.mubr.bf16.mxu0 %v937
    %2297 = vmatmul.mubr.bf16.gmra.mxu0 %v936
    %v2298 = vpop.f32.mrf.mxu0
    %v2299 = vadd.f32 %v618, %v2298
    %v2300 = vpop.f32.mrf.mxu0
    %v2301 = vpop.f32.mrf.mxu0
    %v2302 = vadd.f32 %v619, %v2301
    %v2303 = vpop.f32.mrf.mxu0
    %2304 = vmatprep.mubr.bf16.mxu0 %v961
    %2305 = vmatmul.mubr.bf16.gmra.mxu0 %v960
    %v2306 = vpop.f32.mrf.mxu0
    %v2307 = vadd.f32 %v620, %v2306
    %v2308 = vpop.f32.mrf.mxu0
    %v2309 = vpop.f32.mrf.mxu0
    %v2310 = vadd.f32 %v621, %v2309
    %v2311 = vpop.f32.mrf.mxu0
    %2312 = vmatprep.mubr.bf16.mxu0 %v985
    %2313 = vmatmul.mubr.bf16.gmra.mxu0 %v984
    %v2314 = vpop.f32.mrf.mxu0
    %v2315 = vadd.f32 %v622, %v2314
    %v2316 = vpop.f32.mrf.mxu0
    %v2317 = vpop.f32.mrf.mxu0
    %v2318 = vadd.f32 %v623, %v2317
    %v2319 = vpop.f32.mrf.mxu0
    %2320 = vdwg.mxu0
    %2321 = vmatprep.subr.bf16.mxu0 0
    %2322 = vmatpush1.bf16.msra.mxu0 %v1895
    %2323 = vmatprep.subr.bf16.mxu0 0
    %2324 = vmatpush1.bf16.msra.mxu0 %v1894
    %2325 = vmatprep.subr.bf16.mxu0 0
    %2326 = vmatpush1.bf16.msra.mxu0 %v1893
    %2327 = vmatprep.subr.bf16.mxu0 0
    %2328 = vmatpush1.bf16.msra.mxu0 %v1892
    %2329 = vmatprep.subr.bf16.mxu0 0
    %2330 = vmatpush1.bf16.msra.mxu0 %v1891
    %2331 = vmatprep.subr.bf16.mxu0 0
    %2332 = vmatpush1.bf16.msra.mxu0 %v1890
    %2333 = vmatprep.subr.bf16.mxu0 0
    %2334 = vmatpush1.bf16.msra.mxu0 %v1889
    %2335 = vmatprep.subr.bf16.mxu0 0
    %2336 = vmatpush1.bf16.msra.mxu0 %v1888
    %2337 = vmatprep.subr.bf16.mxu0 0
    %2338 = vmatpush2.bf16.msra.mxu0 %v1903
    %2339 = vmatprep.subr.bf16.mxu0 0
    %2340 = vmatpush2.bf16.msra.mxu0 %v1902
    %2341 = vmatprep.subr.bf16.mxu0 0
    %2342 = vmatpush2.bf16.msra.mxu0 %v1901
    %2343 = vmatprep.subr.bf16.mxu0 0
    %2344 = vmatpush2.bf16.msra.mxu0 %v1900
    %2345 = vmatprep.subr.bf16.mxu0 0
    %2346 = vmatpush2.bf16.msra.mxu0 %v1899
    %2347 = vmatprep.subr.bf16.mxu0 0
    %2348 = vmatpush2.bf16.msra.mxu0 %v1898
    %2349 = vmatprep.subr.bf16.mxu0 0
    %2350 = vmatpush2.bf16.msra.mxu0 %v1897
    %2351 = vmatprep.subr.bf16.mxu0 0
    %2352 = vmatpush2.bf16.msra.mxu0 %v1896
    %2353 = vmatprep.mubr.bf16.mxu0 %v915
    %2354 = vmatmul.mubr.bf16.gmra.mxu0 %v914
    %v2355 = vpop.f32.mrf.mxu0
    %v2356 = vadd.f32 %v2291, %v2355
    %v2357 = vpop.f32.mrf.mxu0
    %v2358 = vpop.f32.mrf.mxu0
    %v2359 = vadd.f32 %v2294, %v2358
    %v2360 = vpop.f32.mrf.mxu0
    %2361 = vmatprep.mubr.bf16.mxu0 %v939
    %2362 = vmatmul.mubr.bf16.gmra.mxu0 %v938
    %v2363 = vpop.f32.mrf.mxu0
    %v2364 = vadd.f32 %v2299, %v2363
    %v2365 = vpop.f32.mrf.mxu0
    %v2366 = vpop.f32.mrf.mxu0
    %v2367 = vadd.f32 %v2302, %v2366
    %v2368 = vpop.f32.mrf.mxu0
    %2369 = vmatprep.mubr.bf16.mxu0 %v963
    %2370 = vmatmul.mubr.bf16.gmra.mxu0 %v962
    %v2371 = vpop.f32.mrf.mxu0
    %v2372 = vadd.f32 %v2307, %v2371
    %v2373 = vpop.f32.mrf.mxu0
    %v2374 = vpop.f32.mrf.mxu0
    %v2375 = vadd.f32 %v2310, %v2374
    %v2376 = vpop.f32.mrf.mxu0
    %2377 = vmatprep.mubr.bf16.mxu0 %v987
    %2378 = vmatmul.mubr.bf16.gmra.mxu0 %v986
    %v2379 = vpop.f32.mrf.mxu0
    %v2380 = vadd.f32 %v2315, %v2379
    %v2381 = vpop.f32.mrf.mxu0
    %v2382 = vpop.f32.mrf.mxu0
    %v2383 = vadd.f32 %v2318, %v2382
    %v2384 = vpop.f32.mrf.mxu0
    %2385 = vdwg.mxu0
    %2386 = vmatprep.subr.bf16.mxu0 0
    %2387 = vmatpush1.bf16.msra.mxu0 %v1911
    %2388 = vmatprep.subr.bf16.mxu0 0
    %2389 = vmatpush1.bf16.msra.mxu0 %v1910
    %2390 = vmatprep.subr.bf16.mxu0 0
    %2391 = vmatpush1.bf16.msra.mxu0 %v1909
    %2392 = vmatprep.subr.bf16.mxu0 0
    %2393 = vmatpush1.bf16.msra.mxu0 %v1908
    %2394 = vmatprep.subr.bf16.mxu0 0
    %2395 = vmatpush1.bf16.msra.mxu0 %v1907
    %2396 = vmatprep.subr.bf16.mxu0 0
    %2397 = vmatpush1.bf16.msra.mxu0 %v1906
    %2398 = vmatprep.subr.bf16.mxu0 0
    %2399 = vmatpush1.bf16.msra.mxu0 %v1905
    %2400 = vmatprep.subr.bf16.mxu0 0
    %2401 = vmatpush1.bf16.msra.mxu0 %v1904
    %2402 = vmatprep.subr.bf16.mxu0 0
    %2403 = vmatpush2.bf16.msra.mxu0 %v1919
    %2404 = vmatprep.subr.bf16.mxu0 0
    %2405 = vmatpush2.bf16.msra.mxu0 %v1918
    %2406 = vmatprep.subr.bf16.mxu0 0
    %2407 = vmatpush2.bf16.msra.mxu0 %v1917
    %2408 = vmatprep.subr.bf16.mxu0 0
    %2409 = vmatpush2.bf16.msra.mxu0 %v1916
    %2410 = vmatprep.subr.bf16.mxu0 0
    %2411 = vmatpush2.bf16.msra.mxu0 %v1915
    %2412 = vmatprep.subr.bf16.mxu0 0
    %2413 = vmatpush2.bf16.msra.mxu0 %v1914
    %2414 = vmatprep.subr.bf16.mxu0 0
    %2415 = vmatpush2.bf16.msra.mxu0 %v1913
    %2416 = vmatprep.subr.bf16.mxu0 0
    %2417 = vmatpush2.bf16.msra.mxu0 %v1912
    %2418 = vmatprep.mubr.bf16.mxu0 %v917
    %2419 = vmatmul.mubr.bf16.gmra.mxu0 %v916
    %v2420 = vpop.f32.mrf.mxu0
    %v2421 = vadd.f32 %v2356, %v2420
    %v2422 = vpop.f32.mrf.mxu0
    %v2423 = vpop.f32.mrf.mxu0
    %v2424 = vadd.f32 %v2359, %v2423
    %v2425 = vpop.f32.mrf.mxu0
    %2426 = vmatprep.mubr.bf16.mxu0 %v941
    %2427 = vmatmul.mubr.bf16.gmra.mxu0 %v940
    %v2428 = vpop.f32.mrf.mxu0
    %v2429 = vadd.f32 %v2364, %v2428
    %v2430 = vpop.f32.mrf.mxu0
    %v2431 = vpop.f32.mrf.mxu0
    %v2432 = vadd.f32 %v2367, %v2431
    %v2433 = vpop.f32.mrf.mxu0
    %2434 = vmatprep.mubr.bf16.mxu0 %v965
    %2435 = vmatmul.mubr.bf16.gmra.mxu0 %v964
    %v2436 = vpop.f32.mrf.mxu0
    %v2437 = vadd.f32 %v2372, %v2436
    %v2438 = vpop.f32.mrf.mxu0
    %v2439 = vpop.f32.mrf.mxu0
    %v2440 = vadd.f32 %v2375, %v2439
    %v2441 = vpop.f32.mrf.mxu0
    %2442 = vmatprep.mubr.bf16.mxu0 %v989
    %2443 = vmatmul.mubr.bf16.gmra.mxu0 %v988
    %v2444 = vpop.f32.mrf.mxu0
    %v2445 = vadd.f32 %v2380, %v2444
    %v2446 = vpop.f32.mrf.mxu0
    %v2447 = vpop.f32.mrf.mxu0
    %v2448 = vadd.f32 %v2383, %v2447
    %v2449 = vpop.f32.mrf.mxu0
    %2450 = vdwg.mxu0
    %2451 = vmatprep.subr.bf16.mxu0 0
    %2452 = vmatpush1.bf16.msra.mxu0 %v1927
    %2453 = vmatprep.subr.bf16.mxu0 0
    %2454 = vmatpush1.bf16.msra.mxu0 %v1926
    %2455 = vmatprep.subr.bf16.mxu0 0
    %2456 = vmatpush1.bf16.msra.mxu0 %v1925
    %2457 = vmatprep.subr.bf16.mxu0 0
    %2458 = vmatpush1.bf16.msra.mxu0 %v1924
    %2459 = vmatprep.subr.bf16.mxu0 0
    %2460 = vmatpush1.bf16.msra.mxu0 %v1923
    %2461 = vmatprep.subr.bf16.mxu0 0
    %2462 = vmatpush1.bf16.msra.mxu0 %v1922
    %2463 = vmatprep.subr.bf16.mxu0 0
    %2464 = vmatpush1.bf16.msra.mxu0 %v1921
    %2465 = vmatprep.subr.bf16.mxu0 0
    %2466 = vmatpush1.bf16.msra.mxu0 %v1920
    %2467 = vmatprep.subr.bf16.mxu0 0
    %2468 = vmatpush2.bf16.msra.mxu0 %v1935
    %2469 = vmatprep.subr.bf16.mxu0 0
    %2470 = vmatpush2.bf16.msra.mxu0 %v1934
    %2471 = vmatprep.subr.bf16.mxu0 0
    %2472 = vmatpush2.bf16.msra.mxu0 %v1933
    %2473 = vmatprep.subr.bf16.mxu0 0
    %2474 = vmatpush2.bf16.msra.mxu0 %v1932
    %2475 = vmatprep.subr.bf16.mxu0 0
    %2476 = vmatpush2.bf16.msra.mxu0 %v1931
    %2477 = vmatprep.subr.bf16.mxu0 0
    %2478 = vmatpush2.bf16.msra.mxu0 %v1930
    %2479 = vmatprep.subr.bf16.mxu0 0
    %2480 = vmatpush2.bf16.msra.mxu0 %v1929
    %2481 = vmatprep.subr.bf16.mxu0 0
    %2482 = vmatpush2.bf16.msra.mxu0 %v1928
    %2483 = vmatprep.mubr.bf16.mxu0 %v919
    %2484 = vmatmul.mubr.bf16.gmra.mxu0 %v918
    %v2485 = vpop.f32.mrf.mxu0
    %v2486 = vadd.f32 %v2421, %v2485
    %v2487 = vpop.f32.mrf.mxu0
    %v2488 = vpop.f32.mrf.mxu0
    %v2489 = vadd.f32 %v2424, %v2488
    %v2490 = vpop.f32.mrf.mxu0
    %2491 = vmatprep.mubr.bf16.mxu0 %v943
    %2492 = vmatmul.mubr.bf16.gmra.mxu0 %v942
    %v2493 = vpop.f32.mrf.mxu0
    %v2494 = vadd.f32 %v2429, %v2493
    %v2495 = vpop.f32.mrf.mxu0
    %v2496 = vpop.f32.mrf.mxu0
    %v2497 = vadd.f32 %v2432, %v2496
    %v2498 = vpop.f32.mrf.mxu0
    %2499 = vmatprep.mubr.bf16.mxu0 %v967
    %2500 = vmatmul.mubr.bf16.gmra.mxu0 %v966
    %v2501 = vpop.f32.mrf.mxu0
    %v2502 = vadd.f32 %v2437, %v2501
    %v2503 = vpop.f32.mrf.mxu0
    %v2504 = vpop.f32.mrf.mxu0
    %v2505 = vadd.f32 %v2440, %v2504
    %v2506 = vpop.f32.mrf.mxu0
    %2507 = vmatprep.mubr.bf16.mxu0 %v991
    %2508 = vmatmul.mubr.bf16.gmra.mxu0 %v990
    %v2509 = vpop.f32.mrf.mxu0
    %v2510 = vadd.f32 %v2445, %v2509
    %v2511 = vpop.f32.mrf.mxu0
    %v2512 = vpop.f32.mrf.mxu0
    %v2513 = vadd.f32 %v2448, %v2512
    %v2514 = vpop.f32.mrf.mxu0
    %2515 = vdwg.mxu0
    %2516 = vmatprep.subr.bf16.mxu0 0
    %2517 = vmatpush1.bf16.msra.mxu0 %v1943
    %2518 = vmatprep.subr.bf16.mxu0 0
    %2519 = vmatpush1.bf16.msra.mxu0 %v1942
    %2520 = vmatprep.subr.bf16.mxu0 0
    %2521 = vmatpush1.bf16.msra.mxu0 %v1941
    %2522 = vmatprep.subr.bf16.mxu0 0
    %2523 = vmatpush1.bf16.msra.mxu0 %v1940
    %2524 = vmatprep.subr.bf16.mxu0 0
    %2525 = vmatpush1.bf16.msra.mxu0 %v1939
    %2526 = vmatprep.subr.bf16.mxu0 0
    %2527 = vmatpush1.bf16.msra.mxu0 %v1938
    %2528 = vmatprep.subr.bf16.mxu0 0
    %2529 = vmatpush1.bf16.msra.mxu0 %v1937
    %2530 = vmatprep.subr.bf16.mxu0 0
    %2531 = vmatpush1.bf16.msra.mxu0 %v1936
    %2532 = vmatprep.subr.bf16.mxu0 0
    %2533 = vmatpush2.bf16.msra.mxu0 %v1951
    %2534 = vmatprep.subr.bf16.mxu0 0
    %2535 = vmatpush2.bf16.msra.mxu0 %v1950
    %2536 = vmatprep.subr.bf16.mxu0 0
    %2537 = vmatpush2.bf16.msra.mxu0 %v1949
    %2538 = vmatprep.subr.bf16.mxu0 0
    %2539 = vmatpush2.bf16.msra.mxu0 %v1948
    %2540 = vmatprep.subr.bf16.mxu0 0
    %2541 = vmatpush2.bf16.msra.mxu0 %v1947
    %2542 = vmatprep.subr.bf16.mxu0 0
    %2543 = vmatpush2.bf16.msra.mxu0 %v1946
    %2544 = vmatprep.subr.bf16.mxu0 0
    %2545 = vmatpush2.bf16.msra.mxu0 %v1945
    %2546 = vmatprep.subr.bf16.mxu0 0
    %2547 = vmatpush2.bf16.msra.mxu0 %v1944
    %2548 = vmatprep.mubr.bf16.mxu0 %v921
    %2549 = vmatmul.mubr.bf16.gmra.mxu0 %v920
    %v2550 = vpop.f32.mrf.mxu0
    %v2551 = vadd.f32 %v2486, %v2550
    %v2552 = vpop.f32.mrf.mxu0
    %v2553 = vpop.f32.mrf.mxu0
    %v2554 = vadd.f32 %v2489, %v2553
    %v2555 = vpop.f32.mrf.mxu0
    %2556 = vmatprep.mubr.bf16.mxu0 %v945
    %2557 = vmatmul.mubr.bf16.gmra.mxu0 %v944
    %v2558 = vpop.f32.mrf.mxu0
    %v2559 = vadd.f32 %v2494, %v2558
    %v2560 = vpop.f32.mrf.mxu0
    %v2561 = vpop.f32.mrf.mxu0
    %v2562 = vadd.f32 %v2497, %v2561
    %v2563 = vpop.f32.mrf.mxu0
    %2564 = vmatprep.mubr.bf16.mxu0 %v969
    %2565 = vmatmul.mubr.bf16.gmra.mxu0 %v968
    %v2566 = vpop.f32.mrf.mxu0
    %v2567 = vadd.f32 %v2502, %v2566
    %v2568 = vpop.f32.mrf.mxu0
    %v2569 = vpop.f32.mrf.mxu0
    %v2570 = vadd.f32 %v2505, %v2569
    %v2571 = vpop.f32.mrf.mxu0
    %2572 = vmatprep.mubr.bf16.mxu0 %v993
    %2573 = vmatmul.mubr.bf16.gmra.mxu0 %v992
    %v2574 = vpop.f32.mrf.mxu0
    %v2575 = vadd.f32 %v2510, %v2574
    %v2576 = vpop.f32.mrf.mxu0
    %v2577 = vpop.f32.mrf.mxu0
    %v2578 = vadd.f32 %v2513, %v2577
    %v2579 = vpop.f32.mrf.mxu0
    %2580 = vdwg.mxu0
    %2581 = vmatprep.subr.bf16.mxu0 0
    %2582 = vmatpush1.bf16.msra.mxu0 %v1959
    %2583 = vmatprep.subr.bf16.mxu0 0
    %2584 = vmatpush1.bf16.msra.mxu0 %v1958
    %2585 = vmatprep.subr.bf16.mxu0 0
    %2586 = vmatpush1.bf16.msra.mxu0 %v1957
    %2587 = vmatprep.subr.bf16.mxu0 0
    %2588 = vmatpush1.bf16.msra.mxu0 %v1956
    %2589 = vmatprep.subr.bf16.mxu0 0
    %2590 = vmatpush1.bf16.msra.mxu0 %v1955
    %2591 = vmatprep.subr.bf16.mxu0 0
    %2592 = vmatpush1.bf16.msra.mxu0 %v1954
    %2593 = vmatprep.subr.bf16.mxu0 0
    %2594 = vmatpush1.bf16.msra.mxu0 %v1953
    %2595 = vmatprep.subr.bf16.mxu0 0
    %2596 = vmatpush1.bf16.msra.mxu0 %v1952
    %2597 = vmatprep.subr.bf16.mxu0 0
    %2598 = vmatpush2.bf16.msra.mxu0 %v1967
    %2599 = vmatprep.subr.bf16.mxu0 0
    %2600 = vmatpush2.bf16.msra.mxu0 %v1966
    %2601 = vmatprep.subr.bf16.mxu0 0
    %2602 = vmatpush2.bf16.msra.mxu0 %v1965
    %2603 = vmatprep.subr.bf16.mxu0 0
    %2604 = vmatpush2.bf16.msra.mxu0 %v1964
    %2605 = vmatprep.subr.bf16.mxu0 0
    %2606 = vmatpush2.bf16.msra.mxu0 %v1963
    %2607 = vmatprep.subr.bf16.mxu0 0
    %2608 = vmatpush2.bf16.msra.mxu0 %v1962
    %2609 = vmatprep.subr.bf16.mxu0 0
    %2610 = vmatpush2.bf16.msra.mxu0 %v1961
    %2611 = vmatprep.subr.bf16.mxu0 0
    %2612 = vmatpush2.bf16.msra.mxu0 %v1960
    %2613 = vmatprep.mubr.bf16.mxu0 %v923
    %2614 = vmatmul.mubr.bf16.gmra.mxu0 %v922
    %v2615 = vpop.f32.mrf.mxu0
    %v2616 = vadd.f32 %v2551, %v2615
    %v2617 = vpop.f32.mrf.mxu0
    %v2618 = vpop.f32.mrf.mxu0
    %v2619 = vadd.f32 %v2554, %v2618
    %v2620 = vpop.f32.mrf.mxu0
    %2621 = vmatprep.mubr.bf16.mxu0 %v947
    %2622 = vmatmul.mubr.bf16.gmra.mxu0 %v946
    %v2623 = vpop.f32.mrf.mxu0
    %v2624 = vadd.f32 %v2559, %v2623
    %v2625 = vpop.f32.mrf.mxu0
    %v2626 = vpop.f32.mrf.mxu0
    %v2627 = vadd.f32 %v2562, %v2626
    %v2628 = vpop.f32.mrf.mxu0
    %2629 = vmatprep.mubr.bf16.mxu0 %v971
    %2630 = vmatmul.mubr.bf16.gmra.mxu0 %v970
    %v2631 = vpop.f32.mrf.mxu0
    %v2632 = vadd.f32 %v2567, %v2631
    %v2633 = vpop.f32.mrf.mxu0
    %v2634 = vpop.f32.mrf.mxu0
    %v2635 = vadd.f32 %v2570, %v2634
    %v2636 = vpop.f32.mrf.mxu0
    %2637 = vmatprep.mubr.bf16.mxu0 %v995
    %2638 = vmatmul.mubr.bf16.gmra.mxu0 %v994
    %v2639 = vpop.f32.mrf.mxu0
    %v2640 = vadd.f32 %v2575, %v2639
    %v2641 = vpop.f32.mrf.mxu0
    %v2642 = vpop.f32.mrf.mxu0
    %v2643 = vadd.f32 %v2578, %v2642
    %v2644 = vpop.f32.mrf.mxu0
    %2645 = vdwg.mxu0
    %2646 = vmatprep.subr.bf16.mxu0 0
    %2647 = vmatpush1.bf16.msra.mxu0 %v1975
    %2648 = vmatprep.subr.bf16.mxu0 0
    %2649 = vmatpush1.bf16.msra.mxu0 %v1974
    %2650 = vmatprep.subr.bf16.mxu0 0
    %2651 = vmatpush1.bf16.msra.mxu0 %v1973
    %2652 = vmatprep.subr.bf16.mxu0 0
    %2653 = vmatpush1.bf16.msra.mxu0 %v1972
    %2654 = vmatprep.subr.bf16.mxu0 0
    %2655 = vmatpush1.bf16.msra.mxu0 %v1971
    %2656 = vmatprep.subr.bf16.mxu0 0
    %2657 = vmatpush1.bf16.msra.mxu0 %v1970
    %2658 = vmatprep.subr.bf16.mxu0 0
    %2659 = vmatpush1.bf16.msra.mxu0 %v1969
    %2660 = vmatprep.subr.bf16.mxu0 0
    %2661 = vmatpush1.bf16.msra.mxu0 %v1968
    %2662 = vmatprep.subr.bf16.mxu0 0
    %2663 = vmatpush2.bf16.msra.mxu0 %v1983
    %2664 = vmatprep.subr.bf16.mxu0 0
    %2665 = vmatpush2.bf16.msra.mxu0 %v1982
    %2666 = vmatprep.subr.bf16.mxu0 0
    %2667 = vmatpush2.bf16.msra.mxu0 %v1981
    %2668 = vmatprep.subr.bf16.mxu0 0
    %2669 = vmatpush2.bf16.msra.mxu0 %v1980
    %2670 = vmatprep.subr.bf16.mxu0 0
    %2671 = vmatpush2.bf16.msra.mxu0 %v1979
    %2672 = vmatprep.subr.bf16.mxu0 0
    %2673 = vmatpush2.bf16.msra.mxu0 %v1978
    %2674 = vmatprep.subr.bf16.mxu0 0
    %2675 = vmatpush2.bf16.msra.mxu0 %v1977
    %2676 = vmatprep.subr.bf16.mxu0 0
    %2677 = vmatpush2.bf16.msra.mxu0 %v1976
    %2678 = vmatprep.mubr.bf16.mxu0 %v925
    %2679 = vmatmul.mubr.bf16.gmra.mxu0 %v924
    %v2680 = vpop.f32.mrf.mxu0
    %v2681 = vadd.f32 %v2616, %v2680
    %v2682 = vpop.f32.mrf.mxu0
    %v2683 = vpop.f32.mrf.mxu0
    %v2684 = vadd.f32 %v2619, %v2683
    %v2685 = vpop.f32.mrf.mxu0
    %2686 = vmatprep.mubr.bf16.mxu0 %v949
    %2687 = vmatmul.mubr.bf16.gmra.mxu0 %v948
    %v2688 = vpop.f32.mrf.mxu0
    %v2689 = vadd.f32 %v2624, %v2688
    %v2690 = vpop.f32.mrf.mxu0
    %v2691 = vpop.f32.mrf.mxu0
    %v2692 = vadd.f32 %v2627, %v2691
    %v2693 = vpop.f32.mrf.mxu0
    %2694 = vmatprep.mubr.bf16.mxu0 %v973
    %2695 = vmatmul.mubr.bf16.gmra.mxu0 %v972
    %v2696 = vpop.f32.mrf.mxu0
    %v2697 = vadd.f32 %v2632, %v2696
    %v2698 = vpop.f32.mrf.mxu0
    %v2699 = vpop.f32.mrf.mxu0
    %v2700 = vadd.f32 %v2635, %v2699
    %v2701 = vpop.f32.mrf.mxu0
    %2702 = vmatprep.mubr.bf16.mxu0 %v997
    %2703 = vmatmul.mubr.bf16.gmra.mxu0 %v996
    %v2704 = vpop.f32.mrf.mxu0
    %v2705 = vadd.f32 %v2640, %v2704
    %v2706 = vpop.f32.mrf.mxu0
    %v2707 = vpop.f32.mrf.mxu0
    %v2708 = vadd.f32 %v2643, %v2707
    %v2709 = vpop.f32.mrf.mxu0
    %2710 = vdwg.mxu0
    %2711 = vmatprep.subr.bf16.mxu0 0
    %2712 = vmatpush1.bf16.msra.mxu0 %v1991
    %2713 = vmatprep.subr.bf16.mxu0 0
    %2714 = vmatpush1.bf16.msra.mxu0 %v1990
    %2715 = vmatprep.subr.bf16.mxu0 0
    %2716 = vmatpush1.bf16.msra.mxu0 %v1989
    %2717 = vmatprep.subr.bf16.mxu0 0
    %2718 = vmatpush1.bf16.msra.mxu0 %v1988
    %2719 = vmatprep.subr.bf16.mxu0 0
    %2720 = vmatpush1.bf16.msra.mxu0 %v1987
    %2721 = vmatprep.subr.bf16.mxu0 0
    %2722 = vmatpush1.bf16.msra.mxu0 %v1986
    %2723 = vmatprep.subr.bf16.mxu0 0
    %2724 = vmatpush1.bf16.msra.mxu0 %v1985
    %2725 = vmatprep.subr.bf16.mxu0 0
    %2726 = vmatpush1.bf16.msra.mxu0 %v1984
    %2727 = vmatprep.subr.bf16.mxu0 0
    %2728 = vmatpush2.bf16.msra.mxu0 %v1999
    %2729 = vmatprep.subr.bf16.mxu0 0
    %2730 = vmatpush2.bf16.msra.mxu0 %v1998
    %2731 = vmatprep.subr.bf16.mxu0 0
    %2732 = vmatpush2.bf16.msra.mxu0 %v1997
    %2733 = vmatprep.subr.bf16.mxu0 0
    %2734 = vmatpush2.bf16.msra.mxu0 %v1996
    %2735 = vmatprep.subr.bf16.mxu0 0
    %2736 = vmatpush2.bf16.msra.mxu0 %v1995
    %2737 = vmatprep.subr.bf16.mxu0 0
    %2738 = vmatpush2.bf16.msra.mxu0 %v1994
    %2739 = vmatprep.subr.bf16.mxu0 0
    %2740 = vmatpush2.bf16.msra.mxu0 %v1993
    %2741 = vmatprep.subr.bf16.mxu0 0
    %2742 = vmatpush2.bf16.msra.mxu0 %v1992
    %2743 = vmatprep.mubr.bf16.mxu0 %v927
    %2744 = vmatmul.mubr.bf16.gmra.mxu0 %v926
    %v2745 = vpop.f32.mrf.mxu0
    %v2746 = vadd.f32 %v2681, %v2745
    %v2747 = vpop.f32.mrf.mxu0
    %v2748 = vpop.f32.mrf.mxu0
    %v2749 = vadd.f32 %v2684, %v2748
    %v2750 = vpop.f32.mrf.mxu0
    %2751 = vmatprep.mubr.bf16.mxu0 %v951
    %2752 = vmatmul.mubr.bf16.gmra.mxu0 %v950
    %v2753 = vpop.f32.mrf.mxu0
    %v2754 = vadd.f32 %v2689, %v2753
    %v2755 = vpop.f32.mrf.mxu0
    %v2756 = vpop.f32.mrf.mxu0
    %v2757 = vadd.f32 %v2692, %v2756
    %v2758 = vpop.f32.mrf.mxu0
    %2759 = vmatprep.mubr.bf16.mxu0 %v975
    %2760 = vmatmul.mubr.bf16.gmra.mxu0 %v974
    %v2761 = vpop.f32.mrf.mxu0
    %v2762 = vadd.f32 %v2697, %v2761
    %v2763 = vpop.f32.mrf.mxu0
    %v2764 = vpop.f32.mrf.mxu0
    %v2765 = vadd.f32 %v2700, %v2764
    %v2766 = vpop.f32.mrf.mxu0
    %2767 = vmatprep.mubr.bf16.mxu0 %v999
    %2768 = vmatmul.mubr.bf16.gmra.mxu0 %v998
    %v2769 = vpop.f32.mrf.mxu0
    %v2770 = vadd.f32 %v2705, %v2769
    %v2771 = vpop.f32.mrf.mxu0
    %v2772 = vpop.f32.mrf.mxu0
    %v2773 = vadd.f32 %v2708, %v2772
    %v2774 = vpop.f32.mrf.mxu0
    %2775 = vdwg.mxu0
    %2776 = vmatprep.subr.bf16.mxu0 0
    %2777 = vmatpush1.bf16.msra.mxu0 %v2007
    %2778 = vmatprep.subr.bf16.mxu0 0
    %2779 = vmatpush1.bf16.msra.mxu0 %v2006
    %2780 = vmatprep.subr.bf16.mxu0 0
    %2781 = vmatpush1.bf16.msra.mxu0 %v2005
    %2782 = vmatprep.subr.bf16.mxu0 0
    %2783 = vmatpush1.bf16.msra.mxu0 %v2004
    %2784 = vmatprep.subr.bf16.mxu0 0
    %2785 = vmatpush1.bf16.msra.mxu0 %v2003
    %2786 = vmatprep.subr.bf16.mxu0 0
    %2787 = vmatpush1.bf16.msra.mxu0 %v2002
    %2788 = vmatprep.subr.bf16.mxu0 0
    %2789 = vmatpush1.bf16.msra.mxu0 %v2001
    %2790 = vmatprep.subr.bf16.mxu0 0
    %2791 = vmatpush1.bf16.msra.mxu0 %v2000
    %2792 = vmatprep.subr.bf16.mxu0 0
    %2793 = vmatpush2.bf16.msra.mxu0 %v2015
    %2794 = vmatprep.subr.bf16.mxu0 0
    %2795 = vmatpush2.bf16.msra.mxu0 %v2014
    %2796 = vmatprep.subr.bf16.mxu0 0
    %2797 = vmatpush2.bf16.msra.mxu0 %v2013
    %2798 = vmatprep.subr.bf16.mxu0 0
    %2799 = vmatpush2.bf16.msra.mxu0 %v2012
    %2800 = vmatprep.subr.bf16.mxu0 0
    %2801 = vmatpush2.bf16.msra.mxu0 %v2011
    %2802 = vmatprep.subr.bf16.mxu0 0
    %2803 = vmatpush2.bf16.msra.mxu0 %v2010
    %2804 = vmatprep.subr.bf16.mxu0 0
    %2805 = vmatpush2.bf16.msra.mxu0 %v2009
    %2806 = vmatprep.subr.bf16.mxu0 0
    %2807 = vmatpush2.bf16.msra.mxu0 %v2008
    %2808 = vmatprep.mubr.bf16.mxu0 %v929
    %2809 = vmatmul.mubr.bf16.gmra.mxu0 %v928
    %v2810 = vpop.f32.mrf.mxu0
    %v2811 = vadd.f32 %v2746, %v2810
    %v2812 = vpop.f32.mrf.mxu0
    %v2813 = vpop.f32.mrf.mxu0
    %v2814 = vadd.f32 %v2749, %v2813
    %v2815 = vpop.f32.mrf.mxu0
    %2816 = vmatprep.mubr.bf16.mxu0 %v953
    %2817 = vmatmul.mubr.bf16.gmra.mxu0 %v952
    %v2818 = vpop.f32.mrf.mxu0
    %v2819 = vadd.f32 %v2754, %v2818
    %v2820 = vpop.f32.mrf.mxu0
    %v2821 = vpop.f32.mrf.mxu0
    %v2822 = vadd.f32 %v2757, %v2821
    %v2823 = vpop.f32.mrf.mxu0
    %2824 = vmatprep.mubr.bf16.mxu0 %v977
    %2825 = vmatmul.mubr.bf16.gmra.mxu0 %v976
    %v2826 = vpop.f32.mrf.mxu0
    %v2827 = vadd.f32 %v2762, %v2826
    %v2828 = vpop.f32.mrf.mxu0
    %v2829 = vpop.f32.mrf.mxu0
    %v2830 = vadd.f32 %v2765, %v2829
    %v2831 = vpop.f32.mrf.mxu0
    %2832 = vmatprep.mubr.bf16.mxu0 %v1001
    %2833 = vmatmul.mubr.bf16.gmra.mxu0 %v1000
    %v2834 = vpop.f32.mrf.mxu0
    %v2835 = vadd.f32 %v2770, %v2834
    %v2836 = vpop.f32.mrf.mxu0
    %v2837 = vpop.f32.mrf.mxu0
    %v2838 = vadd.f32 %v2773, %v2837
    %v2839 = vpop.f32.mrf.mxu0
    %2840 = vdwg.mxu0
    %2841 = vmatprep.subr.bf16.mxu0 0
    %2842 = vmatpush1.bf16.msra.mxu0 %v2023
    %2843 = vmatprep.subr.bf16.mxu0 0
    %2844 = vmatpush1.bf16.msra.mxu0 %v2022
    %2845 = vmatprep.subr.bf16.mxu0 0
    %2846 = vmatpush1.bf16.msra.mxu0 %v2021
    %2847 = vmatprep.subr.bf16.mxu0 0
    %2848 = vmatpush1.bf16.msra.mxu0 %v2020
    %2849 = vmatprep.subr.bf16.mxu0 0
    %2850 = vmatpush1.bf16.msra.mxu0 %v2019
    %2851 = vmatprep.subr.bf16.mxu0 0
    %2852 = vmatpush1.bf16.msra.mxu0 %v2018
    %2853 = vmatprep.subr.bf16.mxu0 0
    %2854 = vmatpush1.bf16.msra.mxu0 %v2017
    %2855 = vmatprep.subr.bf16.mxu0 0
    %2856 = vmatpush1.bf16.msra.mxu0 %v2016
    %2857 = vmatprep.subr.bf16.mxu0 0
    %2858 = vmatpush2.bf16.msra.mxu0 %v2031
    %2859 = vmatprep.subr.bf16.mxu0 0
    %2860 = vmatpush2.bf16.msra.mxu0 %v2030
    %2861 = vmatprep.subr.bf16.mxu0 0
    %2862 = vmatpush2.bf16.msra.mxu0 %v2029
    %2863 = vmatprep.subr.bf16.mxu0 0
    %2864 = vmatpush2.bf16.msra.mxu0 %v2028
    %2865 = vmatprep.subr.bf16.mxu0 0
    %2866 = vmatpush2.bf16.msra.mxu0 %v2027
    %2867 = vmatprep.subr.bf16.mxu0 0
    %2868 = vmatpush2.bf16.msra.mxu0 %v2026
    %2869 = vmatprep.subr.bf16.mxu0 0
    %2870 = vmatpush2.bf16.msra.mxu0 %v2025
    %2871 = vmatprep.subr.bf16.mxu0 0
    %2872 = vmatpush2.bf16.msra.mxu0 %v2024
    %2873 = vmatprep.mubr.bf16.mxu0 %v931
    %2874 = vmatmul.mubr.bf16.gmra.mxu0 %v930
    %v2875 = vpop.f32.mrf.mxu0
    %v2876 = vadd.f32 %v2811, %v2875
    %v2877 = vpop.f32.mrf.mxu0
    %v2878 = vpop.f32.mrf.mxu0
    %v2879 = vadd.f32 %v2814, %v2878
    %v2880 = vpop.f32.mrf.mxu0
    %2881 = vmatprep.mubr.bf16.mxu0 %v955
    %2882 = vmatmul.mubr.bf16.gmra.mxu0 %v954
    %v2883 = vpop.f32.mrf.mxu0
    %v2884 = vadd.f32 %v2819, %v2883
    %v2885 = vpop.f32.mrf.mxu0
    %v2886 = vpop.f32.mrf.mxu0
    %v2887 = vadd.f32 %v2822, %v2886
    %v2888 = vpop.f32.mrf.mxu0
    %2889 = vmatprep.mubr.bf16.mxu0 %v979
    %2890 = vmatmul.mubr.bf16.gmra.mxu0 %v978
    %v2891 = vpop.f32.mrf.mxu0
    %v2892 = vadd.f32 %v2827, %v2891
    %v2893 = vpop.f32.mrf.mxu0
    %v2894 = vpop.f32.mrf.mxu0
    %v2895 = vadd.f32 %v2830, %v2894
    %v2896 = vpop.f32.mrf.mxu0
    %2897 = vmatprep.mubr.bf16.mxu0 %v1003
    %2898 = vmatmul.mubr.bf16.gmra.mxu0 %v1002
    %v2899 = vpop.f32.mrf.mxu0
    %v2900 = vadd.f32 %v2835, %v2899
    %v2901 = vpop.f32.mrf.mxu0
    %v2902 = vpop.f32.mrf.mxu0
    %v2903 = vadd.f32 %v2838, %v2902
    %v2904 = vpop.f32.mrf.mxu0
    %2905 = vdwg.mxu0
    %2906 = vmatprep.subr.bf16.mxu0 0
    %2907 = vmatpush1.bf16.msra.mxu0 %v2039
    %2908 = vmatprep.subr.bf16.mxu0 0
    %2909 = vmatpush1.bf16.msra.mxu0 %v2038
    %2910 = vmatprep.subr.bf16.mxu0 0
    %2911 = vmatpush1.bf16.msra.mxu0 %v2037
    %2912 = vmatprep.subr.bf16.mxu0 0
    %2913 = vmatpush1.bf16.msra.mxu0 %v2036
    %2914 = vmatprep.subr.bf16.mxu0 0
    %2915 = vmatpush1.bf16.msra.mxu0 %v2035
    %2916 = vmatprep.subr.bf16.mxu0 0
    %2917 = vmatpush1.bf16.msra.mxu0 %v2034
    %2918 = vmatprep.subr.bf16.mxu0 0
    %2919 = vmatpush1.bf16.msra.mxu0 %v2033
    %2920 = vmatprep.subr.bf16.mxu0 0
    %2921 = vmatpush1.bf16.msra.mxu0 %v2032
    %2922 = vmatprep.subr.bf16.mxu0 0
    %2923 = vmatpush2.bf16.msra.mxu0 %v2047
    %2924 = vmatprep.subr.bf16.mxu0 0
    %2925 = vmatpush2.bf16.msra.mxu0 %v2046
    %2926 = vmatprep.subr.bf16.mxu0 0
    %2927 = vmatpush2.bf16.msra.mxu0 %v2045
    %2928 = vmatprep.subr.bf16.mxu0 0
    %2929 = vmatpush2.bf16.msra.mxu0 %v2044
    %2930 = vmatprep.subr.bf16.mxu0 0
    %2931 = vmatpush2.bf16.msra.mxu0 %v2043
    %2932 = vmatprep.subr.bf16.mxu0 0
    %2933 = vmatpush2.bf16.msra.mxu0 %v2042
    %2934 = vmatprep.subr.bf16.mxu0 0
    %2935 = vmatpush2.bf16.msra.mxu0 %v2041
    %2936 = vmatprep.subr.bf16.mxu0 0
    %2937 = vmatpush2.bf16.msra.mxu0 %v2040
    %2938 = vmatprep.mubr.bf16.mxu0 %v933
    %2939 = vmatmul.mubr.bf16.gmra.mxu0 %v932
    %v2940 = vpop.f32.mrf.mxu0
    %v2941 = vadd.f32 %v2876, %v2940
    %v2942 = vpop.f32.mrf.mxu0
    %v2943 = vpop.f32.mrf.mxu0
    %v2944 = vadd.f32 %v2879, %v2943
    %v2945 = vpop.f32.mrf.mxu0
    %2946 = vmatprep.mubr.bf16.mxu0 %v957
    %2947 = vmatmul.mubr.bf16.gmra.mxu0 %v956
    %v2948 = vpop.f32.mrf.mxu0
    %v2949 = vadd.f32 %v2884, %v2948
    %v2950 = vpop.f32.mrf.mxu0
    %v2951 = vpop.f32.mrf.mxu0
    %v2952 = vadd.f32 %v2887, %v2951
    %v2953 = vpop.f32.mrf.mxu0
    %2954 = vmatprep.mubr.bf16.mxu0 %v981
    %2955 = vmatmul.mubr.bf16.gmra.mxu0 %v980
    %v2956 = vpop.f32.mrf.mxu0
    %v2957 = vadd.f32 %v2892, %v2956
    %v2958 = vpop.f32.mrf.mxu0
    %v2959 = vpop.f32.mrf.mxu0
    %v2960 = vadd.f32 %v2895, %v2959
    %v2961 = vpop.f32.mrf.mxu0
    %2962 = vmatprep.mubr.bf16.mxu0 %v1005
    %2963 = vmatmul.mubr.bf16.gmra.mxu0 %v1004
    %v2964 = vpop.f32.mrf.mxu0
    %v2965 = vadd.f32 %v2900, %v2964
    %v2966 = vpop.f32.mrf.mxu0
    %v2967 = vpop.f32.mrf.mxu0
    %v2968 = vadd.f32 %v2903, %v2967
    %v2969 = vpop.f32.mrf.mxu0
    %2970 = vdwg.mxu0
    %2971 = vmatprep.subr.bf16.mxu0 0
    %2972 = vmatpush1.bf16.msra.mxu0 %v2055
    %2973 = vmatprep.subr.bf16.mxu0 0
    %2974 = vmatpush1.bf16.msra.mxu0 %v2054
    %2975 = vmatprep.subr.bf16.mxu0 0
    %2976 = vmatpush1.bf16.msra.mxu0 %v2053
    %2977 = vmatprep.subr.bf16.mxu0 0
    %2978 = vmatpush1.bf16.msra.mxu0 %v2052
    %2979 = vmatprep.subr.bf16.mxu0 0
    %2980 = vmatpush1.bf16.msra.mxu0 %v2051
    %2981 = vmatprep.subr.bf16.mxu0 0
    %2982 = vmatpush1.bf16.msra.mxu0 %v2050
    %2983 = vmatprep.subr.bf16.mxu0 0
    %2984 = vmatpush1.bf16.msra.mxu0 %v2049
    %2985 = vmatprep.subr.bf16.mxu0 0
    %2986 = vmatpush1.bf16.msra.mxu0 %v2048
    %2987 = vmatprep.subr.bf16.mxu0 0
    %2988 = vmatpush2.bf16.msra.mxu0 %v2063
    %2989 = vmatprep.subr.bf16.mxu0 0
    %2990 = vmatpush2.bf16.msra.mxu0 %v2062
    %2991 = vmatprep.subr.bf16.mxu0 0
    %2992 = vmatpush2.bf16.msra.mxu0 %v2061
    %2993 = vmatprep.subr.bf16.mxu0 0
    %2994 = vmatpush2.bf16.msra.mxu0 %v2060
    %2995 = vmatprep.subr.bf16.mxu0 0
    %2996 = vmatpush2.bf16.msra.mxu0 %v2059
    %2997 = vmatprep.subr.bf16.mxu0 0
    %2998 = vmatpush2.bf16.msra.mxu0 %v2058
    %2999 = vmatprep.subr.bf16.mxu0 0
    %3000 = vmatpush2.bf16.msra.mxu0 %v2057
    %3001 = vmatprep.subr.bf16.mxu0 0
    %3002 = vmatpush2.bf16.msra.mxu0 %v2056
    %3003 = vmatprep.mubr.bf16.mxu0 %v935
    %3004 = vmatmul.mubr.bf16.gmra.mxu0 %v934
    %v3005 = vpop.f32.mrf.mxu0
    %v3006 = vadd.f32 %v2941, %v3005
    %v3007 = vpop.f32.mrf.mxu0
    %v3008 = vpop.f32.mrf.mxu0
    %v3009 = vadd.f32 %v2944, %v3008
    %v3010 = vpop.f32.mrf.mxu0
    %3011 = vmatprep.mubr.bf16.mxu0 %v959
    %3012 = vmatmul.mubr.bf16.gmra.mxu0 %v958
    %v3013 = vpop.f32.mrf.mxu0
    %v3014 = vadd.f32 %v2949, %v3013
    %v3015 = vpop.f32.mrf.mxu0
    %v3016 = vpop.f32.mrf.mxu0
    %v3017 = vadd.f32 %v2952, %v3016
    %v3018 = vpop.f32.mrf.mxu0
    %3019 = vmatprep.mubr.bf16.mxu0 %v983
    %3020 = vmatmul.mubr.bf16.gmra.mxu0 %v982
    %v3021 = vpop.f32.mrf.mxu0
    %v3022 = vadd.f32 %v2957, %v3021
    %v3023 = vpop.f32.mrf.mxu0
    %v3024 = vpop.f32.mrf.mxu0
    %v3025 = vadd.f32 %v2960, %v3024
    %v3026 = vpop.f32.mrf.mxu0
    %3027 = vmatprep.mubr.bf16.mxu0 %v1007
    %3028 = vmatmul.mubr.bf16.gmra.mxu0 %v1006
    %v3029 = vpop.f32.mrf.mxu0
    %v3030 = vadd.f32 %v2965, %v3029
    %v3031 = vpop.f32.mrf.mxu0
    %v3032 = vpop.f32.mrf.mxu0
    %v3033 = vadd.f32 %v2968, %v3032
    %v3034 = vpop.f32.mrf.mxu0
    %3035 = vdwg.mxu0
    %v3036 = vld [vmem:[%s7] sm:$0xff]
    %v3037 = vld [vmem:[%s7 + $0x8] sm:$0xff]
    %v3038 = vld [vmem:[%s7 + $0x10] sm:$0xff]
    %v3039 = vld [vmem:[%s7 + $0x18] sm:$0xff]
    %v3040 = vld [vmem:[%s7 + $0x20] sm:$0xff]
    %v3041 = vld [vmem:[%s7 + $0x28] sm:$0xff]
    %v3042 = vld [vmem:[%s7 + $0x30] sm:$0xff]
    %v3043 = vld [vmem:[%s7 + $0x38] sm:$0xff]
    %v3044 = vld [vmem:[%s7 + $0x40] sm:$0xff]
    %v3045 = vld [vmem:[%s7 + $0x48] sm:$0xff]
    %v3046 = vld [vmem:[%s7 + $0x50] sm:$0xff]
    %v3047 = vld [vmem:[%s7 + $0x58] sm:$0xff]
    %v3048 = vld [vmem:[%s7 + $0x60] sm:$0xff]
    %v3049 = vld [vmem:[%s7 + $0x68] sm:$0xff]
    %v3050 = vld [vmem:[%s7 + $0x70] sm:$0xff]
    %v3051 = vld [vmem:[%s7 + $0x78] sm:$0xff]
    %v3052 = vld [vmem:[%s9] sm:$0xff]
    %v3053 = vld [vmem:[%s9 + $0x8] sm:$0xff]
    %v3054 = vld [vmem:[%s9 + $0x10] sm:$0xff]
    %v3055 = vld [vmem:[%s9 + $0x18] sm:$0xff]
    %v3056 = vld [vmem:[%s9 + $0x20] sm:$0xff]
    %v3057 = vld [vmem:[%s9 + $0x28] sm:$0xff]
    %v3058 = vld [vmem:[%s9 + $0x30] sm:$0xff]
    %v3059 = vld [vmem:[%s9 + $0x38] sm:$0xff]
    %v3060 = vld [vmem:[%s9 + $0x40] sm:$0xff]
    %v3061 = vld [vmem:[%s9 + $0x48] sm:$0xff]
    %v3062 = vld [vmem:[%s9 + $0x50] sm:$0xff]
    %v3063 = vld [vmem:[%s9 + $0x58] sm:$0xff]
    %v3064 = vld [vmem:[%s9 + $0x60] sm:$0xff]
    %v3065 = vld [vmem:[%s9 + $0x68] sm:$0xff]
    %v3066 = vld [vmem:[%s9 + $0x70] sm:$0xff]
    %v3067 = vld [vmem:[%s9 + $0x78] sm:$0xff]
    %v3068 = vld [vmem:[%s9 + $0x80] sm:$0xff]
    %v3069 = vld [vmem:[%s9 + $0x88] sm:$0xff]
    %v3070 = vld [vmem:[%s9 + $0x90] sm:$0xff]
    %v3071 = vld [vmem:[%s9 + $0x98] sm:$0xff]
    %v3072 = vld [vmem:[%s9 + $0xa0] sm:$0xff]
    %v3073 = vld [vmem:[%s9 + $0xa8] sm:$0xff]
    %v3074 = vld [vmem:[%s9 + $0xb0] sm:$0xff]
    %v3075 = vld [vmem:[%s9 + $0xb8] sm:$0xff]
    %v3076 = vld [vmem:[%s9 + $0xc0] sm:$0xff]
    %v3077 = vld [vmem:[%s9 + $0xc8] sm:$0xff]
    %v3078 = vld [vmem:[%s9 + $0xd0] sm:$0xff]
    %v3079 = vld [vmem:[%s9 + $0xd8] sm:$0xff]
    %v3080 = vld [vmem:[%s9 + $0xe0] sm:$0xff]
    %v3081 = vld [vmem:[%s9 + $0xe8] sm:$0xff]
    %v3082 = vld [vmem:[%s9 + $0xf0] sm:$0xff]
    %v3083 = vld [vmem:[%s9 + $0xf8] sm:$0xff]
    %v3084 = vld [vmem:[%s11] sm:$0x1]
    %v3085 = vld [vmem:[%s13] sm:$0x1]
    %vm3086 = vcmask 523264
    %v3087 = vsel %vm3086, %v3006, 0.0
    %3088 = vadd.xlane.f32.xlu0 %v3087
    %v3089 = vpop.xlane.xlu0 %3088
    %v3090 = vsel %vm3086, %v3009, 0.0
    %3091 = vadd.xlane.f32.xlu0 %v3090
    %v3092 = vpop.xlane.xlu0 %3091
    %v3093 = vsel %vm3086, %v3014, 0.0
    %3094 = vadd.xlane.f32.xlu0 %v3093
    %v3095 = vpop.xlane.xlu0 %3094
    %v3096 = vsel %vm3086, %v3017, 0.0
    %3097 = vadd.xlane.f32.xlu0 %v3096
    %v3098 = vpop.xlane.xlu0 %3097
    %v3099 = vsel %vm3086, %v3022, 0.0
    %3100 = vadd.xlane.f32.xlu0 %v3099
    %v3101 = vpop.xlane.xlu0 %3100
    %v3102 = vsel %vm3086, %v3025, 0.0
    %3103 = vadd.xlane.f32.xlu0 %v3102
    %v3104 = vpop.xlane.xlu0 %3103
    %v3105 = vsel %vm3086, %v3030, 0.0
    %3106 = vadd.xlane.f32.xlu0 %v3105
    %v3107 = vpop.xlane.xlu0 %3106
    %v3108 = vsel %vm3086, %v3033, 0.0
    %3109 = vadd.xlane.f32.xlu0 %v3108
    %v3110 = vpop.xlane.xlu0 %3109
    %v3111 = vrcp.pop 64.0
    %v3112 = vmul.f32 %v3089, %v3111
    %v3113 = vmul.f32 %v3092, %v3111
    %v3114 = vmul.f32 %v3095, %v3111
    %v3115 = vmul.f32 %v3098, %v3111
    %v3116 = vmul.f32 %v3101, %v3111
    %v3117 = vmul.f32 %v3104, %v3111
    %v3118 = vmul.f32 %v3107, %v3111
    %v3119 = vmul.f32 %v3110, %v3111
    %v3120 = vsub.f32 %v3006, %v3112
    %v3121 = vsub.f32 %v3009, %v3113
    %v3122 = vsub.f32 %v3014, %v3114
    %v3123 = vsub.f32 %v3017, %v3115
    %v3124 = vsub.f32 %v3022, %v3116
    %v3125 = vsub.f32 %v3025, %v3117
    %v3126 = vsub.f32 %v3030, %v3118
    %v3127 = vsub.f32 %v3033, %v3119
    %v3128 = vmul.f32 %v3120, %v3120
    %v3129 = vmul.f32 %v3121, %v3121
    %v3130 = vmul.f32 %v3122, %v3122
    %v3131 = vmul.f32 %v3123, %v3123
    %v3132 = vmul.f32 %v3124, %v3124
    %v3133 = vmul.f32 %v3125, %v3125
    %v3134 = vmul.f32 %v3126, %v3126
    %v3135 = vmul.f32 %v3127, %v3127
    %v3136 = vsel %vm3086, %v3128, 0.0
    %3137 = vadd.xlane.f32.xlu0 %v3136
    %v3138 = vpop.xlane.xlu0 %3137
    %v3139 = vsel %vm3086, %v3129, 0.0
    %3140 = vadd.xlane.f32.xlu0 %v3139
    %v3141 = vpop.xlane.xlu0 %3140
    %v3142 = vsel %vm3086, %v3130, 0.0
    %3143 = vadd.xlane.f32.xlu0 %v3142
    %v3144 = vpop.xlane.xlu0 %3143
    %v3145 = vsel %vm3086, %v3131, 0.0
    %3146 = vadd.xlane.f32.xlu0 %v3145
    %v3147 = vpop.xlane.xlu0 %3146
    %v3148 = vsel %vm3086, %v3132, 0.0
    %3149 = vadd.xlane.f32.xlu0 %v3148
    %v3150 = vpop.xlane.xlu0 %3149
    %v3151 = vsel %vm3086, %v3133, 0.0
    %3152 = vadd.xlane.f32.xlu0 %v3151
    %v3153 = vpop.xlane.xlu0 %3152
    %v3154 = vsel %vm3086, %v3134, 0.0
    %3155 = vadd.xlane.f32.xlu0 %v3154
    %v3156 = vpop.xlane.xlu0 %3155
    %v3157 = vsel %vm3086, %v3135, 0.0
    %3158 = vadd.xlane.f32.xlu0 %v3157
    %v3159 = vpop.xlane.xlu0 %3158
    %v3160 = vmul.f32 %v3138, %v3111
    %v3161 = vmul.f32 %v3141, %v3111
    %v3162 = vmul.f32 %v3144, %v3111
    %v3163 = vmul.f32 %v3147, %v3111
    %v3164 = vmul.f32 %v3150, %v3111
    %v3165 = vmul.f32 %v3153, %v3111
    %v3166 = vmul.f32 %v3156, %v3111
    %v3167 = vmul.f32 %v3159, %v3111
    %v3168 = vadd.f32 %v3160, 1e-06
    %v3169 = vadd.f32 %v3161, 1e-06
    %v3170 = vadd.f32 %v3162, 1e-06
    %v3171 = vadd.f32 %v3163, 1e-06
    %v3172 = vadd.f32 %v3164, 1e-06
    %v3173 = vadd.f32 %v3165, 1e-06
    %v3174 = vadd.f32 %v3166, 1e-06
    %v3175 = vadd.f32 %v3167, 1e-06
    %v3176 = vrsqrt.pop %v3168
    %v3177 = vrsqrt.pop %v3169
    %v3178 = vrsqrt.pop %v3170
    %v3179 = vrsqrt.pop %v3171
    %v3180 = vrsqrt.pop %v3172
    %v3181 = vrsqrt.pop %v3173
    %v3182 = vrsqrt.pop %v3174
    %v3183 = vrsqrt.pop %v3175
    %v3184 = vmul.f32 %v3120, %v3176
    %v3185 = vmul.f32 %v3121, %v3177
    %v3186 = vmul.f32 %v3122, %v3178
    %v3187 = vmul.f32 %v3123, %v3179
    %v3188 = vmul.f32 %v3124, %v3180
    %v3189 = vmul.f32 %v3125, %v3181
    %v3190 = vmul.f32 %v3126, %v3182
    %v3191 = vmul.f32 %v3127, %v3183
    %v3193 = vlaneseq
    %v3194 = vshrl.u32 %v3193, 7
    %v3195 = vsub.s32 0, %v3194
    %v3196 = vrot.slane %v3084, %v3195
    %v3198 = vmul.f32 %v3184, %v3196
    %v3199 = vmul.f32 %v3185, %v3196
    %v3200 = vmul.f32 %v3186, %v3196
    %v3201 = vmul.f32 %v3187, %v3196
    %v3202 = vmul.f32 %v3188, %v3196
    %v3203 = vmul.f32 %v3189, %v3196
    %v3204 = vmul.f32 %v3190, %v3196
    %v3205 = vmul.f32 %v3191, %v3196
    %v3207 = vlaneseq
    %v3208 = vshrl.u32 %v3207, 7
    %v3209 = vsub.s32 0, %v3208
    %v3210 = vrot.slane %v3085, %v3209
    %v3212 = vadd.f32 %v3198, %v3210
    %v3213 = vadd.f32 %v3199, %v3210
    %v3214 = vadd.f32 %v3200, %v3210
    %v3215 = vadd.f32 %v3201, %v3210
    %v3216 = vadd.f32 %v3202, %v3210
    %v3217 = vadd.f32 %v3203, %v3210
    %v3218 = vadd.f32 %v3204, %v3210
    %v3219 = vadd.f32 %v3205, %v3210
    %v3220 = vld [vmem:[%s15] sm:$0xf]
    %v3221 = vld [vmem:[%s15 + $0x4] sm:$0xf]
    %v3222 = vld [vmem:[%s15 + $0x8] sm:$0xf]
    %v3223 = vld [vmem:[%s15 + $0xc] sm:$0xf]
    %v3224 = vld [vmem:[%s15 + $0x10] sm:$0xf]
    %v3225 = vld [vmem:[%s15 + $0x14] sm:$0xf]
    %v3226 = vld [vmem:[%s15 + $0x18] sm:$0xf]
    %v3227 = vld [vmem:[%s15 + $0x1c] sm:$0xf]
    %v3228 = vpack.c.bf16 %v3213, %v3212
    %v3229 = vpack.c.bf16 %v3215, %v3214
    %v3230 = vpack.c.bf16 %v3217, %v3216
    %v3231 = vpack.c.bf16 %v3219, %v3218
    %v3232 = vld [vmem:[%s17] sm:$0x1]
    %v3234 = vlaneseq
    %v3235 = vshrl.u32 %v3234, 7
    %v3236 = vsub.s32 0, %v3235
    %v3237 = vrot.slane %v3232, %v3236
    %v3247 = vunpack.c.l.b16 %v3220
    %v3248 = vunpack.c.l.b16 %v3221
    %v3249 = vunpack.c.l.b16 %v3222
    %v3250 = vunpack.c.l.b16 %v3223
    %v3251 = vunpack.c.l.b16 %v3224
    %v3252 = vunpack.c.l.b16 %v3225
    %v3253 = vunpack.c.l.b16 %v3226
    %v3254 = vunpack.c.l.b16 %v3227
    %v3255 = vpack.c.b16 %v3248, %v3247
    %v3256 = vpack.c.b16 %v3250, %v3249
    %v3257 = vpack.c.b16 %v3252, %v3251
    %v3258 = vpack.c.b16 %v3254, %v3253
    %v3264 = vsel %vm3086, %v3228, 0
    %v3267 = vsel %vm3086, %v3229, 0
    %v3270 = vsel %vm3086, %v3230, 0
    %v3273 = vsel %vm3086, %v3231, 0
    %3275 = vmatprep.subr.bf16.mxu0 0
    %3276 = vmatpush1.bf16.msra.mxu0 0
    %3277 = vmatprep.subr.bf16.mxu0 0
    %3278 = vmatpush1.bf16.msra.mxu0 0
    %3279 = vmatprep.subr.bf16.mxu0 0
    %3280 = vmatpush1.bf16.msra.mxu0 0
    %3281 = vmatprep.subr.bf16.mxu0 0
    %3282 = vmatpush1.bf16.msra.mxu0 0
    %3283 = vmatprep.subr.bf16.mxu0 0
    %3284 = vmatpush1.bf16.msra.mxu0 %v3258
    %3285 = vmatprep.subr.bf16.mxu0 0
    %3286 = vmatpush1.bf16.msra.mxu0 %v3257
    %3287 = vmatprep.subr.bf16.mxu0 0
    %3288 = vmatpush1.bf16.msra.mxu0 %v3256
    %3289 = vmatprep.subr.bf16.mxu0 0
    %3290 = vmatpush1.bf16.msra.mxu0 %v3255
    %3291 = vmatprep.subr.bf16.mxu0 0
    %3292 = vmatpush2.bf16.msra.mxu0 0
    %3293 = vmatprep.subr.bf16.mxu0 0
    %3294 = vmatpush2.bf16.msra.mxu0 0
    %3295 = vmatprep.subr.bf16.mxu0 0
    %3296 = vmatpush2.bf16.msra.mxu0 0
    %3297 = vmatprep.subr.bf16.mxu0 0
    %3298 = vmatpush2.bf16.msra.mxu0 0
    %3299 = vmatprep.subr.bf16.mxu0 0
    %3300 = vmatpush2.bf16.msra.mxu0 0
    %3301 = vmatprep.subr.bf16.mxu0 0
    %3302 = vmatpush2.bf16.msra.mxu0 0
    %3303 = vmatprep.subr.bf16.mxu0 0
    %3304 = vmatpush2.bf16.msra.mxu0 0
    %3305 = vmatprep.subr.bf16.mxu0 0
    %3306 = vmatpush2.bf16.msra.mxu0 0
    %3307 = vmatprep.mubr.bf16.mxu0 0
    %3308 = vmatmul.mubr.bf16.gmra.mxu0 %v3264
    %v3309 = vpop.f32.mrf.mxu0
    %v3310 = vadd.f32 %v3237, %v3309
    %v3311 = vpop.f32.mrf.mxu0
    %v3312 = vpop.f32.mrf.mxu0
    %v3313 = vadd.f32 %v3237, %v3312
    %v3314 = vpop.f32.mrf.mxu0
    %3315 = vmatprep.mubr.bf16.mxu0 0
    %3316 = vmatmul.mubr.bf16.gmra.mxu0 %v3267
    %v3317 = vpop.f32.mrf.mxu0
    %v3318 = vadd.f32 %v3237, %v3317
    %v3319 = vpop.f32.mrf.mxu0
    %v3320 = vpop.f32.mrf.mxu0
    %v3321 = vadd.f32 %v3237, %v3320
    %v3322 = vpop.f32.mrf.mxu0
    %3323 = vmatprep.mubr.bf16.mxu0 0
    %3324 = vmatmul.mubr.bf16.gmra.mxu0 %v3270
    %v3325 = vpop.f32.mrf.mxu0
    %v3326 = vadd.f32 %v3237, %v3325
    %v3327 = vpop.f32.mrf.mxu0
    %v3328 = vpop.f32.mrf.mxu0
    %v3329 = vadd.f32 %v3237, %v3328
    %v3330 = vpop.f32.mrf.mxu0
    %3331 = vmatprep.mubr.bf16.mxu0 0
    %3332 = vmatmul.mubr.bf16.gmra.mxu0 %v3273
    %v3333 = vpop.f32.mrf.mxu0
    %v3334 = vadd.f32 %v3237, %v3333
    %v3335 = vpop.f32.mrf.mxu0
    %v3336 = vpop.f32.mrf.mxu0
    %v3337 = vadd.f32 %v3237, %v3336
    %v3338 = vpop.f32.mrf.mxu0
    %3339 = vdwg.mxu0
    %v3340 = vld [vmem:[%s19] sm:$0xf]
    %v3341 = vld [vmem:[%s19 + $0x4] sm:$0xf]
    %v3342 = vld [vmem:[%s19 + $0x8] sm:$0xf]
    %v3343 = vld [vmem:[%s19 + $0xc] sm:$0xf]
    %v3344 = vld [vmem:[%s19 + $0x10] sm:$0xf]
    %v3345 = vld [vmem:[%s19 + $0x14] sm:$0xf]
    %v3346 = vld [vmem:[%s19 + $0x18] sm:$0xf]
    %v3347 = vld [vmem:[%s19 + $0x1c] sm:$0xf]
    %v3348 = vld [vmem:[%s21] sm:$0x1]
    %v3350 = vlaneseq
    %v3351 = vshrl.u32 %v3350, 7
    %v3352 = vsub.s32 0, %v3351
    %v3353 = vrot.slane %v3348, %v3352
    %v3363 = vunpack.c.l.b16 %v3340
    %v3364 = vunpack.c.l.b16 %v3341
    %v3365 = vunpack.c.l.b16 %v3342
    %v3366 = vunpack.c.l.b16 %v3343
    %v3367 = vunpack.c.l.b16 %v3344
    %v3368 = vunpack.c.l.b16 %v3345
    %v3369 = vunpack.c.l.b16 %v3346
    %v3370 = vunpack.c.l.b16 %v3347
    %v3371 = vpack.c.b16 %v3364, %v3363
    %v3372 = vpack.c.b16 %v3366, %v3365
    %v3373 = vpack.c.b16 %v3368, %v3367
    %v3374 = vpack.c.b16 %v3370, %v3369
    %3379 = vmatprep.subr.bf16.mxu0 0
    %3380 = vmatpush1.bf16.msra.mxu0 0
    %3381 = vmatprep.subr.bf16.mxu0 0
    %3382 = vmatpush1.bf16.msra.mxu0 0
    %3383 = vmatprep.subr.bf16.mxu0 0
    %3384 = vmatpush1.bf16.msra.mxu0 0
    %3385 = vmatprep.subr.bf16.mxu0 0
    %3386 = vmatpush1.bf16.msra.mxu0 0
    %3387 = vmatprep.subr.bf16.mxu0 0
    %3388 = vmatpush1.bf16.msra.mxu0 %v3374
    %3389 = vmatprep.subr.bf16.mxu0 0
    %3390 = vmatpush1.bf16.msra.mxu0 %v3373
    %3391 = vmatprep.subr.bf16.mxu0 0
    %3392 = vmatpush1.bf16.msra.mxu0 %v3372
    %3393 = vmatprep.subr.bf16.mxu0 0
    %3394 = vmatpush1.bf16.msra.mxu0 %v3371
    %3395 = vmatprep.subr.bf16.mxu0 0
    %3396 = vmatpush2.bf16.msra.mxu0 0
    %3397 = vmatprep.subr.bf16.mxu0 0
    %3398 = vmatpush2.bf16.msra.mxu0 0
    %3399 = vmatprep.subr.bf16.mxu0 0
    %3400 = vmatpush2.bf16.msra.mxu0 0
    %3401 = vmatprep.subr.bf16.mxu0 0
    %3402 = vmatpush2.bf16.msra.mxu0 0
    %3403 = vmatprep.subr.bf16.mxu0 0
    %3404 = vmatpush2.bf16.msra.mxu0 0
    %3405 = vmatprep.subr.bf16.mxu0 0
    %3406 = vmatpush2.bf16.msra.mxu0 0
    %3407 = vmatprep.subr.bf16.mxu0 0
    %3408 = vmatpush2.bf16.msra.mxu0 0
    %3409 = vmatprep.subr.bf16.mxu0 0
    %3410 = vmatpush2.bf16.msra.mxu0 0
    %3411 = vmatprep.mubr.bf16.mxu0 0
    %3412 = vmatmul.mubr.bf16.gmra.mxu0 %v3264
    %v3413 = vpop.f32.mrf.mxu0
    %v3414 = vadd.f32 %v3353, %v3413
    %v3415 = vpop.f32.mrf.mxu0
    %v3416 = vpop.f32.mrf.mxu0
    %v3417 = vadd.f32 %v3353, %v3416
    %v3418 = vpop.f32.mrf.mxu0
    %3419 = vmatprep.mubr.bf16.mxu0 0
    %3420 = vmatmul.mubr.bf16.gmra.mxu0 %v3267
    %v3421 = vpop.f32.mrf.mxu0
    %v3422 = vadd.f32 %v3353, %v3421
    %v3423 = vpop.f32.mrf.mxu0
    %v3424 = vpop.f32.mrf.mxu0
    %v3425 = vadd.f32 %v3353, %v3424
    %v3426 = vpop.f32.mrf.mxu0
    %3427 = vmatprep.mubr.bf16.mxu0 0
    %3428 = vmatmul.mubr.bf16.gmra.mxu0 %v3270
    %v3429 = vpop.f32.mrf.mxu0
    %v3430 = vadd.f32 %v3353, %v3429
    %v3431 = vpop.f32.mrf.mxu0
    %v3432 = vpop.f32.mrf.mxu0
    %v3433 = vadd.f32 %v3353, %v3432
    %v3434 = vpop.f32.mrf.mxu0
    %3435 = vmatprep.mubr.bf16.mxu0 0
    %3436 = vmatmul.mubr.bf16.gmra.mxu0 %v3273
    %v3437 = vpop.f32.mrf.mxu0
    %v3438 = vadd.f32 %v3353, %v3437
    %v3439 = vpop.f32.mrf.mxu0
    %v3440 = vpop.f32.mrf.mxu0
    %v3441 = vadd.f32 %v3353, %v3440
    %v3442 = vpop.f32.mrf.mxu0
    %3443 = vdwg.mxu0
    %v3444 = vld [vmem:[%s23] sm:$0xf]
    %v3445 = vld [vmem:[%s23 + $0x4] sm:$0xf]
    %v3446 = vld [vmem:[%s23 + $0x8] sm:$0xf]
    %v3447 = vld [vmem:[%s23 + $0xc] sm:$0xf]
    %v3448 = vld [vmem:[%s23 + $0x10] sm:$0xf]
    %v3449 = vld [vmem:[%s23 + $0x14] sm:$0xf]
    %v3450 = vld [vmem:[%s23 + $0x18] sm:$0xf]
    %v3451 = vld [vmem:[%s23 + $0x1c] sm:$0xf]
    %v3452 = vld [vmem:[%s25] sm:$0x1]
    %v3454 = vlaneseq
    %v3455 = vshrl.u32 %v3454, 7
    %v3456 = vsub.s32 0, %v3455
    %v3457 = vrot.slane %v3452, %v3456
    %v3467 = vunpack.c.l.b16 %v3444
    %v3468 = vunpack.c.l.b16 %v3445
    %v3469 = vunpack.c.l.b16 %v3446
    %v3470 = vunpack.c.l.b16 %v3447
    %v3471 = vunpack.c.l.b16 %v3448
    %v3472 = vunpack.c.l.b16 %v3449
    %v3473 = vunpack.c.l.b16 %v3450
    %v3474 = vunpack.c.l.b16 %v3451
    %v3475 = vpack.c.b16 %v3468, %v3467
    %v3476 = vpack.c.b16 %v3470, %v3469
    %v3477 = vpack.c.b16 %v3472, %v3471
    %v3478 = vpack.c.b16 %v3474, %v3473
    %3483 = vmatprep.subr.bf16.mxu0 0
    %3484 = vmatpush1.bf16.msra.mxu0 0
    %3485 = vmatprep.subr.bf16.mxu0 0
    %3486 = vmatpush1.bf16.msra.mxu0 0
    %3487 = vmatprep.subr.bf16.mxu0 0
    %3488 = vmatpush1.bf16.msra.mxu0 0
    %3489 = vmatprep.subr.bf16.mxu0 0
    %3490 = vmatpush1.bf16.msra.mxu0 0
    %3491 = vmatprep.subr.bf16.mxu0 0
    %3492 = vmatpush1.bf16.msra.mxu0 %v3478
    %3493 = vmatprep.subr.bf16.mxu0 0
    %3494 = vmatpush1.bf16.msra.mxu0 %v3477
    %3495 = vmatprep.subr.bf16.mxu0 0
    %3496 = vmatpush1.bf16.msra.mxu0 %v3476
    %3497 = vmatprep.subr.bf16.mxu0 0
    %3498 = vmatpush1.bf16.msra.mxu0 %v3475
    %3499 = vmatprep.subr.bf16.mxu0 0
    %3500 = vmatpush2.bf16.msra.mxu0 0
    %3501 = vmatprep.subr.bf16.mxu0 0
    %3502 = vmatpush2.bf16.msra.mxu0 0
    %3503 = vmatprep.subr.bf16.mxu0 0
    %3504 = vmatpush2.bf16.msra.mxu0 0
    %3505 = vmatprep.subr.bf16.mxu0 0
    %3506 = vmatpush2.bf16.msra.mxu0 0
    %3507 = vmatprep.subr.bf16.mxu0 0
    %3508 = vmatpush2.bf16.msra.mxu0 0
    %3509 = vmatprep.subr.bf16.mxu0 0
    %3510 = vmatpush2.bf16.msra.mxu0 0
    %3511 = vmatprep.subr.bf16.mxu0 0
    %3512 = vmatpush2.bf16.msra.mxu0 0
    %3513 = vmatprep.subr.bf16.mxu0 0
    %3514 = vmatpush2.bf16.msra.mxu0 0
    %3515 = vmatprep.mubr.bf16.mxu0 0
    %3516 = vmatmul.mubr.bf16.gmra.mxu0 %v3264
    %v3517 = vpop.f32.mrf.mxu0
    %v3518 = vadd.f32 %v3457, %v3517
    %v3519 = vpop.f32.mrf.mxu0
    %v3520 = vpop.f32.mrf.mxu0
    %v3521 = vadd.f32 %v3457, %v3520
    %v3522 = vpop.f32.mrf.mxu0
    %3523 = vmatprep.mubr.bf16.mxu0 0
    %3524 = vmatmul.mubr.bf16.gmra.mxu0 %v3267
    %v3525 = vpop.f32.mrf.mxu0
    %v3526 = vadd.f32 %v3457, %v3525
    %v3527 = vpop.f32.mrf.mxu0
    %v3528 = vpop.f32.mrf.mxu0
    %v3529 = vadd.f32 %v3457, %v3528
    %v3530 = vpop.f32.mrf.mxu0
    %3531 = vmatprep.mubr.bf16.mxu0 0
    %3532 = vmatmul.mubr.bf16.gmra.mxu0 %v3270
    %v3533 = vpop.f32.mrf.mxu0
    %v3534 = vadd.f32 %v3457, %v3533
    %v3535 = vpop.f32.mrf.mxu0
    %v3536 = vpop.f32.mrf.mxu0
    %v3537 = vadd.f32 %v3457, %v3536
    %v3538 = vpop.f32.mrf.mxu0
    %3539 = vmatprep.mubr.bf16.mxu0 0
    %3540 = vmatmul.mubr.bf16.gmra.mxu0 %v3273
    %v3541 = vpop.f32.mrf.mxu0
    %v3542 = vadd.f32 %v3457, %v3541
    %v3543 = vpop.f32.mrf.mxu0
    %v3544 = vpop.f32.mrf.mxu0
    %v3545 = vadd.f32 %v3457, %v3544
    %v3546 = vpop.f32.mrf.mxu0
    %3547 = vdwg.mxu0
    %v3548 = vmul.f32 %v3414, %v3052
    %v3549 = vmul.f32 %v3417, %v3053
    %v3550 = vmul.f32 %v3422, %v3054
    %v3551 = vmul.f32 %v3425, %v3055
    %v3552 = vmul.f32 %v3430, %v3056
    %v3553 = vmul.f32 %v3433, %v3057
    %v3554 = vmul.f32 %v3438, %v3058
    %v3555 = vmul.f32 %v3441, %v3059
    %v3556 = vmul.f32 %v3414, %v3060
    %v3557 = vmul.f32 %v3417, %v3061
    %v3558 = vmul.f32 %v3422, %v3062
    %v3559 = vmul.f32 %v3425, %v3063
    %v3560 = vmul.f32 %v3430, %v3064
    %v3561 = vmul.f32 %v3433, %v3065
    %v3562 = vmul.f32 %v3438, %v3066
    %v3563 = vmul.f32 %v3441, %v3067
    %v3564 = vmul.f32 %v3414, %v3068
    %v3565 = vmul.f32 %v3417, %v3069
    %v3566 = vmul.f32 %v3422, %v3070
    %v3567 = vmul.f32 %v3425, %v3071
    %v3568 = vmul.f32 %v3430, %v3072
    %v3569 = vmul.f32 %v3433, %v3073
    %v3570 = vmul.f32 %v3438, %v3074
    %v3571 = vmul.f32 %v3441, %v3075
    %v3572 = vmul.f32 %v3414, %v3076
    %v3573 = vmul.f32 %v3417, %v3077
    %v3574 = vmul.f32 %v3422, %v3078
    %v3575 = vmul.f32 %v3425, %v3079
    %v3576 = vmul.f32 %v3430, %v3080
    %v3577 = vmul.f32 %v3433, %v3081
    %v3578 = vmul.f32 %v3438, %v3082
    %v3579 = vmul.f32 %v3441, %v3083
    %v3580 = vmul.f32 %v3518, %v3052
    %v3581 = vmul.f32 %v3521, %v3053
    %v3582 = vmul.f32 %v3526, %v3054
    %v3583 = vmul.f32 %v3529, %v3055
    %v3584 = vmul.f32 %v3534, %v3056
    %v3585 = vmul.f32 %v3537, %v3057
    %v3586 = vmul.f32 %v3542, %v3058
    %v3587 = vmul.f32 %v3545, %v3059
    %v3588 = vmul.f32 %v3518, %v3060
    %v3589 = vmul.f32 %v3521, %v3061
    %v3590 = vmul.f32 %v3526, %v3062
    %v3591 = vmul.f32 %v3529, %v3063
    %v3592 = vmul.f32 %v3534, %v3064
    %v3593 = vmul.f32 %v3537, %v3065
    %v3594 = vmul.f32 %v3542, %v3066
    %v3595 = vmul.f32 %v3545, %v3067
    %v3596 = vmul.f32 %v3518, %v3068
    %v3597 = vmul.f32 %v3521, %v3069
    %v3598 = vmul.f32 %v3526, %v3070
    %v3599 = vmul.f32 %v3529, %v3071
    %v3600 = vmul.f32 %v3534, %v3072
    %v3601 = vmul.f32 %v3537, %v3073
    %v3602 = vmul.f32 %v3542, %v3074
    %v3603 = vmul.f32 %v3545, %v3075
    %v3604 = vmul.f32 %v3518, %v3076
    %v3605 = vmul.f32 %v3521, %v3077
    %v3606 = vmul.f32 %v3526, %v3078
    %v3607 = vmul.f32 %v3529, %v3079
    %v3608 = vmul.f32 %v3534, %v3080
    %v3609 = vmul.f32 %v3537, %v3081
    %v3610 = vmul.f32 %v3542, %v3082
    %v3611 = vmul.f32 %v3545, %v3083
    %v3613 = vsel %vm3086, %v3310, 0
    %v3616 = vsel %vm3086, %v3313, 0
    %v3619 = vsel %vm3086, %v3318, 0
    %v3622 = vsel %vm3086, %v3321, 0
    %v3625 = vsel %vm3086, %v3326, 0
    %v3628 = vsel %vm3086, %v3329, 0
    %v3631 = vsel %vm3086, %v3334, 0
    %v3634 = vsel %vm3086, %v3337, 0
    %v3637 = vsel %vm3086, %v3548, 0
    %v3640 = vsel %vm3086, %v3549, 0
    %v3643 = vsel %vm3086, %v3550, 0
    %v3646 = vsel %vm3086, %v3551, 0
    %v3649 = vsel %vm3086, %v3552, 0
    %v3652 = vsel %vm3086, %v3553, 0
    %v3655 = vsel %vm3086, %v3554, 0
    %v3658 = vsel %vm3086, %v3555, 0
    %v3661 = vsel %vm3086, %v3556, 0
    %v3664 = vsel %vm3086, %v3557, 0
    %v3667 = vsel %vm3086, %v3558, 0
    %v3670 = vsel %vm3086, %v3559, 0
    %v3673 = vsel %vm3086, %v3560, 0
    %v3676 = vsel %vm3086, %v3561, 0
    %v3679 = vsel %vm3086, %v3562, 0
    %v3682 = vsel %vm3086, %v3563, 0
    %v3685 = vsel %vm3086, %v3564, 0
    %v3688 = vsel %vm3086, %v3565, 0
    %v3691 = vsel %vm3086, %v3566, 0
    %v3694 = vsel %vm3086, %v3567, 0
    %v3697 = vsel %vm3086, %v3568, 0
    %v3700 = vsel %vm3086, %v3569, 0
    %v3703 = vsel %vm3086, %v3570, 0
    %v3706 = vsel %vm3086, %v3571, 0
    %v3709 = vsel %vm3086, %v3572, 0
    %v3712 = vsel %vm3086, %v3573, 0
    %v3715 = vsel %vm3086, %v3574, 0
    %v3718 = vsel %vm3086, %v3575, 0
    %v3721 = vsel %vm3086, %v3576, 0
    %v3724 = vsel %vm3086, %v3577, 0
    %v3727 = vsel %vm3086, %v3578, 0
    %v3730 = vsel %vm3086, %v3579, 0
    %3732 = vmatprep.subr.mxu0 0.0
    %3733 = vmatpush1.xpose.msra.mxu0 %v3682
    %3734 = vmatprep.subr.mxu0 0.0
    %3735 = vmatpush1.xpose.msra.mxu0 %v3679
    %3736 = vmatprep.subr.mxu0 0.0
    %3737 = vmatpush1.xpose.msra.mxu0 %v3676
    %3738 = vmatprep.subr.mxu0 0.0
    %3739 = vmatpush1.xpose.msra.mxu0 %v3673
    %3740 = vmatprep.subr.mxu0 0.0
    %3741 = vmatpush1.xpose.msra.mxu0 %v3670
    %3742 = vmatprep.subr.mxu0 0.0
    %3743 = vmatpush1.xpose.msra.mxu0 %v3667
    %3744 = vmatprep.subr.mxu0 0.0
    %3745 = vmatpush1.xpose.msra.mxu0 %v3664
    %3746 = vmatprep.subr.mxu0 0.0
    %3747 = vmatpush1.xpose.msra.mxu0 %v3661
    %3748 = vmatprep.subr.mxu0 0.0
    %3749 = vmatpush1.xpose.msra.mxu0 %v3658
    %3750 = vmatprep.subr.mxu0 0.0
    %3751 = vmatpush1.xpose.msra.mxu0 %v3655
    %3752 = vmatprep.subr.mxu0 0.0
    %3753 = vmatpush1.xpose.msra.mxu0 %v3652
    %3754 = vmatprep.subr.mxu0 0.0
    %3755 = vmatpush1.xpose.msra.mxu0 %v3649
    %3756 = vmatprep.subr.mxu0 0.0
    %3757 = vmatpush1.xpose.msra.mxu0 %v3646
    %3758 = vmatprep.subr.mxu0 0.0
    %3759 = vmatpush1.xpose.msra.mxu0 %v3643
    %3760 = vmatprep.subr.mxu0 0.0
    %3761 = vmatpush1.xpose.msra.mxu0 %v3640
    %3762 = vmatprep.subr.mxu0 0.0
    %3763 = vmatpush1.xpose.msra.mxu0 %v3637
    %3764 = vmatprep.subr.mxu0 0.0
    %3765 = vmatpush2.xpose.msra.mxu0 %v3730
    %3766 = vmatprep.subr.mxu0 0.0
    %3767 = vmatpush2.xpose.msra.mxu0 %v3727
    %3768 = vmatprep.subr.mxu0 0.0
    %3769 = vmatpush2.xpose.msra.mxu0 %v3724
    %3770 = vmatprep.subr.mxu0 0.0
    %3771 = vmatpush2.xpose.msra.mxu0 %v3721
    %3772 = vmatprep.subr.mxu0 0.0
    %3773 = vmatpush2.xpose.msra.mxu0 %v3718
    %3774 = vmatprep.subr.mxu0 0.0
    %3775 = vmatpush2.xpose.msra.mxu0 %v3715
    %3776 = vmatprep.subr.mxu0 0.0
    %3777 = vmatpush2.xpose.msra.mxu0 %v3712
    %3778 = vmatprep.subr.mxu0 0.0
    %3779 = vmatpush2.xpose.msra.mxu0 %v3709
    %3780 = vmatprep.subr.mxu0 0.0
    %3781 = vmatpush2.xpose.msra.mxu0 %v3706
    %3782 = vmatprep.subr.mxu0 0.0
    %3783 = vmatpush2.xpose.msra.mxu0 %v3703
    %3784 = vmatprep.subr.mxu0 0.0
    %3785 = vmatpush2.xpose.msra.mxu0 %v3700
    %3786 = vmatprep.subr.mxu0 0.0
    %3787 = vmatpush2.xpose.msra.mxu0 %v3697
    %3788 = vmatprep.subr.mxu0 0.0
    %3789 = vmatpush2.xpose.msra.mxu0 %v3694
    %3790 = vmatprep.subr.mxu0 0.0
    %3791 = vmatpush2.xpose.msra.mxu0 %v3691
    %3792 = vmatprep.subr.mxu0 0.0
    %3793 = vmatpush2.xpose.msra.mxu0 %v3688
    %3794 = vmatprep.subr.mxu0 0.0
    %3795 = vmatpush2.xpose.msra.mxu0 %v3685
    %3796 = vmatprep.mubr.f32.mxu0 0.0
    %3797 = vmatmul.mubr.f32.gmra.mxu0 %v3613
    %v3798 = vpop.f32.mrf.mxu0
    %v3799 = vadd.f32 0.0, %v3798
    %v3800 = vpop.f32.mrf.mxu0
    %v3801 = vadd.f32 0.0, %v3800
    %3802 = vmatprep.mubr.f32.mxu0 0.0
    %3803 = vmatmul.mubr.f32.gmra.mxu0 %v3616
    %v3804 = vpop.f32.mrf.mxu0
    %v3805 = vadd.f32 0.0, %v3804
    %v3806 = vpop.f32.mrf.mxu0
    %v3807 = vadd.f32 0.0, %v3806
    %3808 = vmatprep.mubr.f32.mxu0 0.0
    %3809 = vmatmul.mubr.f32.gmra.mxu0 %v3619
    %v3810 = vpop.f32.mrf.mxu0
    %v3811 = vadd.f32 0.0, %v3810
    %v3812 = vpop.f32.mrf.mxu0
    %v3813 = vadd.f32 0.0, %v3812
    %3814 = vmatprep.mubr.f32.mxu0 0.0
    %3815 = vmatmul.mubr.f32.gmra.mxu0 %v3622
    %v3816 = vpop.f32.mrf.mxu0
    %v3817 = vadd.f32 0.0, %v3816
    %v3818 = vpop.f32.mrf.mxu0
    %v3819 = vadd.f32 0.0, %v3818
    %3820 = vmatprep.mubr.f32.mxu0 0.0
    %3821 = vmatmul.mubr.f32.gmra.mxu0 %v3625
    %v3822 = vpop.f32.mrf.mxu0
    %v3823 = vadd.f32 0.0, %v3822
    %v3824 = vpop.f32.mrf.mxu0
    %v3825 = vadd.f32 0.0, %v3824
    %3826 = vmatprep.mubr.f32.mxu0 0.0
    %3827 = vmatmul.mubr.f32.gmra.mxu0 %v3628
    %v3828 = vpop.f32.mrf.mxu0
    %v3829 = vadd.f32 0.0, %v3828
    %v3830 = vpop.f32.mrf.mxu0
    %v3831 = vadd.f32 0.0, %v3830
    %3832 = vmatprep.mubr.f32.mxu0 0.0
    %3833 = vmatmul.mubr.f32.gmra.mxu0 %v3631
    %v3834 = vpop.f32.mrf.mxu0
    %v3835 = vadd.f32 0.0, %v3834
    %v3836 = vpop.f32.mrf.mxu0
    %v3837 = vadd.f32 0.0, %v3836
    %3838 = vmatprep.mubr.f32.mxu0 0.0
    %3839 = vmatmul.mubr.f32.gmra.mxu0 %v3634
    %v3840 = vpop.f32.mrf.mxu0
    %v3841 = vadd.f32 0.0, %v3840
    %v3842 = vpop.f32.mrf.mxu0
    %v3843 = vadd.f32 0.0, %v3842
    %3844 = vdwg.mxu0
    %v3845 = vmul.f32 %v3799, 0.25
    %v3846 = vmul.f32 %v3801, 0.25
    %v3847 = vmul.f32 %v3805, 0.25
    %v3848 = vmul.f32 %v3807, 0.25
    %v3849 = vmul.f32 %v3811, 0.25
    %v3850 = vmul.f32 %v3813, 0.25
    %v3851 = vmul.f32 %v3817, 0.25
    %v3852 = vmul.f32 %v3819, 0.25
    %v3853 = vmul.f32 %v3823, 0.25
    %v3854 = vmul.f32 %v3825, 0.25
    %v3855 = vmul.f32 %v3829, 0.25
    %v3856 = vmul.f32 %v3831, 0.25
    %v3857 = vmul.f32 %v3835, 0.25
    %v3858 = vmul.f32 %v3837, 0.25
    %v3859 = vmul.f32 %v3841, 0.25
    %v3860 = vmul.f32 %v3843, 0.25
    %v3861 = vadd.f32 %v3845, %v3036
    %v3862 = vadd.f32 %v3846, %v3037
    %v3863 = vadd.f32 %v3847, %v3038
    %v3864 = vadd.f32 %v3848, %v3039
    %v3865 = vadd.f32 %v3849, %v3040
    %v3866 = vadd.f32 %v3850, %v3041
    %v3867 = vadd.f32 %v3851, %v3042
    %v3868 = vadd.f32 %v3852, %v3043
    %v3869 = vadd.f32 %v3853, %v3044
    %v3870 = vadd.f32 %v3854, %v3045
    %v3871 = vadd.f32 %v3855, %v3046
    %v3872 = vadd.f32 %v3856, %v3047
    %v3873 = vadd.f32 %v3857, %v3048
    %v3874 = vadd.f32 %v3858, %v3049
    %v3875 = vadd.f32 %v3859, %v3050
    %v3876 = vadd.f32 %v3860, %v3051
    %v3877 = vmax.f32 %v3861, %v3862
    %3878 = vmax.xlane.f32.xlu0 %v3877
    %v3879 = vpop.xlane.xlu0 %3878
    %v3880 = vmax.f32 %v3863, %v3864
    %3881 = vmax.xlane.f32.xlu0 %v3880
    %v3882 = vpop.xlane.xlu0 %3881
    %v3883 = vmax.f32 %v3865, %v3866
    %3884 = vmax.xlane.f32.xlu0 %v3883
    %v3885 = vpop.xlane.xlu0 %3884
    %v3886 = vmax.f32 %v3867, %v3868
    %3887 = vmax.xlane.f32.xlu0 %v3886
    %v3888 = vpop.xlane.xlu0 %3887
    %v3889 = vmax.f32 %v3869, %v3870
    %3890 = vmax.xlane.f32.xlu0 %v3889
    %v3891 = vpop.xlane.xlu0 %3890
    %v3892 = vmax.f32 %v3871, %v3872
    %3893 = vmax.xlane.f32.xlu0 %v3892
    %v3894 = vpop.xlane.xlu0 %3893
    %v3895 = vmax.f32 %v3873, %v3874
    %3896 = vmax.xlane.f32.xlu0 %v3895
    %v3897 = vpop.xlane.xlu0 %3896
    %v3898 = vmax.f32 %v3875, %v3876
    %3899 = vmax.xlane.f32.xlu0 %v3898
    %v3900 = vpop.xlane.xlu0 %3899
    %v3901 = vsub.f32 %v3861, %v3879
    %v3902 = vsub.f32 %v3862, %v3879
    %v3903 = vsub.f32 %v3863, %v3882
    %v3904 = vsub.f32 %v3864, %v3882
    %v3905 = vsub.f32 %v3865, %v3885
    %v3906 = vsub.f32 %v3866, %v3885
    %v3907 = vsub.f32 %v3867, %v3888
    %v3908 = vsub.f32 %v3868, %v3888
    %v3909 = vsub.f32 %v3869, %v3891
    %v3910 = vsub.f32 %v3870, %v3891
    %v3911 = vsub.f32 %v3871, %v3894
    %v3912 = vsub.f32 %v3872, %v3894
    %v3913 = vsub.f32 %v3873, %v3897
    %v3914 = vsub.f32 %v3874, %v3897
    %v3915 = vsub.f32 %v3875, %v3900
    %v3916 = vsub.f32 %v3876, %v3900
    %v3917 = vmul.f32 %v3901, 1.442695
    %v3918 = vpow.pop %v3917
    %v3919 = vmul.f32 %v3902, 1.442695
    %v3920 = vpow.pop %v3919
    %v3921 = vmul.f32 %v3903, 1.442695
    %v3922 = vpow.pop %v3921
    %v3923 = vmul.f32 %v3904, 1.442695
    %v3924 = vpow.pop %v3923
    %v3925 = vmul.f32 %v3905, 1.442695
    %v3926 = vpow.pop %v3925
    %v3927 = vmul.f32 %v3906, 1.442695
    %v3928 = vpow.pop %v3927
    %v3929 = vmul.f32 %v3907, 1.442695
    %v3930 = vpow.pop %v3929
    %v3931 = vmul.f32 %v3908, 1.442695
    %v3932 = vpow.pop %v3931
    %v3933 = vmul.f32 %v3909, 1.442695
    %v3934 = vpow.pop %v3933
    %v3935 = vmul.f32 %v3910, 1.442695
    %v3936 = vpow.pop %v3935
    %v3937 = vmul.f32 %v3911, 1.442695
    %v3938 = vpow.pop %v3937
    %v3939 = vmul.f32 %v3912, 1.442695
    %v3940 = vpow.pop %v3939
    %v3941 = vmul.f32 %v3913, 1.442695
    %v3942 = vpow.pop %v3941
    %v3943 = vmul.f32 %v3914, 1.442695
    %v3944 = vpow.pop %v3943
    %v3945 = vmul.f32 %v3915, 1.442695
    %v3946 = vpow.pop %v3945
    %v3947 = vmul.f32 %v3916, 1.442695
    %v3948 = vpow.pop %v3947
    %3949 = vmatprep.subr.mxu0 0.0
    %3950 = vmatpush1.msra.mxu0 %v3595
    %3951 = vmatprep.subr.mxu0 0.0
    %3952 = vmatpush1.msra.mxu0 %v3594
    %3953 = vmatprep.subr.mxu0 0.0
    %3954 = vmatpush1.msra.mxu0 %v3593
    %3955 = vmatprep.subr.mxu0 0.0
    %3956 = vmatpush1.msra.mxu0 %v3592
    %3957 = vmatprep.subr.mxu0 0.0
    %3958 = vmatpush1.msra.mxu0 %v3591
    %3959 = vmatprep.subr.mxu0 0.0
    %3960 = vmatpush1.msra.mxu0 %v3590
    %3961 = vmatprep.subr.mxu0 0.0
    %3962 = vmatpush1.msra.mxu0 %v3589
    %3963 = vmatprep.subr.mxu0 0.0
    %3964 = vmatpush1.msra.mxu0 %v3588
    %3965 = vmatprep.subr.mxu0 0.0
    %3966 = vmatpush1.msra.mxu0 %v3587
    %3967 = vmatprep.subr.mxu0 0.0
    %3968 = vmatpush1.msra.mxu0 %v3586
    %3969 = vmatprep.subr.mxu0 0.0
    %3970 = vmatpush1.msra.mxu0 %v3585
    %3971 = vmatprep.subr.mxu0 0.0
    %3972 = vmatpush1.msra.mxu0 %v3584
    %3973 = vmatprep.subr.mxu0 0.0
    %3974 = vmatpush1.msra.mxu0 %v3583
    %3975 = vmatprep.subr.mxu0 0.0
    %3976 = vmatpush1.msra.mxu0 %v3582
    %3977 = vmatprep.subr.mxu0 0.0
    %3978 = vmatpush1.msra.mxu0 %v3581
    %3979 = vmatprep.subr.mxu0 0.0
    %3980 = vmatpush1.msra.mxu0 %v3580
    %3981 = vmatprep.subr.mxu0 0.0
    %3982 = vmatpush2.msra.mxu0 %v3611
    %3983 = vmatprep.subr.mxu0 0.0
    %3984 = vmatpush2.msra.mxu0 %v3610
    %3985 = vmatprep.subr.mxu0 0.0
    %3986 = vmatpush2.msra.mxu0 %v3609
    %3987 = vmatprep.subr.mxu0 0.0
    %3988 = vmatpush2.msra.mxu0 %v3608
    %3989 = vmatprep.subr.mxu0 0.0
    %3990 = vmatpush2.msra.mxu0 %v3607
    %3991 = vmatprep.subr.mxu0 0.0
    %3992 = vmatpush2.msra.mxu0 %v3606
    %3993 = vmatprep.subr.mxu0 0.0
    %3994 = vmatpush2.msra.mxu0 %v3605
    %3995 = vmatprep.subr.mxu0 0.0
    %3996 = vmatpush2.msra.mxu0 %v3604
    %3997 = vmatprep.subr.mxu0 0.0
    %3998 = vmatpush2.msra.mxu0 %v3603
    %3999 = vmatprep.subr.mxu0 0.0
    %4000 = vmatpush2.msra.mxu0 %v3602
    %4001 = vmatprep.subr.mxu0 0.0
    %4002 = vmatpush2.msra.mxu0 %v3601
    %4003 = vmatprep.subr.mxu0 0.0
    %4004 = vmatpush2.msra.mxu0 %v3600
    %4005 = vmatprep.subr.mxu0 0.0
    %4006 = vmatpush2.msra.mxu0 %v3599
    %4007 = vmatprep.subr.mxu0 0.0
    %4008 = vmatpush2.msra.mxu0 %v3598
    %4009 = vmatprep.subr.mxu0 0.0
    %4010 = vmatpush2.msra.mxu0 %v3597
    %4011 = vmatprep.subr.mxu0 0.0
    %4012 = vmatpush2.msra.mxu0 %v3596
    %4013 = vmatprep.mubr.f32.mxu0 %v3920
    %4014 = vmatmul.mubr.f32.gmra.mxu0 %v3918
    %v4015 = vpop.f32.mrf.mxu0
    %v4016 = vadd.f32 0.0, %v4015
    %v4017 = vpop.f32.mrf.mxu0
    %4018 = vmatprep.mubr.f32.mxu0 %v3924
    %4019 = vmatmul.mubr.f32.gmra.mxu0 %v3922
    %v4020 = vpop.f32.mrf.mxu0
    %v4021 = vadd.f32 0.0, %v4020
    %v4022 = vpop.f32.mrf.mxu0
    %4023 = vmatprep.mubr.f32.mxu0 %v3928
    %4024 = vmatmul.mubr.f32.gmra.mxu0 %v3926
    %v4025 = vpop.f32.mrf.mxu0
    %v4026 = vadd.f32 0.0, %v4025
    %v4027 = vpop.f32.mrf.mxu0
    %4028 = vmatprep.mubr.f32.mxu0 %v3932
    %4029 = vmatmul.mubr.f32.gmra.mxu0 %v3930
    %v4030 = vpop.f32.mrf.mxu0
    %v4031 = vadd.f32 0.0, %v4030
    %v4032 = vpop.f32.mrf.mxu0
    %4033 = vmatprep.mubr.f32.mxu0 %v3936
    %4034 = vmatmul.mubr.f32.gmra.mxu0 %v3934
    %v4035 = vpop.f32.mrf.mxu0
    %v4036 = vadd.f32 0.0, %v4035
    %v4037 = vpop.f32.mrf.mxu0
    %4038 = vmatprep.mubr.f32.mxu0 %v3940
    %4039 = vmatmul.mubr.f32.gmra.mxu0 %v3938
    %v4040 = vpop.f32.mrf.mxu0
    %v4041 = vadd.f32 0.0, %v4040
    %v4042 = vpop.f32.mrf.mxu0
    %4043 = vmatprep.mubr.f32.mxu0 %v3944
    %4044 = vmatmul.mubr.f32.gmra.mxu0 %v3942
    %v4045 = vpop.f32.mrf.mxu0
    %v4046 = vadd.f32 0.0, %v4045
    %v4047 = vpop.f32.mrf.mxu0
    %4048 = vmatprep.mubr.f32.mxu0 %v3948
    %4049 = vmatmul.mubr.f32.gmra.mxu0 %v3946
    %v4050 = vpop.f32.mrf.mxu0
    %v4051 = vadd.f32 0.0, %v4050
    %v4052 = vpop.f32.mrf.mxu0
    %4053 = vdwg.mxu0
    %4054 = vmatprep.subr.mxu0 0.0
    %4055 = vmatpush1.msra.mxu0 %v3067
    %4056 = vmatprep.subr.mxu0 0.0
    %4057 = vmatpush1.msra.mxu0 %v3066
    %4058 = vmatprep.subr.mxu0 0.0
    %4059 = vmatpush1.msra.mxu0 %v3065
    %4060 = vmatprep.subr.mxu0 0.0
    %4061 = vmatpush1.msra.mxu0 %v3064
    %4062 = vmatprep.subr.mxu0 0.0
    %4063 = vmatpush1.msra.mxu0 %v3063
    %4064 = vmatprep.subr.mxu0 0.0
    %4065 = vmatpush1.msra.mxu0 %v3062
    %4066 = vmatprep.subr.mxu0 0.0
    %4067 = vmatpush1.msra.mxu0 %v3061
    %4068 = vmatprep.subr.mxu0 0.0
    %4069 = vmatpush1.msra.mxu0 %v3060
    %4070 = vmatprep.subr.mxu0 0.0
    %4071 = vmatpush1.msra.mxu0 %v3059
    %4072 = vmatprep.subr.mxu0 0.0
    %4073 = vmatpush1.msra.mxu0 %v3058
    %4074 = vmatprep.subr.mxu0 0.0
    %4075 = vmatpush1.msra.mxu0 %v3057
    %4076 = vmatprep.subr.mxu0 0.0
    %4077 = vmatpush1.msra.mxu0 %v3056
    %4078 = vmatprep.subr.mxu0 0.0
    %4079 = vmatpush1.msra.mxu0 %v3055
    %4080 = vmatprep.subr.mxu0 0.0
    %4081 = vmatpush1.msra.mxu0 %v3054
    %4082 = vmatprep.subr.mxu0 0.0
    %4083 = vmatpush1.msra.mxu0 %v3053
    %4084 = vmatprep.subr.mxu0 0.0
    %4085 = vmatpush1.msra.mxu0 %v3052
    %4086 = vmatprep.subr.mxu0 0.0
    %4087 = vmatpush2.msra.mxu0 %v3083
    %4088 = vmatprep.subr.mxu0 0.0
    %4089 = vmatpush2.msra.mxu0 %v3082
    %4090 = vmatprep.subr.mxu0 0.0
    %4091 = vmatpush2.msra.mxu0 %v3081
    %4092 = vmatprep.subr.mxu0 0.0
    %4093 = vmatpush2.msra.mxu0 %v3080
    %4094 = vmatprep.subr.mxu0 0.0
    %4095 = vmatpush2.msra.mxu0 %v3079
    %4096 = vmatprep.subr.mxu0 0.0
    %4097 = vmatpush2.msra.mxu0 %v3078
    %4098 = vmatprep.subr.mxu0 0.0
    %4099 = vmatpush2.msra.mxu0 %v3077
    %4100 = vmatprep.subr.mxu0 0.0
    %4101 = vmatpush2.msra.mxu0 %v3076
    %4102 = vmatprep.subr.mxu0 0.0
    %4103 = vmatpush2.msra.mxu0 %v3075
    %4104 = vmatprep.subr.mxu0 0.0
    %4105 = vmatpush2.msra.mxu0 %v3074
    %4106 = vmatprep.subr.mxu0 0.0
    %4107 = vmatpush2.msra.mxu0 %v3073
    %4108 = vmatprep.subr.mxu0 0.0
    %4109 = vmatpush2.msra.mxu0 %v3072
    %4110 = vmatprep.subr.mxu0 0.0
    %4111 = vmatpush2.msra.mxu0 %v3071
    %4112 = vmatprep.subr.mxu0 0.0
    %4113 = vmatpush2.msra.mxu0 %v3070
    %4114 = vmatprep.subr.mxu0 0.0
    %4115 = vmatpush2.msra.mxu0 %v3069
    %4116 = vmatprep.subr.mxu0 0.0
    %4117 = vmatpush2.msra.mxu0 %v3068
    %4118 = vmatprep.mubr.f32.mxu0 %v3920
    %4119 = vmatmul.mubr.f32.gmra.mxu0 %v3918
    %v4120 = vpop.f32.mrf.mxu0
    %v4121 = vadd.f32 0.0, %v4120
    %v4122 = vpop.f32.mrf.mxu0
    %4123 = vmatprep.mubr.f32.mxu0 %v3924
    %4124 = vmatmul.mubr.f32.gmra.mxu0 %v3922
    %v4125 = vpop.f32.mrf.mxu0
    %v4126 = vadd.f32 0.0, %v4125
    %v4127 = vpop.f32.mrf.mxu0
    %4128 = vmatprep.mubr.f32.mxu0 %v3928
    %4129 = vmatmul.mubr.f32.gmra.mxu0 %v3926
    %v4130 = vpop.f32.mrf.mxu0
    %v4131 = vadd.f32 0.0, %v4130
    %v4132 = vpop.f32.mrf.mxu0
    %4133 = vmatprep.mubr.f32.mxu0 %v3932
    %4134 = vmatmul.mubr.f32.gmra.mxu0 %v3930
    %v4135 = vpop.f32.mrf.mxu0
    %v4136 = vadd.f32 0.0, %v4135
    %v4137 = vpop.f32.mrf.mxu0
    %4138 = vmatprep.mubr.f32.mxu0 %v3936
    %4139 = vmatmul.mubr.f32.gmra.mxu0 %v3934
    %v4140 = vpop.f32.mrf.mxu0
    %v4141 = vadd.f32 0.0, %v4140
    %v4142 = vpop.f32.mrf.mxu0
    %4143 = vmatprep.mubr.f32.mxu0 %v3940
    %4144 = vmatmul.mubr.f32.gmra.mxu0 %v3938
    %v4145 = vpop.f32.mrf.mxu0
    %v4146 = vadd.f32 0.0, %v4145
    %v4147 = vpop.f32.mrf.mxu0
    %4148 = vmatprep.mubr.f32.mxu0 %v3944
    %4149 = vmatmul.mubr.f32.gmra.mxu0 %v3942
    %v4150 = vpop.f32.mrf.mxu0
    %v4151 = vadd.f32 0.0, %v4150
    %v4152 = vpop.f32.mrf.mxu0
    %4153 = vmatprep.mubr.f32.mxu0 %v3948
    %4154 = vmatmul.mubr.f32.gmra.mxu0 %v3946
    %v4155 = vpop.f32.mrf.mxu0
    %v4156 = vadd.f32 0.0, %v4155
    %v4157 = vpop.f32.mrf.mxu0
    %4158 = vdwg.mxu0
    %v4159 = vrcp.pop %v4121
    %v4160 = vrcp.pop %v4126
    %v4161 = vrcp.pop %v4131
    %v4162 = vrcp.pop %v4136
    %v4163 = vrcp.pop %v4141
    %v4164 = vrcp.pop %v4146
    %v4165 = vrcp.pop %v4151
    %v4166 = vrcp.pop %v4156
    %v4167 = vmul.f32 %v4016, %v4159
    %v4168 = vmul.f32 %v4021, %v4160
    %v4169 = vmul.f32 %v4026, %v4161
    %v4170 = vmul.f32 %v4031, %v4162
    %v4171 = vmul.f32 %v4036, %v4163
    %v4172 = vmul.f32 %v4041, %v4164
    %v4173 = vmul.f32 %v4046, %v4165
    %v4174 = vmul.f32 %v4051, %v4166
    %v4175 = vld [vmem:[%s27] sm:$0xf]
    %v4176 = vld [vmem:[%s27 + $0x4] sm:$0xf]
    %v4177 = vld [vmem:[%s27 + $0x8] sm:$0xf]
    %v4178 = vld [vmem:[%s27 + $0xc] sm:$0xf]
    %v4179 = vld [vmem:[%s27 + $0x10] sm:$0xf]
    %v4180 = vld [vmem:[%s27 + $0x14] sm:$0xf]
    %v4181 = vld [vmem:[%s27 + $0x18] sm:$0xf]
    %v4182 = vld [vmem:[%s27 + $0x1c] sm:$0xf]
    %v4183 = vpack.c.bf16 %v4168, %v4167
    %v4184 = vpack.c.bf16 %v4170, %v4169
    %v4185 = vpack.c.bf16 %v4172, %v4171
    %v4186 = vpack.c.bf16 %v4174, %v4173
    %v4187 = vld [vmem:[%s29] sm:$0x1]
    %v4189 = vlaneseq
    %v4190 = vshrl.u32 %v4189, 7
    %v4191 = vsub.s32 0, %v4190
    %v4192 = vrot.slane %v4187, %v4191
    %v4202 = vunpack.c.l.b16 %v4175
    %v4203 = vunpack.c.l.b16 %v4176
    %v4204 = vunpack.c.l.b16 %v4177
    %v4205 = vunpack.c.l.b16 %v4178
    %v4206 = vunpack.c.l.b16 %v4179
    %v4207 = vunpack.c.l.b16 %v4180
    %v4208 = vunpack.c.l.b16 %v4181
    %v4209 = vunpack.c.l.b16 %v4182
    %v4210 = vpack.c.b16 %v4203, %v4202
    %v4211 = vpack.c.b16 %v4205, %v4204
    %v4212 = vpack.c.b16 %v4207, %v4206
    %v4213 = vpack.c.b16 %v4209, %v4208
    %v4219 = vsel %vm3086, %v4183, 0
    %v4222 = vsel %vm3086, %v4184, 0
    %v4225 = vsel %vm3086, %v4185, 0
    %v4228 = vsel %vm3086, %v4186, 0
    %4230 = vmatprep.subr.bf16.mxu0 0
    %4231 = vmatpush1.bf16.msra.mxu0 0
    %4232 = vmatprep.subr.bf16.mxu0 0
    %4233 = vmatpush1.bf16.msra.mxu0 0
    %4234 = vmatprep.subr.bf16.mxu0 0
    %4235 = vmatpush1.bf16.msra.mxu0 0
    %4236 = vmatprep.subr.bf16.mxu0 0
    %4237 = vmatpush1.bf16.msra.mxu0 0
    %4238 = vmatprep.subr.bf16.mxu0 0
    %4239 = vmatpush1.bf16.msra.mxu0 %v4213
    %4240 = vmatprep.subr.bf16.mxu0 0
    %4241 = vmatpush1.bf16.msra.mxu0 %v4212
    %4242 = vmatprep.subr.bf16.mxu0 0
    %4243 = vmatpush1.bf16.msra.mxu0 %v4211
    %4244 = vmatprep.subr.bf16.mxu0 0
    %4245 = vmatpush1.bf16.msra.mxu0 %v4210
    %4246 = vmatprep.subr.bf16.mxu0 0
    %4247 = vmatpush2.bf16.msra.mxu0 0
    %4248 = vmatprep.subr.bf16.mxu0 0
    %4249 = vmatpush2.bf16.msra.mxu0 0
    %4250 = vmatprep.subr.bf16.mxu0 0
    %4251 = vmatpush2.bf16.msra.mxu0 0
    %4252 = vmatprep.subr.bf16.mxu0 0
    %4253 = vmatpush2.bf16.msra.mxu0 0
    %4254 = vmatprep.subr.bf16.mxu0 0
    %4255 = vmatpush2.bf16.msra.mxu0 0
    %4256 = vmatprep.subr.bf16.mxu0 0
    %4257 = vmatpush2.bf16.msra.mxu0 0
    %4258 = vmatprep.subr.bf16.mxu0 0
    %4259 = vmatpush2.bf16.msra.mxu0 0
    %4260 = vmatprep.subr.bf16.mxu0 0
    %4261 = vmatpush2.bf16.msra.mxu0 0
    %4262 = vmatprep.mubr.bf16.mxu0 0
    %4263 = vmatmul.mubr.bf16.gmra.mxu0 %v4219
    %v4264 = vpop.f32.mrf.mxu0
    %v4265 = vadd.f32 %v4192, %v4264
    %v4266 = vpop.f32.mrf.mxu0
    %v4267 = vpop.f32.mrf.mxu0
    %v4268 = vadd.f32 %v4192, %v4267
    %v4269 = vpop.f32.mrf.mxu0
    %4270 = vmatprep.mubr.bf16.mxu0 0
    %4271 = vmatmul.mubr.bf16.gmra.mxu0 %v4222
    %v4272 = vpop.f32.mrf.mxu0
    %v4273 = vadd.f32 %v4192, %v4272
    %v4274 = vpop.f32.mrf.mxu0
    %v4275 = vpop.f32.mrf.mxu0
    %v4276 = vadd.f32 %v4192, %v4275
    %v4277 = vpop.f32.mrf.mxu0
    %4278 = vmatprep.mubr.bf16.mxu0 0
    %4279 = vmatmul.mubr.bf16.gmra.mxu0 %v4225
    %v4280 = vpop.f32.mrf.mxu0
    %v4281 = vadd.f32 %v4192, %v4280
    %v4282 = vpop.f32.mrf.mxu0
    %v4283 = vpop.f32.mrf.mxu0
    %v4284 = vadd.f32 %v4192, %v4283
    %v4285 = vpop.f32.mrf.mxu0
    %4286 = vmatprep.mubr.bf16.mxu0 0
    %4287 = vmatmul.mubr.bf16.gmra.mxu0 %v4228
    %v4288 = vpop.f32.mrf.mxu0
    %v4289 = vadd.f32 %v4192, %v4288
    %v4290 = vpop.f32.mrf.mxu0
    %v4291 = vpop.f32.mrf.mxu0
    %v4292 = vadd.f32 %v4192, %v4291
    %v4293 = vpop.f32.mrf.mxu0
    %4294 = vdwg.mxu0
    %v4295 = vadd.f32 %v3006, %v4265
    %v4296 = vadd.f32 %v3009, %v4268
    %v4297 = vadd.f32 %v3014, %v4273
    %v4298 = vadd.f32 %v3017, %v4276
    %v4299 = vadd.f32 %v3022, %v4281
    %v4300 = vadd.f32 %v3025, %v4284
    %v4301 = vadd.f32 %v3030, %v4289
    %v4302 = vadd.f32 %v3033, %v4292
    %v4303 = vld [vmem:[%s31] sm:$0x1]
    %v4304 = vld [vmem:[%s33] sm:$0x1]
    %v4305 = vsel %vm3086, %v4295, 0.0
    %4306 = vadd.xlane.f32.xlu0 %v4305
    %v4307 = vpop.xlane.xlu0 %4306
    %v4308 = vsel %vm3086, %v4296, 0.0
    %4309 = vadd.xlane.f32.xlu0 %v4308
    %v4310 = vpop.xlane.xlu0 %4309
    %v4311 = vsel %vm3086, %v4297, 0.0
    %4312 = vadd.xlane.f32.xlu0 %v4311
    %v4313 = vpop.xlane.xlu0 %4312
    %v4314 = vsel %vm3086, %v4298, 0.0
    %4315 = vadd.xlane.f32.xlu0 %v4314
    %v4316 = vpop.xlane.xlu0 %4315
    %v4317 = vsel %vm3086, %v4299, 0.0
    %4318 = vadd.xlane.f32.xlu0 %v4317
    %v4319 = vpop.xlane.xlu0 %4318
    %v4320 = vsel %vm3086, %v4300, 0.0
    %4321 = vadd.xlane.f32.xlu0 %v4320
    %v4322 = vpop.xlane.xlu0 %4321
    %v4323 = vsel %vm3086, %v4301, 0.0
    %4324 = vadd.xlane.f32.xlu0 %v4323
    %v4325 = vpop.xlane.xlu0 %4324
    %v4326 = vsel %vm3086, %v4302, 0.0
    %4327 = vadd.xlane.f32.xlu0 %v4326
    %v4328 = vpop.xlane.xlu0 %4327
    %v4329 = vmul.f32 %v4307, %v3111
    %v4330 = vmul.f32 %v4310, %v3111
    %v4331 = vmul.f32 %v4313, %v3111
    %v4332 = vmul.f32 %v4316, %v3111
    %v4333 = vmul.f32 %v4319, %v3111
    %v4334 = vmul.f32 %v4322, %v3111
    %v4335 = vmul.f32 %v4325, %v3111
    %v4336 = vmul.f32 %v4328, %v3111
    %v4337 = vsub.f32 %v4295, %v4329
    %v4338 = vsub.f32 %v4296, %v4330
    %v4339 = vsub.f32 %v4297, %v4331
    %v4340 = vsub.f32 %v4298, %v4332
    %v4341 = vsub.f32 %v4299, %v4333
    %v4342 = vsub.f32 %v4300, %v4334
    %v4343 = vsub.f32 %v4301, %v4335
    %v4344 = vsub.f32 %v4302, %v4336
    %v4345 = vmul.f32 %v4337, %v4337
    %v4346 = vmul.f32 %v4338, %v4338
    %v4347 = vmul.f32 %v4339, %v4339
    %v4348 = vmul.f32 %v4340, %v4340
    %v4349 = vmul.f32 %v4341, %v4341
    %v4350 = vmul.f32 %v4342, %v4342
    %v4351 = vmul.f32 %v4343, %v4343
    %v4352 = vmul.f32 %v4344, %v4344
    %v4353 = vsel %vm3086, %v4345, 0.0
    %4354 = vadd.xlane.f32.xlu0 %v4353
    %v4355 = vpop.xlane.xlu0 %4354
    %v4356 = vsel %vm3086, %v4346, 0.0
    %4357 = vadd.xlane.f32.xlu0 %v4356
    %v4358 = vpop.xlane.xlu0 %4357
    %v4359 = vsel %vm3086, %v4347, 0.0
    %4360 = vadd.xlane.f32.xlu0 %v4359
    %v4361 = vpop.xlane.xlu0 %4360
    %v4362 = vsel %vm3086, %v4348, 0.0
    %4363 = vadd.xlane.f32.xlu0 %v4362
    %v4364 = vpop.xlane.xlu0 %4363
    %v4365 = vsel %vm3086, %v4349, 0.0
    %4366 = vadd.xlane.f32.xlu0 %v4365
    %v4367 = vpop.xlane.xlu0 %4366
    %v4368 = vsel %vm3086, %v4350, 0.0
    %4369 = vadd.xlane.f32.xlu0 %v4368
    %v4370 = vpop.xlane.xlu0 %4369
    %v4371 = vsel %vm3086, %v4351, 0.0
    %4372 = vadd.xlane.f32.xlu0 %v4371
    %v4373 = vpop.xlane.xlu0 %4372
    %v4374 = vsel %vm3086, %v4352, 0.0
    %4375 = vadd.xlane.f32.xlu0 %v4374
    %v4376 = vpop.xlane.xlu0 %4375
    %v4377 = vmul.f32 %v4355, %v3111
    %v4378 = vmul.f32 %v4358, %v3111
    %v4379 = vmul.f32 %v4361, %v3111
    %v4380 = vmul.f32 %v4364, %v3111
    %v4381 = vmul.f32 %v4367, %v3111
    %v4382 = vmul.f32 %v4370, %v3111
    %v4383 = vmul.f32 %v4373, %v3111
    %v4384 = vmul.f32 %v4376, %v3111
    %v4385 = vadd.f32 %v4377, 1e-06
    %v4386 = vadd.f32 %v4378, 1e-06
    %v4387 = vadd.f32 %v4379, 1e-06
    %v4388 = vadd.f32 %v4380, 1e-06
    %v4389 = vadd.f32 %v4381, 1e-06
    %v4390 = vadd.f32 %v4382, 1e-06
    %v4391 = vadd.f32 %v4383, 1e-06
    %v4392 = vadd.f32 %v4384, 1e-06
    %v4393 = vrsqrt.pop %v4385
    %v4394 = vrsqrt.pop %v4386
    %v4395 = vrsqrt.pop %v4387
    %v4396 = vrsqrt.pop %v4388
    %v4397 = vrsqrt.pop %v4389
    %v4398 = vrsqrt.pop %v4390
    %v4399 = vrsqrt.pop %v4391
    %v4400 = vrsqrt.pop %v4392
    %v4401 = vmul.f32 %v4337, %v4393
    %v4402 = vmul.f32 %v4338, %v4394
    %v4403 = vmul.f32 %v4339, %v4395
    %v4404 = vmul.f32 %v4340, %v4396
    %v4405 = vmul.f32 %v4341, %v4397
    %v4406 = vmul.f32 %v4342, %v4398
    %v4407 = vmul.f32 %v4343, %v4399
    %v4408 = vmul.f32 %v4344, %v4400
    %v4410 = vlaneseq
    %v4411 = vshrl.u32 %v4410, 7
    %v4412 = vsub.s32 0, %v4411
    %v4413 = vrot.slane %v4303, %v4412
    %v4415 = vmul.f32 %v4401, %v4413
    %v4416 = vmul.f32 %v4402, %v4413
    %v4417 = vmul.f32 %v4403, %v4413
    %v4418 = vmul.f32 %v4404, %v4413
    %v4419 = vmul.f32 %v4405, %v4413
    %v4420 = vmul.f32 %v4406, %v4413
    %v4421 = vmul.f32 %v4407, %v4413
    %v4422 = vmul.f32 %v4408, %v4413
    %v4424 = vlaneseq
    %v4425 = vshrl.u32 %v4424, 7
    %v4426 = vsub.s32 0, %v4425
    %v4427 = vrot.slane %v4304, %v4426
    %v4429 = vadd.f32 %v4415, %v4427
    %v4430 = vadd.f32 %v4416, %v4427
    %v4431 = vadd.f32 %v4417, %v4427
    %v4432 = vadd.f32 %v4418, %v4427
    %v4433 = vadd.f32 %v4419, %v4427
    %v4434 = vadd.f32 %v4420, %v4427
    %v4435 = vadd.f32 %v4421, %v4427
    %v4436 = vadd.f32 %v4422, %v4427
    %v4437 = vld [vmem:[%s35] sm:$0xff]
    %v4438 = vld [vmem:[%s35 + $0x8] sm:$0xff]
    %v4439 = vld [vmem:[%s35 + $0x10] sm:$0xff]
    %v4440 = vld [vmem:[%s35 + $0x18] sm:$0xff]
    %v4441 = vld [vmem:[%s35 + $0x20] sm:$0xff]
    %v4442 = vld [vmem:[%s35 + $0x28] sm:$0xff]
    %v4443 = vld [vmem:[%s35 + $0x30] sm:$0xff]
    %v4444 = vld [vmem:[%s35 + $0x38] sm:$0xff]
    %v4445 = vpack.c.bf16 %v4430, %v4429
    %v4446 = vpack.c.bf16 %v4432, %v4431
    %v4447 = vpack.c.bf16 %v4434, %v4433
    %v4448 = vpack.c.bf16 %v4436, %v4435
    %v4449 = vld [vmem:[%s37] sm:$0x3]
    %v4451 = vlaneseq
    %v4452 = vshrl.u32 %v4451, 7
    %v4453 = vsub.s32 0, %v4452
    %v4454 = vrot.slane %v4449, %v4453
    %v4455 = vlaneseq
    %v4456 = vshrl.u32 %v4455, 7
    %v4457 = vsub.s32 1, %v4456
    %v4458 = vrot.slane %v4449, %v4457
    %v4469 = vunpack.c.l.b16 %v4437
    %v4470 = vunpack.c.h.b16 %v4437
    %v4471 = vunpack.c.l.b16 %v4438
    %v4472 = vunpack.c.h.b16 %v4438
    %v4473 = vunpack.c.l.b16 %v4439
    %v4474 = vunpack.c.h.b16 %v4439
    %v4475 = vunpack.c.l.b16 %v4440
    %v4476 = vunpack.c.h.b16 %v4440
    %v4477 = vunpack.c.l.b16 %v4441
    %v4478 = vunpack.c.h.b16 %v4441
    %v4479 = vunpack.c.l.b16 %v4442
    %v4480 = vunpack.c.h.b16 %v4442
    %v4481 = vunpack.c.l.b16 %v4443
    %v4482 = vunpack.c.h.b16 %v4443
    %v4483 = vunpack.c.l.b16 %v4444
    %v4484 = vunpack.c.h.b16 %v4444
    %v4485 = vpack.c.b16 %v4471, %v4469
    %v4486 = vpack.c.b16 %v4472, %v4470
    %v4487 = vpack.c.b16 %v4475, %v4473
    %v4488 = vpack.c.b16 %v4476, %v4474
    %v4489 = vpack.c.b16 %v4479, %v4477
    %v4490 = vpack.c.b16 %v4480, %v4478
    %v4491 = vpack.c.b16 %v4483, %v4481
    %v4492 = vpack.c.b16 %v4484, %v4482
    %v4502 = vsel %vm3086, %v4445, 0
    %v4505 = vsel %vm3086, %v4446, 0
    %v4508 = vsel %vm3086, %v4447, 0
    %v4511 = vsel %vm3086, %v4448, 0
    %4513 = vmatprep.subr.bf16.mxu0 0
    %4514 = vmatpush1.bf16.msra.mxu0 0
    %4515 = vmatprep.subr.bf16.mxu0 0
    %4516 = vmatpush1.bf16.msra.mxu0 0
    %4517 = vmatprep.subr.bf16.mxu0 0
    %4518 = vmatpush1.bf16.msra.mxu0 0
    %4519 = vmatprep.subr.bf16.mxu0 0
    %4520 = vmatpush1.bf16.msra.mxu0 0
    %4521 = vmatprep.subr.bf16.mxu0 %v4492
    %4522 = vmatpush1.bf16.msra.mxu0 %v4491
    %4523 = vmatprep.subr.bf16.mxu0 %v4490
    %4524 = vmatpush1.bf16.msra.mxu0 %v4489
    %4525 = vmatprep.subr.bf16.mxu0 %v4488
    %4526 = vmatpush1.bf16.msra.mxu0 %v4487
    %4527 = vmatprep.subr.bf16.mxu0 %v4486
    %4528 = vmatpush1.bf16.msra.mxu0 %v4485
    %4529 = vmatprep.subr.bf16.mxu0 0
    %4530 = vmatpush2.bf16.msra.mxu0 0
    %4531 = vmatprep.subr.bf16.mxu0 0
    %4532 = vmatpush2.bf16.msra.mxu0 0
    %4533 = vmatprep.subr.bf16.mxu0 0
    %4534 = vmatpush2.bf16.msra.mxu0 0
    %4535 = vmatprep.subr.bf16.mxu0 0
    %4536 = vmatpush2.bf16.msra.mxu0 0
    %4537 = vmatprep.subr.bf16.mxu0 0
    %4538 = vmatpush2.bf16.msra.mxu0 0
    %4539 = vmatprep.subr.bf16.mxu0 0
    %4540 = vmatpush2.bf16.msra.mxu0 0
    %4541 = vmatprep.subr.bf16.mxu0 0
    %4542 = vmatpush2.bf16.msra.mxu0 0
    %4543 = vmatprep.subr.bf16.mxu0 0
    %4544 = vmatpush2.bf16.msra.mxu0 0
    %4545 = vmatprep.mubr.bf16.mxu0 0
    %4546 = vmatmul.mubr.bf16.gmra.mxu0 %v4502
    %v4547 = vpop.f32.mrf.mxu0
    %v4548 = vadd.f32 %v4454, %v4547
    %v4549 = vpop.f32.mrf.mxu0
    %v4550 = vadd.f32 %v4458, %v4549
    %v4551 = vpop.f32.mrf.mxu0
    %v4552 = vadd.f32 %v4454, %v4551
    %v4553 = vpop.f32.mrf.mxu0
    %v4554 = vadd.f32 %v4458, %v4553
    %4555 = vmatprep.mubr.bf16.mxu0 0
    %4556 = vmatmul.mubr.bf16.gmra.mxu0 %v4505
    %v4557 = vpop.f32.mrf.mxu0
    %v4558 = vadd.f32 %v4454, %v4557
    %v4559 = vpop.f32.mrf.mxu0
    %v4560 = vadd.f32 %v4458, %v4559
    %v4561 = vpop.f32.mrf.mxu0
    %v4562 = vadd.f32 %v4454, %v4561
    %v4563 = vpop.f32.mrf.mxu0
    %v4564 = vadd.f32 %v4458, %v4563
    %4565 = vmatprep.mubr.bf16.mxu0 0
    %4566 = vmatmul.mubr.bf16.gmra.mxu0 %v4508
    %v4567 = vpop.f32.mrf.mxu0
    %v4568 = vadd.f32 %v4454, %v4567
    %v4569 = vpop.f32.mrf.mxu0
    %v4570 = vadd.f32 %v4458, %v4569
    %v4571 = vpop.f32.mrf.mxu0
    %v4572 = vadd.f32 %v4454, %v4571
    %v4573 = vpop.f32.mrf.mxu0
    %v4574 = vadd.f32 %v4458, %v4573
    %4575 = vmatprep.mubr.bf16.mxu0 0
    %4576 = vmatmul.mubr.bf16.gmra.mxu0 %v4511
    %v4577 = vpop.f32.mrf.mxu0
    %v4578 = vadd.f32 %v4454, %v4577
    %v4579 = vpop.f32.mrf.mxu0
    %v4580 = vadd.f32 %v4458, %v4579
    %v4581 = vpop.f32.mrf.mxu0
    %v4582 = vadd.f32 %v4454, %v4581
    %v4583 = vpop.f32.mrf.mxu0
    %v4584 = vadd.f32 %v4458, %v4583
    %4585 = vdwg.mxu0
    %v4586 = vmul.f32 %v4548, 0.5
    %v4587 = vmul.f32 %v4550, 0.5
    %v4588 = vmul.f32 %v4552, 0.5
    %v4589 = vmul.f32 %v4554, 0.5
    %v4590 = vmul.f32 %v4558, 0.5
    %v4591 = vmul.f32 %v4560, 0.5
    %v4592 = vmul.f32 %v4562, 0.5
    %v4593 = vmul.f32 %v4564, 0.5
    %v4594 = vmul.f32 %v4568, 0.5
    %v4595 = vmul.f32 %v4570, 0.5
    %v4596 = vmul.f32 %v4572, 0.5
    %v4597 = vmul.f32 %v4574, 0.5
    %v4598 = vmul.f32 %v4578, 0.5
    %v4599 = vmul.f32 %v4580, 0.5
    %v4600 = vmul.f32 %v4582, 0.5
    %v4601 = vmul.f32 %v4584, 0.5
    %v4602 = vmul.f32 %v4548, 0.70710677
    %v4603 = vmul.f32 %v4550, 0.70710677
    %v4604 = vmul.f32 %v4552, 0.70710677
    %v4605 = vmul.f32 %v4554, 0.70710677
    %v4606 = vmul.f32 %v4558, 0.70710677
    %v4607 = vmul.f32 %v4560, 0.70710677
    %v4608 = vmul.f32 %v4562, 0.70710677
    %v4609 = vmul.f32 %v4564, 0.70710677
    %v4610 = vmul.f32 %v4568, 0.70710677
    %v4611 = vmul.f32 %v4570, 0.70710677
    %v4612 = vmul.f32 %v4572, 0.70710677
    %v4613 = vmul.f32 %v4574, 0.70710677
    %v4614 = vmul.f32 %v4578, 0.70710677
    %v4615 = vmul.f32 %v4580, 0.70710677
    %v4616 = vmul.f32 %v4582, 0.70710677
    %v4617 = vmul.f32 %v4584, 0.70710677
    %v4618 = vand.u32 2147483647, %v4602
    %v4619 = vand.u32 2147483647, %v4603
    %v4620 = vand.u32 2147483647, %v4604
    %v4621 = vand.u32 2147483647, %v4605
    %v4622 = vand.u32 2147483647, %v4606
    %v4623 = vand.u32 2147483647, %v4607
    %v4624 = vand.u32 2147483647, %v4608
    %v4625 = vand.u32 2147483647, %v4609
    %v4626 = vand.u32 2147483647, %v4610
    %v4627 = vand.u32 2147483647, %v4611
    %v4628 = vand.u32 2147483647, %v4612
    %v4629 = vand.u32 2147483647, %v4613
    %v4630 = vand.u32 2147483647, %v4614
    %v4631 = vand.u32 2147483647, %v4615
    %v4632 = vand.u32 2147483647, %v4616
    %v4633 = vand.u32 2147483647, %v4617
    %v4634 = vmul.f32 %v4618, 0.3275911
    %v4635 = vmul.f32 %v4619, 0.3275911
    %v4636 = vmul.f32 %v4620, 0.3275911
    %v4637 = vmul.f32 %v4621, 0.3275911
    %v4638 = vmul.f32 %v4622, 0.3275911
    %v4639 = vmul.f32 %v4623, 0.3275911
    %v4640 = vmul.f32 %v4624, 0.3275911
    %v4641 = vmul.f32 %v4625, 0.3275911
    %v4642 = vmul.f32 %v4626, 0.3275911
    %v4643 = vmul.f32 %v4627, 0.3275911
    %v4644 = vmul.f32 %v4628, 0.3275911
    %v4645 = vmul.f32 %v4629, 0.3275911
    %v4646 = vmul.f32 %v4630, 0.3275911
    %v4647 = vmul.f32 %v4631, 0.3275911
    %v4648 = vmul.f32 %v4632, 0.3275911
    %v4649 = vmul.f32 %v4633, 0.3275911
    %v4650 = vadd.f32 %v4634, 1.0
    %v4651 = vadd.f32 %v4635, 1.0
    %v4652 = vadd.f32 %v4636, 1.0
    %v4653 = vadd.f32 %v4637, 1.0
    %v4654 = vadd.f32 %v4638, 1.0
    %v4655 = vadd.f32 %v4639, 1.0
    %v4656 = vadd.f32 %v4640, 1.0
    %v4657 = vadd.f32 %v4641, 1.0
    %v4658 = vadd.f32 %v4642, 1.0
    %v4659 = vadd.f32 %v4643, 1.0
    %v4660 = vadd.f32 %v4644, 1.0
    %v4661 = vadd.f32 %v4645, 1.0
    %v4662 = vadd.f32 %v4646, 1.0
    %v4663 = vadd.f32 %v4647, 1.0
    %v4664 = vadd.f32 %v4648, 1.0
    %v4665 = vadd.f32 %v4649, 1.0
    %v4666 = vrcp.pop %v4650
    %v4667 = vrcp.pop %v4651
    %v4668 = vrcp.pop %v4652
    %v4669 = vrcp.pop %v4653
    %v4670 = vrcp.pop %v4654
    %v4671 = vrcp.pop %v4655
    %v4672 = vrcp.pop %v4656
    %v4673 = vrcp.pop %v4657
    %v4674 = vrcp.pop %v4658
    %v4675 = vrcp.pop %v4659
    %v4676 = vrcp.pop %v4660
    %v4677 = vrcp.pop %v4661
    %v4678 = vrcp.pop %v4662
    %v4679 = vrcp.pop %v4663
    %v4680 = vrcp.pop %v4664
    %v4681 = vrcp.pop %v4665
    %v4682 = vmul.f32 %v4666, 1.0614054
    %v4683 = vmul.f32 %v4667, 1.0614054
    %v4684 = vmul.f32 %v4668, 1.0614054
    %v4685 = vmul.f32 %v4669, 1.0614054
    %v4686 = vmul.f32 %v4670, 1.0614054
    %v4687 = vmul.f32 %v4671, 1.0614054
    %v4688 = vmul.f32 %v4672, 1.0614054
    %v4689 = vmul.f32 %v4673, 1.0614054
    %v4690 = vmul.f32 %v4674, 1.0614054
    %v4691 = vmul.f32 %v4675, 1.0614054
    %v4692 = vmul.f32 %v4676, 1.0614054
    %v4693 = vmul.f32 %v4677, 1.0614054
    %v4694 = vmul.f32 %v4678, 1.0614054
    %v4695 = vmul.f32 %v4679, 1.0614054
    %v4696 = vmul.f32 %v4680, 1.0614054
    %v4697 = vmul.f32 %v4681, 1.0614054
    %v4698 = vadd.f32 %v4682, -1.4531521
    %v4699 = vadd.f32 %v4683, -1.4531521
    %v4700 = vadd.f32 %v4684, -1.4531521
    %v4701 = vadd.f32 %v4685, -1.4531521
    %v4702 = vadd.f32 %v4686, -1.4531521
    %v4703 = vadd.f32 %v4687, -1.4531521
    %v4704 = vadd.f32 %v4688, -1.4531521
    %v4705 = vadd.f32 %v4689, -1.4531521
    %v4706 = vadd.f32 %v4690, -1.4531521
    %v4707 = vadd.f32 %v4691, -1.4531521
    %v4708 = vadd.f32 %v4692, -1.4531521
    %v4709 = vadd.f32 %v4693, -1.4531521
    %v4710 = vadd.f32 %v4694, -1.4531521
    %v4711 = vadd.f32 %v4695, -1.4531521
    %v4712 = vadd.f32 %v4696, -1.4531521
    %v4713 = vadd.f32 %v4697, -1.4531521
    %v4714 = vmul.f32 %v4698, %v4666
    %v4715 = vmul.f32 %v4699, %v4667
    %v4716 = vmul.f32 %v4700, %v4668
    %v4717 = vmul.f32 %v4701, %v4669
    %v4718 = vmul.f32 %v4702, %v4670
    %v4719 = vmul.f32 %v4703, %v4671
    %v4720 = vmul.f32 %v4704, %v4672
    %v4721 = vmul.f32 %v4705, %v4673
    %v4722 = vmul.f32 %v4706, %v4674
    %v4723 = vmul.f32 %v4707, %v4675
    %v4724 = vmul.f32 %v4708, %v4676
    %v4725 = vmul.f32 %v4709, %v4677
    %v4726 = vmul.f32 %v4710, %v4678
    %v4727 = vmul.f32 %v4711, %v4679
    %v4728 = vmul.f32 %v4712, %v4680
    %v4729 = vmul.f32 %v4713, %v4681
    %v4730 = vadd.f32 %v4714, 1.4214138
    %v4731 = vadd.f32 %v4715, 1.4214138
    %v4732 = vadd.f32 %v4716, 1.4214138
    %v4733 = vadd.f32 %v4717, 1.4214138
    %v4734 = vadd.f32 %v4718, 1.4214138
    %v4735 = vadd.f32 %v4719, 1.4214138
    %v4736 = vadd.f32 %v4720, 1.4214138
    %v4737 = vadd.f32 %v4721, 1.4214138
    %v4738 = vadd.f32 %v4722, 1.4214138
    %v4739 = vadd.f32 %v4723, 1.4214138
    %v4740 = vadd.f32 %v4724, 1.4214138
    %v4741 = vadd.f32 %v4725, 1.4214138
    %v4742 = vadd.f32 %v4726, 1.4214138
    %v4743 = vadd.f32 %v4727, 1.4214138
    %v4744 = vadd.f32 %v4728, 1.4214138
    %v4745 = vadd.f32 %v4729, 1.4214138
    %v4746 = vmul.f32 %v4730, %v4666
    %v4747 = vmul.f32 %v4731, %v4667
    %v4748 = vmul.f32 %v4732, %v4668
    %v4749 = vmul.f32 %v4733, %v4669
    %v4750 = vmul.f32 %v4734, %v4670
    %v4751 = vmul.f32 %v4735, %v4671
    %v4752 = vmul.f32 %v4736, %v4672
    %v4753 = vmul.f32 %v4737, %v4673
    %v4754 = vmul.f32 %v4738, %v4674
    %v4755 = vmul.f32 %v4739, %v4675
    %v4756 = vmul.f32 %v4740, %v4676
    %v4757 = vmul.f32 %v4741, %v4677
    %v4758 = vmul.f32 %v4742, %v4678
    %v4759 = vmul.f32 %v4743, %v4679
    %v4760 = vmul.f32 %v4744, %v4680
    %v4761 = vmul.f32 %v4745, %v4681
    %v4762 = vadd.f32 %v4746, -0.28449672
    %v4763 = vadd.f32 %v4747, -0.28449672
    %v4764 = vadd.f32 %v4748, -0.28449672
    %v4765 = vadd.f32 %v4749, -0.28449672
    %v4766 = vadd.f32 %v4750, -0.28449672
    %v4767 = vadd.f32 %v4751, -0.28449672
    %v4768 = vadd.f32 %v4752, -0.28449672
    %v4769 = vadd.f32 %v4753, -0.28449672
    %v4770 = vadd.f32 %v4754, -0.28449672
    %v4771 = vadd.f32 %v4755, -0.28449672
    %v4772 = vadd.f32 %v4756, -0.28449672
    %v4773 = vadd.f32 %v4757, -0.28449672
    %v4774 = vadd.f32 %v4758, -0.28449672
    %v4775 = vadd.f32 %v4759, -0.28449672
    %v4776 = vadd.f32 %v4760, -0.28449672
    %v4777 = vadd.f32 %v4761, -0.28449672
    %v4778 = vmul.f32 %v4762, %v4666
    %v4779 = vmul.f32 %v4763, %v4667
    %v4780 = vmul.f32 %v4764, %v4668
    %v4781 = vmul.f32 %v4765, %v4669
    %v4782 = vmul.f32 %v4766, %v4670
    %v4783 = vmul.f32 %v4767, %v4671
    %v4784 = vmul.f32 %v4768, %v4672
    %v4785 = vmul.f32 %v4769, %v4673
    %v4786 = vmul.f32 %v4770, %v4674
    %v4787 = vmul.f32 %v4771, %v4675
    %v4788 = vmul.f32 %v4772, %v4676
    %v4789 = vmul.f32 %v4773, %v4677
    %v4790 = vmul.f32 %v4774, %v4678
    %v4791 = vmul.f32 %v4775, %v4679
    %v4792 = vmul.f32 %v4776, %v4680
    %v4793 = vmul.f32 %v4777, %v4681
    %v4794 = vadd.f32 %v4778, 0.2548296
    %v4795 = vadd.f32 %v4779, 0.2548296
    %v4796 = vadd.f32 %v4780, 0.2548296
    %v4797 = vadd.f32 %v4781, 0.2548296
    %v4798 = vadd.f32 %v4782, 0.2548296
    %v4799 = vadd.f32 %v4783, 0.2548296
    %v4800 = vadd.f32 %v4784, 0.2548296
    %v4801 = vadd.f32 %v4785, 0.2548296
    %v4802 = vadd.f32 %v4786, 0.2548296
    %v4803 = vadd.f32 %v4787, 0.2548296
    %v4804 = vadd.f32 %v4788, 0.2548296
    %v4805 = vadd.f32 %v4789, 0.2548296
    %v4806 = vadd.f32 %v4790, 0.2548296
    %v4807 = vadd.f32 %v4791, 0.2548296
    %v4808 = vadd.f32 %v4792, 0.2548296
    %v4809 = vadd.f32 %v4793, 0.2548296
    %v4810 = vmul.f32 %v4794, %v4666
    %v4811 = vmul.f32 %v4795, %v4667
    %v4812 = vmul.f32 %v4796, %v4668
    %v4813 = vmul.f32 %v4797, %v4669
    %v4814 = vmul.f32 %v4798, %v4670
    %v4815 = vmul.f32 %v4799, %v4671
    %v4816 = vmul.f32 %v4800, %v4672
    %v4817 = vmul.f32 %v4801, %v4673
    %v4818 = vmul.f32 %v4802, %v4674
    %v4819 = vmul.f32 %v4803, %v4675
    %v4820 = vmul.f32 %v4804, %v4676
    %v4821 = vmul.f32 %v4805, %v4677
    %v4822 = vmul.f32 %v4806, %v4678
    %v4823 = vmul.f32 %v4807, %v4679
    %v4824 = vmul.f32 %v4808, %v4680
    %v4825 = vmul.f32 %v4809, %v4681
    %v4826 = vmul.f32 %v4618, %v4618
    %v4827 = vmul.f32 %v4619, %v4619
    %v4828 = vmul.f32 %v4620, %v4620
    %v4829 = vmul.f32 %v4621, %v4621
    %v4830 = vmul.f32 %v4622, %v4622
    %v4831 = vmul.f32 %v4623, %v4623
    %v4832 = vmul.f32 %v4624, %v4624
    %v4833 = vmul.f32 %v4625, %v4625
    %v4834 = vmul.f32 %v4626, %v4626
    %v4835 = vmul.f32 %v4627, %v4627
    %v4836 = vmul.f32 %v4628, %v4628
    %v4837 = vmul.f32 %v4629, %v4629
    %v4838 = vmul.f32 %v4630, %v4630
    %v4839 = vmul.f32 %v4631, %v4631
    %v4840 = vmul.f32 %v4632, %v4632
    %v4841 = vmul.f32 %v4633, %v4633
    %v4842 = vsub.f32 0.0, %v4826
    %v4843 = vsub.f32 0.0, %v4827
    %v4844 = vsub.f32 0.0, %v4828
    %v4845 = vsub.f32 0.0, %v4829
    %v4846 = vsub.f32 0.0, %v4830
    %v4847 = vsub.f32 0.0, %v4831
    %v4848 = vsub.f32 0.0, %v4832
    %v4849 = vsub.f32 0.0, %v4833
    %v4850 = vsub.f32 0.0, %v4834
    %v4851 = vsub.f32 0.0, %v4835
    %v4852 = vsub.f32 0.0, %v4836
    %v4853 = vsub.f32 0.0, %v4837
    %v4854 = vsub.f32 0.0, %v4838
    %v4855 = vsub.f32 0.0, %v4839
    %v4856 = vsub.f32 0.0, %v4840
    %v4857 = vsub.f32 0.0, %v4841
    %v4858 = vmul.f32 %v4842, 1.442695
    %v4859 = vpow.pop %v4858
    %v4860 = vmul.f32 %v4843, 1.442695
    %v4861 = vpow.pop %v4860
    %v4862 = vmul.f32 %v4844, 1.442695
    %v4863 = vpow.pop %v4862
    %v4864 = vmul.f32 %v4845, 1.442695
    %v4865 = vpow.pop %v4864
    %v4866 = vmul.f32 %v4846, 1.442695
    %v4867 = vpow.pop %v4866
    %v4868 = vmul.f32 %v4847, 1.442695
    %v4869 = vpow.pop %v4868
    %v4870 = vmul.f32 %v4848, 1.442695
    %v4871 = vpow.pop %v4870
    %v4872 = vmul.f32 %v4849, 1.442695
    %v4873 = vpow.pop %v4872
    %v4874 = vmul.f32 %v4850, 1.442695
    %v4875 = vpow.pop %v4874
    %v4876 = vmul.f32 %v4851, 1.442695
    %v4877 = vpow.pop %v4876
    %v4878 = vmul.f32 %v4852, 1.442695
    %v4879 = vpow.pop %v4878
    %v4880 = vmul.f32 %v4853, 1.442695
    %v4881 = vpow.pop %v4880
    %v4882 = vmul.f32 %v4854, 1.442695
    %v4883 = vpow.pop %v4882
    %v4884 = vmul.f32 %v4855, 1.442695
    %v4885 = vpow.pop %v4884
    %v4886 = vmul.f32 %v4856, 1.442695
    %v4887 = vpow.pop %v4886
    %v4888 = vmul.f32 %v4857, 1.442695
    %v4889 = vpow.pop %v4888
    %v4890 = vmul.f32 %v4810, %v4859
    %v4891 = vmul.f32 %v4811, %v4861
    %v4892 = vmul.f32 %v4812, %v4863
    %v4893 = vmul.f32 %v4813, %v4865
    %v4894 = vmul.f32 %v4814, %v4867
    %v4895 = vmul.f32 %v4815, %v4869
    %v4896 = vmul.f32 %v4816, %v4871
    %v4897 = vmul.f32 %v4817, %v4873
    %v4898 = vmul.f32 %v4818, %v4875
    %v4899 = vmul.f32 %v4819, %v4877
    %v4900 = vmul.f32 %v4820, %v4879
    %v4901 = vmul.f32 %v4821, %v4881
    %v4902 = vmul.f32 %v4822, %v4883
    %v4903 = vmul.f32 %v4823, %v4885
    %v4904 = vmul.f32 %v4824, %v4887
    %v4905 = vmul.f32 %v4825, %v4889
    %v4906 = vsub.f32 1.0, %v4890
    %v4907 = vsub.f32 1.0, %v4891
    %v4908 = vsub.f32 1.0, %v4892
    %v4909 = vsub.f32 1.0, %v4893
    %v4910 = vsub.f32 1.0, %v4894
    %v4911 = vsub.f32 1.0, %v4895
    %v4912 = vsub.f32 1.0, %v4896
    %v4913 = vsub.f32 1.0, %v4897
    %v4914 = vsub.f32 1.0, %v4898
    %v4915 = vsub.f32 1.0, %v4899
    %v4916 = vsub.f32 1.0, %v4900
    %v4917 = vsub.f32 1.0, %v4901
    %v4918 = vsub.f32 1.0, %v4902
    %v4919 = vsub.f32 1.0, %v4903
    %v4920 = vsub.f32 1.0, %v4904
    %v4921 = vsub.f32 1.0, %v4905
    %vm4922 = vcmp.ge.f32.partialorder %v4602, 0.0
    %vm4923 = vcmp.ge.f32.partialorder %v4603, 0.0
    %vm4924 = vcmp.ge.f32.partialorder %v4604, 0.0
    %vm4925 = vcmp.ge.f32.partialorder %v4605, 0.0
    %vm4926 = vcmp.ge.f32.partialorder %v4606, 0.0
    %vm4927 = vcmp.ge.f32.partialorder %v4607, 0.0
    %vm4928 = vcmp.ge.f32.partialorder %v4608, 0.0
    %vm4929 = vcmp.ge.f32.partialorder %v4609, 0.0
    %vm4930 = vcmp.ge.f32.partialorder %v4610, 0.0
    %vm4931 = vcmp.ge.f32.partialorder %v4611, 0.0
    %vm4932 = vcmp.ge.f32.partialorder %v4612, 0.0
    %vm4933 = vcmp.ge.f32.partialorder %v4613, 0.0
    %vm4934 = vcmp.ge.f32.partialorder %v4614, 0.0
    %vm4935 = vcmp.ge.f32.partialorder %v4615, 0.0
    %vm4936 = vcmp.ge.f32.partialorder %v4616, 0.0
    %vm4937 = vcmp.ge.f32.partialorder %v4617, 0.0
    %v4938 = vsub.f32 0.0, %v4906
    %v4939 = vsub.f32 0.0, %v4907
    %v4940 = vsub.f32 0.0, %v4908
    %v4941 = vsub.f32 0.0, %v4909
    %v4942 = vsub.f32 0.0, %v4910
    %v4943 = vsub.f32 0.0, %v4911
    %v4944 = vsub.f32 0.0, %v4912
    %v4945 = vsub.f32 0.0, %v4913
    %v4946 = vsub.f32 0.0, %v4914
    %v4947 = vsub.f32 0.0, %v4915
    %v4948 = vsub.f32 0.0, %v4916
    %v4949 = vsub.f32 0.0, %v4917
    %v4950 = vsub.f32 0.0, %v4918
    %v4951 = vsub.f32 0.0, %v4919
    %v4952 = vsub.f32 0.0, %v4920
    %v4953 = vsub.f32 0.0, %v4921
    %v4954 = vsel %vm4922, %v4906, %v4938
    %v4955 = vsel %vm4923, %v4907, %v4939
    %v4956 = vsel %vm4924, %v4908, %v4940
    %v4957 = vsel %vm4925, %v4909, %v4941
    %v4958 = vsel %vm4926, %v4910, %v4942
    %v4959 = vsel %vm4927, %v4911, %v4943
    %v4960 = vsel %vm4928, %v4912, %v4944
    %v4961 = vsel %vm4929, %v4913, %v4945
    %v4962 = vsel %vm4930, %v4914, %v4946
    %v4963 = vsel %vm4931, %v4915, %v4947
    %v4964 = vsel %vm4932, %v4916, %v4948
    %v4965 = vsel %vm4933, %v4917, %v4949
    %v4966 = vsel %vm4934, %v4918, %v4950
    %v4967 = vsel %vm4935, %v4919, %v4951
    %v4968 = vsel %vm4936, %v4920, %v4952
    %v4969 = vsel %vm4937, %v4921, %v4953
    %v4970 = vadd.f32 %v4954, 1.0
    %v4971 = vadd.f32 %v4955, 1.0
    %v4972 = vadd.f32 %v4956, 1.0
    %v4973 = vadd.f32 %v4957, 1.0
    %v4974 = vadd.f32 %v4958, 1.0
    %v4975 = vadd.f32 %v4959, 1.0
    %v4976 = vadd.f32 %v4960, 1.0
    %v4977 = vadd.f32 %v4961, 1.0
    %v4978 = vadd.f32 %v4962, 1.0
    %v4979 = vadd.f32 %v4963, 1.0
    %v4980 = vadd.f32 %v4964, 1.0
    %v4981 = vadd.f32 %v4965, 1.0
    %v4982 = vadd.f32 %v4966, 1.0
    %v4983 = vadd.f32 %v4967, 1.0
    %v4984 = vadd.f32 %v4968, 1.0
    %v4985 = vadd.f32 %v4969, 1.0
    %v4986 = vmul.f32 %v4586, %v4970
    %v4987 = vmul.f32 %v4587, %v4971
    %v4988 = vmul.f32 %v4588, %v4972
    %v4989 = vmul.f32 %v4589, %v4973
    %v4990 = vmul.f32 %v4590, %v4974
    %v4991 = vmul.f32 %v4591, %v4975
    %v4992 = vmul.f32 %v4592, %v4976
    %v4993 = vmul.f32 %v4593, %v4977
    %v4994 = vmul.f32 %v4594, %v4978
    %v4995 = vmul.f32 %v4595, %v4979
    %v4996 = vmul.f32 %v4596, %v4980
    %v4997 = vmul.f32 %v4597, %v4981
    %v4998 = vmul.f32 %v4598, %v4982
    %v4999 = vmul.f32 %v4599, %v4983
    %v5000 = vmul.f32 %v4600, %v4984
    %v5001 = vmul.f32 %v4601, %v4985
    %v5002 = vld [vmem:[%s39] sm:$0xf]
    %v5003 = vld [vmem:[%s39 + $0x4] sm:$0xf]
    %v5004 = vld [vmem:[%s39 + $0x8] sm:$0xf]
    %v5005 = vld [vmem:[%s39 + $0xc] sm:$0xf]
    %v5006 = vld [vmem:[%s39 + $0x10] sm:$0xf]
    %v5007 = vld [vmem:[%s39 + $0x14] sm:$0xf]
    %v5008 = vld [vmem:[%s39 + $0x18] sm:$0xf]
    %v5009 = vld [vmem:[%s39 + $0x1c] sm:$0xf]
    %v5010 = vld [vmem:[%s39 + $0x20] sm:$0xf]
    %v5011 = vld [vmem:[%s39 + $0x24] sm:$0xf]
    %v5012 = vld [vmem:[%s39 + $0x28] sm:$0xf]
    %v5013 = vld [vmem:[%s39 + $0x2c] sm:$0xf]
    %v5014 = vld [vmem:[%s39 + $0x30] sm:$0xf]
    %v5015 = vld [vmem:[%s39 + $0x34] sm:$0xf]
    %v5016 = vld [vmem:[%s39 + $0x38] sm:$0xf]
    %v5017 = vld [vmem:[%s39 + $0x3c] sm:$0xf]
    %v5018 = vld [vmem:[%s39 + $0x40] sm:$0xf]
    %v5019 = vld [vmem:[%s39 + $0x44] sm:$0xf]
    %v5020 = vld [vmem:[%s39 + $0x48] sm:$0xf]
    %v5021 = vld [vmem:[%s39 + $0x4c] sm:$0xf]
    %v5022 = vld [vmem:[%s39 + $0x50] sm:$0xf]
    %v5023 = vld [vmem:[%s39 + $0x54] sm:$0xf]
    %v5024 = vld [vmem:[%s39 + $0x58] sm:$0xf]
    %v5025 = vld [vmem:[%s39 + $0x5c] sm:$0xf]
    %v5026 = vld [vmem:[%s39 + $0x60] sm:$0xf]
    %v5027 = vld [vmem:[%s39 + $0x64] sm:$0xf]
    %v5028 = vld [vmem:[%s39 + $0x68] sm:$0xf]
    %v5029 = vld [vmem:[%s39 + $0x6c] sm:$0xf]
    %v5030 = vld [vmem:[%s39 + $0x70] sm:$0xf]
    %v5031 = vld [vmem:[%s39 + $0x74] sm:$0xf]
    %v5032 = vld [vmem:[%s39 + $0x78] sm:$0xf]
    %v5033 = vld [vmem:[%s39 + $0x7c] sm:$0xf]
    %v5034 = vpack.c.bf16 %v4988, %v4986
    %v5035 = vpack.c.bf16 %v4989, %v4987
    %v5036 = vpack.c.bf16 %v4992, %v4990
    %v5037 = vpack.c.bf16 %v4993, %v4991
    %v5038 = vpack.c.bf16 %v4996, %v4994
    %v5039 = vpack.c.bf16 %v4997, %v4995
    %v5040 = vpack.c.bf16 %v5000, %v4998
    %v5041 = vpack.c.bf16 %v5001, %v4999
    %v5042 = vld [vmem:[%s41] sm:$0x1]
    %v5044 = vlaneseq
    %v5045 = vshrl.u32 %v5044, 7
    %v5046 = vsub.s32 0, %v5045
    %v5047 = vrot.slane %v5042, %v5046
    %v5081 = vunpack.c.l.b16 %v5002
    %v5082 = vunpack.c.l.b16 %v5003
    %v5083 = vunpack.c.l.b16 %v5004
    %v5084 = vunpack.c.l.b16 %v5005
    %v5085 = vunpack.c.l.b16 %v5006
    %v5086 = vunpack.c.l.b16 %v5007
    %v5087 = vunpack.c.l.b16 %v5008
    %v5088 = vunpack.c.l.b16 %v5009
    %v5089 = vunpack.c.l.b16 %v5010
    %v5090 = vunpack.c.l.b16 %v5011
    %v5091 = vunpack.c.l.b16 %v5012
    %v5092 = vunpack.c.l.b16 %v5013
    %v5093 = vunpack.c.l.b16 %v5014
    %v5094 = vunpack.c.l.b16 %v5015
    %v5095 = vunpack.c.l.b16 %v5016
    %v5096 = vunpack.c.l.b16 %v5017
    %v5097 = vunpack.c.l.b16 %v5018
    %v5098 = vunpack.c.l.b16 %v5019
    %v5099 = vunpack.c.l.b16 %v5020
    %v5100 = vunpack.c.l.b16 %v5021
    %v5101 = vunpack.c.l.b16 %v5022
    %v5102 = vunpack.c.l.b16 %v5023
    %v5103 = vunpack.c.l.b16 %v5024
    %v5104 = vunpack.c.l.b16 %v5025
    %v5105 = vunpack.c.l.b16 %v5026
    %v5106 = vunpack.c.l.b16 %v5027
    %v5107 = vunpack.c.l.b16 %v5028
    %v5108 = vunpack.c.l.b16 %v5029
    %v5109 = vunpack.c.l.b16 %v5030
    %v5110 = vunpack.c.l.b16 %v5031
    %v5111 = vunpack.c.l.b16 %v5032
    %v5112 = vunpack.c.l.b16 %v5033
    %v5113 = vpack.c.b16 %v5082, %v5081
    %v5114 = vpack.c.b16 %v5084, %v5083
    %v5115 = vpack.c.b16 %v5086, %v5085
    %v5116 = vpack.c.b16 %v5088, %v5087
    %v5117 = vpack.c.b16 %v5090, %v5089
    %v5118 = vpack.c.b16 %v5092, %v5091
    %v5119 = vpack.c.b16 %v5094, %v5093
    %v5120 = vpack.c.b16 %v5096, %v5095
    %v5121 = vpack.c.b16 %v5098, %v5097
    %v5122 = vpack.c.b16 %v5100, %v5099
    %v5123 = vpack.c.b16 %v5102, %v5101
    %v5124 = vpack.c.b16 %v5104, %v5103
    %v5125 = vpack.c.b16 %v5106, %v5105
    %v5126 = vpack.c.b16 %v5108, %v5107
    %v5127 = vpack.c.b16 %v5110, %v5109
    %v5128 = vpack.c.b16 %v5112, %v5111
    %5145 = vmatprep.subr.bf16.mxu0 0
    %5146 = vmatpush1.bf16.msra.mxu0 %v5120
    %5147 = vmatprep.subr.bf16.mxu0 0
    %5148 = vmatpush1.bf16.msra.mxu0 %v5119
    %5149 = vmatprep.subr.bf16.mxu0 0
    %5150 = vmatpush1.bf16.msra.mxu0 %v5118
    %5151 = vmatprep.subr.bf16.mxu0 0
    %5152 = vmatpush1.bf16.msra.mxu0 %v5117
    %5153 = vmatprep.subr.bf16.mxu0 0
    %5154 = vmatpush1.bf16.msra.mxu0 %v5116
    %5155 = vmatprep.subr.bf16.mxu0 0
    %5156 = vmatpush1.bf16.msra.mxu0 %v5115
    %5157 = vmatprep.subr.bf16.mxu0 0
    %5158 = vmatpush1.bf16.msra.mxu0 %v5114
    %5159 = vmatprep.subr.bf16.mxu0 0
    %5160 = vmatpush1.bf16.msra.mxu0 %v5113
    %5161 = vmatprep.subr.bf16.mxu0 0
    %5162 = vmatpush2.bf16.msra.mxu0 %v5128
    %5163 = vmatprep.subr.bf16.mxu0 0
    %5164 = vmatpush2.bf16.msra.mxu0 %v5127
    %5165 = vmatprep.subr.bf16.mxu0 0
    %5166 = vmatpush2.bf16.msra.mxu0 %v5126
    %5167 = vmatprep.subr.bf16.mxu0 0
    %5168 = vmatpush2.bf16.msra.mxu0 %v5125
    %5169 = vmatprep.subr.bf16.mxu0 0
    %5170 = vmatpush2.bf16.msra.mxu0 %v5124
    %5171 = vmatprep.subr.bf16.mxu0 0
    %5172 = vmatpush2.bf16.msra.mxu0 %v5123
    %5173 = vmatprep.subr.bf16.mxu0 0
    %5174 = vmatpush2.bf16.msra.mxu0 %v5122
    %5175 = vmatprep.subr.bf16.mxu0 0
    %5176 = vmatpush2.bf16.msra.mxu0 %v5121
    %5177 = vmatprep.mubr.bf16.mxu0 %v5035
    %5178 = vmatmul.mubr.bf16.gmra.mxu0 %v5034
    %v5179 = vpop.f32.mrf.mxu0
    %v5180 = vadd.f32 %v5047, %v5179
    %v5181 = vpop.f32.mrf.mxu0
    %v5182 = vpop.f32.mrf.mxu0
    %v5183 = vadd.f32 %v5047, %v5182
    %v5184 = vpop.f32.mrf.mxu0
    %5185 = vmatprep.mubr.bf16.mxu0 %v5037
    %5186 = vmatmul.mubr.bf16.gmra.mxu0 %v5036
    %v5187 = vpop.f32.mrf.mxu0
    %v5188 = vadd.f32 %v5047, %v5187
    %v5189 = vpop.f32.mrf.mxu0
    %v5190 = vpop.f32.mrf.mxu0
    %v5191 = vadd.f32 %v5047, %v5190
    %v5192 = vpop.f32.mrf.mxu0
    %5193 = vmatprep.mubr.bf16.mxu0 %v5039
    %5194 = vmatmul.mubr.bf16.gmra.mxu0 %v5038
    %v5195 = vpop.f32.mrf.mxu0
    %v5196 = vadd.f32 %v5047, %v5195
    %v5197 = vpop.f32.mrf.mxu0
    %v5198 = vpop.f32.mrf.mxu0
    %v5199 = vadd.f32 %v5047, %v5198
    %v5200 = vpop.f32.mrf.mxu0
    %5201 = vmatprep.mubr.bf16.mxu0 %v5041
    %5202 = vmatmul.mubr.bf16.gmra.mxu0 %v5040
    %v5203 = vpop.f32.mrf.mxu0
    %v5204 = vadd.f32 %v5047, %v5203
    %v5205 = vpop.f32.mrf.mxu0
    %v5206 = vpop.f32.mrf.mxu0
    %v5207 = vadd.f32 %v5047, %v5206
    %v5208 = vpop.f32.mrf.mxu0
    %5209 = vdwg.mxu0
    %v5210 = vadd.f32 %v4295, %v5180
    %v5211 = vadd.f32 %v4296, %v5183
    %v5212 = vadd.f32 %v4297, %v5188
    %v5213 = vadd.f32 %v4298, %v5191
    %v5214 = vadd.f32 %v4299, %v5196
    %v5215 = vadd.f32 %v4300, %v5199
    %v5216 = vadd.f32 %v4301, %v5204
    %v5217 = vadd.f32 %v4302, %v5207
    %s5218 = scalar_lea.vmem %s11, 1
    %v5219 = vld [vmem:[%s5218] sm:$0x1]
    %s5220 = scalar_lea.vmem %s13, 1
    %v5221 = vld [vmem:[%s5220] sm:$0x1]
    %v5222 = vsel %vm3086, %v5210, 0.0
    %5223 = vadd.xlane.f32.xlu0 %v5222
    %v5224 = vpop.xlane.xlu0 %5223
    %v5225 = vsel %vm3086, %v5211, 0.0
    %5226 = vadd.xlane.f32.xlu0 %v5225
    %v5227 = vpop.xlane.xlu0 %5226
    %v5228 = vsel %vm3086, %v5212, 0.0
    %5229 = vadd.xlane.f32.xlu0 %v5228
    %v5230 = vpop.xlane.xlu0 %5229
    %v5231 = vsel %vm3086, %v5213, 0.0
    %5232 = vadd.xlane.f32.xlu0 %v5231
    %v5233 = vpop.xlane.xlu0 %5232
    %v5234 = vsel %vm3086, %v5214, 0.0
    %5235 = vadd.xlane.f32.xlu0 %v5234
    %v5236 = vpop.xlane.xlu0 %5235
    %v5237 = vsel %vm3086, %v5215, 0.0
    %5238 = vadd.xlane.f32.xlu0 %v5237
    %v5239 = vpop.xlane.xlu0 %5238
    %v5240 = vsel %vm3086, %v5216, 0.0
    %5241 = vadd.xlane.f32.xlu0 %v5240
    %v5242 = vpop.xlane.xlu0 %5241
    %v5243 = vsel %vm3086, %v5217, 0.0
    %5244 = vadd.xlane.f32.xlu0 %v5243
    %v5245 = vpop.xlane.xlu0 %5244
    %v5246 = vmul.f32 %v5224, %v3111
    %v5247 = vmul.f32 %v5227, %v3111
    %v5248 = vmul.f32 %v5230, %v3111
    %v5249 = vmul.f32 %v5233, %v3111
    %v5250 = vmul.f32 %v5236, %v3111
    %v5251 = vmul.f32 %v5239, %v3111
    %v5252 = vmul.f32 %v5242, %v3111
    %v5253 = vmul.f32 %v5245, %v3111
    %v5254 = vsub.f32 %v5210, %v5246
    %v5255 = vsub.f32 %v5211, %v5247
    %v5256 = vsub.f32 %v5212, %v5248
    %v5257 = vsub.f32 %v5213, %v5249
    %v5258 = vsub.f32 %v5214, %v5250
    %v5259 = vsub.f32 %v5215, %v5251
    %v5260 = vsub.f32 %v5216, %v5252
    %v5261 = vsub.f32 %v5217, %v5253
    %v5262 = vmul.f32 %v5254, %v5254
    %v5263 = vmul.f32 %v5255, %v5255
    %v5264 = vmul.f32 %v5256, %v5256
    %v5265 = vmul.f32 %v5257, %v5257
    %v5266 = vmul.f32 %v5258, %v5258
    %v5267 = vmul.f32 %v5259, %v5259
    %v5268 = vmul.f32 %v5260, %v5260
    %v5269 = vmul.f32 %v5261, %v5261
    %v5270 = vsel %vm3086, %v5262, 0.0
    %5271 = vadd.xlane.f32.xlu0 %v5270
    %v5272 = vpop.xlane.xlu0 %5271
    %v5273 = vsel %vm3086, %v5263, 0.0
    %5274 = vadd.xlane.f32.xlu0 %v5273
    %v5275 = vpop.xlane.xlu0 %5274
    %v5276 = vsel %vm3086, %v5264, 0.0
    %5277 = vadd.xlane.f32.xlu0 %v5276
    %v5278 = vpop.xlane.xlu0 %5277
    %v5279 = vsel %vm3086, %v5265, 0.0
    %5280 = vadd.xlane.f32.xlu0 %v5279
    %v5281 = vpop.xlane.xlu0 %5280
    %v5282 = vsel %vm3086, %v5266, 0.0
    %5283 = vadd.xlane.f32.xlu0 %v5282
    %v5284 = vpop.xlane.xlu0 %5283
    %v5285 = vsel %vm3086, %v5267, 0.0
    %5286 = vadd.xlane.f32.xlu0 %v5285
    %v5287 = vpop.xlane.xlu0 %5286
    %v5288 = vsel %vm3086, %v5268, 0.0
    %5289 = vadd.xlane.f32.xlu0 %v5288
    %v5290 = vpop.xlane.xlu0 %5289
    %v5291 = vsel %vm3086, %v5269, 0.0
    %5292 = vadd.xlane.f32.xlu0 %v5291
    %v5293 = vpop.xlane.xlu0 %5292
    %v5294 = vmul.f32 %v5272, %v3111
    %v5295 = vmul.f32 %v5275, %v3111
    %v5296 = vmul.f32 %v5278, %v3111
    %v5297 = vmul.f32 %v5281, %v3111
    %v5298 = vmul.f32 %v5284, %v3111
    %v5299 = vmul.f32 %v5287, %v3111
    %v5300 = vmul.f32 %v5290, %v3111
    %v5301 = vmul.f32 %v5293, %v3111
    %v5302 = vadd.f32 %v5294, 1e-06
    %v5303 = vadd.f32 %v5295, 1e-06
    %v5304 = vadd.f32 %v5296, 1e-06
    %v5305 = vadd.f32 %v5297, 1e-06
    %v5306 = vadd.f32 %v5298, 1e-06
    %v5307 = vadd.f32 %v5299, 1e-06
    %v5308 = vadd.f32 %v5300, 1e-06
    %v5309 = vadd.f32 %v5301, 1e-06
    %v5310 = vrsqrt.pop %v5302
    %v5311 = vrsqrt.pop %v5303
    %v5312 = vrsqrt.pop %v5304
    %v5313 = vrsqrt.pop %v5305
    %v5314 = vrsqrt.pop %v5306
    %v5315 = vrsqrt.pop %v5307
    %v5316 = vrsqrt.pop %v5308
    %v5317 = vrsqrt.pop %v5309
    %v5318 = vmul.f32 %v5254, %v5310
    %v5319 = vmul.f32 %v5255, %v5311
    %v5320 = vmul.f32 %v5256, %v5312
    %v5321 = vmul.f32 %v5257, %v5313
    %v5322 = vmul.f32 %v5258, %v5314
    %v5323 = vmul.f32 %v5259, %v5315
    %v5324 = vmul.f32 %v5260, %v5316
    %v5325 = vmul.f32 %v5261, %v5317
    %v5327 = vlaneseq
    %v5328 = vshrl.u32 %v5327, 7
    %v5329 = vsub.s32 0, %v5328
    %v5330 = vrot.slane %v5219, %v5329
    %v5332 = vmul.f32 %v5318, %v5330
    %v5333 = vmul.f32 %v5319, %v5330
    %v5334 = vmul.f32 %v5320, %v5330
    %v5335 = vmul.f32 %v5321, %v5330
    %v5336 = vmul.f32 %v5322, %v5330
    %v5337 = vmul.f32 %v5323, %v5330
    %v5338 = vmul.f32 %v5324, %v5330
    %v5339 = vmul.f32 %v5325, %v5330
    %v5341 = vlaneseq
    %v5342 = vshrl.u32 %v5341, 7
    %v5343 = vsub.s32 0, %v5342
    %v5344 = vrot.slane %v5221, %v5343
    %v5346 = vadd.f32 %v5332, %v5344
    %v5347 = vadd.f32 %v5333, %v5344
    %v5348 = vadd.f32 %v5334, %v5344
    %v5349 = vadd.f32 %v5335, %v5344
    %v5350 = vadd.f32 %v5336, %v5344
    %v5351 = vadd.f32 %v5337, %v5344
    %v5352 = vadd.f32 %v5338, %v5344
    %v5353 = vadd.f32 %v5339, %v5344
    %s5354 = scalar_lea.vmem %s15, 32
    %v5355 = vld [vmem:[%s5354] sm:$0xf]
    %v5356 = vld [vmem:[%s5354 + $0x4] sm:$0xf]
    %v5357 = vld [vmem:[%s5354 + $0x8] sm:$0xf]
    %v5358 = vld [vmem:[%s5354 + $0xc] sm:$0xf]
    %v5359 = vld [vmem:[%s5354 + $0x10] sm:$0xf]
    %v5360 = vld [vmem:[%s5354 + $0x14] sm:$0xf]
    %v5361 = vld [vmem:[%s5354 + $0x18] sm:$0xf]
    %v5362 = vld [vmem:[%s5354 + $0x1c] sm:$0xf]
    %v5363 = vpack.c.bf16 %v5347, %v5346
    %v5364 = vpack.c.bf16 %v5349, %v5348
    %v5365 = vpack.c.bf16 %v5351, %v5350
    %v5366 = vpack.c.bf16 %v5353, %v5352
    %s5367 = scalar_lea.vmem %s17, 1
    %v5368 = vld [vmem:[%s5367] sm:$0x1]
    %v5370 = vlaneseq
    %v5371 = vshrl.u32 %v5370, 7
    %v5372 = vsub.s32 0, %v5371
    %v5373 = vrot.slane %v5368, %v5372
    %v5383 = vunpack.c.l.b16 %v5355
    %v5384 = vunpack.c.l.b16 %v5356
    %v5385 = vunpack.c.l.b16 %v5357
    %v5386 = vunpack.c.l.b16 %v5358
    %v5387 = vunpack.c.l.b16 %v5359
    %v5388 = vunpack.c.l.b16 %v5360
    %v5389 = vunpack.c.l.b16 %v5361
    %v5390 = vunpack.c.l.b16 %v5362
    %v5391 = vpack.c.b16 %v5384, %v5383
    %v5392 = vpack.c.b16 %v5386, %v5385
    %v5393 = vpack.c.b16 %v5388, %v5387
    %v5394 = vpack.c.b16 %v5390, %v5389
    %v5400 = vsel %vm3086, %v5363, 0
    %v5403 = vsel %vm3086, %v5364, 0
    %v5406 = vsel %vm3086, %v5365, 0
    %v5409 = vsel %vm3086, %v5366, 0
    %5411 = vmatprep.subr.bf16.mxu0 0
    %5412 = vmatpush1.bf16.msra.mxu0 0
    %5413 = vmatprep.subr.bf16.mxu0 0
    %5414 = vmatpush1.bf16.msra.mxu0 0
    %5415 = vmatprep.subr.bf16.mxu0 0
    %5416 = vmatpush1.bf16.msra.mxu0 0
    %5417 = vmatprep.subr.bf16.mxu0 0
    %5418 = vmatpush1.bf16.msra.mxu0 0
    %5419 = vmatprep.subr.bf16.mxu0 0
    %5420 = vmatpush1.bf16.msra.mxu0 %v5394
    %5421 = vmatprep.subr.bf16.mxu0 0
    %5422 = vmatpush1.bf16.msra.mxu0 %v5393
    %5423 = vmatprep.subr.bf16.mxu0 0
    %5424 = vmatpush1.bf16.msra.mxu0 %v5392
    %5425 = vmatprep.subr.bf16.mxu0 0
    %5426 = vmatpush1.bf16.msra.mxu0 %v5391
    %5427 = vmatprep.subr.bf16.mxu0 0
    %5428 = vmatpush2.bf16.msra.mxu0 0
    %5429 = vmatprep.subr.bf16.mxu0 0
    %5430 = vmatpush2.bf16.msra.mxu0 0
    %5431 = vmatprep.subr.bf16.mxu0 0
    %5432 = vmatpush2.bf16.msra.mxu0 0
    %5433 = vmatprep.subr.bf16.mxu0 0
    %5434 = vmatpush2.bf16.msra.mxu0 0
    %5435 = vmatprep.subr.bf16.mxu0 0
    %5436 = vmatpush2.bf16.msra.mxu0 0
    %5437 = vmatprep.subr.bf16.mxu0 0
    %5438 = vmatpush2.bf16.msra.mxu0 0
    %5439 = vmatprep.subr.bf16.mxu0 0
    %5440 = vmatpush2.bf16.msra.mxu0 0
    %5441 = vmatprep.subr.bf16.mxu0 0
    %5442 = vmatpush2.bf16.msra.mxu0 0
    %5443 = vmatprep.mubr.bf16.mxu0 0
    %5444 = vmatmul.mubr.bf16.gmra.mxu0 %v5400
    %v5445 = vpop.f32.mrf.mxu0
    %v5446 = vadd.f32 %v5373, %v5445
    %v5447 = vpop.f32.mrf.mxu0
    %v5448 = vpop.f32.mrf.mxu0
    %v5449 = vadd.f32 %v5373, %v5448
    %v5450 = vpop.f32.mrf.mxu0
    %5451 = vmatprep.mubr.bf16.mxu0 0
    %5452 = vmatmul.mubr.bf16.gmra.mxu0 %v5403
    %v5453 = vpop.f32.mrf.mxu0
    %v5454 = vadd.f32 %v5373, %v5453
    %v5455 = vpop.f32.mrf.mxu0
    %v5456 = vpop.f32.mrf.mxu0
    %v5457 = vadd.f32 %v5373, %v5456
    %v5458 = vpop.f32.mrf.mxu0
    %5459 = vmatprep.mubr.bf16.mxu0 0
    %5460 = vmatmul.mubr.bf16.gmra.mxu0 %v5406
    %v5461 = vpop.f32.mrf.mxu0
    %v5462 = vadd.f32 %v5373, %v5461
    %v5463 = vpop.f32.mrf.mxu0
    %v5464 = vpop.f32.mrf.mxu0
    %v5465 = vadd.f32 %v5373, %v5464
    %v5466 = vpop.f32.mrf.mxu0
    %5467 = vmatprep.mubr.bf16.mxu0 0
    %5468 = vmatmul.mubr.bf16.gmra.mxu0 %v5409
    %v5469 = vpop.f32.mrf.mxu0
    %v5470 = vadd.f32 %v5373, %v5469
    %v5471 = vpop.f32.mrf.mxu0
    %v5472 = vpop.f32.mrf.mxu0
    %v5473 = vadd.f32 %v5373, %v5472
    %v5474 = vpop.f32.mrf.mxu0
    %5475 = vdwg.mxu0
    %s5476 = scalar_lea.vmem %s19, 32
    %v5477 = vld [vmem:[%s5476] sm:$0xf]
    %v5478 = vld [vmem:[%s5476 + $0x4] sm:$0xf]
    %v5479 = vld [vmem:[%s5476 + $0x8] sm:$0xf]
    %v5480 = vld [vmem:[%s5476 + $0xc] sm:$0xf]
    %v5481 = vld [vmem:[%s5476 + $0x10] sm:$0xf]
    %v5482 = vld [vmem:[%s5476 + $0x14] sm:$0xf]
    %v5483 = vld [vmem:[%s5476 + $0x18] sm:$0xf]
    %v5484 = vld [vmem:[%s5476 + $0x1c] sm:$0xf]
    %s5485 = scalar_lea.vmem %s21, 1
    %v5486 = vld [vmem:[%s5485] sm:$0x1]
    %v5488 = vlaneseq
    %v5489 = vshrl.u32 %v5488, 7
    %v5490 = vsub.s32 0, %v5489
    %v5491 = vrot.slane %v5486, %v5490
    %v5501 = vunpack.c.l.b16 %v5477
    %v5502 = vunpack.c.l.b16 %v5478
    %v5503 = vunpack.c.l.b16 %v5479
    %v5504 = vunpack.c.l.b16 %v5480
    %v5505 = vunpack.c.l.b16 %v5481
    %v5506 = vunpack.c.l.b16 %v5482
    %v5507 = vunpack.c.l.b16 %v5483
    %v5508 = vunpack.c.l.b16 %v5484
    %v5509 = vpack.c.b16 %v5502, %v5501
    %v5510 = vpack.c.b16 %v5504, %v5503
    %v5511 = vpack.c.b16 %v5506, %v5505
    %v5512 = vpack.c.b16 %v5508, %v5507
    %5517 = vmatprep.subr.bf16.mxu0 0
    %5518 = vmatpush1.bf16.msra.mxu0 0
    %5519 = vmatprep.subr.bf16.mxu0 0
    %5520 = vmatpush1.bf16.msra.mxu0 0
    %5521 = vmatprep.subr.bf16.mxu0 0
    %5522 = vmatpush1.bf16.msra.mxu0 0
    %5523 = vmatprep.subr.bf16.mxu0 0
    %5524 = vmatpush1.bf16.msra.mxu0 0
    %5525 = vmatprep.subr.bf16.mxu0 0
    %5526 = vmatpush1.bf16.msra.mxu0 %v5512
    %5527 = vmatprep.subr.bf16.mxu0 0
    %5528 = vmatpush1.bf16.msra.mxu0 %v5511
    %5529 = vmatprep.subr.bf16.mxu0 0
    %5530 = vmatpush1.bf16.msra.mxu0 %v5510
    %5531 = vmatprep.subr.bf16.mxu0 0
    %5532 = vmatpush1.bf16.msra.mxu0 %v5509
    %5533 = vmatprep.subr.bf16.mxu0 0
    %5534 = vmatpush2.bf16.msra.mxu0 0
    %5535 = vmatprep.subr.bf16.mxu0 0
    %5536 = vmatpush2.bf16.msra.mxu0 0
    %5537 = vmatprep.subr.bf16.mxu0 0
    %5538 = vmatpush2.bf16.msra.mxu0 0
    %5539 = vmatprep.subr.bf16.mxu0 0
    %5540 = vmatpush2.bf16.msra.mxu0 0
    %5541 = vmatprep.subr.bf16.mxu0 0
    %5542 = vmatpush2.bf16.msra.mxu0 0
    %5543 = vmatprep.subr.bf16.mxu0 0
    %5544 = vmatpush2.bf16.msra.mxu0 0
    %5545 = vmatprep.subr.bf16.mxu0 0
    %5546 = vmatpush2.bf16.msra.mxu0 0
    %5547 = vmatprep.subr.bf16.mxu0 0
    %5548 = vmatpush2.bf16.msra.mxu0 0
    %5549 = vmatprep.mubr.bf16.mxu0 0
    %5550 = vmatmul.mubr.bf16.gmra.mxu0 %v5400
    %v5551 = vpop.f32.mrf.mxu0
    %v5552 = vadd.f32 %v5491, %v5551
    %v5553 = vpop.f32.mrf.mxu0
    %v5554 = vpop.f32.mrf.mxu0
    %v5555 = vadd.f32 %v5491, %v5554
    %v5556 = vpop.f32.mrf.mxu0
    %5557 = vmatprep.mubr.bf16.mxu0 0
    %5558 = vmatmul.mubr.bf16.gmra.mxu0 %v5403
    %v5559 = vpop.f32.mrf.mxu0
    %v5560 = vadd.f32 %v5491, %v5559
    %v5561 = vpop.f32.mrf.mxu0
    %v5562 = vpop.f32.mrf.mxu0
    %v5563 = vadd.f32 %v5491, %v5562
    %v5564 = vpop.f32.mrf.mxu0
    %5565 = vmatprep.mubr.bf16.mxu0 0
    %5566 = vmatmul.mubr.bf16.gmra.mxu0 %v5406
    %v5567 = vpop.f32.mrf.mxu0
    %v5568 = vadd.f32 %v5491, %v5567
    %v5569 = vpop.f32.mrf.mxu0
    %v5570 = vpop.f32.mrf.mxu0
    %v5571 = vadd.f32 %v5491, %v5570
    %v5572 = vpop.f32.mrf.mxu0
    %5573 = vmatprep.mubr.bf16.mxu0 0
    %5574 = vmatmul.mubr.bf16.gmra.mxu0 %v5409
    %v5575 = vpop.f32.mrf.mxu0
    %v5576 = vadd.f32 %v5491, %v5575
    %v5577 = vpop.f32.mrf.mxu0
    %v5578 = vpop.f32.mrf.mxu0
    %v5579 = vadd.f32 %v5491, %v5578
    %v5580 = vpop.f32.mrf.mxu0
    %5581 = vdwg.mxu0
    %s5582 = scalar_lea.vmem %s23, 32
    %v5583 = vld [vmem:[%s5582] sm:$0xf]
    %v5584 = vld [vmem:[%s5582 + $0x4] sm:$0xf]
    %v5585 = vld [vmem:[%s5582 + $0x8] sm:$0xf]
    %v5586 = vld [vmem:[%s5582 + $0xc] sm:$0xf]
    %v5587 = vld [vmem:[%s5582 + $0x10] sm:$0xf]
    %v5588 = vld [vmem:[%s5582 + $0x14] sm:$0xf]
    %v5589 = vld [vmem:[%s5582 + $0x18] sm:$0xf]
    %v5590 = vld [vmem:[%s5582 + $0x1c] sm:$0xf]
    %s5591 = scalar_lea.vmem %s25, 1
    %v5592 = vld [vmem:[%s5591] sm:$0x1]
    %v5594 = vlaneseq
    %v5595 = vshrl.u32 %v5594, 7
    %v5596 = vsub.s32 0, %v5595
    %v5597 = vrot.slane %v5592, %v5596
    %v5607 = vunpack.c.l.b16 %v5583
    %v5608 = vunpack.c.l.b16 %v5584
    %v5609 = vunpack.c.l.b16 %v5585
    %v5610 = vunpack.c.l.b16 %v5586
    %v5611 = vunpack.c.l.b16 %v5587
    %v5612 = vunpack.c.l.b16 %v5588
    %v5613 = vunpack.c.l.b16 %v5589
    %v5614 = vunpack.c.l.b16 %v5590
    %v5615 = vpack.c.b16 %v5608, %v5607
    %v5616 = vpack.c.b16 %v5610, %v5609
    %v5617 = vpack.c.b16 %v5612, %v5611
    %v5618 = vpack.c.b16 %v5614, %v5613
    %5623 = vmatprep.subr.bf16.mxu0 0
    %5624 = vmatpush1.bf16.msra.mxu0 0
    %5625 = vmatprep.subr.bf16.mxu0 0
    %5626 = vmatpush1.bf16.msra.mxu0 0
    %5627 = vmatprep.subr.bf16.mxu0 0
    %5628 = vmatpush1.bf16.msra.mxu0 0
    %5629 = vmatprep.subr.bf16.mxu0 0
    %5630 = vmatpush1.bf16.msra.mxu0 0
    %5631 = vmatprep.subr.bf16.mxu0 0
    %5632 = vmatpush1.bf16.msra.mxu0 %v5618
    %5633 = vmatprep.subr.bf16.mxu0 0
    %5634 = vmatpush1.bf16.msra.mxu0 %v5617
    %5635 = vmatprep.subr.bf16.mxu0 0
    %5636 = vmatpush1.bf16.msra.mxu0 %v5616
    %5637 = vmatprep.subr.bf16.mxu0 0
    %5638 = vmatpush1.bf16.msra.mxu0 %v5615
    %5639 = vmatprep.subr.bf16.mxu0 0
    %5640 = vmatpush2.bf16.msra.mxu0 0
    %5641 = vmatprep.subr.bf16.mxu0 0
    %5642 = vmatpush2.bf16.msra.mxu0 0
    %5643 = vmatprep.subr.bf16.mxu0 0
    %5644 = vmatpush2.bf16.msra.mxu0 0
    %5645 = vmatprep.subr.bf16.mxu0 0
    %5646 = vmatpush2.bf16.msra.mxu0 0
    %5647 = vmatprep.subr.bf16.mxu0 0
    %5648 = vmatpush2.bf16.msra.mxu0 0
    %5649 = vmatprep.subr.bf16.mxu0 0
    %5650 = vmatpush2.bf16.msra.mxu0 0
    %5651 = vmatprep.subr.bf16.mxu0 0
    %5652 = vmatpush2.bf16.msra.mxu0 0
    %5653 = vmatprep.subr.bf16.mxu0 0
    %5654 = vmatpush2.bf16.msra.mxu0 0
    %5655 = vmatprep.mubr.bf16.mxu0 0
    %5656 = vmatmul.mubr.bf16.gmra.mxu0 %v5400
    %v5657 = vpop.f32.mrf.mxu0
    %v5658 = vadd.f32 %v5597, %v5657
    %v5659 = vpop.f32.mrf.mxu0
    %v5660 = vpop.f32.mrf.mxu0
    %v5661 = vadd.f32 %v5597, %v5660
    %v5662 = vpop.f32.mrf.mxu0
    %5663 = vmatprep.mubr.bf16.mxu0 0
    %5664 = vmatmul.mubr.bf16.gmra.mxu0 %v5403
    %v5665 = vpop.f32.mrf.mxu0
    %v5666 = vadd.f32 %v5597, %v5665
    %v5667 = vpop.f32.mrf.mxu0
    %v5668 = vpop.f32.mrf.mxu0
    %v5669 = vadd.f32 %v5597, %v5668
    %v5670 = vpop.f32.mrf.mxu0
    %5671 = vmatprep.mubr.bf16.mxu0 0
    %5672 = vmatmul.mubr.bf16.gmra.mxu0 %v5406
    %v5673 = vpop.f32.mrf.mxu0
    %v5674 = vadd.f32 %v5597, %v5673
    %v5675 = vpop.f32.mrf.mxu0
    %v5676 = vpop.f32.mrf.mxu0
    %v5677 = vadd.f32 %v5597, %v5676
    %v5678 = vpop.f32.mrf.mxu0
    %5679 = vmatprep.mubr.bf16.mxu0 0
    %5680 = vmatmul.mubr.bf16.gmra.mxu0 %v5409
    %v5681 = vpop.f32.mrf.mxu0
    %v5682 = vadd.f32 %v5597, %v5681
    %v5683 = vpop.f32.mrf.mxu0
    %v5684 = vpop.f32.mrf.mxu0
    %v5685 = vadd.f32 %v5597, %v5684
    %v5686 = vpop.f32.mrf.mxu0
    %5687 = vdwg.mxu0
    %v5688 = vmul.f32 %v5552, %v3052
    %v5689 = vmul.f32 %v5555, %v3053
    %v5690 = vmul.f32 %v5560, %v3054
    %v5691 = vmul.f32 %v5563, %v3055
    %v5692 = vmul.f32 %v5568, %v3056
    %v5693 = vmul.f32 %v5571, %v3057
    %v5694 = vmul.f32 %v5576, %v3058
    %v5695 = vmul.f32 %v5579, %v3059
    %v5696 = vmul.f32 %v5552, %v3060
    %v5697 = vmul.f32 %v5555, %v3061
    %v5698 = vmul.f32 %v5560, %v3062
    %v5699 = vmul.f32 %v5563, %v3063
    %v5700 = vmul.f32 %v5568, %v3064
    %v5701 = vmul.f32 %v5571, %v3065
    %v5702 = vmul.f32 %v5576, %v3066
    %v5703 = vmul.f32 %v5579, %v3067
    %v5704 = vmul.f32 %v5552, %v3068
    %v5705 = vmul.f32 %v5555, %v3069
    %v5706 = vmul.f32 %v5560, %v3070
    %v5707 = vmul.f32 %v5563, %v3071
    %v5708 = vmul.f32 %v5568, %v3072
    %v5709 = vmul.f32 %v5571, %v3073
    %v5710 = vmul.f32 %v5576, %v3074
    %v5711 = vmul.f32 %v5579, %v3075
    %v5712 = vmul.f32 %v5552, %v3076
    %v5713 = vmul.f32 %v5555, %v3077
    %v5714 = vmul.f32 %v5560, %v3078
    %v5715 = vmul.f32 %v5563, %v3079
    %v5716 = vmul.f32 %v5568, %v3080
    %v5717 = vmul.f32 %v5571, %v3081
    %v5718 = vmul.f32 %v5576, %v3082
    %v5719 = vmul.f32 %v5579, %v3083
    %v5720 = vmul.f32 %v5658, %v3052
    %v5721 = vmul.f32 %v5661, %v3053
    %v5722 = vmul.f32 %v5666, %v3054
    %v5723 = vmul.f32 %v5669, %v3055
    %v5724 = vmul.f32 %v5674, %v3056
    %v5725 = vmul.f32 %v5677, %v3057
    %v5726 = vmul.f32 %v5682, %v3058
    %v5727 = vmul.f32 %v5685, %v3059
    %v5728 = vmul.f32 %v5658, %v3060
    %v5729 = vmul.f32 %v5661, %v3061
    %v5730 = vmul.f32 %v5666, %v3062
    %v5731 = vmul.f32 %v5669, %v3063
    %v5732 = vmul.f32 %v5674, %v3064
    %v5733 = vmul.f32 %v5677, %v3065
    %v5734 = vmul.f32 %v5682, %v3066
    %v5735 = vmul.f32 %v5685, %v3067
    %v5736 = vmul.f32 %v5658, %v3068
    %v5737 = vmul.f32 %v5661, %v3069
    %v5738 = vmul.f32 %v5666, %v3070
    %v5739 = vmul.f32 %v5669, %v3071
    %v5740 = vmul.f32 %v5674, %v3072
    %v5741 = vmul.f32 %v5677, %v3073
    %v5742 = vmul.f32 %v5682, %v3074
    %v5743 = vmul.f32 %v5685, %v3075
    %v5744 = vmul.f32 %v5658, %v3076
    %v5745 = vmul.f32 %v5661, %v3077
    %v5746 = vmul.f32 %v5666, %v3078
    %v5747 = vmul.f32 %v5669, %v3079
    %v5748 = vmul.f32 %v5674, %v3080
    %v5749 = vmul.f32 %v5677, %v3081
    %v5750 = vmul.f32 %v5682, %v3082
    %v5751 = vmul.f32 %v5685, %v3083
    %v5753 = vsel %vm3086, %v5446, 0
    %v5756 = vsel %vm3086, %v5449, 0
    %v5759 = vsel %vm3086, %v5454, 0
    %v5762 = vsel %vm3086, %v5457, 0
    %v5765 = vsel %vm3086, %v5462, 0
    %v5768 = vsel %vm3086, %v5465, 0
    %v5771 = vsel %vm3086, %v5470, 0
    %v5774 = vsel %vm3086, %v5473, 0
    %v5777 = vsel %vm3086, %v5688, 0
    %v5780 = vsel %vm3086, %v5689, 0
    %v5783 = vsel %vm3086, %v5690, 0
    %v5786 = vsel %vm3086, %v5691, 0
    %v5789 = vsel %vm3086, %v5692, 0
    %v5792 = vsel %vm3086, %v5693, 0
    %v5795 = vsel %vm3086, %v5694, 0
    %v5798 = vsel %vm3086, %v5695, 0
    %v5801 = vsel %vm3086, %v5696, 0
    %v5804 = vsel %vm3086, %v5697, 0
    %v5807 = vsel %vm3086, %v5698, 0
    %v5810 = vsel %vm3086, %v5699, 0
    %v5813 = vsel %vm3086, %v5700, 0
    %v5816 = vsel %vm3086, %v5701, 0
    %v5819 = vsel %vm3086, %v5702, 0
    %v5822 = vsel %vm3086, %v5703, 0
    %v5825 = vsel %vm3086, %v5704, 0
    %v5828 = vsel %vm3086, %v5705, 0
    %v5831 = vsel %vm3086, %v5706, 0
    %v5834 = vsel %vm3086, %v5707, 0
    %v5837 = vsel %vm3086, %v5708, 0
    %v5840 = vsel %vm3086, %v5709, 0
    %v5843 = vsel %vm3086, %v5710, 0
    %v5846 = vsel %vm3086, %v5711, 0
    %v5849 = vsel %vm3086, %v5712, 0
    %v5852 = vsel %vm3086, %v5713, 0
    %v5855 = vsel %vm3086, %v5714, 0
    %v5858 = vsel %vm3086, %v5715, 0
    %v5861 = vsel %vm3086, %v5716, 0
    %v5864 = vsel %vm3086, %v5717, 0
    %v5867 = vsel %vm3086, %v5718, 0
    %v5870 = vsel %vm3086, %v5719, 0
    %5872 = vmatprep.subr.mxu0 0.0
    %5873 = vmatpush1.xpose.msra.mxu0 %v5822
    %5874 = vmatprep.subr.mxu0 0.0
    %5875 = vmatpush1.xpose.msra.mxu0 %v5819
    %5876 = vmatprep.subr.mxu0 0.0
    %5877 = vmatpush1.xpose.msra.mxu0 %v5816
    %5878 = vmatprep.subr.mxu0 0.0
    %5879 = vmatpush1.xpose.msra.mxu0 %v5813
    %5880 = vmatprep.subr.mxu0 0.0
    %5881 = vmatpush1.xpose.msra.mxu0 %v5810
    %5882 = vmatprep.subr.mxu0 0.0
    %5883 = vmatpush1.xpose.msra.mxu0 %v5807
    %5884 = vmatprep.subr.mxu0 0.0
    %5885 = vmatpush1.xpose.msra.mxu0 %v5804
    %5886 = vmatprep.subr.mxu0 0.0
    %5887 = vmatpush1.xpose.msra.mxu0 %v5801
    %5888 = vmatprep.subr.mxu0 0.0
    %5889 = vmatpush1.xpose.msra.mxu0 %v5798
    %5890 = vmatprep.subr.mxu0 0.0
    %5891 = vmatpush1.xpose.msra.mxu0 %v5795
    %5892 = vmatprep.subr.mxu0 0.0
    %5893 = vmatpush1.xpose.msra.mxu0 %v5792
    %5894 = vmatprep.subr.mxu0 0.0
    %5895 = vmatpush1.xpose.msra.mxu0 %v5789
    %5896 = vmatprep.subr.mxu0 0.0
    %5897 = vmatpush1.xpose.msra.mxu0 %v5786
    %5898 = vmatprep.subr.mxu0 0.0
    %5899 = vmatpush1.xpose.msra.mxu0 %v5783
    %5900 = vmatprep.subr.mxu0 0.0
    %5901 = vmatpush1.xpose.msra.mxu0 %v5780
    %5902 = vmatprep.subr.mxu0 0.0
    %5903 = vmatpush1.xpose.msra.mxu0 %v5777
    %5904 = vmatprep.subr.mxu0 0.0
    %5905 = vmatpush2.xpose.msra.mxu0 %v5870
    %5906 = vmatprep.subr.mxu0 0.0
    %5907 = vmatpush2.xpose.msra.mxu0 %v5867
    %5908 = vmatprep.subr.mxu0 0.0
    %5909 = vmatpush2.xpose.msra.mxu0 %v5864
    %5910 = vmatprep.subr.mxu0 0.0
    %5911 = vmatpush2.xpose.msra.mxu0 %v5861
    %5912 = vmatprep.subr.mxu0 0.0
    %5913 = vmatpush2.xpose.msra.mxu0 %v5858
    %5914 = vmatprep.subr.mxu0 0.0
    %5915 = vmatpush2.xpose.msra.mxu0 %v5855
    %5916 = vmatprep.subr.mxu0 0.0
    %5917 = vmatpush2.xpose.msra.mxu0 %v5852
    %5918 = vmatprep.subr.mxu0 0.0
    %5919 = vmatpush2.xpose.msra.mxu0 %v5849
    %5920 = vmatprep.subr.mxu0 0.0
    %5921 = vmatpush2.xpose.msra.mxu0 %v5846
    %5922 = vmatprep.subr.mxu0 0.0
    %5923 = vmatpush2.xpose.msra.mxu0 %v5843
    %5924 = vmatprep.subr.mxu0 0.0
    %5925 = vmatpush2.xpose.msra.mxu0 %v5840
    %5926 = vmatprep.subr.mxu0 0.0
    %5927 = vmatpush2.xpose.msra.mxu0 %v5837
    %5928 = vmatprep.subr.mxu0 0.0
    %5929 = vmatpush2.xpose.msra.mxu0 %v5834
    %5930 = vmatprep.subr.mxu0 0.0
    %5931 = vmatpush2.xpose.msra.mxu0 %v5831
    %5932 = vmatprep.subr.mxu0 0.0
    %5933 = vmatpush2.xpose.msra.mxu0 %v5828
    %5934 = vmatprep.subr.mxu0 0.0
    %5935 = vmatpush2.xpose.msra.mxu0 %v5825
    %5936 = vmatprep.mubr.f32.mxu0 0.0
    %5937 = vmatmul.mubr.f32.gmra.mxu0 %v5753
    %v5938 = vpop.f32.mrf.mxu0
    %v5939 = vadd.f32 0.0, %v5938
    %v5940 = vpop.f32.mrf.mxu0
    %v5941 = vadd.f32 0.0, %v5940
    %5942 = vmatprep.mubr.f32.mxu0 0.0
    %5943 = vmatmul.mubr.f32.gmra.mxu0 %v5756
    %v5944 = vpop.f32.mrf.mxu0
    %v5945 = vadd.f32 0.0, %v5944
    %v5946 = vpop.f32.mrf.mxu0
    %v5947 = vadd.f32 0.0, %v5946
    %5948 = vmatprep.mubr.f32.mxu0 0.0
    %5949 = vmatmul.mubr.f32.gmra.mxu0 %v5759
    %v5950 = vpop.f32.mrf.mxu0
    %v5951 = vadd.f32 0.0, %v5950
    %v5952 = vpop.f32.mrf.mxu0
    %v5953 = vadd.f32 0.0, %v5952
    %5954 = vmatprep.mubr.f32.mxu0 0.0
    %5955 = vmatmul.mubr.f32.gmra.mxu0 %v5762
    %v5956 = vpop.f32.mrf.mxu0
    %v5957 = vadd.f32 0.0, %v5956
    %v5958 = vpop.f32.mrf.mxu0
    %v5959 = vadd.f32 0.0, %v5958
    %5960 = vmatprep.mubr.f32.mxu0 0.0
    %5961 = vmatmul.mubr.f32.gmra.mxu0 %v5765
    %v5962 = vpop.f32.mrf.mxu0
    %v5963 = vadd.f32 0.0, %v5962
    %v5964 = vpop.f32.mrf.mxu0
    %v5965 = vadd.f32 0.0, %v5964
    %5966 = vmatprep.mubr.f32.mxu0 0.0
    %5967 = vmatmul.mubr.f32.gmra.mxu0 %v5768
    %v5968 = vpop.f32.mrf.mxu0
    %v5969 = vadd.f32 0.0, %v5968
    %v5970 = vpop.f32.mrf.mxu0
    %v5971 = vadd.f32 0.0, %v5970
    %5972 = vmatprep.mubr.f32.mxu0 0.0
    %5973 = vmatmul.mubr.f32.gmra.mxu0 %v5771
    %v5974 = vpop.f32.mrf.mxu0
    %v5975 = vadd.f32 0.0, %v5974
    %v5976 = vpop.f32.mrf.mxu0
    %v5977 = vadd.f32 0.0, %v5976
    %5978 = vmatprep.mubr.f32.mxu0 0.0
    %5979 = vmatmul.mubr.f32.gmra.mxu0 %v5774
    %v5980 = vpop.f32.mrf.mxu0
    %v5981 = vadd.f32 0.0, %v5980
    %v5982 = vpop.f32.mrf.mxu0
    %v5983 = vadd.f32 0.0, %v5982
    %5984 = vdwg.mxu0
    %v5985 = vmul.f32 %v5939, 0.25
    %v5986 = vmul.f32 %v5941, 0.25
    %v5987 = vmul.f32 %v5945, 0.25
    %v5988 = vmul.f32 %v5947, 0.25
    %v5989 = vmul.f32 %v5951, 0.25
    %v5990 = vmul.f32 %v5953, 0.25
    %v5991 = vmul.f32 %v5957, 0.25
    %v5992 = vmul.f32 %v5959, 0.25
    %v5993 = vmul.f32 %v5963, 0.25
    %v5994 = vmul.f32 %v5965, 0.25
    %v5995 = vmul.f32 %v5969, 0.25
    %v5996 = vmul.f32 %v5971, 0.25
    %v5997 = vmul.f32 %v5975, 0.25
    %v5998 = vmul.f32 %v5977, 0.25
    %v5999 = vmul.f32 %v5981, 0.25
    %v6000 = vmul.f32 %v5983, 0.25
    %v6001 = vadd.f32 %v5985, %v3036
    %v6002 = vadd.f32 %v5986, %v3037
    %v6003 = vadd.f32 %v5987, %v3038
    %v6004 = vadd.f32 %v5988, %v3039
    %v6005 = vadd.f32 %v5989, %v3040
    %v6006 = vadd.f32 %v5990, %v3041
    %v6007 = vadd.f32 %v5991, %v3042
    %v6008 = vadd.f32 %v5992, %v3043
    %v6009 = vadd.f32 %v5993, %v3044
    %v6010 = vadd.f32 %v5994, %v3045
    %v6011 = vadd.f32 %v5995, %v3046
    %v6012 = vadd.f32 %v5996, %v3047
    %v6013 = vadd.f32 %v5997, %v3048
    %v6014 = vadd.f32 %v5998, %v3049
    %v6015 = vadd.f32 %v5999, %v3050
    %v6016 = vadd.f32 %v6000, %v3051
    %v6017 = vmax.f32 %v6001, %v6002
    %6018 = vmax.xlane.f32.xlu0 %v6017
    %v6019 = vpop.xlane.xlu0 %6018
    %v6020 = vmax.f32 %v6003, %v6004
    %6021 = vmax.xlane.f32.xlu0 %v6020
    %v6022 = vpop.xlane.xlu0 %6021
    %v6023 = vmax.f32 %v6005, %v6006
    %6024 = vmax.xlane.f32.xlu0 %v6023
    %v6025 = vpop.xlane.xlu0 %6024
    %v6026 = vmax.f32 %v6007, %v6008
    %6027 = vmax.xlane.f32.xlu0 %v6026
    %v6028 = vpop.xlane.xlu0 %6027
    %v6029 = vmax.f32 %v6009, %v6010
    %6030 = vmax.xlane.f32.xlu0 %v6029
    %v6031 = vpop.xlane.xlu0 %6030
    %v6032 = vmax.f32 %v6011, %v6012
    %6033 = vmax.xlane.f32.xlu0 %v6032
    %v6034 = vpop.xlane.xlu0 %6033
    %v6035 = vmax.f32 %v6013, %v6014
    %6036 = vmax.xlane.f32.xlu0 %v6035
    %v6037 = vpop.xlane.xlu0 %6036
    %v6038 = vmax.f32 %v6015, %v6016
    %6039 = vmax.xlane.f32.xlu0 %v6038
    %v6040 = vpop.xlane.xlu0 %6039
    %v6041 = vsub.f32 %v6001, %v6019
    %v6042 = vsub.f32 %v6002, %v6019
    %v6043 = vsub.f32 %v6003, %v6022
    %v6044 = vsub.f32 %v6004, %v6022
    %v6045 = vsub.f32 %v6005, %v6025
    %v6046 = vsub.f32 %v6006, %v6025
    %v6047 = vsub.f32 %v6007, %v6028
    %v6048 = vsub.f32 %v6008, %v6028
    %v6049 = vsub.f32 %v6009, %v6031
    %v6050 = vsub.f32 %v6010, %v6031
    %v6051 = vsub.f32 %v6011, %v6034
    %v6052 = vsub.f32 %v6012, %v6034
    %v6053 = vsub.f32 %v6013, %v6037
    %v6054 = vsub.f32 %v6014, %v6037
    %v6055 = vsub.f32 %v6015, %v6040
    %v6056 = vsub.f32 %v6016, %v6040
    %v6057 = vmul.f32 %v6041, 1.442695
    %v6058 = vpow.pop %v6057
    %v6059 = vmul.f32 %v6042, 1.442695
    %v6060 = vpow.pop %v6059
    %v6061 = vmul.f32 %v6043, 1.442695
    %v6062 = vpow.pop %v6061
    %v6063 = vmul.f32 %v6044, 1.442695
    %v6064 = vpow.pop %v6063
    %v6065 = vmul.f32 %v6045, 1.442695
    %v6066 = vpow.pop %v6065
    %v6067 = vmul.f32 %v6046, 1.442695
    %v6068 = vpow.pop %v6067
    %v6069 = vmul.f32 %v6047, 1.442695
    %v6070 = vpow.pop %v6069
    %v6071 = vmul.f32 %v6048, 1.442695
    %v6072 = vpow.pop %v6071
    %v6073 = vmul.f32 %v6049, 1.442695
    %v6074 = vpow.pop %v6073
    %v6075 = vmul.f32 %v6050, 1.442695
    %v6076 = vpow.pop %v6075
    %v6077 = vmul.f32 %v6051, 1.442695
    %v6078 = vpow.pop %v6077
    %v6079 = vmul.f32 %v6052, 1.442695
    %v6080 = vpow.pop %v6079
    %v6081 = vmul.f32 %v6053, 1.442695
    %v6082 = vpow.pop %v6081
    %v6083 = vmul.f32 %v6054, 1.442695
    %v6084 = vpow.pop %v6083
    %v6085 = vmul.f32 %v6055, 1.442695
    %v6086 = vpow.pop %v6085
    %v6087 = vmul.f32 %v6056, 1.442695
    %v6088 = vpow.pop %v6087
    %6089 = vmatprep.subr.mxu0 0.0
    %6090 = vmatpush1.msra.mxu0 %v5735
    %6091 = vmatprep.subr.mxu0 0.0
    %6092 = vmatpush1.msra.mxu0 %v5734
    %6093 = vmatprep.subr.mxu0 0.0
    %6094 = vmatpush1.msra.mxu0 %v5733
    %6095 = vmatprep.subr.mxu0 0.0
    %6096 = vmatpush1.msra.mxu0 %v5732
    %6097 = vmatprep.subr.mxu0 0.0
    %6098 = vmatpush1.msra.mxu0 %v5731
    %6099 = vmatprep.subr.mxu0 0.0
    %6100 = vmatpush1.msra.mxu0 %v5730
    %6101 = vmatprep.subr.mxu0 0.0
    %6102 = vmatpush1.msra.mxu0 %v5729
    %6103 = vmatprep.subr.mxu0 0.0
    %6104 = vmatpush1.msra.mxu0 %v5728
    %6105 = vmatprep.subr.mxu0 0.0
    %6106 = vmatpush1.msra.mxu0 %v5727
    %6107 = vmatprep.subr.mxu0 0.0
    %6108 = vmatpush1.msra.mxu0 %v5726
    %6109 = vmatprep.subr.mxu0 0.0
    %6110 = vmatpush1.msra.mxu0 %v5725
    %6111 = vmatprep.subr.mxu0 0.0
    %6112 = vmatpush1.msra.mxu0 %v5724
    %6113 = vmatprep.subr.mxu0 0.0
    %6114 = vmatpush1.msra.mxu0 %v5723
    %6115 = vmatprep.subr.mxu0 0.0
    %6116 = vmatpush1.msra.mxu0 %v5722
    %6117 = vmatprep.subr.mxu0 0.0
    %6118 = vmatpush1.msra.mxu0 %v5721
    %6119 = vmatprep.subr.mxu0 0.0
    %6120 = vmatpush1.msra.mxu0 %v5720
    %6121 = vmatprep.subr.mxu0 0.0
    %6122 = vmatpush2.msra.mxu0 %v5751
    %6123 = vmatprep.subr.mxu0 0.0
    %6124 = vmatpush2.msra.mxu0 %v5750
    %6125 = vmatprep.subr.mxu0 0.0
    %6126 = vmatpush2.msra.mxu0 %v5749
    %6127 = vmatprep.subr.mxu0 0.0
    %6128 = vmatpush2.msra.mxu0 %v5748
    %6129 = vmatprep.subr.mxu0 0.0
    %6130 = vmatpush2.msra.mxu0 %v5747
    %6131 = vmatprep.subr.mxu0 0.0
    %6132 = vmatpush2.msra.mxu0 %v5746
    %6133 = vmatprep.subr.mxu0 0.0
    %6134 = vmatpush2.msra.mxu0 %v5745
    %6135 = vmatprep.subr.mxu0 0.0
    %6136 = vmatpush2.msra.mxu0 %v5744
    %6137 = vmatprep.subr.mxu0 0.0
    %6138 = vmatpush2.msra.mxu0 %v5743
    %6139 = vmatprep.subr.mxu0 0.0
    %6140 = vmatpush2.msra.mxu0 %v5742
    %6141 = vmatprep.subr.mxu0 0.0
    %6142 = vmatpush2.msra.mxu0 %v5741
    %6143 = vmatprep.subr.mxu0 0.0
    %6144 = vmatpush2.msra.mxu0 %v5740
    %6145 = vmatprep.subr.mxu0 0.0
    %6146 = vmatpush2.msra.mxu0 %v5739
    %6147 = vmatprep.subr.mxu0 0.0
    %6148 = vmatpush2.msra.mxu0 %v5738
    %6149 = vmatprep.subr.mxu0 0.0
    %6150 = vmatpush2.msra.mxu0 %v5737
    %6151 = vmatprep.subr.mxu0 0.0
    %6152 = vmatpush2.msra.mxu0 %v5736
    %6153 = vmatprep.mubr.f32.mxu0 %v6060
    %6154 = vmatmul.mubr.f32.gmra.mxu0 %v6058
    %v6155 = vpop.f32.mrf.mxu0
    %v6156 = vadd.f32 0.0, %v6155
    %v6157 = vpop.f32.mrf.mxu0
    %6158 = vmatprep.mubr.f32.mxu0 %v6064
    %6159 = vmatmul.mubr.f32.gmra.mxu0 %v6062
    %v6160 = vpop.f32.mrf.mxu0
    %v6161 = vadd.f32 0.0, %v6160
    %v6162 = vpop.f32.mrf.mxu0
    %6163 = vmatprep.mubr.f32.mxu0 %v6068
    %6164 = vmatmul.mubr.f32.gmra.mxu0 %v6066
    %v6165 = vpop.f32.mrf.mxu0
    %v6166 = vadd.f32 0.0, %v6165
    %v6167 = vpop.f32.mrf.mxu0
    %6168 = vmatprep.mubr.f32.mxu0 %v6072
    %6169 = vmatmul.mubr.f32.gmra.mxu0 %v6070
    %v6170 = vpop.f32.mrf.mxu0
    %v6171 = vadd.f32 0.0, %v6170
    %v6172 = vpop.f32.mrf.mxu0
    %6173 = vmatprep.mubr.f32.mxu0 %v6076
    %6174 = vmatmul.mubr.f32.gmra.mxu0 %v6074
    %v6175 = vpop.f32.mrf.mxu0
    %v6176 = vadd.f32 0.0, %v6175
    %v6177 = vpop.f32.mrf.mxu0
    %6178 = vmatprep.mubr.f32.mxu0 %v6080
    %6179 = vmatmul.mubr.f32.gmra.mxu0 %v6078
    %v6180 = vpop.f32.mrf.mxu0
    %v6181 = vadd.f32 0.0, %v6180
    %v6182 = vpop.f32.mrf.mxu0
    %6183 = vmatprep.mubr.f32.mxu0 %v6084
    %6184 = vmatmul.mubr.f32.gmra.mxu0 %v6082
    %v6185 = vpop.f32.mrf.mxu0
    %v6186 = vadd.f32 0.0, %v6185
    %v6187 = vpop.f32.mrf.mxu0
    %6188 = vmatprep.mubr.f32.mxu0 %v6088
    %6189 = vmatmul.mubr.f32.gmra.mxu0 %v6086
    %v6190 = vpop.f32.mrf.mxu0
    %v6191 = vadd.f32 0.0, %v6190
    %v6192 = vpop.f32.mrf.mxu0
    %6193 = vdwg.mxu0
    %6194 = vmatprep.subr.mxu0 0.0
    %6195 = vmatpush1.msra.mxu0 %v3067
    %6196 = vmatprep.subr.mxu0 0.0
    %6197 = vmatpush1.msra.mxu0 %v3066
    %6198 = vmatprep.subr.mxu0 0.0
    %6199 = vmatpush1.msra.mxu0 %v3065
    %6200 = vmatprep.subr.mxu0 0.0
    %6201 = vmatpush1.msra.mxu0 %v3064
    %6202 = vmatprep.subr.mxu0 0.0
    %6203 = vmatpush1.msra.mxu0 %v3063
    %6204 = vmatprep.subr.mxu0 0.0
    %6205 = vmatpush1.msra.mxu0 %v3062
    %6206 = vmatprep.subr.mxu0 0.0
    %6207 = vmatpush1.msra.mxu0 %v3061
    %6208 = vmatprep.subr.mxu0 0.0
    %6209 = vmatpush1.msra.mxu0 %v3060
    %6210 = vmatprep.subr.mxu0 0.0
    %6211 = vmatpush1.msra.mxu0 %v3059
    %6212 = vmatprep.subr.mxu0 0.0
    %6213 = vmatpush1.msra.mxu0 %v3058
    %6214 = vmatprep.subr.mxu0 0.0
    %6215 = vmatpush1.msra.mxu0 %v3057
    %6216 = vmatprep.subr.mxu0 0.0
    %6217 = vmatpush1.msra.mxu0 %v3056
    %6218 = vmatprep.subr.mxu0 0.0
    %6219 = vmatpush1.msra.mxu0 %v3055
    %6220 = vmatprep.subr.mxu0 0.0
    %6221 = vmatpush1.msra.mxu0 %v3054
    %6222 = vmatprep.subr.mxu0 0.0
    %6223 = vmatpush1.msra.mxu0 %v3053
    %6224 = vmatprep.subr.mxu0 0.0
    %6225 = vmatpush1.msra.mxu0 %v3052
    %6226 = vmatprep.subr.mxu0 0.0
    %6227 = vmatpush2.msra.mxu0 %v3083
    %6228 = vmatprep.subr.mxu0 0.0
    %6229 = vmatpush2.msra.mxu0 %v3082
    %6230 = vmatprep.subr.mxu0 0.0
    %6231 = vmatpush2.msra.mxu0 %v3081
    %6232 = vmatprep.subr.mxu0 0.0
    %6233 = vmatpush2.msra.mxu0 %v3080
    %6234 = vmatprep.subr.mxu0 0.0
    %6235 = vmatpush2.msra.mxu0 %v3079
    %6236 = vmatprep.subr.mxu0 0.0
    %6237 = vmatpush2.msra.mxu0 %v3078
    %6238 = vmatprep.subr.mxu0 0.0
    %6239 = vmatpush2.msra.mxu0 %v3077
    %6240 = vmatprep.subr.mxu0 0.0
    %6241 = vmatpush2.msra.mxu0 %v3076
    %6242 = vmatprep.subr.mxu0 0.0
    %6243 = vmatpush2.msra.mxu0 %v3075
    %6244 = vmatprep.subr.mxu0 0.0
    %6245 = vmatpush2.msra.mxu0 %v3074
    %6246 = vmatprep.subr.mxu0 0.0
    %6247 = vmatpush2.msra.mxu0 %v3073
    %6248 = vmatprep.subr.mxu0 0.0
    %6249 = vmatpush2.msra.mxu0 %v3072
    %6250 = vmatprep.subr.mxu0 0.0
    %6251 = vmatpush2.msra.mxu0 %v3071
    %6252 = vmatprep.subr.mxu0 0.0
    %6253 = vmatpush2.msra.mxu0 %v3070
    %6254 = vmatprep.subr.mxu0 0.0
    %6255 = vmatpush2.msra.mxu0 %v3069
    %6256 = vmatprep.subr.mxu0 0.0
    %6257 = vmatpush2.msra.mxu0 %v3068
    %6258 = vmatprep.mubr.f32.mxu0 %v6060
    %6259 = vmatmul.mubr.f32.gmra.mxu0 %v6058
    %v6260 = vpop.f32.mrf.mxu0
    %v6261 = vadd.f32 0.0, %v6260
    %v6262 = vpop.f32.mrf.mxu0
    %6263 = vmatprep.mubr.f32.mxu0 %v6064
    %6264 = vmatmul.mubr.f32.gmra.mxu0 %v6062
    %v6265 = vpop.f32.mrf.mxu0
    %v6266 = vadd.f32 0.0, %v6265
    %v6267 = vpop.f32.mrf.mxu0
    %6268 = vmatprep.mubr.f32.mxu0 %v6068
    %6269 = vmatmul.mubr.f32.gmra.mxu0 %v6066
    %v6270 = vpop.f32.mrf.mxu0
    %v6271 = vadd.f32 0.0, %v6270
    %v6272 = vpop.f32.mrf.mxu0
    %6273 = vmatprep.mubr.f32.mxu0 %v6072
    %6274 = vmatmul.mubr.f32.gmra.mxu0 %v6070
    %v6275 = vpop.f32.mrf.mxu0
    %v6276 = vadd.f32 0.0, %v6275
    %v6277 = vpop.f32.mrf.mxu0
    %6278 = vmatprep.mubr.f32.mxu0 %v6076
    %6279 = vmatmul.mubr.f32.gmra.mxu0 %v6074
    %v6280 = vpop.f32.mrf.mxu0
    %v6281 = vadd.f32 0.0, %v6280
    %v6282 = vpop.f32.mrf.mxu0
    %6283 = vmatprep.mubr.f32.mxu0 %v6080
    %6284 = vmatmul.mubr.f32.gmra.mxu0 %v6078
    %v6285 = vpop.f32.mrf.mxu0
    %v6286 = vadd.f32 0.0, %v6285
    %v6287 = vpop.f32.mrf.mxu0
    %6288 = vmatprep.mubr.f32.mxu0 %v6084
    %6289 = vmatmul.mubr.f32.gmra.mxu0 %v6082
    %v6290 = vpop.f32.mrf.mxu0
    %v6291 = vadd.f32 0.0, %v6290
    %v6292 = vpop.f32.mrf.mxu0
    %6293 = vmatprep.mubr.f32.mxu0 %v6088
    %6294 = vmatmul.mubr.f32.gmra.mxu0 %v6086
    %v6295 = vpop.f32.mrf.mxu0
    %v6296 = vadd.f32 0.0, %v6295
    %v6297 = vpop.f32.mrf.mxu0
    %6298 = vdwg.mxu0
    %v6299 = vrcp.pop %v6261
    %v6300 = vrcp.pop %v6266
    %v6301 = vrcp.pop %v6271
    %v6302 = vrcp.pop %v6276
    %v6303 = vrcp.pop %v6281
    %v6304 = vrcp.pop %v6286
    %v6305 = vrcp.pop %v6291
    %v6306 = vrcp.pop %v6296
    %v6307 = vmul.f32 %v6156, %v6299
    %v6308 = vmul.f32 %v6161, %v6300
    %v6309 = vmul.f32 %v6166, %v6301
    %v6310 = vmul.f32 %v6171, %v6302
    %v6311 = vmul.f32 %v6176, %v6303
    %v6312 = vmul.f32 %v6181, %v6304
    %v6313 = vmul.f32 %v6186, %v6305
    %v6314 = vmul.f32 %v6191, %v6306
    %s6315 = scalar_lea.vmem %s27, 32
    %v6316 = vld [vmem:[%s6315] sm:$0xf]
    %v6317 = vld [vmem:[%s6315 + $0x4] sm:$0xf]
    %v6318 = vld [vmem:[%s6315 + $0x8] sm:$0xf]
    %v6319 = vld [vmem:[%s6315 + $0xc] sm:$0xf]
    %v6320 = vld [vmem:[%s6315 + $0x10] sm:$0xf]
    %v6321 = vld [vmem:[%s6315 + $0x14] sm:$0xf]
    %v6322 = vld [vmem:[%s6315 + $0x18] sm:$0xf]
    %v6323 = vld [vmem:[%s6315 + $0x1c] sm:$0xf]
    %v6324 = vpack.c.bf16 %v6308, %v6307
    %v6325 = vpack.c.bf16 %v6310, %v6309
    %v6326 = vpack.c.bf16 %v6312, %v6311
    %v6327 = vpack.c.bf16 %v6314, %v6313
    %s6328 = scalar_lea.vmem %s29, 1
    %v6329 = vld [vmem:[%s6328] sm:$0x1]
    %v6331 = vlaneseq
    %v6332 = vshrl.u32 %v6331, 7
    %v6333 = vsub.s32 0, %v6332
    %v6334 = vrot.slane %v6329, %v6333
    %v6344 = vunpack.c.l.b16 %v6316
    %v6345 = vunpack.c.l.b16 %v6317
    %v6346 = vunpack.c.l.b16 %v6318
    %v6347 = vunpack.c.l.b16 %v6319
    %v6348 = vunpack.c.l.b16 %v6320
    %v6349 = vunpack.c.l.b16 %v6321
    %v6350 = vunpack.c.l.b16 %v6322
    %v6351 = vunpack.c.l.b16 %v6323
    %v6352 = vpack.c.b16 %v6345, %v6344
    %v6353 = vpack.c.b16 %v6347, %v6346
    %v6354 = vpack.c.b16 %v6349, %v6348
    %v6355 = vpack.c.b16 %v6351, %v6350
    %v6361 = vsel %vm3086, %v6324, 0
    %v6364 = vsel %vm3086, %v6325, 0
    %v6367 = vsel %vm3086, %v6326, 0
    %v6370 = vsel %vm3086, %v6327, 0
    %6372 = vmatprep.subr.bf16.mxu0 0
    %6373 = vmatpush1.bf16.msra.mxu0 0
    %6374 = vmatprep.subr.bf16.mxu0 0
    %6375 = vmatpush1.bf16.msra.mxu0 0
    %6376 = vmatprep.subr.bf16.mxu0 0
    %6377 = vmatpush1.bf16.msra.mxu0 0
    %6378 = vmatprep.subr.bf16.mxu0 0
    %6379 = vmatpush1.bf16.msra.mxu0 0
    %6380 = vmatprep.subr.bf16.mxu0 0
    %6381 = vmatpush1.bf16.msra.mxu0 %v6355
    %6382 = vmatprep.subr.bf16.mxu0 0
    %6383 = vmatpush1.bf16.msra.mxu0 %v6354
    %6384 = vmatprep.subr.bf16.mxu0 0
    %6385 = vmatpush1.bf16.msra.mxu0 %v6353
    %6386 = vmatprep.subr.bf16.mxu0 0
    %6387 = vmatpush1.bf16.msra.mxu0 %v6352
    %6388 = vmatprep.subr.bf16.mxu0 0
    %6389 = vmatpush2.bf16.msra.mxu0 0
    %6390 = vmatprep.subr.bf16.mxu0 0
    %6391 = vmatpush2.bf16.msra.mxu0 0
    %6392 = vmatprep.subr.bf16.mxu0 0
    %6393 = vmatpush2.bf16.msra.mxu0 0
    %6394 = vmatprep.subr.bf16.mxu0 0
    %6395 = vmatpush2.bf16.msra.mxu0 0
    %6396 = vmatprep.subr.bf16.mxu0 0
    %6397 = vmatpush2.bf16.msra.mxu0 0
    %6398 = vmatprep.subr.bf16.mxu0 0
    %6399 = vmatpush2.bf16.msra.mxu0 0
    %6400 = vmatprep.subr.bf16.mxu0 0
    %6401 = vmatpush2.bf16.msra.mxu0 0
    %6402 = vmatprep.subr.bf16.mxu0 0
    %6403 = vmatpush2.bf16.msra.mxu0 0
    %6404 = vmatprep.mubr.bf16.mxu0 0
    %6405 = vmatmul.mubr.bf16.gmra.mxu0 %v6361
    %v6406 = vpop.f32.mrf.mxu0
    %v6407 = vadd.f32 %v6334, %v6406
    %v6408 = vpop.f32.mrf.mxu0
    %v6409 = vpop.f32.mrf.mxu0
    %v6410 = vadd.f32 %v6334, %v6409
    %v6411 = vpop.f32.mrf.mxu0
    %6412 = vmatprep.mubr.bf16.mxu0 0
    %6413 = vmatmul.mubr.bf16.gmra.mxu0 %v6364
    %v6414 = vpop.f32.mrf.mxu0
    %v6415 = vadd.f32 %v6334, %v6414
    %v6416 = vpop.f32.mrf.mxu0
    %v6417 = vpop.f32.mrf.mxu0
    %v6418 = vadd.f32 %v6334, %v6417
    %v6419 = vpop.f32.mrf.mxu0
    %6420 = vmatprep.mubr.bf16.mxu0 0
    %6421 = vmatmul.mubr.bf16.gmra.mxu0 %v6367
    %v6422 = vpop.f32.mrf.mxu0
    %v6423 = vadd.f32 %v6334, %v6422
    %v6424 = vpop.f32.mrf.mxu0
    %v6425 = vpop.f32.mrf.mxu0
    %v6426 = vadd.f32 %v6334, %v6425
    %v6427 = vpop.f32.mrf.mxu0
    %6428 = vmatprep.mubr.bf16.mxu0 0
    %6429 = vmatmul.mubr.bf16.gmra.mxu0 %v6370
    %v6430 = vpop.f32.mrf.mxu0
    %v6431 = vadd.f32 %v6334, %v6430
    %v6432 = vpop.f32.mrf.mxu0
    %v6433 = vpop.f32.mrf.mxu0
    %v6434 = vadd.f32 %v6334, %v6433
    %v6435 = vpop.f32.mrf.mxu0
    %6436 = vdwg.mxu0
    %v6437 = vadd.f32 %v5210, %v6407
    %v6438 = vadd.f32 %v5211, %v6410
    %v6439 = vadd.f32 %v5212, %v6415
    %v6440 = vadd.f32 %v5213, %v6418
    %v6441 = vadd.f32 %v5214, %v6423
    %v6442 = vadd.f32 %v5215, %v6426
    %v6443 = vadd.f32 %v5216, %v6431
    %v6444 = vadd.f32 %v5217, %v6434
    %s6445 = scalar_lea.vmem %s31, 1
    %v6446 = vld [vmem:[%s6445] sm:$0x1]
    %s6447 = scalar_lea.vmem %s33, 1
    %v6448 = vld [vmem:[%s6447] sm:$0x1]
    %v6449 = vsel %vm3086, %v6437, 0.0
    %6450 = vadd.xlane.f32.xlu0 %v6449
    %v6451 = vpop.xlane.xlu0 %6450
    %v6452 = vsel %vm3086, %v6438, 0.0
    %6453 = vadd.xlane.f32.xlu0 %v6452
    %v6454 = vpop.xlane.xlu0 %6453
    %v6455 = vsel %vm3086, %v6439, 0.0
    %6456 = vadd.xlane.f32.xlu0 %v6455
    %v6457 = vpop.xlane.xlu0 %6456
    %v6458 = vsel %vm3086, %v6440, 0.0
    %6459 = vadd.xlane.f32.xlu0 %v6458
    %v6460 = vpop.xlane.xlu0 %6459
    %v6461 = vsel %vm3086, %v6441, 0.0
    %6462 = vadd.xlane.f32.xlu0 %v6461
    %v6463 = vpop.xlane.xlu0 %6462
    %v6464 = vsel %vm3086, %v6442, 0.0
    %6465 = vadd.xlane.f32.xlu0 %v6464
    %v6466 = vpop.xlane.xlu0 %6465
    %v6467 = vsel %vm3086, %v6443, 0.0
    %6468 = vadd.xlane.f32.xlu0 %v6467
    %v6469 = vpop.xlane.xlu0 %6468
    %v6470 = vsel %vm3086, %v6444, 0.0
    %6471 = vadd.xlane.f32.xlu0 %v6470
    %v6472 = vpop.xlane.xlu0 %6471
    %v6473 = vmul.f32 %v6451, %v3111
    %v6474 = vmul.f32 %v6454, %v3111
    %v6475 = vmul.f32 %v6457, %v3111
    %v6476 = vmul.f32 %v6460, %v3111
    %v6477 = vmul.f32 %v6463, %v3111
    %v6478 = vmul.f32 %v6466, %v3111
    %v6479 = vmul.f32 %v6469, %v3111
    %v6480 = vmul.f32 %v6472, %v3111
    %v6481 = vsub.f32 %v6437, %v6473
    %v6482 = vsub.f32 %v6438, %v6474
    %v6483 = vsub.f32 %v6439, %v6475
    %v6484 = vsub.f32 %v6440, %v6476
    %v6485 = vsub.f32 %v6441, %v6477
    %v6486 = vsub.f32 %v6442, %v6478
    %v6487 = vsub.f32 %v6443, %v6479
    %v6488 = vsub.f32 %v6444, %v6480
    %v6489 = vmul.f32 %v6481, %v6481
    %v6490 = vmul.f32 %v6482, %v6482
    %v6491 = vmul.f32 %v6483, %v6483
    %v6492 = vmul.f32 %v6484, %v6484
    %v6493 = vmul.f32 %v6485, %v6485
    %v6494 = vmul.f32 %v6486, %v6486
    %v6495 = vmul.f32 %v6487, %v6487
    %v6496 = vmul.f32 %v6488, %v6488
    %v6497 = vsel %vm3086, %v6489, 0.0
    %6498 = vadd.xlane.f32.xlu0 %v6497
    %v6499 = vpop.xlane.xlu0 %6498
    %v6500 = vsel %vm3086, %v6490, 0.0
    %6501 = vadd.xlane.f32.xlu0 %v6500
    %v6502 = vpop.xlane.xlu0 %6501
    %v6503 = vsel %vm3086, %v6491, 0.0
    %6504 = vadd.xlane.f32.xlu0 %v6503
    %v6505 = vpop.xlane.xlu0 %6504
    %v6506 = vsel %vm3086, %v6492, 0.0
    %6507 = vadd.xlane.f32.xlu0 %v6506
    %v6508 = vpop.xlane.xlu0 %6507
    %v6509 = vsel %vm3086, %v6493, 0.0
    %6510 = vadd.xlane.f32.xlu0 %v6509
    %v6511 = vpop.xlane.xlu0 %6510
    %v6512 = vsel %vm3086, %v6494, 0.0
    %6513 = vadd.xlane.f32.xlu0 %v6512
    %v6514 = vpop.xlane.xlu0 %6513
    %v6515 = vsel %vm3086, %v6495, 0.0
    %6516 = vadd.xlane.f32.xlu0 %v6515
    %v6517 = vpop.xlane.xlu0 %6516
    %v6518 = vsel %vm3086, %v6496, 0.0
    %6519 = vadd.xlane.f32.xlu0 %v6518
    %v6520 = vpop.xlane.xlu0 %6519
    %v6521 = vmul.f32 %v6499, %v3111
    %v6522 = vmul.f32 %v6502, %v3111
    %v6523 = vmul.f32 %v6505, %v3111
    %v6524 = vmul.f32 %v6508, %v3111
    %v6525 = vmul.f32 %v6511, %v3111
    %v6526 = vmul.f32 %v6514, %v3111
    %v6527 = vmul.f32 %v6517, %v3111
    %v6528 = vmul.f32 %v6520, %v3111
    %v6529 = vadd.f32 %v6521, 1e-06
    %v6530 = vadd.f32 %v6522, 1e-06
    %v6531 = vadd.f32 %v6523, 1e-06
    %v6532 = vadd.f32 %v6524, 1e-06
    %v6533 = vadd.f32 %v6525, 1e-06
    %v6534 = vadd.f32 %v6526, 1e-06
    %v6535 = vadd.f32 %v6527, 1e-06
    %v6536 = vadd.f32 %v6528, 1e-06
    %v6537 = vrsqrt.pop %v6529
    %v6538 = vrsqrt.pop %v6530
    %v6539 = vrsqrt.pop %v6531
    %v6540 = vrsqrt.pop %v6532
    %v6541 = vrsqrt.pop %v6533
    %v6542 = vrsqrt.pop %v6534
    %v6543 = vrsqrt.pop %v6535
    %v6544 = vrsqrt.pop %v6536
    %v6545 = vmul.f32 %v6481, %v6537
    %v6546 = vmul.f32 %v6482, %v6538
    %v6547 = vmul.f32 %v6483, %v6539
    %v6548 = vmul.f32 %v6484, %v6540
    %v6549 = vmul.f32 %v6485, %v6541
    %v6550 = vmul.f32 %v6486, %v6542
    %v6551 = vmul.f32 %v6487, %v6543
    %v6552 = vmul.f32 %v6488, %v6544
    %v6554 = vlaneseq
    %v6555 = vshrl.u32 %v6554, 7
    %v6556 = vsub.s32 0, %v6555
    %v6557 = vrot.slane %v6446, %v6556
    %v6559 = vmul.f32 %v6545, %v6557
    %v6560 = vmul.f32 %v6546, %v6557
    %v6561 = vmul.f32 %v6547, %v6557
    %v6562 = vmul.f32 %v6548, %v6557
    %v6563 = vmul.f32 %v6549, %v6557
    %v6564 = vmul.f32 %v6550, %v6557
    %v6565 = vmul.f32 %v6551, %v6557
    %v6566 = vmul.f32 %v6552, %v6557
    %v6568 = vlaneseq
    %v6569 = vshrl.u32 %v6568, 7
    %v6570 = vsub.s32 0, %v6569
    %v6571 = vrot.slane %v6448, %v6570
    %v6573 = vadd.f32 %v6559, %v6571
    %v6574 = vadd.f32 %v6560, %v6571
    %v6575 = vadd.f32 %v6561, %v6571
    %v6576 = vadd.f32 %v6562, %v6571
    %v6577 = vadd.f32 %v6563, %v6571
    %v6578 = vadd.f32 %v6564, %v6571
    %v6579 = vadd.f32 %v6565, %v6571
    %v6580 = vadd.f32 %v6566, %v6571
    %s6581 = scalar_lea.vmem %s35, 64
    %v6582 = vld [vmem:[%s6581] sm:$0xff]
    %v6583 = vld [vmem:[%s6581 + $0x8] sm:$0xff]
    %v6584 = vld [vmem:[%s6581 + $0x10] sm:$0xff]
    %v6585 = vld [vmem:[%s6581 + $0x18] sm:$0xff]
    %v6586 = vld [vmem:[%s6581 + $0x20] sm:$0xff]
    %v6587 = vld [vmem:[%s6581 + $0x28] sm:$0xff]
    %v6588 = vld [vmem:[%s6581 + $0x30] sm:$0xff]
    %v6589 = vld [vmem:[%s6581 + $0x38] sm:$0xff]
    %v6590 = vpack.c.bf16 %v6574, %v6573
    %v6591 = vpack.c.bf16 %v6576, %v6575
    %v6592 = vpack.c.bf16 %v6578, %v6577
    %v6593 = vpack.c.bf16 %v6580, %v6579
    %s6594 = scalar_lea.vmem %s37, 2
    %v6595 = vld [vmem:[%s6594] sm:$0x3]
    %v6597 = vlaneseq
    %v6598 = vshrl.u32 %v6597, 7
    %v6599 = vsub.s32 0, %v6598
    %v6600 = vrot.slane %v6595, %v6599
    %v6601 = vlaneseq
    %v6602 = vshrl.u32 %v6601, 7
    %v6603 = vsub.s32 1, %v6602
    %v6604 = vrot.slane %v6595, %v6603
    %v6615 = vunpack.c.l.b16 %v6582
    %v6616 = vunpack.c.h.b16 %v6582
    %v6617 = vunpack.c.l.b16 %v6583
    %v6618 = vunpack.c.h.b16 %v6583
    %v6619 = vunpack.c.l.b16 %v6584
    %v6620 = vunpack.c.h.b16 %v6584
    %v6621 = vunpack.c.l.b16 %v6585
    %v6622 = vunpack.c.h.b16 %v6585
    %v6623 = vunpack.c.l.b16 %v6586
    %v6624 = vunpack.c.h.b16 %v6586
    %v6625 = vunpack.c.l.b16 %v6587
    %v6626 = vunpack.c.h.b16 %v6587
    %v6627 = vunpack.c.l.b16 %v6588
    %v6628 = vunpack.c.h.b16 %v6588
    %v6629 = vunpack.c.l.b16 %v6589
    %v6630 = vunpack.c.h.b16 %v6589
    %v6631 = vpack.c.b16 %v6617, %v6615
    %v6632 = vpack.c.b16 %v6618, %v6616
    %v6633 = vpack.c.b16 %v6621, %v6619
    %v6634 = vpack.c.b16 %v6622, %v6620
    %v6635 = vpack.c.b16 %v6625, %v6623
    %v6636 = vpack.c.b16 %v6626, %v6624
    %v6637 = vpack.c.b16 %v6629, %v6627
    %v6638 = vpack.c.b16 %v6630, %v6628
    %v6648 = vsel %vm3086, %v6590, 0
    %v6651 = vsel %vm3086, %v6591, 0
    %v6654 = vsel %vm3086, %v6592, 0
    %v6657 = vsel %vm3086, %v6593, 0
    %6659 = vmatprep.subr.bf16.mxu0 0
    %6660 = vmatpush1.bf16.msra.mxu0 0
    %6661 = vmatprep.subr.bf16.mxu0 0
    %6662 = vmatpush1.bf16.msra.mxu0 0
    %6663 = vmatprep.subr.bf16.mxu0 0
    %6664 = vmatpush1.bf16.msra.mxu0 0
    %6665 = vmatprep.subr.bf16.mxu0 0
    %6666 = vmatpush1.bf16.msra.mxu0 0
    %6667 = vmatprep.subr.bf16.mxu0 %v6638
    %6668 = vmatpush1.bf16.msra.mxu0 %v6637
    %6669 = vmatprep.subr.bf16.mxu0 %v6636
    %6670 = vmatpush1.bf16.msra.mxu0 %v6635
    %6671 = vmatprep.subr.bf16.mxu0 %v6634
    %6672 = vmatpush1.bf16.msra.mxu0 %v6633
    %6673 = vmatprep.subr.bf16.mxu0 %v6632
    %6674 = vmatpush1.bf16.msra.mxu0 %v6631
    %6675 = vmatprep.subr.bf16.mxu0 0
    %6676 = vmatpush2.bf16.msra.mxu0 0
    %6677 = vmatprep.subr.bf16.mxu0 0
    %6678 = vmatpush2.bf16.msra.mxu0 0
    %6679 = vmatprep.subr.bf16.mxu0 0
    %6680 = vmatpush2.bf16.msra.mxu0 0
    %6681 = vmatprep.subr.bf16.mxu0 0
    %6682 = vmatpush2.bf16.msra.mxu0 0
    %6683 = vmatprep.subr.bf16.mxu0 0
    %6684 = vmatpush2.bf16.msra.mxu0 0
    %6685 = vmatprep.subr.bf16.mxu0 0
    %6686 = vmatpush2.bf16.msra.mxu0 0
    %6687 = vmatprep.subr.bf16.mxu0 0
    %6688 = vmatpush2.bf16.msra.mxu0 0
    %6689 = vmatprep.subr.bf16.mxu0 0
    %6690 = vmatpush2.bf16.msra.mxu0 0
    %6691 = vmatprep.mubr.bf16.mxu0 0
    %6692 = vmatmul.mubr.bf16.gmra.mxu0 %v6648
    %v6693 = vpop.f32.mrf.mxu0
    %v6694 = vadd.f32 %v6600, %v6693
    %v6695 = vpop.f32.mrf.mxu0
    %v6696 = vadd.f32 %v6604, %v6695
    %v6697 = vpop.f32.mrf.mxu0
    %v6698 = vadd.f32 %v6600, %v6697
    %v6699 = vpop.f32.mrf.mxu0
    %v6700 = vadd.f32 %v6604, %v6699
    %6701 = vmatprep.mubr.bf16.mxu0 0
    %6702 = vmatmul.mubr.bf16.gmra.mxu0 %v6651
    %v6703 = vpop.f32.mrf.mxu0
    %v6704 = vadd.f32 %v6600, %v6703
    %v6705 = vpop.f32.mrf.mxu0
    %v6706 = vadd.f32 %v6604, %v6705
    %v6707 = vpop.f32.mrf.mxu0
    %v6708 = vadd.f32 %v6600, %v6707
    %v6709 = vpop.f32.mrf.mxu0
    %v6710 = vadd.f32 %v6604, %v6709
    %6711 = vmatprep.mubr.bf16.mxu0 0
    %6712 = vmatmul.mubr.bf16.gmra.mxu0 %v6654
    %v6713 = vpop.f32.mrf.mxu0
    %v6714 = vadd.f32 %v6600, %v6713
    %v6715 = vpop.f32.mrf.mxu0
    %v6716 = vadd.f32 %v6604, %v6715
    %v6717 = vpop.f32.mrf.mxu0
    %v6718 = vadd.f32 %v6600, %v6717
    %v6719 = vpop.f32.mrf.mxu0
    %v6720 = vadd.f32 %v6604, %v6719
    %6721 = vmatprep.mubr.bf16.mxu0 0
    %6722 = vmatmul.mubr.bf16.gmra.mxu0 %v6657
    %v6723 = vpop.f32.mrf.mxu0
    %v6724 = vadd.f32 %v6600, %v6723
    %v6725 = vpop.f32.mrf.mxu0
    %v6726 = vadd.f32 %v6604, %v6725
    %v6727 = vpop.f32.mrf.mxu0
    %v6728 = vadd.f32 %v6600, %v6727
    %v6729 = vpop.f32.mrf.mxu0
    %v6730 = vadd.f32 %v6604, %v6729
    %6731 = vdwg.mxu0
    %v6732 = vmul.f32 %v6694, 0.5
    %v6733 = vmul.f32 %v6696, 0.5
    %v6734 = vmul.f32 %v6698, 0.5
    %v6735 = vmul.f32 %v6700, 0.5
    %v6736 = vmul.f32 %v6704, 0.5
    %v6737 = vmul.f32 %v6706, 0.5
    %v6738 = vmul.f32 %v6708, 0.5
    %v6739 = vmul.f32 %v6710, 0.5
    %v6740 = vmul.f32 %v6714, 0.5
    %v6741 = vmul.f32 %v6716, 0.5
    %v6742 = vmul.f32 %v6718, 0.5
    %v6743 = vmul.f32 %v6720, 0.5
    %v6744 = vmul.f32 %v6724, 0.5
    %v6745 = vmul.f32 %v6726, 0.5
    %v6746 = vmul.f32 %v6728, 0.5
    %v6747 = vmul.f32 %v6730, 0.5
    %v6748 = vmul.f32 %v6694, 0.70710677
    %v6749 = vmul.f32 %v6696, 0.70710677
    %v6750 = vmul.f32 %v6698, 0.70710677
    %v6751 = vmul.f32 %v6700, 0.70710677
    %v6752 = vmul.f32 %v6704, 0.70710677
    %v6753 = vmul.f32 %v6706, 0.70710677
    %v6754 = vmul.f32 %v6708, 0.70710677
    %v6755 = vmul.f32 %v6710, 0.70710677
    %v6756 = vmul.f32 %v6714, 0.70710677
    %v6757 = vmul.f32 %v6716, 0.70710677
    %v6758 = vmul.f32 %v6718, 0.70710677
    %v6759 = vmul.f32 %v6720, 0.70710677
    %v6760 = vmul.f32 %v6724, 0.70710677
    %v6761 = vmul.f32 %v6726, 0.70710677
    %v6762 = vmul.f32 %v6728, 0.70710677
    %v6763 = vmul.f32 %v6730, 0.70710677
    %v6764 = vand.u32 2147483647, %v6748
    %v6765 = vand.u32 2147483647, %v6749
    %v6766 = vand.u32 2147483647, %v6750
    %v6767 = vand.u32 2147483647, %v6751
    %v6768 = vand.u32 2147483647, %v6752
    %v6769 = vand.u32 2147483647, %v6753
    %v6770 = vand.u32 2147483647, %v6754
    %v6771 = vand.u32 2147483647, %v6755
    %v6772 = vand.u32 2147483647, %v6756
    %v6773 = vand.u32 2147483647, %v6757
    %v6774 = vand.u32 2147483647, %v6758
    %v6775 = vand.u32 2147483647, %v6759
    %v6776 = vand.u32 2147483647, %v6760
    %v6777 = vand.u32 2147483647, %v6761
    %v6778 = vand.u32 2147483647, %v6762
    %v6779 = vand.u32 2147483647, %v6763
    %v6780 = vmul.f32 %v6764, 0.3275911
    %v6781 = vmul.f32 %v6765, 0.3275911
    %v6782 = vmul.f32 %v6766, 0.3275911
    %v6783 = vmul.f32 %v6767, 0.3275911
    %v6784 = vmul.f32 %v6768, 0.3275911
    %v6785 = vmul.f32 %v6769, 0.3275911
    %v6786 = vmul.f32 %v6770, 0.3275911
    %v6787 = vmul.f32 %v6771, 0.3275911
    %v6788 = vmul.f32 %v6772, 0.3275911
    %v6789 = vmul.f32 %v6773, 0.3275911
    %v6790 = vmul.f32 %v6774, 0.3275911
    %v6791 = vmul.f32 %v6775, 0.3275911
    %v6792 = vmul.f32 %v6776, 0.3275911
    %v6793 = vmul.f32 %v6777, 0.3275911
    %v6794 = vmul.f32 %v6778, 0.3275911
    %v6795 = vmul.f32 %v6779, 0.3275911
    %v6796 = vadd.f32 %v6780, 1.0
    %v6797 = vadd.f32 %v6781, 1.0
    %v6798 = vadd.f32 %v6782, 1.0
    %v6799 = vadd.f32 %v6783, 1.0
    %v6800 = vadd.f32 %v6784, 1.0
    %v6801 = vadd.f32 %v6785, 1.0
    %v6802 = vadd.f32 %v6786, 1.0
    %v6803 = vadd.f32 %v6787, 1.0
    %v6804 = vadd.f32 %v6788, 1.0
    %v6805 = vadd.f32 %v6789, 1.0
    %v6806 = vadd.f32 %v6790, 1.0
    %v6807 = vadd.f32 %v6791, 1.0
    %v6808 = vadd.f32 %v6792, 1.0
    %v6809 = vadd.f32 %v6793, 1.0
    %v6810 = vadd.f32 %v6794, 1.0
    %v6811 = vadd.f32 %v6795, 1.0
    %v6812 = vrcp.pop %v6796
    %v6813 = vrcp.pop %v6797
    %v6814 = vrcp.pop %v6798
    %v6815 = vrcp.pop %v6799
    %v6816 = vrcp.pop %v6800
    %v6817 = vrcp.pop %v6801
    %v6818 = vrcp.pop %v6802
    %v6819 = vrcp.pop %v6803
    %v6820 = vrcp.pop %v6804
    %v6821 = vrcp.pop %v6805
    %v6822 = vrcp.pop %v6806
    %v6823 = vrcp.pop %v6807
    %v6824 = vrcp.pop %v6808
    %v6825 = vrcp.pop %v6809
    %v6826 = vrcp.pop %v6810
    %v6827 = vrcp.pop %v6811
    %v6828 = vmul.f32 %v6812, 1.0614054
    %v6829 = vmul.f32 %v6813, 1.0614054
    %v6830 = vmul.f32 %v6814, 1.0614054
    %v6831 = vmul.f32 %v6815, 1.0614054
    %v6832 = vmul.f32 %v6816, 1.0614054
    %v6833 = vmul.f32 %v6817, 1.0614054
    %v6834 = vmul.f32 %v6818, 1.0614054
    %v6835 = vmul.f32 %v6819, 1.0614054
    %v6836 = vmul.f32 %v6820, 1.0614054
    %v6837 = vmul.f32 %v6821, 1.0614054
    %v6838 = vmul.f32 %v6822, 1.0614054
    %v6839 = vmul.f32 %v6823, 1.0614054
    %v6840 = vmul.f32 %v6824, 1.0614054
    %v6841 = vmul.f32 %v6825, 1.0614054
    %v6842 = vmul.f32 %v6826, 1.0614054
    %v6843 = vmul.f32 %v6827, 1.0614054
    %v6844 = vadd.f32 %v6828, -1.4531521
    %v6845 = vadd.f32 %v6829, -1.4531521
    %v6846 = vadd.f32 %v6830, -1.4531521
    %v6847 = vadd.f32 %v6831, -1.4531521
    %v6848 = vadd.f32 %v6832, -1.4531521
    %v6849 = vadd.f32 %v6833, -1.4531521
    %v6850 = vadd.f32 %v6834, -1.4531521
    %v6851 = vadd.f32 %v6835, -1.4531521
    %v6852 = vadd.f32 %v6836, -1.4531521
    %v6853 = vadd.f32 %v6837, -1.4531521
    %v6854 = vadd.f32 %v6838, -1.4531521
    %v6855 = vadd.f32 %v6839, -1.4531521
    %v6856 = vadd.f32 %v6840, -1.4531521
    %v6857 = vadd.f32 %v6841, -1.4531521
    %v6858 = vadd.f32 %v6842, -1.4531521
    %v6859 = vadd.f32 %v6843, -1.4531521
    %v6860 = vmul.f32 %v6844, %v6812
    %v6861 = vmul.f32 %v6845, %v6813
    %v6862 = vmul.f32 %v6846, %v6814
    %v6863 = vmul.f32 %v6847, %v6815
    %v6864 = vmul.f32 %v6848, %v6816
    %v6865 = vmul.f32 %v6849, %v6817
    %v6866 = vmul.f32 %v6850, %v6818
    %v6867 = vmul.f32 %v6851, %v6819
    %v6868 = vmul.f32 %v6852, %v6820
    %v6869 = vmul.f32 %v6853, %v6821
    %v6870 = vmul.f32 %v6854, %v6822
    %v6871 = vmul.f32 %v6855, %v6823
    %v6872 = vmul.f32 %v6856, %v6824
    %v6873 = vmul.f32 %v6857, %v6825
    %v6874 = vmul.f32 %v6858, %v6826
    %v6875 = vmul.f32 %v6859, %v6827
    %v6876 = vadd.f32 %v6860, 1.4214138
    %v6877 = vadd.f32 %v6861, 1.4214138
    %v6878 = vadd.f32 %v6862, 1.4214138
    %v6879 = vadd.f32 %v6863, 1.4214138
    %v6880 = vadd.f32 %v6864, 1.4214138
    %v6881 = vadd.f32 %v6865, 1.4214138
    %v6882 = vadd.f32 %v6866, 1.4214138
    %v6883 = vadd.f32 %v6867, 1.4214138
    %v6884 = vadd.f32 %v6868, 1.4214138
    %v6885 = vadd.f32 %v6869, 1.4214138
    %v6886 = vadd.f32 %v6870, 1.4214138
    %v6887 = vadd.f32 %v6871, 1.4214138
    %v6888 = vadd.f32 %v6872, 1.4214138
    %v6889 = vadd.f32 %v6873, 1.4214138
    %v6890 = vadd.f32 %v6874, 1.4214138
    %v6891 = vadd.f32 %v6875, 1.4214138
    %v6892 = vmul.f32 %v6876, %v6812
    %v6893 = vmul.f32 %v6877, %v6813
    %v6894 = vmul.f32 %v6878, %v6814
    %v6895 = vmul.f32 %v6879, %v6815
    %v6896 = vmul.f32 %v6880, %v6816
    %v6897 = vmul.f32 %v6881, %v6817
    %v6898 = vmul.f32 %v6882, %v6818
    %v6899 = vmul.f32 %v6883, %v6819
    %v6900 = vmul.f32 %v6884, %v6820
    %v6901 = vmul.f32 %v6885, %v6821
    %v6902 = vmul.f32 %v6886, %v6822
    %v6903 = vmul.f32 %v6887, %v6823
    %v6904 = vmul.f32 %v6888, %v6824
    %v6905 = vmul.f32 %v6889, %v6825
    %v6906 = vmul.f32 %v6890, %v6826
    %v6907 = vmul.f32 %v6891, %v6827
    %v6908 = vadd.f32 %v6892, -0.28449672
    %v6909 = vadd.f32 %v6893, -0.28449672
    %v6910 = vadd.f32 %v6894, -0.28449672
    %v6911 = vadd.f32 %v6895, -0.28449672
    %v6912 = vadd.f32 %v6896, -0.28449672
    %v6913 = vadd.f32 %v6897, -0.28449672
    %v6914 = vadd.f32 %v6898, -0.28449672
    %v6915 = vadd.f32 %v6899, -0.28449672
    %v6916 = vadd.f32 %v6900, -0.28449672
    %v6917 = vadd.f32 %v6901, -0.28449672
    %v6918 = vadd.f32 %v6902, -0.28449672
    %v6919 = vadd.f32 %v6903, -0.28449672
    %v6920 = vadd.f32 %v6904, -0.28449672
    %v6921 = vadd.f32 %v6905, -0.28449672
    %v6922 = vadd.f32 %v6906, -0.28449672
    %v6923 = vadd.f32 %v6907, -0.28449672
    %v6924 = vmul.f32 %v6908, %v6812
    %v6925 = vmul.f32 %v6909, %v6813
    %v6926 = vmul.f32 %v6910, %v6814
    %v6927 = vmul.f32 %v6911, %v6815
    %v6928 = vmul.f32 %v6912, %v6816
    %v6929 = vmul.f32 %v6913, %v6817
    %v6930 = vmul.f32 %v6914, %v6818
    %v6931 = vmul.f32 %v6915, %v6819
    %v6932 = vmul.f32 %v6916, %v6820
    %v6933 = vmul.f32 %v6917, %v6821
    %v6934 = vmul.f32 %v6918, %v6822
    %v6935 = vmul.f32 %v6919, %v6823
    %v6936 = vmul.f32 %v6920, %v6824
    %v6937 = vmul.f32 %v6921, %v6825
    %v6938 = vmul.f32 %v6922, %v6826
    %v6939 = vmul.f32 %v6923, %v6827
    %v6940 = vadd.f32 %v6924, 0.2548296
    %v6941 = vadd.f32 %v6925, 0.2548296
    %v6942 = vadd.f32 %v6926, 0.2548296
    %v6943 = vadd.f32 %v6927, 0.2548296
    %v6944 = vadd.f32 %v6928, 0.2548296
    %v6945 = vadd.f32 %v6929, 0.2548296
    %v6946 = vadd.f32 %v6930, 0.2548296
    %v6947 = vadd.f32 %v6931, 0.2548296
    %v6948 = vadd.f32 %v6932, 0.2548296
    %v6949 = vadd.f32 %v6933, 0.2548296
    %v6950 = vadd.f32 %v6934, 0.2548296
    %v6951 = vadd.f32 %v6935, 0.2548296
    %v6952 = vadd.f32 %v6936, 0.2548296
    %v6953 = vadd.f32 %v6937, 0.2548296
    %v6954 = vadd.f32 %v6938, 0.2548296
    %v6955 = vadd.f32 %v6939, 0.2548296
    %v6956 = vmul.f32 %v6940, %v6812
    %v6957 = vmul.f32 %v6941, %v6813
    %v6958 = vmul.f32 %v6942, %v6814
    %v6959 = vmul.f32 %v6943, %v6815
    %v6960 = vmul.f32 %v6944, %v6816
    %v6961 = vmul.f32 %v6945, %v6817
    %v6962 = vmul.f32 %v6946, %v6818
    %v6963 = vmul.f32 %v6947, %v6819
    %v6964 = vmul.f32 %v6948, %v6820
    %v6965 = vmul.f32 %v6949, %v6821
    %v6966 = vmul.f32 %v6950, %v6822
    %v6967 = vmul.f32 %v6951, %v6823
    %v6968 = vmul.f32 %v6952, %v6824
    %v6969 = vmul.f32 %v6953, %v6825
    %v6970 = vmul.f32 %v6954, %v6826
    %v6971 = vmul.f32 %v6955, %v6827
    %v6972 = vmul.f32 %v6764, %v6764
    %v6973 = vmul.f32 %v6765, %v6765
    %v6974 = vmul.f32 %v6766, %v6766
    %v6975 = vmul.f32 %v6767, %v6767
    %v6976 = vmul.f32 %v6768, %v6768
    %v6977 = vmul.f32 %v6769, %v6769
    %v6978 = vmul.f32 %v6770, %v6770
    %v6979 = vmul.f32 %v6771, %v6771
    %v6980 = vmul.f32 %v6772, %v6772
    %v6981 = vmul.f32 %v6773, %v6773
    %v6982 = vmul.f32 %v6774, %v6774
    %v6983 = vmul.f32 %v6775, %v6775
    %v6984 = vmul.f32 %v6776, %v6776
    %v6985 = vmul.f32 %v6777, %v6777
    %v6986 = vmul.f32 %v6778, %v6778
    %v6987 = vmul.f32 %v6779, %v6779
    %v6988 = vsub.f32 0.0, %v6972
    %v6989 = vsub.f32 0.0, %v6973
    %v6990 = vsub.f32 0.0, %v6974
    %v6991 = vsub.f32 0.0, %v6975
    %v6992 = vsub.f32 0.0, %v6976
    %v6993 = vsub.f32 0.0, %v6977
    %v6994 = vsub.f32 0.0, %v6978
    %v6995 = vsub.f32 0.0, %v6979
    %v6996 = vsub.f32 0.0, %v6980
    %v6997 = vsub.f32 0.0, %v6981
    %v6998 = vsub.f32 0.0, %v6982
    %v6999 = vsub.f32 0.0, %v6983
    %v7000 = vsub.f32 0.0, %v6984
    %v7001 = vsub.f32 0.0, %v6985
    %v7002 = vsub.f32 0.0, %v6986
    %v7003 = vsub.f32 0.0, %v6987
    %v7004 = vmul.f32 %v6988, 1.442695
    %v7005 = vpow.pop %v7004
    %v7006 = vmul.f32 %v6989, 1.442695
    %v7007 = vpow.pop %v7006
    %v7008 = vmul.f32 %v6990, 1.442695
    %v7009 = vpow.pop %v7008
    %v7010 = vmul.f32 %v6991, 1.442695
    %v7011 = vpow.pop %v7010
    %v7012 = vmul.f32 %v6992, 1.442695
    %v7013 = vpow.pop %v7012
    %v7014 = vmul.f32 %v6993, 1.442695
    %v7015 = vpow.pop %v7014
    %v7016 = vmul.f32 %v6994, 1.442695
    %v7017 = vpow.pop %v7016
    %v7018 = vmul.f32 %v6995, 1.442695
    %v7019 = vpow.pop %v7018
    %v7020 = vmul.f32 %v6996, 1.442695
    %v7021 = vpow.pop %v7020
    %v7022 = vmul.f32 %v6997, 1.442695
    %v7023 = vpow.pop %v7022
    %v7024 = vmul.f32 %v6998, 1.442695
    %v7025 = vpow.pop %v7024
    %v7026 = vmul.f32 %v6999, 1.442695
    %v7027 = vpow.pop %v7026
    %v7028 = vmul.f32 %v7000, 1.442695
    %v7029 = vpow.pop %v7028
    %v7030 = vmul.f32 %v7001, 1.442695
    %v7031 = vpow.pop %v7030
    %v7032 = vmul.f32 %v7002, 1.442695
    %v7033 = vpow.pop %v7032
    %v7034 = vmul.f32 %v7003, 1.442695
    %v7035 = vpow.pop %v7034
    %v7036 = vmul.f32 %v6956, %v7005
    %v7037 = vmul.f32 %v6957, %v7007
    %v7038 = vmul.f32 %v6958, %v7009
    %v7039 = vmul.f32 %v6959, %v7011
    %v7040 = vmul.f32 %v6960, %v7013
    %v7041 = vmul.f32 %v6961, %v7015
    %v7042 = vmul.f32 %v6962, %v7017
    %v7043 = vmul.f32 %v6963, %v7019
    %v7044 = vmul.f32 %v6964, %v7021
    %v7045 = vmul.f32 %v6965, %v7023
    %v7046 = vmul.f32 %v6966, %v7025
    %v7047 = vmul.f32 %v6967, %v7027
    %v7048 = vmul.f32 %v6968, %v7029
    %v7049 = vmul.f32 %v6969, %v7031
    %v7050 = vmul.f32 %v6970, %v7033
    %v7051 = vmul.f32 %v6971, %v7035
    %v7052 = vsub.f32 1.0, %v7036
    %v7053 = vsub.f32 1.0, %v7037
    %v7054 = vsub.f32 1.0, %v7038
    %v7055 = vsub.f32 1.0, %v7039
    %v7056 = vsub.f32 1.0, %v7040
    %v7057 = vsub.f32 1.0, %v7041
    %v7058 = vsub.f32 1.0, %v7042
    %v7059 = vsub.f32 1.0, %v7043
    %v7060 = vsub.f32 1.0, %v7044
    %v7061 = vsub.f32 1.0, %v7045
    %v7062 = vsub.f32 1.0, %v7046
    %v7063 = vsub.f32 1.0, %v7047
    %v7064 = vsub.f32 1.0, %v7048
    %v7065 = vsub.f32 1.0, %v7049
    %v7066 = vsub.f32 1.0, %v7050
    %v7067 = vsub.f32 1.0, %v7051
    %vm7068 = vcmp.ge.f32.partialorder %v6748, 0.0
    %vm7069 = vcmp.ge.f32.partialorder %v6749, 0.0
    %vm7070 = vcmp.ge.f32.partialorder %v6750, 0.0
    %vm7071 = vcmp.ge.f32.partialorder %v6751, 0.0
    %vm7072 = vcmp.ge.f32.partialorder %v6752, 0.0
    %vm7073 = vcmp.ge.f32.partialorder %v6753, 0.0
    %vm7074 = vcmp.ge.f32.partialorder %v6754, 0.0
    %vm7075 = vcmp.ge.f32.partialorder %v6755, 0.0
    %vm7076 = vcmp.ge.f32.partialorder %v6756, 0.0
    %vm7077 = vcmp.ge.f32.partialorder %v6757, 0.0
    %vm7078 = vcmp.ge.f32.partialorder %v6758, 0.0
    %vm7079 = vcmp.ge.f32.partialorder %v6759, 0.0
    %vm7080 = vcmp.ge.f32.partialorder %v6760, 0.0
    %vm7081 = vcmp.ge.f32.partialorder %v6761, 0.0
    %vm7082 = vcmp.ge.f32.partialorder %v6762, 0.0
    %vm7083 = vcmp.ge.f32.partialorder %v6763, 0.0
    %v7084 = vsub.f32 0.0, %v7052
    %v7085 = vsub.f32 0.0, %v7053
    %v7086 = vsub.f32 0.0, %v7054
    %v7087 = vsub.f32 0.0, %v7055
    %v7088 = vsub.f32 0.0, %v7056
    %v7089 = vsub.f32 0.0, %v7057
    %v7090 = vsub.f32 0.0, %v7058
    %v7091 = vsub.f32 0.0, %v7059
    %v7092 = vsub.f32 0.0, %v7060
    %v7093 = vsub.f32 0.0, %v7061
    %v7094 = vsub.f32 0.0, %v7062
    %v7095 = vsub.f32 0.0, %v7063
    %v7096 = vsub.f32 0.0, %v7064
    %v7097 = vsub.f32 0.0, %v7065
    %v7098 = vsub.f32 0.0, %v7066
    %v7099 = vsub.f32 0.0, %v7067
    %v7100 = vsel %vm7068, %v7052, %v7084
    %v7101 = vsel %vm7069, %v7053, %v7085
    %v7102 = vsel %vm7070, %v7054, %v7086
    %v7103 = vsel %vm7071, %v7055, %v7087
    %v7104 = vsel %vm7072, %v7056, %v7088
    %v7105 = vsel %vm7073, %v7057, %v7089
    %v7106 = vsel %vm7074, %v7058, %v7090
    %v7107 = vsel %vm7075, %v7059, %v7091
    %v7108 = vsel %vm7076, %v7060, %v7092
    %v7109 = vsel %vm7077, %v7061, %v7093
    %v7110 = vsel %vm7078, %v7062, %v7094
    %v7111 = vsel %vm7079, %v7063, %v7095
    %v7112 = vsel %vm7080, %v7064, %v7096
    %v7113 = vsel %vm7081, %v7065, %v7097
    %v7114 = vsel %vm7082, %v7066, %v7098
    %v7115 = vsel %vm7083, %v7067, %v7099
    %v7116 = vadd.f32 %v7100, 1.0
    %v7117 = vadd.f32 %v7101, 1.0
    %v7118 = vadd.f32 %v7102, 1.0
    %v7119 = vadd.f32 %v7103, 1.0
    %v7120 = vadd.f32 %v7104, 1.0
    %v7121 = vadd.f32 %v7105, 1.0
    %v7122 = vadd.f32 %v7106, 1.0
    %v7123 = vadd.f32 %v7107, 1.0
    %v7124 = vadd.f32 %v7108, 1.0
    %v7125 = vadd.f32 %v7109, 1.0
    %v7126 = vadd.f32 %v7110, 1.0
    %v7127 = vadd.f32 %v7111, 1.0
    %v7128 = vadd.f32 %v7112, 1.0
    %v7129 = vadd.f32 %v7113, 1.0
    %v7130 = vadd.f32 %v7114, 1.0
    %v7131 = vadd.f32 %v7115, 1.0
    %v7132 = vmul.f32 %v6732, %v7116
    %v7133 = vmul.f32 %v6733, %v7117
    %v7134 = vmul.f32 %v6734, %v7118
    %v7135 = vmul.f32 %v6735, %v7119
    %v7136 = vmul.f32 %v6736, %v7120
    %v7137 = vmul.f32 %v6737, %v7121
    %v7138 = vmul.f32 %v6738, %v7122
    %v7139 = vmul.f32 %v6739, %v7123
    %v7140 = vmul.f32 %v6740, %v7124
    %v7141 = vmul.f32 %v6741, %v7125
    %v7142 = vmul.f32 %v6742, %v7126
    %v7143 = vmul.f32 %v6743, %v7127
    %v7144 = vmul.f32 %v6744, %v7128
    %v7145 = vmul.f32 %v6745, %v7129
    %v7146 = vmul.f32 %v6746, %v7130
    %v7147 = vmul.f32 %v6747, %v7131
    %s7148 = scalar_lea.vmem %s39, 128
    %v7149 = vld [vmem:[%s7148] sm:$0xf]
    %v7150 = vld [vmem:[%s7148 + $0x4] sm:$0xf]
    %v7151 = vld [vmem:[%s7148 + $0x8] sm:$0xf]
    %v7152 = vld [vmem:[%s7148 + $0xc] sm:$0xf]
    %v7153 = vld [vmem:[%s7148 + $0x10] sm:$0xf]
    %v7154 = vld [vmem:[%s7148 + $0x14] sm:$0xf]
    %v7155 = vld [vmem:[%s7148 + $0x18] sm:$0xf]
    %v7156 = vld [vmem:[%s7148 + $0x1c] sm:$0xf]
    %v7157 = vld [vmem:[%s7148 + $0x20] sm:$0xf]
    %v7158 = vld [vmem:[%s7148 + $0x24] sm:$0xf]
    %v7159 = vld [vmem:[%s7148 + $0x28] sm:$0xf]
    %v7160 = vld [vmem:[%s7148 + $0x2c] sm:$0xf]
    %v7161 = vld [vmem:[%s7148 + $0x30] sm:$0xf]
    %v7162 = vld [vmem:[%s7148 + $0x34] sm:$0xf]
    %v7163 = vld [vmem:[%s7148 + $0x38] sm:$0xf]
    %v7164 = vld [vmem:[%s7148 + $0x3c] sm:$0xf]
    %v7165 = vld [vmem:[%s7148 + $0x40] sm:$0xf]
    %v7166 = vld [vmem:[%s7148 + $0x44] sm:$0xf]
    %v7167 = vld [vmem:[%s7148 + $0x48] sm:$0xf]
    %v7168 = vld [vmem:[%s7148 + $0x4c] sm:$0xf]
    %v7169 = vld [vmem:[%s7148 + $0x50] sm:$0xf]
    %v7170 = vld [vmem:[%s7148 + $0x54] sm:$0xf]
    %v7171 = vld [vmem:[%s7148 + $0x58] sm:$0xf]
    %v7172 = vld [vmem:[%s7148 + $0x5c] sm:$0xf]
    %v7173 = vld [vmem:[%s7148 + $0x60] sm:$0xf]
    %v7174 = vld [vmem:[%s7148 + $0x64] sm:$0xf]
    %v7175 = vld [vmem:[%s7148 + $0x68] sm:$0xf]
    %v7176 = vld [vmem:[%s7148 + $0x6c] sm:$0xf]
    %v7177 = vld [vmem:[%s7148 + $0x70] sm:$0xf]
    %v7178 = vld [vmem:[%s7148 + $0x74] sm:$0xf]
    %v7179 = vld [vmem:[%s7148 + $0x78] sm:$0xf]
    %v7180 = vld [vmem:[%s7148 + $0x7c] sm:$0xf]
    %v7181 = vpack.c.bf16 %v7134, %v7132
    %v7182 = vpack.c.bf16 %v7135, %v7133
    %v7183 = vpack.c.bf16 %v7138, %v7136
    %v7184 = vpack.c.bf16 %v7139, %v7137
    %v7185 = vpack.c.bf16 %v7142, %v7140
    %v7186 = vpack.c.bf16 %v7143, %v7141
    %v7187 = vpack.c.bf16 %v7146, %v7144
    %v7188 = vpack.c.bf16 %v7147, %v7145
    %s7189 = scalar_lea.vmem %s41, 1
    %v7190 = vld [vmem:[%s7189] sm:$0x1]
    %v7192 = vlaneseq
    %v7193 = vshrl.u32 %v7192, 7
    %v7194 = vsub.s32 0, %v7193
    %v7195 = vrot.slane %v7190, %v7194
    %v7229 = vunpack.c.l.b16 %v7149
    %v7230 = vunpack.c.l.b16 %v7150
    %v7231 = vunpack.c.l.b16 %v7151
    %v7232 = vunpack.c.l.b16 %v7152
    %v7233 = vunpack.c.l.b16 %v7153
    %v7234 = vunpack.c.l.b16 %v7154
    %v7235 = vunpack.c.l.b16 %v7155
    %v7236 = vunpack.c.l.b16 %v7156
    %v7237 = vunpack.c.l.b16 %v7157
    %v7238 = vunpack.c.l.b16 %v7158
    %v7239 = vunpack.c.l.b16 %v7159
    %v7240 = vunpack.c.l.b16 %v7160
    %v7241 = vunpack.c.l.b16 %v7161
    %v7242 = vunpack.c.l.b16 %v7162
    %v7243 = vunpack.c.l.b16 %v7163
    %v7244 = vunpack.c.l.b16 %v7164
    %v7245 = vunpack.c.l.b16 %v7165
    %v7246 = vunpack.c.l.b16 %v7166
    %v7247 = vunpack.c.l.b16 %v7167
    %v7248 = vunpack.c.l.b16 %v7168
    %v7249 = vunpack.c.l.b16 %v7169
    %v7250 = vunpack.c.l.b16 %v7170
    %v7251 = vunpack.c.l.b16 %v7171
    %v7252 = vunpack.c.l.b16 %v7172
    %v7253 = vunpack.c.l.b16 %v7173
    %v7254 = vunpack.c.l.b16 %v7174
    %v7255 = vunpack.c.l.b16 %v7175
    %v7256 = vunpack.c.l.b16 %v7176
    %v7257 = vunpack.c.l.b16 %v7177
    %v7258 = vunpack.c.l.b16 %v7178
    %v7259 = vunpack.c.l.b16 %v7179
    %v7260 = vunpack.c.l.b16 %v7180
    %v7261 = vpack.c.b16 %v7230, %v7229
    %v7262 = vpack.c.b16 %v7232, %v7231
    %v7263 = vpack.c.b16 %v7234, %v7233
    %v7264 = vpack.c.b16 %v7236, %v7235
    %v7265 = vpack.c.b16 %v7238, %v7237
    %v7266 = vpack.c.b16 %v7240, %v7239
    %v7267 = vpack.c.b16 %v7242, %v7241
    %v7268 = vpack.c.b16 %v7244, %v7243
    %v7269 = vpack.c.b16 %v7246, %v7245
    %v7270 = vpack.c.b16 %v7248, %v7247
    %v7271 = vpack.c.b16 %v7250, %v7249
    %v7272 = vpack.c.b16 %v7252, %v7251
    %v7273 = vpack.c.b16 %v7254, %v7253
    %v7274 = vpack.c.b16 %v7256, %v7255
    %v7275 = vpack.c.b16 %v7258, %v7257
    %v7276 = vpack.c.b16 %v7260, %v7259
    %7293 = vmatprep.subr.bf16.mxu0 0
    %7294 = vmatpush1.bf16.msra.mxu0 %v7268
    %7295 = vmatprep.subr.bf16.mxu0 0
    %7296 = vmatpush1.bf16.msra.mxu0 %v7267
    %7297 = vmatprep.subr.bf16.mxu0 0
    %7298 = vmatpush1.bf16.msra.mxu0 %v7266
    %7299 = vmatprep.subr.bf16.mxu0 0
    %7300 = vmatpush1.bf16.msra.mxu0 %v7265
    %7301 = vmatprep.subr.bf16.mxu0 0
    %7302 = vmatpush1.bf16.msra.mxu0 %v7264
    %7303 = vmatprep.subr.bf16.mxu0 0
    %7304 = vmatpush1.bf16.msra.mxu0 %v7263
    %7305 = vmatprep.subr.bf16.mxu0 0
    %7306 = vmatpush1.bf16.msra.mxu0 %v7262
    %7307 = vmatprep.subr.bf16.mxu0 0
    %7308 = vmatpush1.bf16.msra.mxu0 %v7261
    %7309 = vmatprep.subr.bf16.mxu0 0
    %7310 = vmatpush2.bf16.msra.mxu0 %v7276
    %7311 = vmatprep.subr.bf16.mxu0 0
    %7312 = vmatpush2.bf16.msra.mxu0 %v7275
    %7313 = vmatprep.subr.bf16.mxu0 0
    %7314 = vmatpush2.bf16.msra.mxu0 %v7274
    %7315 = vmatprep.subr.bf16.mxu0 0
    %7316 = vmatpush2.bf16.msra.mxu0 %v7273
    %7317 = vmatprep.subr.bf16.mxu0 0
    %7318 = vmatpush2.bf16.msra.mxu0 %v7272
    %7319 = vmatprep.subr.bf16.mxu0 0
    %7320 = vmatpush2.bf16.msra.mxu0 %v7271
    %7321 = vmatprep.subr.bf16.mxu0 0
    %7322 = vmatpush2.bf16.msra.mxu0 %v7270
    %7323 = vmatprep.subr.bf16.mxu0 0
    %7324 = vmatpush2.bf16.msra.mxu0 %v7269
    %7325 = vmatprep.mubr.bf16.mxu0 %v7182
    %7326 = vmatmul.mubr.bf16.gmra.mxu0 %v7181
    %v7327 = vpop.f32.mrf.mxu0
    %v7328 = vadd.f32 %v7195, %v7327
    %v7329 = vpop.f32.mrf.mxu0
    %v7330 = vpop.f32.mrf.mxu0
    %v7331 = vadd.f32 %v7195, %v7330
    %v7332 = vpop.f32.mrf.mxu0
    %7333 = vmatprep.mubr.bf16.mxu0 %v7184
    %7334 = vmatmul.mubr.bf16.gmra.mxu0 %v7183
    %v7335 = vpop.f32.mrf.mxu0
    %v7336 = vadd.f32 %v7195, %v7335
    %v7337 = vpop.f32.mrf.mxu0
    %v7338 = vpop.f32.mrf.mxu0
    %v7339 = vadd.f32 %v7195, %v7338
    %v7340 = vpop.f32.mrf.mxu0
    %7341 = vmatprep.mubr.bf16.mxu0 %v7186
    %7342 = vmatmul.mubr.bf16.gmra.mxu0 %v7185
    %v7343 = vpop.f32.mrf.mxu0
    %v7344 = vadd.f32 %v7195, %v7343
    %v7345 = vpop.f32.mrf.mxu0
    %v7346 = vpop.f32.mrf.mxu0
    %v7347 = vadd.f32 %v7195, %v7346
    %v7348 = vpop.f32.mrf.mxu0
    %7349 = vmatprep.mubr.bf16.mxu0 %v7188
    %7350 = vmatmul.mubr.bf16.gmra.mxu0 %v7187
    %v7351 = vpop.f32.mrf.mxu0
    %v7352 = vadd.f32 %v7195, %v7351
    %v7353 = vpop.f32.mrf.mxu0
    %v7354 = vpop.f32.mrf.mxu0
    %v7355 = vadd.f32 %v7195, %v7354
    %v7356 = vpop.f32.mrf.mxu0
    %7357 = vdwg.mxu0
    %v7358 = vadd.f32 %v6437, %v7328
    %v7359 = vadd.f32 %v6438, %v7331
    %v7360 = vadd.f32 %v6439, %v7336
    %v7361 = vadd.f32 %v6440, %v7339
    %v7362 = vadd.f32 %v6441, %v7344
    %v7363 = vadd.f32 %v6442, %v7347
    %v7364 = vadd.f32 %v6443, %v7352
    %v7365 = vadd.f32 %v6444, %v7355
    %v7366 = vld [vmem:[%s43] sm:$0x1]
    %v7367 = vld [vmem:[%s45] sm:$0x1]
    %v7368 = vsel %vm3086, %v7358, 0.0
    %7369 = vadd.xlane.f32.xlu0 %v7368
    %v7370 = vpop.xlane.xlu0 %7369
    %v7371 = vsel %vm3086, %v7359, 0.0
    %7372 = vadd.xlane.f32.xlu0 %v7371
    %v7373 = vpop.xlane.xlu0 %7372
    %v7374 = vsel %vm3086, %v7360, 0.0
    %7375 = vadd.xlane.f32.xlu0 %v7374
    %v7376 = vpop.xlane.xlu0 %7375
    %v7377 = vsel %vm3086, %v7361, 0.0
    %7378 = vadd.xlane.f32.xlu0 %v7377
    %v7379 = vpop.xlane.xlu0 %7378
    %v7380 = vsel %vm3086, %v7362, 0.0
    %7381 = vadd.xlane.f32.xlu0 %v7380
    %v7382 = vpop.xlane.xlu0 %7381
    %v7383 = vsel %vm3086, %v7363, 0.0
    %7384 = vadd.xlane.f32.xlu0 %v7383
    %v7385 = vpop.xlane.xlu0 %7384
    %v7386 = vsel %vm3086, %v7364, 0.0
    %7387 = vadd.xlane.f32.xlu0 %v7386
    %v7388 = vpop.xlane.xlu0 %7387
    %v7389 = vsel %vm3086, %v7365, 0.0
    %7390 = vadd.xlane.f32.xlu0 %v7389
    %v7391 = vpop.xlane.xlu0 %7390
    %v7392 = vmul.f32 %v7370, %v3111
    %v7393 = vmul.f32 %v7373, %v3111
    %v7394 = vmul.f32 %v7376, %v3111
    %v7395 = vmul.f32 %v7379, %v3111
    %v7396 = vmul.f32 %v7382, %v3111
    %v7397 = vmul.f32 %v7385, %v3111
    %v7398 = vmul.f32 %v7388, %v3111
    %v7399 = vmul.f32 %v7391, %v3111
    %v7400 = vsub.f32 %v7358, %v7392
    %v7401 = vsub.f32 %v7359, %v7393
    %v7402 = vsub.f32 %v7360, %v7394
    %v7403 = vsub.f32 %v7361, %v7395
    %v7404 = vsub.f32 %v7362, %v7396
    %v7405 = vsub.f32 %v7363, %v7397
    %v7406 = vsub.f32 %v7364, %v7398
    %v7407 = vsub.f32 %v7365, %v7399
    %v7408 = vmul.f32 %v7400, %v7400
    %v7409 = vmul.f32 %v7401, %v7401
    %v7410 = vmul.f32 %v7402, %v7402
    %v7411 = vmul.f32 %v7403, %v7403
    %v7412 = vmul.f32 %v7404, %v7404
    %v7413 = vmul.f32 %v7405, %v7405
    %v7414 = vmul.f32 %v7406, %v7406
    %v7415 = vmul.f32 %v7407, %v7407
    %v7416 = vsel %vm3086, %v7408, 0.0
    %7417 = vadd.xlane.f32.xlu0 %v7416
    %v7418 = vpop.xlane.xlu0 %7417
    %v7419 = vsel %vm3086, %v7409, 0.0
    %7420 = vadd.xlane.f32.xlu0 %v7419
    %v7421 = vpop.xlane.xlu0 %7420
    %v7422 = vsel %vm3086, %v7410, 0.0
    %7423 = vadd.xlane.f32.xlu0 %v7422
    %v7424 = vpop.xlane.xlu0 %7423
    %v7425 = vsel %vm3086, %v7411, 0.0
    %7426 = vadd.xlane.f32.xlu0 %v7425
    %v7427 = vpop.xlane.xlu0 %7426
    %v7428 = vsel %vm3086, %v7412, 0.0
    %7429 = vadd.xlane.f32.xlu0 %v7428
    %v7430 = vpop.xlane.xlu0 %7429
    %v7431 = vsel %vm3086, %v7413, 0.0
    %7432 = vadd.xlane.f32.xlu0 %v7431
    %v7433 = vpop.xlane.xlu0 %7432
    %v7434 = vsel %vm3086, %v7414, 0.0
    %7435 = vadd.xlane.f32.xlu0 %v7434
    %v7436 = vpop.xlane.xlu0 %7435
    %v7437 = vsel %vm3086, %v7415, 0.0
    %7438 = vadd.xlane.f32.xlu0 %v7437
    %v7439 = vpop.xlane.xlu0 %7438
    %v7440 = vmul.f32 %v7418, %v3111
    %v7441 = vmul.f32 %v7421, %v3111
    %v7442 = vmul.f32 %v7424, %v3111
    %v7443 = vmul.f32 %v7427, %v3111
    %v7444 = vmul.f32 %v7430, %v3111
    %v7445 = vmul.f32 %v7433, %v3111
    %v7446 = vmul.f32 %v7436, %v3111
    %v7447 = vmul.f32 %v7439, %v3111
    %v7448 = vadd.f32 %v7440, 1e-06
    %v7449 = vadd.f32 %v7441, 1e-06
    %v7450 = vadd.f32 %v7442, 1e-06
    %v7451 = vadd.f32 %v7443, 1e-06
    %v7452 = vadd.f32 %v7444, 1e-06
    %v7453 = vadd.f32 %v7445, 1e-06
    %v7454 = vadd.f32 %v7446, 1e-06
    %v7455 = vadd.f32 %v7447, 1e-06
    %v7456 = vrsqrt.pop %v7448
    %v7457 = vrsqrt.pop %v7449
    %v7458 = vrsqrt.pop %v7450
    %v7459 = vrsqrt.pop %v7451
    %v7460 = vrsqrt.pop %v7452
    %v7461 = vrsqrt.pop %v7453
    %v7462 = vrsqrt.pop %v7454
    %v7463 = vrsqrt.pop %v7455
    %v7464 = vmul.f32 %v7400, %v7456
    %v7465 = vmul.f32 %v7401, %v7457
    %v7466 = vmul.f32 %v7402, %v7458
    %v7467 = vmul.f32 %v7403, %v7459
    %v7468 = vmul.f32 %v7404, %v7460
    %v7469 = vmul.f32 %v7405, %v7461
    %v7470 = vmul.f32 %v7406, %v7462
    %v7471 = vmul.f32 %v7407, %v7463
    %v7473 = vlaneseq
    %v7474 = vshrl.u32 %v7473, 7
    %v7475 = vsub.s32 0, %v7474
    %v7476 = vrot.slane %v7366, %v7475
    %v7478 = vmul.f32 %v7464, %v7476
    %v7479 = vmul.f32 %v7465, %v7476
    %v7480 = vmul.f32 %v7466, %v7476
    %v7481 = vmul.f32 %v7467, %v7476
    %v7482 = vmul.f32 %v7468, %v7476
    %v7483 = vmul.f32 %v7469, %v7476
    %v7484 = vmul.f32 %v7470, %v7476
    %v7485 = vmul.f32 %v7471, %v7476
    %v7487 = vlaneseq
    %v7488 = vshrl.u32 %v7487, 7
    %v7489 = vsub.s32 0, %v7488
    %v7490 = vrot.slane %v7367, %v7489
    %v7492 = vadd.f32 %v7478, %v7490
    %v7493 = vadd.f32 %v7479, %v7490
    %v7494 = vadd.f32 %v7480, %v7490
    %v7495 = vadd.f32 %v7481, %v7490
    %v7496 = vadd.f32 %v7482, %v7490
    %v7497 = vadd.f32 %v7483, %v7490
    %v7498 = vadd.f32 %v7484, %v7490
    %v7499 = vadd.f32 %v7485, %v7490
    %v7500 = vld [vmem:[%s47] sm:$0xf]
    %v7501 = vld [vmem:[%s47 + $0x4] sm:$0xf]
    %v7502 = vld [vmem:[%s47 + $0x8] sm:$0xf]
    %v7503 = vld [vmem:[%s47 + $0xc] sm:$0xf]
    %v7504 = vld [vmem:[%s47 + $0x10] sm:$0xf]
    %v7505 = vld [vmem:[%s47 + $0x14] sm:$0xf]
    %v7506 = vld [vmem:[%s47 + $0x18] sm:$0xf]
    %v7507 = vld [vmem:[%s47 + $0x1c] sm:$0xf]
    %v7508 = vpack.c.bf16 %v7493, %v7492
    %v7509 = vld [vmem:[%s47 + $0x20] sm:$0xf]
    %v7510 = vld [vmem:[%s47 + $0x24] sm:$0xf]
    %v7511 = vld [vmem:[%s47 + $0x28] sm:$0xf]
    %v7512 = vld [vmem:[%s47 + $0x2c] sm:$0xf]
    %v7513 = vld [vmem:[%s47 + $0x30] sm:$0xf]
    %v7514 = vld [vmem:[%s47 + $0x34] sm:$0xf]
    %v7515 = vld [vmem:[%s47 + $0x38] sm:$0xf]
    %v7516 = vld [vmem:[%s47 + $0x3c] sm:$0xf]
    %v7517 = vpack.c.bf16 %v7495, %v7494
    %v7526 = vunpack.c.l.b16 %v7509
    %v7527 = vunpack.c.l.b16 %v7510
    %v7528 = vunpack.c.l.b16 %v7511
    %v7529 = vunpack.c.l.b16 %v7512
    %v7530 = vunpack.c.l.b16 %v7513
    %v7531 = vunpack.c.l.b16 %v7514
    %v7532 = vunpack.c.l.b16 %v7515
    %v7533 = vunpack.c.l.b16 %v7516
    %v7534 = vpack.c.b16 %v7527, %v7526
    %v7535 = vpack.c.b16 %v7529, %v7528
    %v7536 = vpack.c.b16 %v7531, %v7530
    %v7537 = vpack.c.b16 %v7533, %v7532
    %v7543 = vsel %vm3086, %v7517, 0
    %7545 = vmatprep.subr.bf16.mxu0 0
    %7546 = vmatpush1.bf16.msra.mxu0 0
    %7547 = vmatprep.subr.bf16.mxu0 0
    %7548 = vmatpush1.bf16.msra.mxu0 0
    %7549 = vmatprep.subr.bf16.mxu0 0
    %7550 = vmatpush1.bf16.msra.mxu0 0
    %7551 = vmatprep.subr.bf16.mxu0 0
    %7552 = vmatpush1.bf16.msra.mxu0 0
    %7553 = vmatprep.subr.bf16.mxu0 0
    %7554 = vmatpush1.bf16.msra.mxu0 %v7537
    %7555 = vmatprep.subr.bf16.mxu0 0
    %7556 = vmatpush1.bf16.msra.mxu0 %v7536
    %7557 = vmatprep.subr.bf16.mxu0 0
    %7558 = vmatpush1.bf16.msra.mxu0 %v7535
    %7559 = vmatprep.subr.bf16.mxu0 0
    %7560 = vmatpush1.bf16.msra.mxu0 %v7534
    %7561 = vmatprep.subr.bf16.mxu0 0
    %7562 = vmatpush2.bf16.msra.mxu0 0
    %7563 = vmatprep.subr.bf16.mxu0 0
    %7564 = vmatpush2.bf16.msra.mxu0 0
    %7565 = vmatprep.subr.bf16.mxu0 0
    %7566 = vmatpush2.bf16.msra.mxu0 0
    %7567 = vmatprep.subr.bf16.mxu0 0
    %7568 = vmatpush2.bf16.msra.mxu0 0
    %7569 = vmatprep.subr.bf16.mxu0 0
    %7570 = vmatpush2.bf16.msra.mxu0 0
    %7571 = vmatprep.subr.bf16.mxu0 0
    %7572 = vmatpush2.bf16.msra.mxu0 0
    %7573 = vmatprep.subr.bf16.mxu0 0
    %7574 = vmatpush2.bf16.msra.mxu0 0
    %7575 = vmatprep.subr.bf16.mxu0 0
    %7576 = vmatpush2.bf16.msra.mxu0 0
    %7577 = vmatprep.mubr.bf16.mxu0 0
    %7578 = vmatmul.mubr.bf16.gmra.mxu0 %v7543
    %v7579 = vpop.f32.mrf.mxu0
    %v7580 = vadd.f32 0.0, %v7579
    %v7581 = vpop.f32.mrf.mxu0
    %v7582 = vpop.f32.mrf.mxu0
    %v7583 = vadd.f32 0.0, %v7582
    %v7584 = vpop.f32.mrf.mxu0
    %7585 = vdwg.mxu0
    %v7594 = vunpack.c.l.b16 %v7500
    %v7595 = vunpack.c.l.b16 %v7501
    %v7596 = vunpack.c.l.b16 %v7502
    %v7597 = vunpack.c.l.b16 %v7503
    %v7598 = vunpack.c.l.b16 %v7504
    %v7599 = vunpack.c.l.b16 %v7505
    %v7600 = vunpack.c.l.b16 %v7506
    %v7601 = vunpack.c.l.b16 %v7507
    %v7602 = vpack.c.b16 %v7595, %v7594
    %v7603 = vpack.c.b16 %v7597, %v7596
    %v7604 = vpack.c.b16 %v7599, %v7598
    %v7605 = vpack.c.b16 %v7601, %v7600
    %v7611 = vsel %vm3086, %v7508, 0
    %7613 = vmatprep.subr.bf16.mxu0 0
    %7614 = vmatpush1.bf16.msra.mxu0 0
    %7615 = vmatprep.subr.bf16.mxu0 0
    %7616 = vmatpush1.bf16.msra.mxu0 0
    %7617 = vmatprep.subr.bf16.mxu0 0
    %7618 = vmatpush1.bf16.msra.mxu0 0
    %7619 = vmatprep.subr.bf16.mxu0 0
    %7620 = vmatpush1.bf16.msra.mxu0 0
    %7621 = vmatprep.subr.bf16.mxu0 0
    %7622 = vmatpush1.bf16.msra.mxu0 %v7605
    %7623 = vmatprep.subr.bf16.mxu0 0
    %7624 = vmatpush1.bf16.msra.mxu0 %v7604
    %7625 = vmatprep.subr.bf16.mxu0 0
    %7626 = vmatpush1.bf16.msra.mxu0 %v7603
    %7627 = vmatprep.subr.bf16.mxu0 0
    %7628 = vmatpush1.bf16.msra.mxu0 %v7602
    %7629 = vmatprep.subr.bf16.mxu0 0
    %7630 = vmatpush2.bf16.msra.mxu0 0
    %7631 = vmatprep.subr.bf16.mxu0 0
    %7632 = vmatpush2.bf16.msra.mxu0 0
    %7633 = vmatprep.subr.bf16.mxu0 0
    %7634 = vmatpush2.bf16.msra.mxu0 0
    %7635 = vmatprep.subr.bf16.mxu0 0
    %7636 = vmatpush2.bf16.msra.mxu0 0
    %7637 = vmatprep.subr.bf16.mxu0 0
    %7638 = vmatpush2.bf16.msra.mxu0 0
    %7639 = vmatprep.subr.bf16.mxu0 0
    %7640 = vmatpush2.bf16.msra.mxu0 0
    %7641 = vmatprep.subr.bf16.mxu0 0
    %7642 = vmatpush2.bf16.msra.mxu0 0
    %7643 = vmatprep.subr.bf16.mxu0 0
    %7644 = vmatpush2.bf16.msra.mxu0 0
    %7645 = vmatprep.mubr.bf16.mxu0 0
    %7646 = vmatmul.mubr.bf16.gmra.mxu0 %v7611
    %v7647 = vpop.f32.mrf.mxu0
    %v7648 = vadd.f32 %v7580, %v7647
    %v7649 = vpop.f32.mrf.mxu0
    %v7650 = vpop.f32.mrf.mxu0
    %v7651 = vadd.f32 %v7583, %v7650
    %v7652 = vpop.f32.mrf.mxu0
    %7653 = vdwg.mxu0
    %v7654 = vld [vmem:[%s47 + $0x40] sm:$0xf]
    %v7655 = vld [vmem:[%s47 + $0x44] sm:$0xf]
    %v7656 = vld [vmem:[%s47 + $0x48] sm:$0xf]
    %v7657 = vld [vmem:[%s47 + $0x4c] sm:$0xf]
    %v7658 = vld [vmem:[%s47 + $0x50] sm:$0xf]
    %v7659 = vld [vmem:[%s47 + $0x54] sm:$0xf]
    %v7660 = vld [vmem:[%s47 + $0x58] sm:$0xf]
    %v7661 = vld [vmem:[%s47 + $0x5c] sm:$0xf]
    %v7662 = vpack.c.bf16 %v7497, %v7496
    %v7671 = vunpack.c.l.b16 %v7654
    %v7672 = vunpack.c.l.b16 %v7655
    %v7673 = vunpack.c.l.b16 %v7656
    %v7674 = vunpack.c.l.b16 %v7657
    %v7675 = vunpack.c.l.b16 %v7658
    %v7676 = vunpack.c.l.b16 %v7659
    %v7677 = vunpack.c.l.b16 %v7660
    %v7678 = vunpack.c.l.b16 %v7661
    %v7679 = vpack.c.b16 %v7672, %v7671
    %v7680 = vpack.c.b16 %v7674, %v7673
    %v7681 = vpack.c.b16 %v7676, %v7675
    %v7682 = vpack.c.b16 %v7678, %v7677
    %v7688 = vsel %vm3086, %v7662, 0
    %7690 = vmatprep.subr.bf16.mxu0 0
    %7691 = vmatpush1.bf16.msra.mxu0 0
    %7692 = vmatprep.subr.bf16.mxu0 0
    %7693 = vmatpush1.bf16.msra.mxu0 0
    %7694 = vmatprep.subr.bf16.mxu0 0
    %7695 = vmatpush1.bf16.msra.mxu0 0
    %7696 = vmatprep.subr.bf16.mxu0 0
    %7697 = vmatpush1.bf16.msra.mxu0 0
    %7698 = vmatprep.subr.bf16.mxu0 0
    %7699 = vmatpush1.bf16.msra.mxu0 %v7682
    %7700 = vmatprep.subr.bf16.mxu0 0
    %7701 = vmatpush1.bf16.msra.mxu0 %v7681
    %7702 = vmatprep.subr.bf16.mxu0 0
    %7703 = vmatpush1.bf16.msra.mxu0 %v7680
    %7704 = vmatprep.subr.bf16.mxu0 0
    %7705 = vmatpush1.bf16.msra.mxu0 %v7679
    %7706 = vmatprep.subr.bf16.mxu0 0
    %7707 = vmatpush2.bf16.msra.mxu0 0
    %7708 = vmatprep.subr.bf16.mxu0 0
    %7709 = vmatpush2.bf16.msra.mxu0 0
    %7710 = vmatprep.subr.bf16.mxu0 0
    %7711 = vmatpush2.bf16.msra.mxu0 0
    %7712 = vmatprep.subr.bf16.mxu0 0
    %7713 = vmatpush2.bf16.msra.mxu0 0
    %7714 = vmatprep.subr.bf16.mxu0 0
    %7715 = vmatpush2.bf16.msra.mxu0 0
    %7716 = vmatprep.subr.bf16.mxu0 0
    %7717 = vmatpush2.bf16.msra.mxu0 0
    %7718 = vmatprep.subr.bf16.mxu0 0
    %7719 = vmatpush2.bf16.msra.mxu0 0
    %7720 = vmatprep.subr.bf16.mxu0 0
    %7721 = vmatpush2.bf16.msra.mxu0 0
    %7722 = vmatprep.mubr.bf16.mxu0 0
    %7723 = vmatmul.mubr.bf16.gmra.mxu0 %v7688
    %v7724 = vpop.f32.mrf.mxu0
    %v7725 = vadd.f32 0.0, %v7724
    %v7726 = vpop.f32.mrf.mxu0
    %v7727 = vpop.f32.mrf.mxu0
    %v7728 = vadd.f32 0.0, %v7727
    %v7729 = vpop.f32.mrf.mxu0
    %7730 = vdwg.mxu0
    %v7731 = vadd.f32 %v7648, %v7725
    %v7732 = vadd.f32 %v7651, %v7728
    %v7733 = vld [vmem:[%s47 + $0x60] sm:$0xf]
    %v7734 = vld [vmem:[%s47 + $0x64] sm:$0xf]
    %v7735 = vld [vmem:[%s47 + $0x68] sm:$0xf]
    %v7736 = vld [vmem:[%s47 + $0x6c] sm:$0xf]
    %v7737 = vld [vmem:[%s47 + $0x70] sm:$0xf]
    %v7738 = vld [vmem:[%s47 + $0x74] sm:$0xf]
    %v7739 = vld [vmem:[%s47 + $0x78] sm:$0xf]
    %v7740 = vld [vmem:[%s47 + $0x7c] sm:$0xf]
    %v7741 = vpack.c.bf16 %v7499, %v7498
    %v7750 = vunpack.c.l.b16 %v7733
    %v7751 = vunpack.c.l.b16 %v7734
    %v7752 = vunpack.c.l.b16 %v7735
    %v7753 = vunpack.c.l.b16 %v7736
    %v7754 = vunpack.c.l.b16 %v7737
    %v7755 = vunpack.c.l.b16 %v7738
    %v7756 = vunpack.c.l.b16 %v7739
    %v7757 = vunpack.c.l.b16 %v7740
    %v7758 = vpack.c.b16 %v7751, %v7750
    %v7759 = vpack.c.b16 %v7753, %v7752
    %v7760 = vpack.c.b16 %v7755, %v7754
    %v7761 = vpack.c.b16 %v7757, %v7756
    %v7767 = vsel %vm3086, %v7741, 0
    %7769 = vmatprep.subr.bf16.mxu0 0
    %7770 = vmatpush1.bf16.msra.mxu0 0
    %7771 = vmatprep.subr.bf16.mxu0 0
    %7772 = vmatpush1.bf16.msra.mxu0 0
    %7773 = vmatprep.subr.bf16.mxu0 0
    %7774 = vmatpush1.bf16.msra.mxu0 0
    %7775 = vmatprep.subr.bf16.mxu0 0
    %7776 = vmatpush1.bf16.msra.mxu0 0
    %7777 = vmatprep.subr.bf16.mxu0 0
    %7778 = vmatpush1.bf16.msra.mxu0 %v7761
    %7779 = vmatprep.subr.bf16.mxu0 0
    %7780 = vmatpush1.bf16.msra.mxu0 %v7760
    %7781 = vmatprep.subr.bf16.mxu0 0
    %7782 = vmatpush1.bf16.msra.mxu0 %v7759
    %7783 = vmatprep.subr.bf16.mxu0 0
    %7784 = vmatpush1.bf16.msra.mxu0 %v7758
    %7785 = vmatprep.subr.bf16.mxu0 0
    %7786 = vmatpush2.bf16.msra.mxu0 0
    %7787 = vmatprep.subr.bf16.mxu0 0
    %7788 = vmatpush2.bf16.msra.mxu0 0
    %7789 = vmatprep.subr.bf16.mxu0 0
    %7790 = vmatpush2.bf16.msra.mxu0 0
    %7791 = vmatprep.subr.bf16.mxu0 0
    %7792 = vmatpush2.bf16.msra.mxu0 0
    %7793 = vmatprep.subr.bf16.mxu0 0
    %7794 = vmatpush2.bf16.msra.mxu0 0
    %7795 = vmatprep.subr.bf16.mxu0 0
    %7796 = vmatpush2.bf16.msra.mxu0 0
    %7797 = vmatprep.subr.bf16.mxu0 0
    %7798 = vmatpush2.bf16.msra.mxu0 0
    %7799 = vmatprep.subr.bf16.mxu0 0
    %7800 = vmatpush2.bf16.msra.mxu0 0
    %7801 = vmatprep.mubr.bf16.mxu0 0
    %7802 = vmatmul.mubr.bf16.gmra.mxu0 %v7767
    %v7803 = vpop.f32.mrf.mxu0
    %v7804 = vadd.f32 0.0, %v7803
    %v7805 = vpop.f32.mrf.mxu0
    %v7806 = vpop.f32.mrf.mxu0
    %v7807 = vadd.f32 0.0, %v7806
    %v7808 = vpop.f32.mrf.mxu0
    %7809 = vdwg.mxu0
    %v7810 = vadd.f32 %v7731, %v7804
    %v7811 = vadd.f32 %v7732, %v7807
    %v7812 = vld [vmem:[%s49] sm:$0x1]
    %v7814 = vlaneseq
    %v7815 = vshrl.u32 %v7814, 7
    %v7816 = vsub.s32 0, %v7815
    %v7817 = vrot.slane %v7812, %v7816
    %v7819 = vadd.f32 %v7810, %v7817
    %v7820 = vadd.f32 %v7811, %v7817
    %v7821 = vld [vmem:[%s51] sm:$0x1]
    %v7822 = vld [vmem:[%s53] sm:$0x1]
    %v7823 = vrot.slane %v7819, 4
    %v7824 = vadd.f32 %v7819, %v7823
    %v7825 = vrot.slane %v7824, 2
    %v7826 = vadd.f32 %v7824, %v7825
    %v7827 = vrot.slane %v7826, 1
    %v7828 = vadd.f32 %v7826, %v7827
    %v7829 = vrot.slane %v7820, 4
    %v7830 = vadd.f32 %v7820, %v7829
    %v7831 = vrot.slane %v7830, 2
    %v7832 = vadd.f32 %v7830, %v7831
    %v7833 = vrot.slane %v7832, 1
    %v7834 = vadd.f32 %v7832, %v7833
    %v7835 = vrcp.pop 8.0
    %v7836 = vmul.f32 %v7828, %v7835
    %v7837 = vmul.f32 %v7834, %v7835
    %v7838 = vsub.f32 %v7819, %v7836
    %v7839 = vsub.f32 %v7820, %v7837
    %v7840 = vmul.f32 %v7838, %v7838
    %v7841 = vmul.f32 %v7839, %v7839
    %v7842 = vrot.slane %v7840, 4
    %v7843 = vadd.f32 %v7840, %v7842
    %v7844 = vrot.slane %v7843, 2
    %v7845 = vadd.f32 %v7843, %v7844
    %v7846 = vrot.slane %v7845, 1
    %v7847 = vadd.f32 %v7845, %v7846
    %v7848 = vrot.slane %v7841, 4
    %v7849 = vadd.f32 %v7841, %v7848
    %v7850 = vrot.slane %v7849, 2
    %v7851 = vadd.f32 %v7849, %v7850
    %v7852 = vrot.slane %v7851, 1
    %v7853 = vadd.f32 %v7851, %v7852
    %v7854 = vmul.f32 %v7847, %v7835
    %v7855 = vmul.f32 %v7853, %v7835
    %v7856 = vadd.f32 %v7854, 1e-05
    %v7857 = vadd.f32 %v7855, 1e-05
    %v7858 = vrsqrt.pop %v7856
    %v7859 = vrsqrt.pop %v7857
    %v7860 = vmul.f32 %v7838, %v7858
    %v7861 = vmul.f32 %v7839, %v7859
    %v7863 = vlaneseq
    %v7864 = vshrl.u32 %v7863, 7
    %v7865 = vsub.s32 0, %v7864
    %v7866 = vrot.slane %v7821, %v7865
    %v7868 = vmul.f32 %v7860, %v7866
    %v7869 = vmul.f32 %v7861, %v7866
    %v7871 = vlaneseq
    %v7872 = vshrl.u32 %v7871, 7
    %v7873 = vsub.s32 0, %v7872
    %v7874 = vrot.slane %v7822, %v7873
    %v7876 = vadd.f32 %v7868, %v7874
    %v7877 = vadd.f32 %v7869, %v7874
    %v7878 = vmax.f32 %v7876, 0.0
    %v7879 = vmax.f32 %v7877, 0.0
    %v7880 = vld [vmem:[%s55] sm:$0xf]
    %v7881 = vld [vmem:[%s55 + $0x4] sm:$0xf]
    %v7882 = vld [vmem:[%s55 + $0x8] sm:$0xf]
    %v7883 = vld [vmem:[%s55 + $0xc] sm:$0xf]
    %v7884 = vld [vmem:[%s55 + $0x10] sm:$0xf]
    %v7885 = vld [vmem:[%s55 + $0x14] sm:$0xf]
    %v7886 = vld [vmem:[%s55 + $0x18] sm:$0xf]
    %v7887 = vld [vmem:[%s55 + $0x1c] sm:$0xf]
    %v7888 = vld [vmem:[%s55 + $0x20] sm:$0xf]
    %v7889 = vld [vmem:[%s55 + $0x24] sm:$0xf]
    %v7890 = vld [vmem:[%s55 + $0x28] sm:$0xf]
    %v7891 = vld [vmem:[%s55 + $0x2c] sm:$0xf]
    %v7892 = vld [vmem:[%s55 + $0x30] sm:$0xf]
    %v7893 = vld [vmem:[%s55 + $0x34] sm:$0xf]
    %v7894 = vld [vmem:[%s55 + $0x38] sm:$0xf]
    %v7895 = vld [vmem:[%s55 + $0x3c] sm:$0xf]
    %v7896 = vpack.c.bf16 %v7879, %v7878
    %v7897 = vld [vmem:[%s57] sm:$0x1]
    %v7899 = vlaneseq
    %v7900 = vshrl.u32 %v7899, 7
    %v7901 = vsub.s32 0, %v7900
    %v7902 = vrot.slane %v7897, %v7901
    %v7920 = vunpack.c.l.b16 %v7880
    %v7921 = vunpack.c.l.b16 %v7881
    %v7922 = vunpack.c.l.b16 %v7882
    %v7923 = vunpack.c.l.b16 %v7883
    %v7924 = vunpack.c.l.b16 %v7884
    %v7925 = vunpack.c.l.b16 %v7885
    %v7926 = vunpack.c.l.b16 %v7886
    %v7927 = vunpack.c.l.b16 %v7887
    %v7928 = vunpack.c.l.b16 %v7888
    %v7929 = vunpack.c.l.b16 %v7889
    %v7930 = vunpack.c.l.b16 %v7890
    %v7931 = vunpack.c.l.b16 %v7891
    %v7932 = vunpack.c.l.b16 %v7892
    %v7933 = vunpack.c.l.b16 %v7893
    %v7934 = vunpack.c.l.b16 %v7894
    %v7935 = vunpack.c.l.b16 %v7895
    %v7936 = vpack.c.b16 %v7921, %v7920
    %v7937 = vpack.c.b16 %v7923, %v7922
    %v7938 = vpack.c.b16 %v7925, %v7924
    %v7939 = vpack.c.b16 %v7927, %v7926
    %v7940 = vpack.c.b16 %v7929, %v7928
    %v7941 = vpack.c.b16 %v7931, %v7930
    %v7942 = vpack.c.b16 %v7933, %v7932
    %v7943 = vpack.c.b16 %v7935, %v7934
    %7952 = vmatprep.subr.bf16.mxu0 0
    %7953 = vmatpush1.bf16.msra.mxu0 %v7943
    %7954 = vmatprep.subr.bf16.mxu0 0
    %7955 = vmatpush1.bf16.msra.mxu0 %v7942
    %7956 = vmatprep.subr.bf16.mxu0 0
    %7957 = vmatpush1.bf16.msra.mxu0 %v7941
    %7958 = vmatprep.subr.bf16.mxu0 0
    %7959 = vmatpush1.bf16.msra.mxu0 %v7940
    %7960 = vmatprep.subr.bf16.mxu0 0
    %7961 = vmatpush1.bf16.msra.mxu0 %v7939
    %7962 = vmatprep.subr.bf16.mxu0 0
    %7963 = vmatpush1.bf16.msra.mxu0 %v7938
    %7964 = vmatprep.subr.bf16.mxu0 0
    %7965 = vmatpush1.bf16.msra.mxu0 %v7937
    %7966 = vmatprep.subr.bf16.mxu0 0
    %7967 = vmatpush1.bf16.msra.mxu0 %v7936
    %7968 = vmatprep.subr.bf16.mxu0 0
    %7969 = vmatpush2.bf16.msra.mxu0 0
    %7970 = vmatprep.subr.bf16.mxu0 0
    %7971 = vmatpush2.bf16.msra.mxu0 0
    %7972 = vmatprep.subr.bf16.mxu0 0
    %7973 = vmatpush2.bf16.msra.mxu0 0
    %7974 = vmatprep.subr.bf16.mxu0 0
    %7975 = vmatpush2.bf16.msra.mxu0 0
    %7976 = vmatprep.subr.bf16.mxu0 0
    %7977 = vmatpush2.bf16.msra.mxu0 0
    %7978 = vmatprep.subr.bf16.mxu0 0
    %7979 = vmatpush2.bf16.msra.mxu0 0
    %7980 = vmatprep.subr.bf16.mxu0 0
    %7981 = vmatpush2.bf16.msra.mxu0 0
    %7982 = vmatprep.subr.bf16.mxu0 0
    %7983 = vmatpush2.bf16.msra.mxu0 0
    %7984 = vmatprep.mubr.bf16.mxu0 0
    %7985 = vmatmul.mubr.bf16.gmra.mxu0 %v7896
    %v7986 = vpop.f32.mrf.mxu0
    %v7987 = vadd.f32 %v7902, %v7986
    %v7988 = vpop.f32.mrf.mxu0
    %v7989 = vpop.f32.mrf.mxu0
    %v7990 = vadd.f32 %v7902, %v7989
    %v7991 = vpop.f32.mrf.mxu0
    %7992 = vdwg.mxu0
    %v7993 = vld [vmem:[%s59] sm:$0x1]
    %v7994 = vld [vmem:[%s61] sm:$0x1]
    %v7995 = vrot.slane %v7987, 4
    %v7996 = vadd.f32 %v7987, %v7995
    %v7997 = vrot.slane %v7996, 2
    %v7998 = vadd.f32 %v7996, %v7997
    %v7999 = vrot.slane %v7998, 1
    %v8000 = vadd.f32 %v7998, %v7999
    %v8001 = vrot.slane %v7990, 4
    %v8002 = vadd.f32 %v7990, %v8001
    %v8003 = vrot.slane %v8002, 2
    %v8004 = vadd.f32 %v8002, %v8003
    %v8005 = vrot.slane %v8004, 1
    %v8006 = vadd.f32 %v8004, %v8005
    %v8007 = vmul.f32 %v8000, %v7835
    %v8008 = vmul.f32 %v8006, %v7835
    %v8009 = vsub.f32 %v7987, %v8007
    %v8010 = vsub.f32 %v7990, %v8008
    %v8011 = vmul.f32 %v8009, %v8009
    %v8012 = vmul.f32 %v8010, %v8010
    %v8013 = vrot.slane %v8011, 4
    %v8014 = vadd.f32 %v8011, %v8013
    %v8015 = vrot.slane %v8014, 2
    %v8016 = vadd.f32 %v8014, %v8015
    %v8017 = vrot.slane %v8016, 1
    %v8018 = vadd.f32 %v8016, %v8017
    %v8019 = vrot.slane %v8012, 4
    %v8020 = vadd.f32 %v8012, %v8019
    %v8021 = vrot.slane %v8020, 2
    %v8022 = vadd.f32 %v8020, %v8021
    %v8023 = vrot.slane %v8022, 1
    %v8024 = vadd.f32 %v8022, %v8023
    %v8025 = vmul.f32 %v8018, %v7835
    %v8026 = vmul.f32 %v8024, %v7835
    %v8027 = vadd.f32 %v8025, 1e-05
    %v8028 = vadd.f32 %v8026, 1e-05
    %v8029 = vrsqrt.pop %v8027
    %v8030 = vrsqrt.pop %v8028
    %v8031 = vmul.f32 %v8009, %v8029
    %v8032 = vmul.f32 %v8010, %v8030
    %v8034 = vlaneseq
    %v8035 = vshrl.u32 %v8034, 7
    %v8036 = vsub.s32 0, %v8035
    %v8037 = vrot.slane %v7993, %v8036
    %v8039 = vmul.f32 %v8031, %v8037
    %v8040 = vmul.f32 %v8032, %v8037
    %v8042 = vlaneseq
    %v8043 = vshrl.u32 %v8042, 7
    %v8044 = vsub.s32 0, %v8043
    %v8045 = vrot.slane %v7994, %v8044
    %v8047 = vadd.f32 %v8039, %v8045
    %v8048 = vadd.f32 %v8040, %v8045
    %v8049 = vmax.f32 %v8047, 0.0
    %v8050 = vmax.f32 %v8048, 0.0
    %v8051 = vld [vmem:[%s63] sm:$0xf]
    %v8052 = vld [vmem:[%s63 + $0x4] sm:$0xf]
    %v8053 = vld [vmem:[%s63 + $0x8] sm:$0xf]
    %v8054 = vld [vmem:[%s63 + $0xc] sm:$0xf]
    %v8055 = vld [vmem:[%s63 + $0x10] sm:$0xf]
    %v8056 = vld [vmem:[%s63 + $0x14] sm:$0xf]
    %v8057 = vld [vmem:[%s63 + $0x18] sm:$0xf]
    %v8058 = vld [vmem:[%s63 + $0x1c] sm:$0xf]
    %v8059 = vld [vmem:[%s63 + $0x20] sm:$0xf]
    %v8060 = vld [vmem:[%s63 + $0x24] sm:$0xf]
    %v8061 = vld [vmem:[%s63 + $0x28] sm:$0xf]
    %v8062 = vld [vmem:[%s63 + $0x2c] sm:$0xf]
    %v8063 = vld [vmem:[%s63 + $0x30] sm:$0xf]
    %v8064 = vld [vmem:[%s63 + $0x34] sm:$0xf]
    %v8065 = vld [vmem:[%s63 + $0x38] sm:$0xf]
    %v8066 = vld [vmem:[%s63 + $0x3c] sm:$0xf]
    %v8067 = vpack.c.bf16 %v8050, %v8049
    %v8084 = vunpack.c.l.b16 %v8051
    %v8085 = vunpack.c.l.b16 %v8052
    %v8086 = vunpack.c.l.b16 %v8053
    %v8087 = vunpack.c.l.b16 %v8054
    %v8088 = vunpack.c.l.b16 %v8055
    %v8089 = vunpack.c.l.b16 %v8056
    %v8090 = vunpack.c.l.b16 %v8057
    %v8091 = vunpack.c.l.b16 %v8058
    %v8092 = vunpack.c.l.b16 %v8059
    %v8093 = vunpack.c.l.b16 %v8060
    %v8094 = vunpack.c.l.b16 %v8061
    %v8095 = vunpack.c.l.b16 %v8062
    %v8096 = vunpack.c.l.b16 %v8063
    %v8097 = vunpack.c.l.b16 %v8064
    %v8098 = vunpack.c.l.b16 %v8065
    %v8099 = vunpack.c.l.b16 %v8066
    %v8100 = vpack.c.b16 %v8085, %v8084
    %v8101 = vpack.c.b16 %v8087, %v8086
    %v8102 = vpack.c.b16 %v8089, %v8088
    %v8103 = vpack.c.b16 %v8091, %v8090
    %v8104 = vpack.c.b16 %v8093, %v8092
    %v8105 = vpack.c.b16 %v8095, %v8094
    %v8106 = vpack.c.b16 %v8097, %v8096
    %v8107 = vpack.c.b16 %v8099, %v8098
    %8116 = vmatprep.subr.bf16.mxu0 0
    %8117 = vmatpush1.bf16.msra.mxu0 %v8107
    %8118 = vmatprep.subr.bf16.mxu0 0
    %8119 = vmatpush1.bf16.msra.mxu0 %v8106
    %8120 = vmatprep.subr.bf16.mxu0 0
    %8121 = vmatpush1.bf16.msra.mxu0 %v8105
    %8122 = vmatprep.subr.bf16.mxu0 0
    %8123 = vmatpush1.bf16.msra.mxu0 %v8104
    %8124 = vmatprep.subr.bf16.mxu0 0
    %8125 = vmatpush1.bf16.msra.mxu0 %v8103
    %8126 = vmatprep.subr.bf16.mxu0 0
    %8127 = vmatpush1.bf16.msra.mxu0 %v8102
    %8128 = vmatprep.subr.bf16.mxu0 0
    %8129 = vmatpush1.bf16.msra.mxu0 %v8101
    %8130 = vmatprep.subr.bf16.mxu0 0
    %8131 = vmatpush1.bf16.msra.mxu0 %v8100
    %8132 = vmatprep.subr.bf16.mxu0 0
    %8133 = vmatpush2.bf16.msra.mxu0 0
    %8134 = vmatprep.subr.bf16.mxu0 0
    %8135 = vmatpush2.bf16.msra.mxu0 0
    %8136 = vmatprep.subr.bf16.mxu0 0
    %8137 = vmatpush2.bf16.msra.mxu0 0
    %8138 = vmatprep.subr.bf16.mxu0 0
    %8139 = vmatpush2.bf16.msra.mxu0 0
    %8140 = vmatprep.subr.bf16.mxu0 0
    %8141 = vmatpush2.bf16.msra.mxu0 0
    %8142 = vmatprep.subr.bf16.mxu0 0
    %8143 = vmatpush2.bf16.msra.mxu0 0
    %8144 = vmatprep.subr.bf16.mxu0 0
    %8145 = vmatpush2.bf16.msra.mxu0 0
    %8146 = vmatprep.subr.bf16.mxu0 0
    %8147 = vmatpush2.bf16.msra.mxu0 0
    %8148 = vmatprep.mubr.bf16.mxu0 0
    %8149 = vmatmul.mubr.bf16.gmra.mxu0 %v8067
    %v8150 = vpop.f32.mrf.mxu0
    %v8151 = vadd.f32 0.0, %v8150
    %v8152 = vpop.f32.mrf.mxu0
    %v8153 = vpop.f32.mrf.mxu0
    %v8154 = vadd.f32 0.0, %v8153
    %v8155 = vpop.f32.mrf.mxu0
    %8156 = vdwg.mxu0
    %v8157 = vsub.f32 %v8151, %v8154
    %v8158 = vmul.f32 %v8157, %v8157
    %v8159 = vsel %vm3086, %v8158, 0.0
    %8160 = vadd.xlane.f32.xlu0 %v8159
    %v8161 = vpop.xlane.xlu0 %8160
    %v8162 = vrot.slane %v8161, 4
    %v8163 = vadd.f32 %v8161, %v8162
    %v8164 = vrot.slane %v8163, 2
    %v8165 = vadd.f32 %v8163, %v8164
    %v8166 = vrot.slane %v8165, 1
    %v8167 = vadd.f32 %v8165, %v8166
    %s8168 = vtos %v8167
    %v8169 = vrcp.pop 512.0
    %s8170 = vtos %v8169
    %s8171 = smul.f32 %s8168, %s8170
    %v8172 = vsel %vm3086, %v8151, 0.0
    %v8173 = vrot.slane %v8172, 4
    %v8174 = vadd.f32 %v8172, %v8173
    %v8175 = vrot.slane %v8174, 2
    %v8176 = vadd.f32 %v8174, %v8175
    %v8177 = vrot.slane %v8176, 1
    %v8178 = vadd.f32 %v8176, %v8177
    %v8179 = vmul.f32 %v8178, %v7835
    %v8180 = vsub.f32 %v8151, %v8179
    %v8181 = vsel %vm3086, %v8154, 0.0
    %v8182 = vrot.slane %v8181, 4
    %v8183 = vadd.f32 %v8181, %v8182
    %v8184 = vrot.slane %v8183, 2
    %v8185 = vadd.f32 %v8183, %v8184
    %v8186 = vrot.slane %v8185, 1
    %v8187 = vadd.f32 %v8185, %v8186
    %v8188 = vmul.f32 %v8187, %v7835
    %v8189 = vsub.f32 %v8154, %v8188
    %v8190 = vmul.f32 %v8180, %v8180
    %v8191 = vsel %vm3086, %v8190, 0.0
    %v8192 = vrot.slane %v8191, 4
    %v8193 = vadd.f32 %v8191, %v8192
    %v8194 = vrot.slane %v8193, 2
    %v8195 = vadd.f32 %v8193, %v8194
    %v8196 = vrot.slane %v8195, 1
    %v8197 = vadd.f32 %v8195, %v8196
    %v8198 = vmul.f32 %v8197, 0.14285715
    %v8199 = vmul.f32 %v8189, %v8189
    %v8200 = vsel %vm3086, %v8199, 0.0
    %v8201 = vrot.slane %v8200, 4
    %v8202 = vadd.f32 %v8200, %v8201
    %v8203 = vrot.slane %v8202, 2
    %v8204 = vadd.f32 %v8202, %v8203
    %v8205 = vrot.slane %v8204, 1
    %v8206 = vadd.f32 %v8204, %v8205
    %v8207 = vmul.f32 %v8206, 0.14285715
    %v8208 = vadd.f32 %v8198, 0.0001
    %v8209 = vrsqrt.pop %v8208
    %v8210 = vmul.f32 %v8208, %v8209
    %vm8211 = vcmp.eq.f32.partialorder %v8208, inf
    %v8212 = vsel %vm8211, %v8208, %v8210
    %vm8213 = vcmp.eq.f32.partialorder %v8208, 0.0
    %v8214 = vand.u32 %v8208, 2147483648
    %v8215 = vsel %vm8213, %v8214, %v8212
    %v8216 = vadd.f32 %v8207, 0.0001
    %v8217 = vrsqrt.pop %v8216
    %v8218 = vmul.f32 %v8216, %v8217
    %vm8219 = vcmp.eq.f32.partialorder %v8216, inf
    %v8220 = vsel %vm8219, %v8216, %v8218
    %vm8221 = vcmp.eq.f32.partialorder %v8216, 0.0
    %v8222 = vand.u32 %v8216, 2147483648
    %v8223 = vsel %vm8221, %v8222, %v8220
    %v8224 = vsub.f32 1.0, %v8215
    %v8225 = vmax.f32 %v8224, 0.0
    %vm8226 = vcmask 516096
    %v8227 = vsel %vm8226, %v8225, 0.0
    %8228 = vadd.xlane.f32.xlu0 %v8227
    %v8229 = vpop.xlane.xlu0 %8228
    %v8230 = vrot.slane %v8229, 4
    %v8231 = vadd.f32 %v8229, %v8230
    %v8232 = vrot.slane %v8231, 2
    %v8233 = vadd.f32 %v8231, %v8232
    %v8234 = vrot.slane %v8233, 1
    %v8235 = vadd.f32 %v8233, %v8234
    %s8236 = vtos %v8235
    %v8237 = vrcp.pop 64.0
    %s8238 = vtos %v8237
    %s8239 = smul.f32 %s8236, %s8238
    %v8240 = vrcp.pop 2.0
    %s8241 = vtos %v8240
    %s8242 = smul.f32 %s8239, %s8241
    %v8243 = vsub.f32 1.0, %v8223
    %v8244 = vmax.f32 %v8243, 0.0
    %v8245 = vsel %vm8226, %v8244, 0.0
    %8246 = vadd.xlane.f32.xlu0 %v8245
    %v8247 = vpop.xlane.xlu0 %8246
    %v8248 = vrot.slane %v8247, 4
    %v8249 = vadd.f32 %v8247, %v8248
    %v8250 = vrot.slane %v8249, 2
    %v8251 = vadd.f32 %v8249, %v8250
    %v8252 = vrot.slane %v8251, 1
    %v8253 = vadd.f32 %v8251, %v8252
    %s8254 = vtos %v8253
    %v8255 = vrcp.pop 64.0
    %s8256 = vtos %v8255
    %s8257 = smul.f32 %s8254, %s8256
    %v8258 = vrcp.pop 2.0
    %s8259 = vtos %v8258
    %s8260 = smul.f32 %s8257, %s8259
    %s8261 = sadd.f32 %s8242, %s8260
    %8262 = vxpose.xlu0.b32.start [1/16] %v8180, 128
    %8263 = vxpose.xlu0.b32.cont [2/16] 0.0, 128
    %8264 = vxpose.xlu0.b32.cont [3/16] 0.0, 128
    %8265 = vxpose.xlu0.b32.cont [4/16] 0.0, 128
    %8266 = vxpose.xlu0.b32.cont [5/16] 0.0, 128
    %8267 = vxpose.xlu0.b32.cont [6/16] 0.0, 128
    %8268 = vxpose.xlu0.b32.cont [7/16] 0.0, 128
    %8269 = vxpose.xlu0.b32.cont [8/16] 0.0, 128
    %8270 = vxpose.xlu0.b32.cont [9/16] 0.0, 128
    %8271 = vxpose.xlu0.b32.cont [10/16] 0.0, 128
    %8272 = vxpose.xlu0.b32.cont [11/16] 0.0, 128
    %8273 = vxpose.xlu0.b32.cont [12/16] 0.0, 128
    %8274 = vxpose.xlu0.b32.cont [13/16] 0.0, 128
    %8275 = vxpose.xlu0.b32.cont [14/16] 0.0, 128
    %8276 = vxpose.xlu0.b32.cont [15/16] 0.0, 128
    %8277 = vxpose.xlu0.b32.end [16/16] 0.0, 128
    %v8278 = vpop.trf.xlu0
    %v8279 = vpop.trf.xlu0
    %v8280 = vpop.trf.xlu0
    %v8281 = vpop.trf.xlu0
    %v8282 = vpop.trf.xlu0
    %v8283 = vpop.trf.xlu0
    %v8284 = vpop.trf.xlu0
    %v8285 = vpop.trf.xlu0
    %v8286 = vpop.trf.xlu0
    %v8287 = vpop.trf.xlu0
    %v8288 = vpop.trf.xlu0
    %v8289 = vpop.trf.xlu0
    %v8290 = vpop.trf.xlu0
    %v8291 = vpop.trf.xlu0
    %v8292 = vpop.trf.xlu0
    %v8293 = vpop.trf.xlu0
    %vm8294 = vcmask 64512
    %v8296 = vsel %vm8294, %v8278, 0
    %v8299 = vsel %vm8294, %v8279, 0
    %v8302 = vsel %vm8294, %v8280, 0
    %v8305 = vsel %vm8294, %v8281, 0
    %v8308 = vsel %vm8294, %v8282, 0
    %v8311 = vsel %vm8294, %v8283, 0
    %v8314 = vsel %vm8294, %v8284, 0
    %v8317 = vsel %vm8294, %v8285, 0
    %8319 = vmatprep.subr.mxu0 0.0
    %8320 = vmatpush1.msra.mxu0 0.0
    %8321 = vmatprep.subr.mxu0 0.0
    %8322 = vmatpush1.msra.mxu0 0.0
    %8323 = vmatprep.subr.mxu0 0.0
    %8324 = vmatpush1.msra.mxu0 0.0
    %8325 = vmatprep.subr.mxu0 0.0
    %8326 = vmatpush1.msra.mxu0 0.0
    %8327 = vmatprep.subr.mxu0 0.0
    %8328 = vmatpush1.msra.mxu0 0.0
    %8329 = vmatprep.subr.mxu0 0.0
    %8330 = vmatpush1.msra.mxu0 0.0
    %8331 = vmatprep.subr.mxu0 0.0
    %8332 = vmatpush1.msra.mxu0 0.0
    %8333 = vmatprep.subr.mxu0 0.0
    %8334 = vmatpush1.msra.mxu0 0.0
    %8335 = vmatprep.subr.mxu0 0.0
    %8336 = vmatpush1.msra.mxu0 0.0
    %8337 = vmatprep.subr.mxu0 0.0
    %8338 = vmatpush1.msra.mxu0 0.0
    %8339 = vmatprep.subr.mxu0 0.0
    %8340 = vmatpush1.msra.mxu0 0.0
    %8341 = vmatprep.subr.mxu0 0.0
    %8342 = vmatpush1.msra.mxu0 0.0
    %8343 = vmatprep.subr.mxu0 0.0
    %8344 = vmatpush1.msra.mxu0 0.0
    %8345 = vmatprep.subr.mxu0 0.0
    %8346 = vmatpush1.msra.mxu0 0.0
    %8347 = vmatprep.subr.mxu0 0.0
    %8348 = vmatpush1.msra.mxu0 0.0
    %8349 = vmatprep.subr.mxu0 0.0
    %8350 = vmatpush1.msra.mxu0 %v8180
    %8351 = vmatprep.subr.mxu0 0.0
    %8352 = vmatpush2.msra.mxu0 0.0
    %8353 = vmatprep.subr.mxu0 0.0
    %8354 = vmatpush2.msra.mxu0 0.0
    %8355 = vmatprep.subr.mxu0 0.0
    %8356 = vmatpush2.msra.mxu0 0.0
    %8357 = vmatprep.subr.mxu0 0.0
    %8358 = vmatpush2.msra.mxu0 0.0
    %8359 = vmatprep.subr.mxu0 0.0
    %8360 = vmatpush2.msra.mxu0 0.0
    %8361 = vmatprep.subr.mxu0 0.0
    %8362 = vmatpush2.msra.mxu0 0.0
    %8363 = vmatprep.subr.mxu0 0.0
    %8364 = vmatpush2.msra.mxu0 0.0
    %8365 = vmatprep.subr.mxu0 0.0
    %8366 = vmatpush2.msra.mxu0 0.0
    %8367 = vmatprep.subr.mxu0 0.0
    %8368 = vmatpush2.msra.mxu0 0.0
    %8369 = vmatprep.subr.mxu0 0.0
    %8370 = vmatpush2.msra.mxu0 0.0
    %8371 = vmatprep.subr.mxu0 0.0
    %8372 = vmatpush2.msra.mxu0 0.0
    %8373 = vmatprep.subr.mxu0 0.0
    %8374 = vmatpush2.msra.mxu0 0.0
    %8375 = vmatprep.subr.mxu0 0.0
    %8376 = vmatpush2.msra.mxu0 0.0
    %8377 = vmatprep.subr.mxu0 0.0
    %8378 = vmatpush2.msra.mxu0 0.0
    %8379 = vmatprep.subr.mxu0 0.0
    %8380 = vmatpush2.msra.mxu0 0.0
    %8381 = vmatprep.subr.mxu0 0.0
    %8382 = vmatpush2.msra.mxu0 0.0
    %8383 = vmatprep.mubr.f32.mxu0 0.0
    %8384 = vmatmul.mubr.f32.gmra.mxu0 %v8296
    %v8385 = vpop.f32.mrf.mxu0
    %v8386 = vadd.f32 0.0, %v8385
    %v8387 = vpop.f32.mrf.mxu0
    %8388 = vmatprep.mubr.f32.mxu0 0.0
    %8389 = vmatmul.mubr.f32.gmra.mxu0 %v8299
    %v8390 = vpop.f32.mrf.mxu0
    %v8391 = vadd.f32 0.0, %v8390
    %v8392 = vpop.f32.mrf.mxu0
    %8393 = vmatprep.mubr.f32.mxu0 0.0
    %8394 = vmatmul.mubr.f32.gmra.mxu0 %v8302
    %v8395 = vpop.f32.mrf.mxu0
    %v8396 = vadd.f32 0.0, %v8395
    %v8397 = vpop.f32.mrf.mxu0
    %8398 = vmatprep.mubr.f32.mxu0 0.0
    %8399 = vmatmul.mubr.f32.gmra.mxu0 %v8305
    %v8400 = vpop.f32.mrf.mxu0
    %v8401 = vadd.f32 0.0, %v8400
    %v8402 = vpop.f32.mrf.mxu0
    %8403 = vmatprep.mubr.f32.mxu0 0.0
    %8404 = vmatmul.mubr.f32.gmra.mxu0 %v8308
    %v8405 = vpop.f32.mrf.mxu0
    %v8406 = vadd.f32 0.0, %v8405
    %v8407 = vpop.f32.mrf.mxu0
    %8408 = vmatprep.mubr.f32.mxu0 0.0
    %8409 = vmatmul.mubr.f32.gmra.mxu0 %v8311
    %v8410 = vpop.f32.mrf.mxu0
    %v8411 = vadd.f32 0.0, %v8410
    %v8412 = vpop.f32.mrf.mxu0
    %8413 = vmatprep.mubr.f32.mxu0 0.0
    %8414 = vmatmul.mubr.f32.gmra.mxu0 %v8314
    %v8415 = vpop.f32.mrf.mxu0
    %v8416 = vadd.f32 0.0, %v8415
    %v8417 = vpop.f32.mrf.mxu0
    %8418 = vmatprep.mubr.f32.mxu0 0.0
    %8419 = vmatmul.mubr.f32.gmra.mxu0 %v8317
    %v8420 = vpop.f32.mrf.mxu0
    %v8421 = vadd.f32 0.0, %v8420
    %v8422 = vpop.f32.mrf.mxu0
    %8423 = vdwg.mxu0
    %v8424 = vmul.f32 %v8386, 0.14285715
    %v8425 = vmul.f32 %v8391, 0.14285715
    %v8426 = vmul.f32 %v8396, 0.14285715
    %v8427 = vmul.f32 %v8401, 0.14285715
    %v8428 = vmul.f32 %v8406, 0.14285715
    %v8429 = vmul.f32 %v8411, 0.14285715
    %v8430 = vmul.f32 %v8416, 0.14285715
    %v8431 = vmul.f32 %v8421, 0.14285715
    %8432 = vxpose.xlu0.b32.start [1/16] %v8189, 128
    %8433 = vxpose.xlu0.b32.cont [2/16] 0.0, 128
    %8434 = vxpose.xlu0.b32.cont [3/16] 0.0, 128
    %8435 = vxpose.xlu0.b32.cont [4/16] 0.0, 128
    %8436 = vxpose.xlu0.b32.cont [5/16] 0.0, 128
    %8437 = vxpose.xlu0.b32.cont [6/16] 0.0, 128
    %8438 = vxpose.xlu0.b32.cont [7/16] 0.0, 128
    %8439 = vxpose.xlu0.b32.cont [8/16] 0.0, 128
    %8440 = vxpose.xlu0.b32.cont [9/16] 0.0, 128
    %8441 = vxpose.xlu0.b32.cont [10/16] 0.0, 128
    %8442 = vxpose.xlu0.b32.cont [11/16] 0.0, 128
    %8443 = vxpose.xlu0.b32.cont [12/16] 0.0, 128
    %8444 = vxpose.xlu0.b32.cont [13/16] 0.0, 128
    %8445 = vxpose.xlu0.b32.cont [14/16] 0.0, 128
    %8446 = vxpose.xlu0.b32.cont [15/16] 0.0, 128
    %8447 = vxpose.xlu0.b32.end [16/16] 0.0, 128
    %v8448 = vpop.trf.xlu0
    %v8449 = vpop.trf.xlu0
    %v8450 = vpop.trf.xlu0
    %v8451 = vpop.trf.xlu0
    %v8452 = vpop.trf.xlu0
    %v8453 = vpop.trf.xlu0
    %v8454 = vpop.trf.xlu0
    %v8455 = vpop.trf.xlu0
    %v8456 = vpop.trf.xlu0
    %v8457 = vpop.trf.xlu0
    %v8458 = vpop.trf.xlu0
    %v8459 = vpop.trf.xlu0
    %v8460 = vpop.trf.xlu0
    %v8461 = vpop.trf.xlu0
    %v8462 = vpop.trf.xlu0
    %v8463 = vpop.trf.xlu0
    %v8465 = vsel %vm8294, %v8448, 0
    %v8468 = vsel %vm8294, %v8449, 0
    %v8471 = vsel %vm8294, %v8450, 0
    %v8474 = vsel %vm8294, %v8451, 0
    %v8477 = vsel %vm8294, %v8452, 0
    %v8480 = vsel %vm8294, %v8453, 0
    %v8483 = vsel %vm8294, %v8454, 0
    %v8486 = vsel %vm8294, %v8455, 0
    %8488 = vmatprep.subr.mxu0 0.0
    %8489 = vmatpush1.msra.mxu0 0.0
    %8490 = vmatprep.subr.mxu0 0.0
    %8491 = vmatpush1.msra.mxu0 0.0
    %8492 = vmatprep.subr.mxu0 0.0
    %8493 = vmatpush1.msra.mxu0 0.0
    %8494 = vmatprep.subr.mxu0 0.0
    %8495 = vmatpush1.msra.mxu0 0.0
    %8496 = vmatprep.subr.mxu0 0.0
    %8497 = vmatpush1.msra.mxu0 0.0
    %8498 = vmatprep.subr.mxu0 0.0
    %8499 = vmatpush1.msra.mxu0 0.0
    %8500 = vmatprep.subr.mxu0 0.0
    %8501 = vmatpush1.msra.mxu0 0.0
    %8502 = vmatprep.subr.mxu0 0.0
    %8503 = vmatpush1.msra.mxu0 0.0
    %8504 = vmatprep.subr.mxu0 0.0
    %8505 = vmatpush1.msra.mxu0 0.0
    %8506 = vmatprep.subr.mxu0 0.0
    %8507 = vmatpush1.msra.mxu0 0.0
    %8508 = vmatprep.subr.mxu0 0.0
    %8509 = vmatpush1.msra.mxu0 0.0
    %8510 = vmatprep.subr.mxu0 0.0
    %8511 = vmatpush1.msra.mxu0 0.0
    %8512 = vmatprep.subr.mxu0 0.0
    %8513 = vmatpush1.msra.mxu0 0.0
    %8514 = vmatprep.subr.mxu0 0.0
    %8515 = vmatpush1.msra.mxu0 0.0
    %8516 = vmatprep.subr.mxu0 0.0
    %8517 = vmatpush1.msra.mxu0 0.0
    %8518 = vmatprep.subr.mxu0 0.0
    %8519 = vmatpush1.msra.mxu0 %v8189
    %8520 = vmatprep.subr.mxu0 0.0
    %8521 = vmatpush2.msra.mxu0 0.0
    %8522 = vmatprep.subr.mxu0 0.0
    %8523 = vmatpush2.msra.mxu0 0.0
    %8524 = vmatprep.subr.mxu0 0.0
    %8525 = vmatpush2.msra.mxu0 0.0
    %8526 = vmatprep.subr.mxu0 0.0
    %8527 = vmatpush2.msra.mxu0 0.0
    %8528 = vmatprep.subr.mxu0 0.0
    %8529 = vmatpush2.msra.mxu0 0.0
    %8530 = vmatprep.subr.mxu0 0.0
    %8531 = vmatpush2.msra.mxu0 0.0
    %8532 = vmatprep.subr.mxu0 0.0
    %8533 = vmatpush2.msra.mxu0 0.0
    %8534 = vmatprep.subr.mxu0 0.0
    %8535 = vmatpush2.msra.mxu0 0.0
    %8536 = vmatprep.subr.mxu0 0.0
    %8537 = vmatpush2.msra.mxu0 0.0
    %8538 = vmatprep.subr.mxu0 0.0
    %8539 = vmatpush2.msra.mxu0 0.0
    %8540 = vmatprep.subr.mxu0 0.0
    %8541 = vmatpush2.msra.mxu0 0.0
    %8542 = vmatprep.subr.mxu0 0.0
    %8543 = vmatpush2.msra.mxu0 0.0
    %8544 = vmatprep.subr.mxu0 0.0
    %8545 = vmatpush2.msra.mxu0 0.0
    %8546 = vmatprep.subr.mxu0 0.0
    %8547 = vmatpush2.msra.mxu0 0.0
    %8548 = vmatprep.subr.mxu0 0.0
    %8549 = vmatpush2.msra.mxu0 0.0
    %8550 = vmatprep.subr.mxu0 0.0
    %8551 = vmatpush2.msra.mxu0 0.0
    %8552 = vmatprep.mubr.f32.mxu0 0.0
    %8553 = vmatmul.mubr.f32.gmra.mxu0 %v8465
    %v8554 = vpop.f32.mrf.mxu0
    %v8555 = vadd.f32 0.0, %v8554
    %v8556 = vpop.f32.mrf.mxu0
    %8557 = vmatprep.mubr.f32.mxu0 0.0
    %8558 = vmatmul.mubr.f32.gmra.mxu0 %v8468
    %v8559 = vpop.f32.mrf.mxu0
    %v8560 = vadd.f32 0.0, %v8559
    %v8561 = vpop.f32.mrf.mxu0
    %8562 = vmatprep.mubr.f32.mxu0 0.0
    %8563 = vmatmul.mubr.f32.gmra.mxu0 %v8471
    %v8564 = vpop.f32.mrf.mxu0
    %v8565 = vadd.f32 0.0, %v8564
    %v8566 = vpop.f32.mrf.mxu0
    %8567 = vmatprep.mubr.f32.mxu0 0.0
    %8568 = vmatmul.mubr.f32.gmra.mxu0 %v8474
    %v8569 = vpop.f32.mrf.mxu0
    %v8570 = vadd.f32 0.0, %v8569
    %v8571 = vpop.f32.mrf.mxu0
    %8572 = vmatprep.mubr.f32.mxu0 0.0
    %8573 = vmatmul.mubr.f32.gmra.mxu0 %v8477
    %v8574 = vpop.f32.mrf.mxu0
    %v8575 = vadd.f32 0.0, %v8574
    %v8576 = vpop.f32.mrf.mxu0
    %8577 = vmatprep.mubr.f32.mxu0 0.0
    %8578 = vmatmul.mubr.f32.gmra.mxu0 %v8480
    %v8579 = vpop.f32.mrf.mxu0
    %v8580 = vadd.f32 0.0, %v8579
    %v8581 = vpop.f32.mrf.mxu0
    %8582 = vmatprep.mubr.f32.mxu0 0.0
    %8583 = vmatmul.mubr.f32.gmra.mxu0 %v8483
    %v8584 = vpop.f32.mrf.mxu0
    %v8585 = vadd.f32 0.0, %v8584
    %v8586 = vpop.f32.mrf.mxu0
    %8587 = vmatprep.mubr.f32.mxu0 0.0
    %8588 = vmatmul.mubr.f32.gmra.mxu0 %v8486
    %v8589 = vpop.f32.mrf.mxu0
    %v8590 = vadd.f32 0.0, %v8589
    %v8591 = vpop.f32.mrf.mxu0
    %8592 = vdwg.mxu0
    %v8593 = vmul.f32 %v8555, 0.14285715
    %v8594 = vmul.f32 %v8560, 0.14285715
    %v8595 = vmul.f32 %v8565, 0.14285715
    %v8596 = vmul.f32 %v8570, 0.14285715
    %v8597 = vmul.f32 %v8575, 0.14285715
    %v8598 = vmul.f32 %v8580, 0.14285715
    %v8599 = vmul.f32 %v8585, 0.14285715
    %v8600 = vmul.f32 %v8590, 0.14285715
    %v8601 = vmul.f32 %v8424, %v8424
    %v8602 = vmul.f32 %v8425, %v8425
    %v8603 = vmul.f32 %v8426, %v8426
    %v8604 = vmul.f32 %v8427, %v8427
    %v8605 = vmul.f32 %v8428, %v8428
    %v8606 = vmul.f32 %v8429, %v8429
    %v8607 = vmul.f32 %v8430, %v8430
    %v8608 = vmul.f32 %v8431, %v8431
    %v8609 = vsel %vm3086, %v8601, 0.0
    %v8610 = vsel %vm3086, %v8602, 0.0
    %v8611 = vadd.f32 %v8609, %v8610
    %v8612 = vsel %vm3086, %v8603, 0.0
    %v8613 = vadd.f32 %v8611, %v8612
    %v8614 = vsel %vm3086, %v8604, 0.0
    %v8615 = vadd.f32 %v8613, %v8614
    %v8616 = vsel %vm3086, %v8605, 0.0
    %v8617 = vadd.f32 %v8615, %v8616
    %v8618 = vsel %vm3086, %v8606, 0.0
    %v8619 = vadd.f32 %v8617, %v8618
    %v8620 = vsel %vm3086, %v8607, 0.0
    %v8621 = vadd.f32 %v8619, %v8620
    %v8622 = vsel %vm3086, %v8608, 0.0
    %v8623 = vadd.f32 %v8621, %v8622
    %8624 = vadd.xlane.f32.xlu0 %v8623
    %v8625 = vpop.xlane.xlu0 %8624
    %v8626 = vrot.slane %v8625, 4
    %v8627 = vadd.f32 %v8625, %v8626
    %v8628 = vrot.slane %v8627, 2
    %v8629 = vadd.f32 %v8627, %v8628
    %v8630 = vrot.slane %v8629, 1
    %v8631 = vadd.f32 %v8629, %v8630
    %s8632 = vtos %v8631
    %v8633 = vmul.f32 %v8198, %v8198
    %v8634 = vsel %vm8226, %v8633, 0.0
    %8635 = vadd.xlane.f32.xlu0 %v8634
    %v8636 = vpop.xlane.xlu0 %8635
    %v8637 = vrot.slane %v8636, 4
    %v8638 = vadd.f32 %v8636, %v8637
    %v8639 = vrot.slane %v8638, 2
    %v8640 = vadd.f32 %v8638, %v8639
    %v8641 = vrot.slane %v8640, 1
    %v8642 = vadd.f32 %v8640, %v8641
    %s8643 = vtos %v8642
    %s8644 = ssub.f32 %s8632, %s8643
    %v8645 = vmul.f32 %v8593, %v8593
    %v8646 = vmul.f32 %v8594, %v8594
    %v8647 = vmul.f32 %v8595, %v8595
    %v8648 = vmul.f32 %v8596, %v8596
    %v8649 = vmul.f32 %v8597, %v8597
    %v8650 = vmul.f32 %v8598, %v8598
    %v8651 = vmul.f32 %v8599, %v8599
    %v8652 = vmul.f32 %v8600, %v8600
    %v8653 = vsel %vm3086, %v8645, 0.0
    %v8654 = vsel %vm3086, %v8646, 0.0
    %v8655 = vadd.f32 %v8653, %v8654
    %v8656 = vsel %vm3086, %v8647, 0.0
    %v8657 = vadd.f32 %v8655, %v8656
    %v8658 = vsel %vm3086, %v8648, 0.0
    %v8659 = vadd.f32 %v8657, %v8658
    %v8660 = vsel %vm3086, %v8649, 0.0
    %v8661 = vadd.f32 %v8659, %v8660
    %v8662 = vsel %vm3086, %v8650, 0.0
    %v8663 = vadd.f32 %v8661, %v8662
    %v8664 = vsel %vm3086, %v8651, 0.0
    %v8665 = vadd.f32 %v8663, %v8664
    %v8666 = vsel %vm3086, %v8652, 0.0
    %v8667 = vadd.f32 %v8665, %v8666
    %8668 = vadd.xlane.f32.xlu0 %v8667
    %v8669 = vpop.xlane.xlu0 %8668
    %v8670 = vrot.slane %v8669, 4
    %v8671 = vadd.f32 %v8669, %v8670
    %v8672 = vrot.slane %v8671, 2
    %v8673 = vadd.f32 %v8671, %v8672
    %v8674 = vrot.slane %v8673, 1
    %v8675 = vadd.f32 %v8673, %v8674
    %s8676 = vtos %v8675
    %v8677 = vmul.f32 %v8207, %v8207
    %v8678 = vsel %vm8226, %v8677, 0.0
    %8679 = vadd.xlane.f32.xlu0 %v8678
    %v8680 = vpop.xlane.xlu0 %8679
    %v8681 = vrot.slane %v8680, 4
    %v8682 = vadd.f32 %v8680, %v8681
    %v8683 = vrot.slane %v8682, 2
    %v8684 = vadd.f32 %v8682, %v8683
    %v8685 = vrot.slane %v8684, 1
    %v8686 = vadd.f32 %v8684, %v8685
    %s8687 = vtos %v8686
    %s8688 = ssub.f32 %s8676, %s8687
    %v8689 = vrcp.pop 64.0
    %s8690 = vtos %v8689
    %s8691 = smul.f32 %s8644, %s8690
    %v8692 = vrcp.pop 64.0
    %s8693 = vtos %v8692
    %s8694 = smul.f32 %s8688, %s8693
    %s8695 = sadd.f32 %s8691, %s8694
    %s8696 = smul.f32 %s8171, 25.0
    %s8697 = smul.f32 %s8261, 25.0
    %s8698 = sadd.f32 %s8696, %s8697
    %s8699 = sadd.f32 %s8698, %s8695
    %s8700 = scalar_lea.smem [#allocation2], 0
    %8701 = sst [smem:[%s8700]] %s8699
    // Predicated region
    $region130: #{vicreg_forward.1} parent=1 // pred_check
      _
    $region131: #{vicreg_forward.1} parent=1 // pred_check_branch
      %8703 = sbr.rel (0) target = $region133
    $region132: #{vicreg_forward.1} parent=1 // pred_region
      %s8705 = ssub.s32 16, 16
      %8706 = vsyncadd [#allocation3], %s8705
      %8709 = dma.smem_to_hbm [#allocation2], 16, %s65, [#allocation3]
    $region133: #{vicreg_forward.1} parent=1 // pred_fallthru
      _
    // Predicated region
    $region134: #{vicreg_forward.1} parent=1 // pred_check
      _
    $region135: #{vicreg_forward.1} parent=1 // pred_check_branch
      %8711 = sbr.rel (0) target = $region137
    $region136: #{vicreg_forward.1} parent=1 // pred_region
      %8712 = dma.done [#allocation3], 16
    $region137: #{vicreg_forward.1} parent=1 // pred_fallthru
      _
    %8713 = sfence
    %8714 = vsyncpa [#allocation3], 1

</llo_original>
